<compile_context>
chip_gen: v6e
topology: v6e:2x2x1
jax: 0.10.0
libtpu: 0.0.40
codegen_flags: <defaults>
</compile_context>

<pallas_src>
import functools
import math

import numpy as np
import jax
import jax.numpy as jnp
from jax.experimental import pallas as pl
from jax.experimental.pallas import tpu as pltpu


# --------------------------------------------------------------------------
# Fused forward kernel: one grid step == G scenes.
# Weight stack slots (w_ref: (8, D, 4D) bf16, b_ref: (8, 1, 4D) f32):
#   0 enc0.ISAB.mab0  [Wk|Wv|Wo|0]      (query precomputed on host)
#   1 enc0.ISAB.mab1  [Wq|Wk|Wv|Wo]
#   2 enc1.ISAB.mab0  [Wk|Wv|Wo|0]      (query precomputed)
#   3 enc1.ISAB.mab1  [Wq|Wk|Wv|Wo]
#   4 dec.PMA         [Wk|Wv|Wo|0]      (seed query precomputed)
#   5 dec.SAB0        [Wq|Wk|Wv|Wo]
#   6 dec.SAB1        [Wq|Wk|Wv|Wo]
#   7 head            [W_regressor|w_conf|0 ...]
# --------------------------------------------------------------------------
def _fused_kernel(num_heads,
                  x_ref, q0_ref, q1_ref, qp_ref,
                  bia_ref, bai_ref, bma_ref, bmm_ref,
                  w_ref, b_ref, out_ref):
    D = x_ref.shape[-1]
    scale = 1.0 / math.sqrt(D)            # Set-Transformer scales by sqrt(dim_V)

    # Hoisted per-head {0,1} lane masks: built once, reused by all 7 MABs.
    lane = jax.lax.broadcasted_iota(jnp.int32, (1, D), 1)
    hd = D // num_heads
    head_masks = [((lane >= h * hd) & (lane < (h + 1) * hd)).astype(jnp.float32)
                  for h in range(num_heads)]

    def w_cols(idx, c0, c1):               # bf16 storage -> f32 compute
        return w_ref[idx, :, c0 * D:c1 * D].astype(jnp.float32)

    def b_cols(idx, c0, c1):
        return b_ref[idx, :, c0 * D:c1 * D]

    def attention(q_proj, k, v, bias):
        """All heads fused: heads stacked along sublanes -> one score matmul, one A@V.
        bias is the precomputed (num_heads*Rq, Rk) block-diagonal scene/padding mask."""
        rq = q_proj.shape[0]
        q_st = jnp.concatenate([q_proj * head_masks[h] for h in range(num_heads)],
                               axis=0)                                   # (H*Rq, D)
        s = jax.lax.dot_general(q_st, k, (((1,), (1,)), ((), ())),
                                preferred_element_type=jnp.float32)      # (H*Rq, Rk)
        s = s * scale + bias
        m = jnp.max(s, axis=-1, keepdims=True)
        e = jnp.exp(s - m)
        a = e / jnp.sum(e, axis=-1, keepdims=True)                       # exact softmax
        o_st = jnp.dot(a, v, preferred_element_type=jnp.float32)         # (H*Rq, D)
        o = q_proj                                                       # residual = fc_q(Q)
        for h in range(num_heads):
            o = o + o_st[h * rq:(h + 1) * rq, :] * head_masks[h]         # concat-by-mask
        return o

    def mab_pre(idx, q_pre, xk, bias):      # query projection done on host
        kv = jnp.dot(xk, w_cols(idx, 0, 2),
                     preferred_element_type=jnp.float32) + b_cols(idx, 0, 2)
        o = attention(q_pre, kv[:, :D], kv[:, D:], bias)
        return o + jax.nn.relu(jnp.dot(o, w_cols(idx, 2, 3),
                                       preferred_element_type=jnp.float32) + b_cols(idx, 2, 3))

    def mab_q(idx, xq, xk, bias):           # distinct query / key inputs
        qp = jnp.dot(xq, w_cols(idx, 0, 1),
                     preferred_element_type=jnp.float32) + b_cols(idx, 0, 1)
        kv = jnp.dot(xk, w_cols(idx, 1, 3),
                     preferred_element_type=jnp.float32) + b_cols(idx, 1, 3)
        o = attention(qp, kv[:, :D], kv[:, D:], bias)
        return o + jax.nn.relu(jnp.dot(o, w_cols(idx, 3, 4),
                                       preferred_element_type=jnp.float32) + b_cols(idx, 3, 4))

    def mab_self(idx, x, bias):             # SAB: Q=K=V from the same input -> one QKV matmul
        qkv = jnp.dot(x, w_cols(idx, 0, 3),
                      preferred_element_type=jnp.float32) + b_cols(idx, 0, 3)
        o = attention(qkv[:, :D], qkv[:, D:2 * D], qkv[:, 2 * D:], bias)
        return o + jax.nn.relu(jnp.dot(o, w_cols(idx, 3, 4),
                                       preferred_element_type=jnp.float32) + b_cols(idx, 3, 4))

    x = x_ref[...]                          # (G*Na, D) stacked, padded scenes
    bia = bia_ref[...]                      # inds  -> agents mask
    bai = bai_ref[...]                      # agents-> inds   mask
    bma = bma_ref[...]                      # modes -> agents mask
    bmm = bmm_ref[...]                      # modes -> modes  mask

    h0 = mab_pre(0, q0_ref[...], x, bia)    # enc0.ISAB.mab0
    x1 = mab_q(1, x, h0, bai)               # enc0.ISAB.mab1
    h1 = mab_pre(2, q1_ref[...], x1, bia)   # enc1.ISAB.mab0
    x2 = mab_q(3, x1, h1, bai)              # enc1.ISAB.mab1
    z = mab_pre(4, qp_ref[...], x2, bma)    # dec.PMA
    z = mab_self(5, z, bmm)                 # dec.SAB0
    z = mab_self(6, z, bmm)                 # dec.SAB1

    # Fused regressor + mode-confidence head -> lane-dense (G*Nm_pad, 128) store.
    head = jnp.dot(z, w_cols(7, 0, 1),
                   preferred_element_type=jnp.float32) + b_cols(7, 0, 1)
    out_ref[...] = head.astype(out_ref.dtype)


def fused_forward(x_flat, q0, q1, qp, bia, bai, bma, bmm, w_stack, b_stack,
                  num_heads, G, Na, Ni, Nm_pad, num_blocks):
    D = x_flat.shape[-1]
    Rm = G * Nm_pad
    kernel = functools.partial(_fused_kernel, num_heads)
    return pl.pallas_call(
        kernel,
        out_shape=jax.ShapeDtypeStruct((num_blocks * Rm, D), jnp.float32),
        grid=(num_blocks,),
        in_specs=[
            pl.BlockSpec((G * Na, D), lambda s: (s, 0)),          # scenes for this step
            pl.BlockSpec((G * Ni, D), lambda s: (0, 0)),          # precomputed inducing q (enc0)
            pl.BlockSpec((G * Ni, D), lambda s: (0, 0)),          # precomputed inducing q (enc1)
            pl.BlockSpec((Rm, D), lambda s: (0, 0)),              # precomputed PMA seed q
            pl.BlockSpec(bia.shape, lambda s: (0, 0)),            # score masks (constants)
            pl.BlockSpec(bai.shape, lambda s: (0, 0)),
            pl.BlockSpec(bma.shape, lambda s: (0, 0)),
            pl.BlockSpec(bmm.shape, lambda s: (0, 0)),
            pl.BlockSpec(w_stack.shape, lambda s: (0, 0, 0)),     # bf16 weights, VMEM resident
            pl.BlockSpec(b_stack.shape, lambda s: (0, 0, 0)),     # f32 biases
        ],
        out_specs=pl.BlockSpec((Rm, D), lambda s: (s, 0)),
        compiler_params=pltpu.CompilerParams(
            dimension_semantics=("parallel",),                    # v7x: scenes split over TCs
        ),
    )(x_flat, q0, q1, qp, bia, bai, bma, bmm, w_stack, b_stack)


# --------------------------------------------------------------------------
# Parameter init (deterministic, synthetic) and packing.
# --------------------------------------------------------------------------
def _init_linear(key, din, dout):
    kw, kb = jax.random.split(key)
    w = jax.random.normal(kw, (din, dout), jnp.float32) / math.sqrt(din)
    b = jax.random.normal(kb, (1, dout), jnp.float32) * 0.01
    return w, b


def _init_mab(key, dq, dk, dv):
    ks = jax.random.split(key, 4)
    wq, bq = _init_linear(ks[0], dq, dv)
    wk, bk = _init_linear(ks[1], dk, dv)
    wv, bv = _init_linear(ks[2], dk, dv)
    wo, bo = _init_linear(ks[3], dv, dv)
    return dict(wq=wq, bq=bq, wk=wk, bk=bk, wv=wv, bv=bv, wo=wo, bo=bo)


def init_params(key, dim_input, dim_hidden, num_heads, num_inds, num_modes, dim_output):
    ks = jax.random.split(key, 12)
    params = {
        "enc0": dict(I=jax.random.normal(ks[0], (1, num_inds, dim_hidden)) * 0.1,
                     mab0=_init_mab(ks[1], dim_hidden, dim_input, dim_hidden),
                     mab1=_init_mab(ks[2], dim_input, dim_hidden, dim_hidden)),
        "enc1": dict(I=jax.random.normal(ks[3], (1, num_inds, dim_hidden)) * 0.1,
                     mab0=_init_mab(ks[4], dim_hidden, dim_hidden, dim_hidden),
                     mab1=_init_mab(ks[5], dim_hidden, dim_hidden, dim_hidden)),
        "pma": dict(S=jax.random.normal(ks[6], (1, num_modes, dim_hidden)) * 0.1,
                    mab=_init_mab(ks[7], dim_hidden, dim_hidden, dim_hidden)),
        "sab0": dict(mab=_init_mab(ks[8], dim_hidden, dim_hidden, dim_hidden)),
        "sab1": dict(mab=_init_mab(ks[9], dim_hidden, dim_hidden, dim_hidden)),
    }
    params["regressor"] = _init_linear(ks[10], dim_hidden, dim_output)
    params["mode_confidences"] = _init_linear(ks[11], dim_hidden, 1)
    return params


def pack_params(params, D):
    """Pack weights into one (8, D, 4D) bf16 stack (wide K|V / Q|K|V fusion) + f32 biases."""
    def pad_rows(w):
        return jnp.pad(w, ((0, D - w.shape[0]), (0, 0)))

    def pad_lane(a, width):
        return jnp.pad(a, ((0, 0), (0, width - a.shape[1])))

    def slot_pre(m):                       # [Wk | Wv | Wo | 0]  (query precomputed)
        w = jnp.concatenate([pad_rows(m["wk"]), pad_rows(m["wv"]), m["wo"]], axis=1)
        b = jnp.concatenate([m["bk"], m["bv"], m["bo"]], axis=1)
        return pad_lane(w, 4 * D), pad_lane(b, 4 * D)

    def slot_q(m):                         # [Wq | Wk | Wv | Wo]
        w = jnp.concatenate([pad_rows(m["wq"]), pad_rows(m["wk"]),
                             pad_rows(m["wv"]), m["wo"]], axis=1)
        b = jnp.concatenate([m["bq"], m["bk"], m["bv"], m["bo"]], axis=1)
        return w, b

    slots = [
        slot_pre(params["enc0"]["mab0"]),
        slot_q(params["enc0"]["mab1"]),
        slot_pre(params["enc1"]["mab0"]),
        slot_q(params["enc1"]["mab1"]),
        slot_pre(params["pma"]["mab"]),
        slot_q(params["sab0"]["mab"]),
        slot_q(params["sab1"]["mab"]),
    ]
    wr, br = params["regressor"]           # (D, dim_out), (1, dim_out)
    wc, bc = params["mode_confidences"]    # (D, 1), (1, 1)
    wh = pad_lane(jnp.concatenate([wr, wc], axis=1), 4 * D)
    bh = pad_lane(jnp.concatenate([br, bc], axis=1), 4 * D)
    slots.append((wh, bh))

    w_stack = jnp.stack([s[0] for s in slots]).astype(jnp.bfloat16)   # (8, D, 4D)
    b_stack = jnp.stack([s[1] for s in slots]).astype(jnp.float32)    # (8, 1, 4D)
    return w_stack, b_stack


def precompute_queries(params, G, num_modes, Nm_pad):
    """fc_q(inducing points / seeds) are constants -> computed once on host (f32)."""
    def proj(I, m):
        return I @ m["wq"] + m["bq"]
    q0 = proj(params["enc0"]["I"][0], params["enc0"]["mab0"])          # (Ni, D)
    q1 = proj(params["enc1"]["I"][0], params["enc1"]["mab0"])          # (Ni, D)
    qp = proj(params["pma"]["S"][0], params["pma"]["mab"])             # (Nm, D)
    qp = jnp.pad(qp, ((0, Nm_pad - num_modes), (0, 0)))
    return jnp.tile(q0, (G, 1)), jnp.tile(q1, (G, 1)), jnp.tile(qp, (G, 1))


def make_score_bias(num_heads, G, nq, nk, nk_valid):
    """(num_heads*G*nq, G*nk) additive mask: 0 within-scene & valid key, else -1e9."""
    rq, rk = G * nq, G * nk
    r = np.arange(num_heads * rq) % rq
    c = np.arange(rk)
    same_scene = (r[:, None] // nq) == (c[None, :] // nk)
    key_valid = (c % nk) < nk_valid
    return jnp.asarray(np.where(same_scene & key_valid[None, :], 0.0, -1e9),
                       dtype=jnp.float32)


# --------------------------------------------------------------------------
# Full forward pass (matches TrajectoryGenerator.forward semantics).
# --------------------------------------------------------------------------
def trajectory_generator_forward(params, obs_traj_rel, seq_start_end,
                                 num_heads=4, num_modes=6, pred_len=30,
                                 num_inds=32, dim_hidden=128, scenes_per_step=8):
    obs_len, total_agents, data_dim = obs_traj_rel.shape
    dim_input = obs_len * data_dim
    dim_output = pred_len * data_dim
    D = dim_hidden

    seq_start_end = [(int(s), int(e)) for s, e in seq_start_end]
    B = len(seq_start_end)
    counts = [e - s for s, e in seq_start_end]
    N = counts[0]
    # TODO(synk): ragged scenes (different agent counts) fall back outside this wrapper.
    assert all(c == N for c in counts), "uniform agent count per scene required"
    assert seq_start_end[0][0] == 0 and all(
        seq_start_end[i][1] == seq_start_end[i + 1][0] for i in range(B - 1)), \
        "scenes must be contiguous"

    # Glue: single transpose+reshape (no per-scene Python loop), matching
    # permute(1,0,2).view(n, obs_len*2) layout of the reference.
    x = jnp.transpose(obs_traj_rel, (1, 0, 2)).reshape(B, N, dim_input).astype(jnp.float32)

    G = max(1, min(scenes_per_step, B))                 # scenes per grid step
    B_pad = ((B + G - 1) // G) * G
    Na = ((N + 7) // 8) * 8                             # agent rows padded to sublane tile
    Nm_pad = ((num_modes + 7) // 8) * 8
    Ni = num_inds
    assert dim_input <= D and dim_output + 1 <= D and D % num_heads == 0

    x = jnp.pad(x, ((0, B_pad - B), (0, Na - N), (0, D - dim_input)))
    x_flat = x.reshape(B_pad * Na, D)                   # lane-dense (rows, 128)

    q0, q1, qp = precompute_queries(params, G, num_modes, Nm_pad)
    w_stack, b_stack = pack_params(params, D)

    bia = make_score_bias(num_heads, G, Ni, Na, N)                  # inds  -> agents
    bai = make_score_bias(num_heads, G, Na, Ni, Ni)                 # agents-> inds
    bma = make_score_bias(num_heads, G, Nm_pad, Na, N)              # modes -> agents
    bmm = make_score_bias(num_heads, G, Nm_pad, Nm_pad, num_modes)  # modes -> modes

    num_blocks = B_pad // G
    out = fused_forward(x_flat, q0, q1, qp, bia, bai, bma, bmm,
                        w_stack, b_stack, num_heads, G, Na, Ni, Nm_pad, num_blocks)

    out = out.reshape(B_pad, Nm_pad, D)[:B, :num_modes, :]
    pred_traj_fake_rel = out[:, :, :dim_output].reshape(B, num_modes, pred_len, data_dim)
    conf = jax.nn.softmax(out[:, :, dim_output], axis=1)            # exact softmax over modes
    # TODO(synk): pdb.set_trace() breakpoints and the torch.allclose runtime assert of the
    # reference forward are debugging-only and omitted here.
    return pred_traj_fake_rel, conf


# --------------------------------------------------------------------------
if __name__ == "__main__":
    OBS_LEN = 20
    DIM_INPUT = OBS_LEN * 2          # 40
    DIM_HIDDEN = 128
    NUM_HEADS = 4
    NUM_INDS = 32
    NUM_MODES = 6
    PRED_LEN = 30
    DIM_OUTPUT = PRED_LEN * 2        # 60

    AGENTS_PER_SCENE = 10
    NUM_SCENES = 2
    TOTAL_AGENTS = AGENTS_PER_SCENE * NUM_SCENES

    key = jax.random.PRNGKey(0)
    k_data, k_params = jax.random.split(key)
    obs_traj_rel = jax.random.normal(k_data, (OBS_LEN, TOTAL_AGENTS, 2), jnp.float32)
    seq_start_end = [(i * AGENTS_PER_SCENE, (i + 1) * AGENTS_PER_SCENE)
                     for i in range(NUM_SCENES)]

    params = init_params(k_params, DIM_INPUT, DIM_HIDDEN, NUM_HEADS,
                         NUM_INDS, NUM_MODES, DIM_OUTPUT)

    pred, conf = trajectory_generator_forward(
        params, obs_traj_rel, seq_start_end,
        num_heads=NUM_HEADS, num_modes=NUM_MODES, pred_len=PRED_LEN,
        num_inds=NUM_INDS, dim_hidden=DIM_HIDDEN)

    pred = jax.block_until_ready(pred)
    conf = jax.block_until_ready(conf)

    assert pred.shape == (NUM_SCENES, NUM_MODES, PRED_LEN, 2), pred.shape
    assert conf.shape == (NUM_SCENES, NUM_MODES), conf.shape
    assert bool(jnp.all(jnp.isfinite(pred)))
    assert bool(jnp.allclose(jnp.sum(conf, axis=1), jnp.ones((NUM_SCENES,)), atol=1e-5))

    print("KERNEL_OK")
</pallas_src>

<mosaic_0001>
module attributes {stable_mosaic.version = 11 : i64} {
  func.func @_fused_kernel(%arg0: i32, %arg1: memref<32x128xf32, #tpu.memory_space<vmem>>, %arg2: memref<64x128xf32, #tpu.memory_space<vmem>>, %arg3: memref<64x128xf32, #tpu.memory_space<vmem>>, %arg4: memref<16x128xf32, #tpu.memory_space<vmem>>, %arg5: memref<256x32xf32, #tpu.memory_space<vmem>>, %arg6: memref<128x64xf32, #tpu.memory_space<vmem>>, %arg7: memref<64x32xf32, #tpu.memory_space<vmem>>, %arg8: memref<64x16xf32, #tpu.memory_space<vmem>>, %arg9: memref<8x128x512xbf16, #tpu.memory_space<vmem>>, %arg10: memref<8x1x512xf32, #tpu.memory_space<vmem>>, %arg11: memref<16x128xf32, #tpu.memory_space<vmem>>) attributes {dimension_semantics = [#tpu.dimension_semantics<parallel>], iteration_bounds = array<i64: 1>, scalar_prefetch = 0 : i64, scratch_operands = 0 : i64, tpu.core_type = #tpu.core_type<tc>, window_params = [{transform_indices = @transform_0, window_bounds = array<i64: 32, 128>}, {pipeline_mode = #tpu.pipeline_mode<synchronous>, transform_indices = @transform_1, window_bounds = array<i64: 64, 128>}, {pipeline_mode = #tpu.pipeline_mode<synchronous>, transform_indices = @transform_2, window_bounds = array<i64: 64, 128>}, {pipeline_mode = #tpu.pipeline_mode<synchronous>, transform_indices = @transform_3, window_bounds = array<i64: 16, 128>}, {pipeline_mode = #tpu.pipeline_mode<synchronous>, transform_indices = @transform_4, window_bounds = array<i64: 256, 32>}, {pipeline_mode = #tpu.pipeline_mode<synchronous>, transform_indices = @transform_5, window_bounds = array<i64: 128, 64>}, {pipeline_mode = #tpu.pipeline_mode<synchronous>, transform_indices = @transform_6, window_bounds = array<i64: 64, 32>}, {pipeline_mode = #tpu.pipeline_mode<synchronous>, transform_indices = @transform_7, window_bounds = array<i64: 64, 16>}, {pipeline_mode = #tpu.pipeline_mode<synchronous>, transform_indices = @transform_8, window_bounds = array<i64: 8, 128, 512>}, {pipeline_mode = #tpu.pipeline_mode<synchronous>, transform_indices = @transform_9, window_bounds = array<i64: 8, 1, 512>}, {transform_indices = @transform_10, window_bounds = array<i64: 16, 128>}]} {
    %0 = tpu.iota {dimensions = array<i32: 1>} : vector<1x128xi32>
    %c0_i32 = arith.constant 0 : i32
    %1 = vector.broadcast %c0_i32 : i32 to vector<1x128xi32>
    %2 = arith.cmpi sge, %0, %1 : vector<1x128xi32>
    %c32_i32 = arith.constant 32 : i32
    %3 = vector.broadcast %c32_i32 : i32 to vector<1x128xi32>
    %4 = arith.cmpi slt, %0, %3 : vector<1x128xi32>
    %5 = arith.andi %2, %4 : vector<1x128xi1>
    %6 = arith.extui %5 : vector<1x128xi1> to vector<1x128xi32>
    %7 = arith.sitofp %6 : vector<1x128xi32> to vector<1x128xf32>
    %c32_i32_0 = arith.constant 32 : i32
    %8 = vector.broadcast %c32_i32_0 : i32 to vector<1x128xi32>
    %9 = arith.cmpi sge, %0, %8 : vector<1x128xi32>
    %c64_i32 = arith.constant 64 : i32
    %10 = vector.broadcast %c64_i32 : i32 to vector<1x128xi32>
    %11 = arith.cmpi slt, %0, %10 : vector<1x128xi32>
    %12 = arith.andi %9, %11 : vector<1x128xi1>
    %13 = arith.extui %12 : vector<1x128xi1> to vector<1x128xi32>
    %14 = arith.sitofp %13 : vector<1x128xi32> to vector<1x128xf32>
    %c64_i32_1 = arith.constant 64 : i32
    %15 = vector.broadcast %c64_i32_1 : i32 to vector<1x128xi32>
    %16 = arith.cmpi sge, %0, %15 : vector<1x128xi32>
    %c96_i32 = arith.constant 96 : i32
    %17 = vector.broadcast %c96_i32 : i32 to vector<1x128xi32>
    %18 = arith.cmpi slt, %0, %17 : vector<1x128xi32>
    %19 = arith.andi %16, %18 : vector<1x128xi1>
    %20 = arith.extui %19 : vector<1x128xi1> to vector<1x128xi32>
    %21 = arith.sitofp %20 : vector<1x128xi32> to vector<1x128xf32>
    %c96_i32_2 = arith.constant 96 : i32
    %22 = vector.broadcast %c96_i32_2 : i32 to vector<1x128xi32>
    %23 = arith.cmpi sge, %0, %22 : vector<1x128xi32>
    %c128_i32 = arith.constant 128 : i32
    %24 = vector.broadcast %c128_i32 : i32 to vector<1x128xi32>
    %25 = arith.cmpi slt, %0, %24 : vector<1x128xi32>
    %26 = arith.andi %23, %25 : vector<1x128xi1>
    %27 = arith.extui %26 : vector<1x128xi1> to vector<1x128xi32>
    %28 = arith.sitofp %27 : vector<1x128xi32> to vector<1x128xf32>
    %c0 = arith.constant 0 : index
    %c0_3 = arith.constant 0 : index
    %29 = vector.load %arg1[%c0, %c0_3] : memref<32x128xf32, #tpu.memory_space<vmem>>, vector<32x128xf32>
    %c0_4 = arith.constant 0 : index
    %c0_5 = arith.constant 0 : index
    %30 = vector.load %arg5[%c0_4, %c0_5] : memref<256x32xf32, #tpu.memory_space<vmem>>, vector<256x32xf32>
    %c0_6 = arith.constant 0 : index
    %c0_7 = arith.constant 0 : index
    %31 = vector.load %arg6[%c0_6, %c0_7] : memref<128x64xf32, #tpu.memory_space<vmem>>, vector<128x64xf32>
    %c0_8 = arith.constant 0 : index
    %c0_9 = arith.constant 0 : index
    %32 = vector.load %arg7[%c0_8, %c0_9] : memref<64x32xf32, #tpu.memory_space<vmem>>, vector<64x32xf32>
    %c0_10 = arith.constant 0 : index
    %c0_11 = arith.constant 0 : index
    %33 = vector.load %arg8[%c0_10, %c0_11] : memref<64x16xf32, #tpu.memory_space<vmem>>, vector<64x16xf32>
    %c0_12 = arith.constant 0 : index
    %c0_13 = arith.constant 0 : index
    %34 = vector.load %arg2[%c0_12, %c0_13] : memref<64x128xf32, #tpu.memory_space<vmem>>, vector<64x128xf32>
    %c0_14 = arith.constant 0 : index
    %c0_15 = arith.constant 0 : index
    %c0_16 = arith.constant 0 : index
    %35 = vector.load %arg9[%c0_14, %c0_15, %c0_16] : memref<8x128x512xbf16, #tpu.memory_space<vmem>>, vector<1x128x256xbf16>
    %36 = vector.shape_cast %35 : vector<1x128x256xbf16> to vector<128x256xbf16>
    %37 = arith.extf %36 : vector<128x256xbf16> to vector<128x256xf32>
    %cst = arith.constant dense<0.000000e+00> : vector<32x256xf32>
    %38 = tpu.matmul %29, %37, %cst {dimension_numbers = #tpu.dot_dimension_numbers<[1], [0], [0], [1], [0, 0, 1, 1], [], []>} : vector<32x128xf32>, vector<128x256xf32>, vector<32x256xf32> -> vector<32x256xf32>
    %c0_17 = arith.constant 0 : index
    %c0_18 = arith.constant 0 : index
    %c0_19 = arith.constant 0 : index
    %39 = vector.load %arg10[%c0_17, %c0_18, %c0_19] : memref<8x1x512xf32, #tpu.memory_space<vmem>>, vector<1x1x256xf32>
    %40 = vector.shape_cast %39 : vector<1x1x256xf32> to vector<1x256xf32>
    %41 = vector.broadcast %40 : vector<1x256xf32> to vector<32x256xf32>
    %42 = arith.addf %38, %41 : vector<32x256xf32>
    %43 = vector.extract_strided_slice %42 {offsets = [0, 0], sizes = [32, 128], strides = [1, 1]} : vector<32x256xf32> to vector<32x128xf32>
    %44 = vector.extract_strided_slice %42 {offsets = [0, 128], sizes = [32, 128], strides = [1, 1]} : vector<32x256xf32> to vector<32x128xf32>
    %45 = vector.broadcast %7 : vector<1x128xf32> to vector<64x128xf32>
    %46 = arith.mulf %34, %45 : vector<64x128xf32>
    %47 = vector.broadcast %14 : vector<1x128xf32> to vector<64x128xf32>
    %48 = arith.mulf %34, %47 : vector<64x128xf32>
    %49 = vector.broadcast %21 : vector<1x128xf32> to vector<64x128xf32>
    %50 = arith.mulf %34, %49 : vector<64x128xf32>
    %51 = vector.broadcast %28 : vector<1x128xf32> to vector<64x128xf32>
    %52 = arith.mulf %34, %51 : vector<64x128xf32>
    %53 = tpu.concatenate %46, %48, %50, %52 in 0 : vector<64x128xf32>, vector<64x128xf32>, vector<64x128xf32>, vector<64x128xf32> -> vector<256x128xf32>
    %cst_20 = arith.constant dense<0.000000e+00> : vector<256x32xf32>
    %54 = tpu.matmul %53, %43, %cst_20 {dimension_numbers = #tpu.dot_dimension_numbers<[1], [1], [0], [0], [0, 0, 1, 0], [], []>} : vector<256x128xf32>, vector<32x128xf32>, vector<256x32xf32> -> vector<256x32xf32>
    %cst_21 = arith.constant 0.0883883461 : f32
    %55 = vector.broadcast %cst_21 : f32 to vector<256x32xf32>
    %56 = arith.mulf %54, %55 : vector<256x32xf32>
    %57 = arith.addf %56, %30 : vector<256x32xf32>
    %cst_22 = arith.constant dense<0xFF800000> : vector<256xf32>
    %58 = vector.multi_reduction <maximumf>, %57, %cst_22 [1] : vector<256x32xf32> to vector<256xf32>
    %59 = vector.shape_cast %58 : vector<256xf32> to vector<256x1xf32>
    %60 = vector.broadcast %59 : vector<256x1xf32> to vector<256x32xf32>
    %61 = arith.subf %57, %60 : vector<256x32xf32>
    %62 = math.exp %61 : vector<256x32xf32>
    %cst_23 = arith.constant dense<0.000000e+00> : vector<256xf32>
    %63 = vector.multi_reduction <add>, %62, %cst_23 [1] : vector<256x32xf32> to vector<256xf32>
    %64 = vector.shape_cast %63 : vector<256xf32> to vector<256x1xf32>
    %65 = vector.broadcast %64 : vector<256x1xf32> to vector<256x32xf32>
    %66 = arith.divf %62, %65 : vector<256x32xf32>
    %cst_24 = arith.constant dense<0.000000e+00> : vector<256x128xf32>
    %67 = tpu.matmul %66, %44, %cst_24 {dimension_numbers = #tpu.dot_dimension_numbers<[1], [0], [0], [1], [0, 0, 1, 1], [], []>} : vector<256x32xf32>, vector<32x128xf32>, vector<256x128xf32> -> vector<256x128xf32>
    %68 = vector.extract_strided_slice %67 {offsets = [0, 0], sizes = [64, 128], strides = [1, 1]} : vector<256x128xf32> to vector<64x128xf32>
    %69 = vector.broadcast %7 : vector<1x128xf32> to vector<64x128xf32>
    %70 = arith.mulf %68, %69 : vector<64x128xf32>
    %71 = arith.addf %34, %70 : vector<64x128xf32>
    %72 = vector.extract_strided_slice %67 {offsets = [64, 0], sizes = [64, 128], strides = [1, 1]} : vector<256x128xf32> to vector<64x128xf32>
    %73 = vector.broadcast %14 : vector<1x128xf32> to vector<64x128xf32>
    %74 = arith.mulf %72, %73 : vector<64x128xf32>
    %75 = arith.addf %71, %74 : vector<64x128xf32>
    %76 = vector.extract_strided_slice %67 {offsets = [128, 0], sizes = [64, 128], strides = [1, 1]} : vector<256x128xf32> to vector<64x128xf32>
    %77 = vector.broadcast %21 : vector<1x128xf32> to vector<64x128xf32>
    %78 = arith.mulf %76, %77 : vector<64x128xf32>
    %79 = arith.addf %75, %78 : vector<64x128xf32>
    %80 = vector.extract_strided_slice %67 {offsets = [192, 0], sizes = [64, 128], strides = [1, 1]} : vector<256x128xf32> to vector<64x128xf32>
    %81 = vector.broadcast %28 : vector<1x128xf32> to vector<64x128xf32>
    %82 = arith.mulf %80, %81 : vector<64x128xf32>
    %83 = arith.addf %79, %82 : vector<64x128xf32>
    %c0_25 = arith.constant 0 : index
    %c0_26 = arith.constant 0 : index
    %c256 = arith.constant 256 : index
    %84 = vector.load %arg9[%c0_25, %c0_26, %c256] : memref<8x128x512xbf16, #tpu.memory_space<vmem>>, vector<1x128x128xbf16>
    %85 = vector.shape_cast %84 : vector<1x128x128xbf16> to vector<128x128xbf16>
    %86 = arith.extf %85 : vector<128x128xbf16> to vector<128x128xf32>
    %cst_27 = arith.constant dense<0.000000e+00> : vector<64x128xf32>
    %87 = tpu.matmul %83, %86, %cst_27 {dimension_numbers = #tpu.dot_dimension_numbers<[1], [0], [0], [1], [0, 0, 1, 1], [], []>} : vector<64x128xf32>, vector<128x128xf32>, vector<64x128xf32> -> vector<64x128xf32>
    %c0_28 = arith.constant 0 : index
    %c0_29 = arith.constant 0 : index
    %c256_30 = arith.constant 256 : index
    %88 = vector.load %arg10[%c0_28, %c0_29, %c256_30] : memref<8x1x512xf32, #tpu.memory_space<vmem>>, vector<1x1x128xf32>
    %89 = vector.shape_cast %88 : vector<1x1x128xf32> to vector<1x128xf32>
    %90 = vector.broadcast %89 : vector<1x128xf32> to vector<64x128xf32>
    %91 = arith.addf %87, %90 : vector<64x128xf32>
    %cst_31 = arith.constant 0.000000e+00 : f32
    %92 = vector.broadcast %cst_31 : f32 to vector<64x128xf32>
    %93 = arith.maximumf %91, %92 : vector<64x128xf32>
    %94 = arith.addf %83, %93 : vector<64x128xf32>
    %c1 = arith.constant 1 : index
    %c0_32 = arith.constant 0 : index
    %c0_33 = arith.constant 0 : index
    %95 = vector.load %arg9[%c1, %c0_32, %c0_33] : memref<8x128x512xbf16, #tpu.memory_space<vmem>>, vector<1x128x128xbf16>
    %96 = vector.shape_cast %95 : vector<1x128x128xbf16> to vector<128x128xbf16>
    %97 = arith.extf %96 : vector<128x128xbf16> to vector<128x128xf32>
    %cst_34 = arith.constant dense<0.000000e+00> : vector<32x128xf32>
    %98 = tpu.matmul %29, %97, %cst_34 {dimension_numbers = #tpu.dot_dimension_numbers<[1], [0], [0], [1], [0, 0, 1, 1], [], []>} : vector<32x128xf32>, vector<128x128xf32>, vector<32x128xf32> -> vector<32x128xf32>
    %c1_35 = arith.constant 1 : index
    %c0_36 = arith.constant 0 : index
    %c0_37 = arith.constant 0 : index
    %99 = vector.load %arg10[%c1_35, %c0_36, %c0_37] : memref<8x1x512xf32, #tpu.memory_space<vmem>>, vector<1x1x128xf32>
    %100 = vector.shape_cast %99 : vector<1x1x128xf32> to vector<1x128xf32>
    %101 = vector.broadcast %100 : vector<1x128xf32> to vector<32x128xf32>
    %102 = arith.addf %98, %101 : vector<32x128xf32>
    %c1_38 = arith.constant 1 : index
    %c0_39 = arith.constant 0 : index
    %c128 = arith.constant 128 : index
    %103 = vector.load %arg9[%c1_38, %c0_39, %c128] : memref<8x128x512xbf16, #tpu.memory_space<vmem>>, vector<1x128x256xbf16>
    %104 = vector.shape_cast %103 : vector<1x128x256xbf16> to vector<128x256xbf16>
    %105 = arith.extf %104 : vector<128x256xbf16> to vector<128x256xf32>
    %cst_40 = arith.constant dense<0.000000e+00> : vector<64x256xf32>
    %106 = tpu.matmul %94, %105, %cst_40 {dimension_numbers = #tpu.dot_dimension_numbers<[1], [0], [0], [1], [0, 0, 1, 1], [], []>} : vector<64x128xf32>, vector<128x256xf32>, vector<64x256xf32> -> vector<64x256xf32>
    %c1_41 = arith.constant 1 : index
    %c0_42 = arith.constant 0 : index
    %c128_43 = arith.constant 128 : index
    %107 = vector.load %arg10[%c1_41, %c0_42, %c128_43] : memref<8x1x512xf32, #tpu.memory_space<vmem>>, vector<1x1x256xf32>
    %108 = vector.shape_cast %107 : vector<1x1x256xf32> to vector<1x256xf32>
    %109 = vector.broadcast %108 : vector<1x256xf32> to vector<64x256xf32>
    %110 = arith.addf %106, %109 : vector<64x256xf32>
    %111 = vector.extract_strided_slice %110 {offsets = [0, 0], sizes = [64, 128], strides = [1, 1]} : vector<64x256xf32> to vector<64x128xf32>
    %112 = vector.extract_strided_slice %110 {offsets = [0, 128], sizes = [64, 128], strides = [1, 1]} : vector<64x256xf32> to vector<64x128xf32>
    %113 = vector.broadcast %7 : vector<1x128xf32> to vector<32x128xf32>
    %114 = arith.mulf %102, %113 : vector<32x128xf32>
    %115 = vector.broadcast %14 : vector<1x128xf32> to vector<32x128xf32>
    %116 = arith.mulf %102, %115 : vector<32x128xf32>
    %117 = vector.broadcast %21 : vector<1x128xf32> to vector<32x128xf32>
    %118 = arith.mulf %102, %117 : vector<32x128xf32>
    %119 = vector.broadcast %28 : vector<1x128xf32> to vector<32x128xf32>
    %120 = arith.mulf %102, %119 : vector<32x128xf32>
    %121 = tpu.concatenate %114, %116, %118, %120 in 0 : vector<32x128xf32>, vector<32x128xf32>, vector<32x128xf32>, vector<32x128xf32> -> vector<128x128xf32>
    %cst_44 = arith.constant dense<0.000000e+00> : vector<128x64xf32>
    %122 = tpu.matmul %121, %111, %cst_44 {dimension_numbers = #tpu.dot_dimension_numbers<[1], [1], [0], [0], [0, 0, 1, 0], [], []>} : vector<128x128xf32>, vector<64x128xf32>, vector<128x64xf32> -> vector<128x64xf32>
    %cst_45 = arith.constant 0.0883883461 : f32
    %123 = vector.broadcast %cst_45 : f32 to vector<128x64xf32>
    %124 = arith.mulf %122, %123 : vector<128x64xf32>
    %125 = arith.addf %124, %31 : vector<128x64xf32>
    %cst_46 = arith.constant dense<0xFF800000> : vector<128xf32>
    %126 = vector.multi_reduction <maximumf>, %125, %cst_46 [1] : vector<128x64xf32> to vector<128xf32>
    %127 = vector.shape_cast %126 : vector<128xf32> to vector<128x1xf32>
    %128 = vector.broadcast %127 : vector<128x1xf32> to vector<128x64xf32>
    %129 = arith.subf %125, %128 : vector<128x64xf32>
    %130 = math.exp %129 : vector<128x64xf32>
    %cst_47 = arith.constant dense<0.000000e+00> : vector<128xf32>
    %131 = vector.multi_reduction <add>, %130, %cst_47 [1] : vector<128x64xf32> to vector<128xf32>
    %132 = vector.shape_cast %131 : vector<128xf32> to vector<128x1xf32>
    %133 = vector.broadcast %132 : vector<128x1xf32> to vector<128x64xf32>
    %134 = arith.divf %130, %133 : vector<128x64xf32>
    %cst_48 = arith.constant dense<0.000000e+00> : vector<128x128xf32>
    %135 = tpu.matmul %134, %112, %cst_48 {dimension_numbers = #tpu.dot_dimension_numbers<[1], [0], [0], [1], [0, 0, 1, 1], [], []>} : vector<128x64xf32>, vector<64x128xf32>, vector<128x128xf32> -> vector<128x128xf32>
    %136 = vector.extract_strided_slice %135 {offsets = [0, 0], sizes = [32, 128], strides = [1, 1]} : vector<128x128xf32> to vector<32x128xf32>
    %137 = vector.broadcast %7 : vector<1x128xf32> to vector<32x128xf32>
    %138 = arith.mulf %136, %137 : vector<32x128xf32>
    %139 = arith.addf %102, %138 : vector<32x128xf32>
    %140 = vector.extract_strided_slice %135 {offsets = [32, 0], sizes = [32, 128], strides = [1, 1]} : vector<128x128xf32> to vector<32x128xf32>
    %141 = vector.broadcast %14 : vector<1x128xf32> to vector<32x128xf32>
    %142 = arith.mulf %140, %141 : vector<32x128xf32>
    %143 = arith.addf %139, %142 : vector<32x128xf32>
    %144 = vector.extract_strided_slice %135 {offsets = [64, 0], sizes = [32, 128], strides = [1, 1]} : vector<128x128xf32> to vector<32x128xf32>
    %145 = vector.broadcast %21 : vector<1x128xf32> to vector<32x128xf32>
    %146 = arith.mulf %144, %145 : vector<32x128xf32>
    %147 = arith.addf %143, %146 : vector<32x128xf32>
    %148 = vector.extract_strided_slice %135 {offsets = [96, 0], sizes = [32, 128], strides = [1, 1]} : vector<128x128xf32> to vector<32x128xf32>
    %149 = vector.broadcast %28 : vector<1x128xf32> to vector<32x128xf32>
    %150 = arith.mulf %148, %149 : vector<32x128xf32>
    %151 = arith.addf %147, %150 : vector<32x128xf32>
    %c1_49 = arith.constant 1 : index
    %c0_50 = arith.constant 0 : index
    %c384 = arith.constant 384 : index
    %152 = vector.load %arg9[%c1_49, %c0_50, %c384] : memref<8x128x512xbf16, #tpu.memory_space<vmem>>, vector<1x128x128xbf16>
    %153 = vector.shape_cast %152 : vector<1x128x128xbf16> to vector<128x128xbf16>
    %154 = arith.extf %153 : vector<128x128xbf16> to vector<128x128xf32>
    %cst_51 = arith.constant dense<0.000000e+00> : vector<32x128xf32>
    %155 = tpu.matmul %151, %154, %cst_51 {dimension_numbers = #tpu.dot_dimension_numbers<[1], [0], [0], [1], [0, 0, 1, 1], [], []>} : vector<32x128xf32>, vector<128x128xf32>, vector<32x128xf32> -> vector<32x128xf32>
    %c1_52 = arith.constant 1 : index
    %c0_53 = arith.constant 0 : index
    %c384_54 = arith.constant 384 : index
    %156 = vector.load %arg10[%c1_52, %c0_53, %c384_54] : memref<8x1x512xf32, #tpu.memory_space<vmem>>, vector<1x1x128xf32>
    %157 = vector.shape_cast %156 : vector<1x1x128xf32> to vector<1x128xf32>
    %158 = vector.broadcast %157 : vector<1x128xf32> to vector<32x128xf32>
    %159 = arith.addf %155, %158 : vector<32x128xf32>
    %cst_55 = arith.constant 0.000000e+00 : f32
    %160 = vector.broadcast %cst_55 : f32 to vector<32x128xf32>
    %161 = arith.maximumf %159, %160 : vector<32x128xf32>
    %162 = arith.addf %151, %161 : vector<32x128xf32>
    %c0_56 = arith.constant 0 : index
    %c0_57 = arith.constant 0 : index
    %163 = vector.load %arg3[%c0_56, %c0_57] : memref<64x128xf32, #tpu.memory_space<vmem>>, vector<64x128xf32>
    %c2 = arith.constant 2 : index
    %c0_58 = arith.constant 0 : index
    %c0_59 = arith.constant 0 : index
    %164 = vector.load %arg9[%c2, %c0_58, %c0_59] : memref<8x128x512xbf16, #tpu.memory_space<vmem>>, vector<1x128x256xbf16>
    %165 = vector.shape_cast %164 : vector<1x128x256xbf16> to vector<128x256xbf16>
    %166 = arith.extf %165 : vector<128x256xbf16> to vector<128x256xf32>
    %cst_60 = arith.constant dense<0.000000e+00> : vector<32x256xf32>
    %167 = tpu.matmul %162, %166, %cst_60 {dimension_numbers = #tpu.dot_dimension_numbers<[1], [0], [0], [1], [0, 0, 1, 1], [], []>} : vector<32x128xf32>, vector<128x256xf32>, vector<32x256xf32> -> vector<32x256xf32>
    %c2_61 = arith.constant 2 : index
    %c0_62 = arith.constant 0 : index
    %c0_63 = arith.constant 0 : index
    %168 = vector.load %arg10[%c2_61, %c0_62, %c0_63] : memref<8x1x512xf32, #tpu.memory_space<vmem>>, vector<1x1x256xf32>
    %169 = vector.shape_cast %168 : vector<1x1x256xf32> to vector<1x256xf32>
    %170 = vector.broadcast %169 : vector<1x256xf32> to vector<32x256xf32>
    %171 = arith.addf %167, %170 : vector<32x256xf32>
    %172 = vector.extract_strided_slice %171 {offsets = [0, 0], sizes = [32, 128], strides = [1, 1]} : vector<32x256xf32> to vector<32x128xf32>
    %173 = vector.extract_strided_slice %171 {offsets = [0, 128], sizes = [32, 128], strides = [1, 1]} : vector<32x256xf32> to vector<32x128xf32>
    %174 = vector.broadcast %7 : vector<1x128xf32> to vector<64x128xf32>
    %175 = arith.mulf %163, %174 : vector<64x128xf32>
    %176 = vector.broadcast %14 : vector<1x128xf32> to vector<64x128xf32>
    %177 = arith.mulf %163, %176 : vector<64x128xf32>
    %178 = vector.broadcast %21 : vector<1x128xf32> to vector<64x128xf32>
    %179 = arith.mulf %163, %178 : vector<64x128xf32>
    %180 = vector.broadcast %28 : vector<1x128xf32> to vector<64x128xf32>
    %181 = arith.mulf %163, %180 : vector<64x128xf32>
    %182 = tpu.concatenate %175, %177, %179, %181 in 0 : vector<64x128xf32>, vector<64x128xf32>, vector<64x128xf32>, vector<64x128xf32> -> vector<256x128xf32>
    %cst_64 = arith.constant dense<0.000000e+00> : vector<256x32xf32>
    %183 = tpu.matmul %182, %172, %cst_64 {dimension_numbers = #tpu.dot_dimension_numbers<[1], [1], [0], [0], [0, 0, 1, 0], [], []>} : vector<256x128xf32>, vector<32x128xf32>, vector<256x32xf32> -> vector<256x32xf32>
    %cst_65 = arith.constant 0.0883883461 : f32
    %184 = vector.broadcast %cst_65 : f32 to vector<256x32xf32>
    %185 = arith.mulf %183, %184 : vector<256x32xf32>
    %186 = arith.addf %185, %30 : vector<256x32xf32>
    %cst_66 = arith.constant dense<0xFF800000> : vector<256xf32>
    %187 = vector.multi_reduction <maximumf>, %186, %cst_66 [1] : vector<256x32xf32> to vector<256xf32>
    %188 = vector.shape_cast %187 : vector<256xf32> to vector<256x1xf32>
    %189 = vector.broadcast %188 : vector<256x1xf32> to vector<256x32xf32>
    %190 = arith.subf %186, %189 : vector<256x32xf32>
    %191 = math.exp %190 : vector<256x32xf32>
    %cst_67 = arith.constant dense<0.000000e+00> : vector<256xf32>
    %192 = vector.multi_reduction <add>, %191, %cst_67 [1] : vector<256x32xf32> to vector<256xf32>
    %193 = vector.shape_cast %192 : vector<256xf32> to vector<256x1xf32>
    %194 = vector.broadcast %193 : vector<256x1xf32> to vector<256x32xf32>
    %195 = arith.divf %191, %194 : vector<256x32xf32>
    %cst_68 = arith.constant dense<0.000000e+00> : vector<256x128xf32>
    %196 = tpu.matmul %195, %173, %cst_68 {dimension_numbers = #tpu.dot_dimension_numbers<[1], [0], [0], [1], [0, 0, 1, 1], [], []>} : vector<256x32xf32>, vector<32x128xf32>, vector<256x128xf32> -> vector<256x128xf32>
    %197 = vector.extract_strided_slice %196 {offsets = [0, 0], sizes = [64, 128], strides = [1, 1]} : vector<256x128xf32> to vector<64x128xf32>
    %198 = vector.broadcast %7 : vector<1x128xf32> to vector<64x128xf32>
    %199 = arith.mulf %197, %198 : vector<64x128xf32>
    %200 = arith.addf %163, %199 : vector<64x128xf32>
    %201 = vector.extract_strided_slice %196 {offsets = [64, 0], sizes = [64, 128], strides = [1, 1]} : vector<256x128xf32> to vector<64x128xf32>
    %202 = vector.broadcast %14 : vector<1x128xf32> to vector<64x128xf32>
    %203 = arith.mulf %201, %202 : vector<64x128xf32>
    %204 = arith.addf %200, %203 : vector<64x128xf32>
    %205 = vector.extract_strided_slice %196 {offsets = [128, 0], sizes = [64, 128], strides = [1, 1]} : vector<256x128xf32> to vector<64x128xf32>
    %206 = vector.broadcast %21 : vector<1x128xf32> to vector<64x128xf32>
    %207 = arith.mulf %205, %206 : vector<64x128xf32>
    %208 = arith.addf %204, %207 : vector<64x128xf32>
    %209 = vector.extract_strided_slice %196 {offsets = [192, 0], sizes = [64, 128], strides = [1, 1]} : vector<256x128xf32> to vector<64x128xf32>
    %210 = vector.broadcast %28 : vector<1x128xf32> to vector<64x128xf32>
    %211 = arith.mulf %209, %210 : vector<64x128xf32>
    %212 = arith.addf %208, %211 : vector<64x128xf32>
    %c2_69 = arith.constant 2 : index
    %c0_70 = arith.constant 0 : index
    %c256_71 = arith.constant 256 : index
    %213 = vector.load %arg9[%c2_69, %c0_70, %c256_71] : memref<8x128x512xbf16, #tpu.memory_space<vmem>>, vector<1x128x128xbf16>
    %214 = vector.shape_cast %213 : vector<1x128x128xbf16> to vector<128x128xbf16>
    %215 = arith.extf %214 : vector<128x128xbf16> to vector<128x128xf32>
    %cst_72 = arith.constant dense<0.000000e+00> : vector<64x128xf32>
    %216 = tpu.matmul %212, %215, %cst_72 {dimension_numbers = #tpu.dot_dimension_numbers<[1], [0], [0], [1], [0, 0, 1, 1], [], []>} : vector<64x128xf32>, vector<128x128xf32>, vector<64x128xf32> -> vector<64x128xf32>
    %c2_73 = arith.constant 2 : index
    %c0_74 = arith.constant 0 : index
    %c256_75 = arith.constant 256 : index
    %217 = vector.load %arg10[%c2_73, %c0_74, %c256_75] : memref<8x1x512xf32, #tpu.memory_space<vmem>>, vector<1x1x128xf32>
    %218 = vector.shape_cast %217 : vector<1x1x128xf32> to vector<1x128xf32>
    %219 = vector.broadcast %218 : vector<1x128xf32> to vector<64x128xf32>
    %220 = arith.addf %216, %219 : vector<64x128xf32>
    %cst_76 = arith.constant 0.000000e+00 : f32
    %221 = vector.broadcast %cst_76 : f32 to vector<64x128xf32>
    %222 = arith.maximumf %220, %221 : vector<64x128xf32>
    %223 = arith.addf %212, %222 : vector<64x128xf32>
    %c3 = arith.constant 3 : index
    %c0_77 = arith.constant 0 : index
    %c0_78 = arith.constant 0 : index
    %224 = vector.load %arg9[%c3, %c0_77, %c0_78] : memref<8x128x512xbf16, #tpu.memory_space<vmem>>, vector<1x128x128xbf16>
    %225 = vector.shape_cast %224 : vector<1x128x128xbf16> to vector<128x128xbf16>
    %226 = arith.extf %225 : vector<128x128xbf16> to vector<128x128xf32>
    %cst_79 = arith.constant dense<0.000000e+00> : vector<32x128xf32>
    %227 = tpu.matmul %162, %226, %cst_79 {dimension_numbers = #tpu.dot_dimension_numbers<[1], [0], [0], [1], [0, 0, 1, 1], [], []>} : vector<32x128xf32>, vector<128x128xf32>, vector<32x128xf32> -> vector<32x128xf32>
    %c3_80 = arith.constant 3 : index
    %c0_81 = arith.constant 0 : index
    %c0_82 = arith.constant 0 : index
    %228 = vector.load %arg10[%c3_80, %c0_81, %c0_82] : memref<8x1x512xf32, #tpu.memory_space<vmem>>, vector<1x1x128xf32>
    %229 = vector.shape_cast %228 : vector<1x1x128xf32> to vector<1x128xf32>
    %230 = vector.broadcast %229 : vector<1x128xf32> to vector<32x128xf32>
    %231 = arith.addf %227, %230 : vector<32x128xf32>
    %c3_83 = arith.constant 3 : index
    %c0_84 = arith.constant 0 : index
    %c128_85 = arith.constant 128 : index
    %232 = vector.load %arg9[%c3_83, %c0_84, %c128_85] : memref<8x128x512xbf16, #tpu.memory_space<vmem>>, vector<1x128x256xbf16>
    %233 = vector.shape_cast %232 : vector<1x128x256xbf16> to vector<128x256xbf16>
    %234 = arith.extf %233 : vector<128x256xbf16> to vector<128x256xf32>
    %cst_86 = arith.constant dense<0.000000e+00> : vector<64x256xf32>
    %235 = tpu.matmul %223, %234, %cst_86 {dimension_numbers = #tpu.dot_dimension_numbers<[1], [0], [0], [1], [0, 0, 1, 1], [], []>} : vector<64x128xf32>, vector<128x256xf32>, vector<64x256xf32> -> vector<64x256xf32>
    %c3_87 = arith.constant 3 : index
    %c0_88 = arith.constant 0 : index
    %c128_89 = arith.constant 128 : index
    %236 = vector.load %arg10[%c3_87, %c0_88, %c128_89] : memref<8x1x512xf32, #tpu.memory_space<vmem>>, vector<1x1x256xf32>
    %237 = vector.shape_cast %236 : vector<1x1x256xf32> to vector<1x256xf32>
    %238 = vector.broadcast %237 : vector<1x256xf32> to vector<64x256xf32>
    %239 = arith.addf %235, %238 : vector<64x256xf32>
    %240 = vector.extract_strided_slice %239 {offsets = [0, 0], sizes = [64, 128], strides = [1, 1]} : vector<64x256xf32> to vector<64x128xf32>
    %241 = vector.extract_strided_slice %239 {offsets = [0, 128], sizes = [64, 128], strides = [1, 1]} : vector<64x256xf32> to vector<64x128xf32>
    %242 = vector.broadcast %7 : vector<1x128xf32> to vector<32x128xf32>
    %243 = arith.mulf %231, %242 : vector<32x128xf32>
    %244 = vector.broadcast %14 : vector<1x128xf32> to vector<32x128xf32>
    %245 = arith.mulf %231, %244 : vector<32x128xf32>
    %246 = vector.broadcast %21 : vector<1x128xf32> to vector<32x128xf32>
    %247 = arith.mulf %231, %246 : vector<32x128xf32>
    %248 = vector.broadcast %28 : vector<1x128xf32> to vector<32x128xf32>
    %249 = arith.mulf %231, %248 : vector<32x128xf32>
    %250 = tpu.concatenate %243, %245, %247, %249 in 0 : vector<32x128xf32>, vector<32x128xf32>, vector<32x128xf32>, vector<32x128xf32> -> vector<128x128xf32>
    %cst_90 = arith.constant dense<0.000000e+00> : vector<128x64xf32>
    %251 = tpu.matmul %250, %240, %cst_90 {dimension_numbers = #tpu.dot_dimension_numbers<[1], [1], [0], [0], [0, 0, 1, 0], [], []>} : vector<128x128xf32>, vector<64x128xf32>, vector<128x64xf32> -> vector<128x64xf32>
    %cst_91 = arith.constant 0.0883883461 : f32
    %252 = vector.broadcast %cst_91 : f32 to vector<128x64xf32>
    %253 = arith.mulf %251, %252 : vector<128x64xf32>
    %254 = arith.addf %253, %31 : vector<128x64xf32>
    %cst_92 = arith.constant dense<0xFF800000> : vector<128xf32>
    %255 = vector.multi_reduction <maximumf>, %254, %cst_92 [1] : vector<128x64xf32> to vector<128xf32>
    %256 = vector.shape_cast %255 : vector<128xf32> to vector<128x1xf32>
    %257 = vector.broadcast %256 : vector<128x1xf32> to vector<128x64xf32>
    %258 = arith.subf %254, %257 : vector<128x64xf32>
    %259 = math.exp %258 : vector<128x64xf32>
    %cst_93 = arith.constant dense<0.000000e+00> : vector<128xf32>
    %260 = vector.multi_reduction <add>, %259, %cst_93 [1] : vector<128x64xf32> to vector<128xf32>
    %261 = vector.shape_cast %260 : vector<128xf32> to vector<128x1xf32>
    %262 = vector.broadcast %261 : vector<128x1xf32> to vector<128x64xf32>
    %263 = arith.divf %259, %262 : vector<128x64xf32>
    %cst_94 = arith.constant dense<0.000000e+00> : vector<128x128xf32>
    %264 = tpu.matmul %263, %241, %cst_94 {dimension_numbers = #tpu.dot_dimension_numbers<[1], [0], [0], [1], [0, 0, 1, 1], [], []>} : vector<128x64xf32>, vector<64x128xf32>, vector<128x128xf32> -> vector<128x128xf32>
    %265 = vector.extract_strided_slice %264 {offsets = [0, 0], sizes = [32, 128], strides = [1, 1]} : vector<128x128xf32> to vector<32x128xf32>
    %266 = vector.broadcast %7 : vector<1x128xf32> to vector<32x128xf32>
    %267 = arith.mulf %265, %266 : vector<32x128xf32>
    %268 = arith.addf %231, %267 : vector<32x128xf32>
    %269 = vector.extract_strided_slice %264 {offsets = [32, 0], sizes = [32, 128], strides = [1, 1]} : vector<128x128xf32> to vector<32x128xf32>
    %270 = vector.broadcast %14 : vector<1x128xf32> to vector<32x128xf32>
    %271 = arith.mulf %269, %270 : vector<32x128xf32>
    %272 = arith.addf %268, %271 : vector<32x128xf32>
    %273 = vector.extract_strided_slice %264 {offsets = [64, 0], sizes = [32, 128], strides = [1, 1]} : vector<128x128xf32> to vector<32x128xf32>
    %274 = vector.broadcast %21 : vector<1x128xf32> to vector<32x128xf32>
    %275 = arith.mulf %273, %274 : vector<32x128xf32>
    %276 = arith.addf %272, %275 : vector<32x128xf32>
    %277 = vector.extract_strided_slice %264 {offsets = [96, 0], sizes = [32, 128], strides = [1, 1]} : vector<128x128xf32> to vector<32x128xf32>
    %278 = vector.broadcast %28 : vector<1x128xf32> to vector<32x128xf32>
    %279 = arith.mulf %277, %278 : vector<32x128xf32>
    %280 = arith.addf %276, %279 : vector<32x128xf32>
    %c3_95 = arith.constant 3 : index
    %c0_96 = arith.constant 0 : index
    %c384_97 = arith.constant 384 : index
    %281 = vector.load %arg9[%c3_95, %c0_96, %c384_97] : memref<8x128x512xbf16, #tpu.memory_space<vmem>>, vector<1x128x128xbf16>
    %282 = vector.shape_cast %281 : vector<1x128x128xbf16> to vector<128x128xbf16>
    %283 = arith.extf %282 : vector<128x128xbf16> to vector<128x128xf32>
    %cst_98 = arith.constant dense<0.000000e+00> : vector<32x128xf32>
    %284 = tpu.matmul %280, %283, %cst_98 {dimension_numbers = #tpu.dot_dimension_numbers<[1], [0], [0], [1], [0, 0, 1, 1], [], []>} : vector<32x128xf32>, vector<128x128xf32>, vector<32x128xf32> -> vector<32x128xf32>
    %c3_99 = arith.constant 3 : index
    %c0_100 = arith.constant 0 : index
    %c384_101 = arith.constant 384 : index
    %285 = vector.load %arg10[%c3_99, %c0_100, %c384_101] : memref<8x1x512xf32, #tpu.memory_space<vmem>>, vector<1x1x128xf32>
    %286 = vector.shape_cast %285 : vector<1x1x128xf32> to vector<1x128xf32>
    %287 = vector.broadcast %286 : vector<1x128xf32> to vector<32x128xf32>
    %288 = arith.addf %284, %287 : vector<32x128xf32>
    %cst_102 = arith.constant 0.000000e+00 : f32
    %289 = vector.broadcast %cst_102 : f32 to vector<32x128xf32>
    %290 = arith.maximumf %288, %289 : vector<32x128xf32>
    %291 = arith.addf %280, %290 : vector<32x128xf32>
    %c0_103 = arith.constant 0 : index
    %c0_104 = arith.constant 0 : index
    %292 = vector.load %arg4[%c0_103, %c0_104] : memref<16x128xf32, #tpu.memory_space<vmem>>, vector<16x128xf32>
    %c4 = arith.constant 4 : index
    %c0_105 = arith.constant 0 : index
    %c0_106 = arith.constant 0 : index
    %293 = vector.load %arg9[%c4, %c0_105, %c0_106] : memref<8x128x512xbf16, #tpu.memory_space<vmem>>, vector<1x128x256xbf16>
    %294 = vector.shape_cast %293 : vector<1x128x256xbf16> to vector<128x256xbf16>
    %295 = arith.extf %294 : vector<128x256xbf16> to vector<128x256xf32>
    %cst_107 = arith.constant dense<0.000000e+00> : vector<32x256xf32>
    %296 = tpu.matmul %291, %295, %cst_107 {dimension_numbers = #tpu.dot_dimension_numbers<[1], [0], [0], [1], [0, 0, 1, 1], [], []>} : vector<32x128xf32>, vector<128x256xf32>, vector<32x256xf32> -> vector<32x256xf32>
    %c4_108 = arith.constant 4 : index
    %c0_109 = arith.constant 0 : index
    %c0_110 = arith.constant 0 : index
    %297 = vector.load %arg10[%c4_108, %c0_109, %c0_110] : memref<8x1x512xf32, #tpu.memory_space<vmem>>, vector<1x1x256xf32>
    %298 = vector.shape_cast %297 : vector<1x1x256xf32> to vector<1x256xf32>
    %299 = vector.broadcast %298 : vector<1x256xf32> to vector<32x256xf32>
    %300 = arith.addf %296, %299 : vector<32x256xf32>
    %301 = vector.extract_strided_slice %300 {offsets = [0, 0], sizes = [32, 128], strides = [1, 1]} : vector<32x256xf32> to vector<32x128xf32>
    %302 = vector.extract_strided_slice %300 {offsets = [0, 128], sizes = [32, 128], strides = [1, 1]} : vector<32x256xf32> to vector<32x128xf32>
    %303 = vector.broadcast %7 : vector<1x128xf32> to vector<16x128xf32>
    %304 = arith.mulf %292, %303 : vector<16x128xf32>
    %305 = vector.broadcast %14 : vector<1x128xf32> to vector<16x128xf32>
    %306 = arith.mulf %292, %305 : vector<16x128xf32>
    %307 = vector.broadcast %21 : vector<1x128xf32> to vector<16x128xf32>
    %308 = arith.mulf %292, %307 : vector<16x128xf32>
    %309 = vector.broadcast %28 : vector<1x128xf32> to vector<16x128xf32>
    %310 = arith.mulf %292, %309 : vector<16x128xf32>
    %311 = tpu.concatenate %304, %306, %308, %310 in 0 : vector<16x128xf32>, vector<16x128xf32>, vector<16x128xf32>, vector<16x128xf32> -> vector<64x128xf32>
    %cst_111 = arith.constant dense<0.000000e+00> : vector<64x32xf32>
    %312 = tpu.matmul %311, %301, %cst_111 {dimension_numbers = #tpu.dot_dimension_numbers<[1], [1], [0], [0], [0, 0, 1, 0], [], []>} : vector<64x128xf32>, vector<32x128xf32>, vector<64x32xf32> -> vector<64x32xf32>
    %cst_112 = arith.constant 0.0883883461 : f32
    %313 = vector.broadcast %cst_112 : f32 to vector<64x32xf32>
    %314 = arith.mulf %312, %313 : vector<64x32xf32>
    %315 = arith.addf %314, %32 : vector<64x32xf32>
    %cst_113 = arith.constant dense<0xFF800000> : vector<64xf32>
    %316 = vector.multi_reduction <maximumf>, %315, %cst_113 [1] : vector<64x32xf32> to vector<64xf32>
    %317 = vector.shape_cast %316 : vector<64xf32> to vector<64x1xf32>
    %318 = vector.broadcast %317 : vector<64x1xf32> to vector<64x32xf32>
    %319 = arith.subf %315, %318 : vector<64x32xf32>
    %320 = math.exp %319 : vector<64x32xf32>
    %cst_114 = arith.constant dense<0.000000e+00> : vector<64xf32>
    %321 = vector.multi_reduction <add>, %320, %cst_114 [1] : vector<64x32xf32> to vector<64xf32>
    %322 = vector.shape_cast %321 : vector<64xf32> to vector<64x1xf32>
    %323 = vector.broadcast %322 : vector<64x1xf32> to vector<64x32xf32>
    %324 = arith.divf %320, %323 : vector<64x32xf32>
    %cst_115 = arith.constant dense<0.000000e+00> : vector<64x128xf32>
    %325 = tpu.matmul %324, %302, %cst_115 {dimension_numbers = #tpu.dot_dimension_numbers<[1], [0], [0], [1], [0, 0, 1, 1], [], []>} : vector<64x32xf32>, vector<32x128xf32>, vector<64x128xf32> -> vector<64x128xf32>
    %326 = vector.extract_strided_slice %325 {offsets = [0, 0], sizes = [16, 128], strides = [1, 1]} : vector<64x128xf32> to vector<16x128xf32>
    %327 = vector.broadcast %7 : vector<1x128xf32> to vector<16x128xf32>
    %328 = arith.mulf %326, %327 : vector<16x128xf32>
    %329 = arith.addf %292, %328 : vector<16x128xf32>
    %330 = vector.extract_strided_slice %325 {offsets = [16, 0], sizes = [16, 128], strides = [1, 1]} : vector<64x128xf32> to vector<16x128xf32>
    %331 = vector.broadcast %14 : vector<1x128xf32> to vector<16x128xf32>
    %332 = arith.mulf %330, %331 : vector<16x128xf32>
    %333 = arith.addf %329, %332 : vector<16x128xf32>
    %334 = vector.extract_strided_slice %325 {offsets = [32, 0], sizes = [16, 128], strides = [1, 1]} : vector<64x128xf32> to vector<16x128xf32>
    %335 = vector.broadcast %21 : vector<1x128xf32> to vector<16x128xf32>
    %336 = arith.mulf %334, %335 : vector<16x128xf32>
    %337 = arith.addf %333, %336 : vector<16x128xf32>
    %338 = vector.extract_strided_slice %325 {offsets = [48, 0], sizes = [16, 128], strides = [1, 1]} : vector<64x128xf32> to vector<16x128xf32>
    %339 = vector.broadcast %28 : vector<1x128xf32> to vector<16x128xf32>
    %340 = arith.mulf %338, %339 : vector<16x128xf32>
    %341 = arith.addf %337, %340 : vector<16x128xf32>
    %c4_116 = arith.constant 4 : index
    %c0_117 = arith.constant 0 : index
    %c256_118 = arith.constant 256 : index
    %342 = vector.load %arg9[%c4_116, %c0_117, %c256_118] : memref<8x128x512xbf16, #tpu.memory_space<vmem>>, vector<1x128x128xbf16>
    %343 = vector.shape_cast %342 : vector<1x128x128xbf16> to vector<128x128xbf16>
    %344 = arith.extf %343 : vector<128x128xbf16> to vector<128x128xf32>
    %cst_119 = arith.constant dense<0.000000e+00> : vector<16x128xf32>
    %345 = tpu.matmul %341, %344, %cst_119 {dimension_numbers = #tpu.dot_dimension_numbers<[1], [0], [0], [1], [0, 0, 1, 1], [], []>} : vector<16x128xf32>, vector<128x128xf32>, vector<16x128xf32> -> vector<16x128xf32>
    %c4_120 = arith.constant 4 : index
    %c0_121 = arith.constant 0 : index
    %c256_122 = arith.constant 256 : index
    %346 = vector.load %arg10[%c4_120, %c0_121, %c256_122] : memref<8x1x512xf32, #tpu.memory_space<vmem>>, vector<1x1x128xf32>
    %347 = vector.shape_cast %346 : vector<1x1x128xf32> to vector<1x128xf32>
    %348 = vector.broadcast %347 : vector<1x128xf32> to vector<16x128xf32>
    %349 = arith.addf %345, %348 : vector<16x128xf32>
    %cst_123 = arith.constant 0.000000e+00 : f32
    %350 = vector.broadcast %cst_123 : f32 to vector<16x128xf32>
    %351 = arith.maximumf %349, %350 : vector<16x128xf32>
    %352 = arith.addf %341, %351 : vector<16x128xf32>
    %c5 = arith.constant 5 : index
    %c0_124 = arith.constant 0 : index
    %c0_125 = arith.constant 0 : index
    %353 = vector.load %arg9[%c5, %c0_124, %c0_125] : memref<8x128x512xbf16, #tpu.memory_space<vmem>>, vector<1x128x384xbf16>
    %354 = vector.shape_cast %353 : vector<1x128x384xbf16> to vector<128x384xbf16>
    %355 = arith.extf %354 : vector<128x384xbf16> to vector<128x384xf32>
    %cst_126 = arith.constant dense<0.000000e+00> : vector<16x384xf32>
    %356 = tpu.matmul %352, %355, %cst_126 {dimension_numbers = #tpu.dot_dimension_numbers<[1], [0], [0], [1], [0, 0, 1, 1], [], []>} : vector<16x128xf32>, vector<128x384xf32>, vector<16x384xf32> -> vector<16x384xf32>
    %c5_127 = arith.constant 5 : index
    %c0_128 = arith.constant 0 : index
    %c0_129 = arith.constant 0 : index
    %357 = vector.load %arg10[%c5_127, %c0_128, %c0_129] : memref<8x1x512xf32, #tpu.memory_space<vmem>>, vector<1x1x384xf32>
    %358 = vector.shape_cast %357 : vector<1x1x384xf32> to vector<1x384xf32>
    %359 = vector.broadcast %358 : vector<1x384xf32> to vector<16x384xf32>
    %360 = arith.addf %356, %359 : vector<16x384xf32>
    %361 = vector.extract_strided_slice %360 {offsets = [0, 0], sizes = [16, 128], strides = [1, 1]} : vector<16x384xf32> to vector<16x128xf32>
    %362 = vector.extract_strided_slice %360 {offsets = [0, 128], sizes = [16, 128], strides = [1, 1]} : vector<16x384xf32> to vector<16x128xf32>
    %363 = vector.extract_strided_slice %360 {offsets = [0, 256], sizes = [16, 128], strides = [1, 1]} : vector<16x384xf32> to vector<16x128xf32>
    %364 = vector.broadcast %7 : vector<1x128xf32> to vector<16x128xf32>
    %365 = arith.mulf %361, %364 : vector<16x128xf32>
    %366 = vector.broadcast %14 : vector<1x128xf32> to vector<16x128xf32>
    %367 = arith.mulf %361, %366 : vector<16x128xf32>
    %368 = vector.broadcast %21 : vector<1x128xf32> to vector<16x128xf32>
    %369 = arith.mulf %361, %368 : vector<16x128xf32>
    %370 = vector.broadcast %28 : vector<1x128xf32> to vector<16x128xf32>
    %371 = arith.mulf %361, %370 : vector<16x128xf32>
    %372 = tpu.concatenate %365, %367, %369, %371 in 0 : vector<16x128xf32>, vector<16x128xf32>, vector<16x128xf32>, vector<16x128xf32> -> vector<64x128xf32>
    %cst_130 = arith.constant dense<0.000000e+00> : vector<64x16xf32>
    %373 = tpu.matmul %372, %362, %cst_130 {dimension_numbers = #tpu.dot_dimension_numbers<[1], [1], [0], [0], [0, 0, 1, 0], [], []>} : vector<64x128xf32>, vector<16x128xf32>, vector<64x16xf32> -> vector<64x16xf32>
    %cst_131 = arith.constant 0.0883883461 : f32
    %374 = vector.broadcast %cst_131 : f32 to vector<64x16xf32>
    %375 = arith.mulf %373, %374 : vector<64x16xf32>
    %376 = arith.addf %375, %33 : vector<64x16xf32>
    %cst_132 = arith.constant dense<0xFF800000> : vector<64xf32>
    %377 = vector.multi_reduction <maximumf>, %376, %cst_132 [1] : vector<64x16xf32> to vector<64xf32>
    %378 = vector.shape_cast %377 : vector<64xf32> to vector<64x1xf32>
    %379 = vector.broadcast %378 : vector<64x1xf32> to vector<64x16xf32>
    %380 = arith.subf %376, %379 : vector<64x16xf32>
    %381 = math.exp %380 : vector<64x16xf32>
    %cst_133 = arith.constant dense<0.000000e+00> : vector<64xf32>
    %382 = vector.multi_reduction <add>, %381, %cst_133 [1] : vector<64x16xf32> to vector<64xf32>
    %383 = vector.shape_cast %382 : vector<64xf32> to vector<64x1xf32>
    %384 = vector.broadcast %383 : vector<64x1xf32> to vector<64x16xf32>
    %385 = arith.divf %381, %384 : vector<64x16xf32>
    %cst_134 = arith.constant dense<0.000000e+00> : vector<64x128xf32>
    %386 = tpu.matmul %385, %363, %cst_134 {dimension_numbers = #tpu.dot_dimension_numbers<[1], [0], [0], [1], [0, 0, 1, 1], [], []>} : vector<64x16xf32>, vector<16x128xf32>, vector<64x128xf32> -> vector<64x128xf32>
    %387 = vector.extract_strided_slice %386 {offsets = [0, 0], sizes = [16, 128], strides = [1, 1]} : vector<64x128xf32> to vector<16x128xf32>
    %388 = vector.broadcast %7 : vector<1x128xf32> to vector<16x128xf32>
    %389 = arith.mulf %387, %388 : vector<16x128xf32>
    %390 = arith.addf %361, %389 : vector<16x128xf32>
    %391 = vector.extract_strided_slice %386 {offsets = [16, 0], sizes = [16, 128], strides = [1, 1]} : vector<64x128xf32> to vector<16x128xf32>
    %392 = vector.broadcast %14 : vector<1x128xf32> to vector<16x128xf32>
    %393 = arith.mulf %391, %392 : vector<16x128xf32>
    %394 = arith.addf %390, %393 : vector<16x128xf32>
    %395 = vector.extract_strided_slice %386 {offsets = [32, 0], sizes = [16, 128], strides = [1, 1]} : vector<64x128xf32> to vector<16x128xf32>
    %396 = vector.broadcast %21 : vector<1x128xf32> to vector<16x128xf32>
    %397 = arith.mulf %395, %396 : vector<16x128xf32>
    %398 = arith.addf %394, %397 : vector<16x128xf32>
    %399 = vector.extract_strided_slice %386 {offsets = [48, 0], sizes = [16, 128], strides = [1, 1]} : vector<64x128xf32> to vector<16x128xf32>
    %400 = vector.broadcast %28 : vector<1x128xf32> to vector<16x128xf32>
    %401 = arith.mulf %399, %400 : vector<16x128xf32>
    %402 = arith.addf %398, %401 : vector<16x128xf32>
    %c5_135 = arith.constant 5 : index
    %c0_136 = arith.constant 0 : index
    %c384_137 = arith.constant 384 : index
    %403 = vector.load %arg9[%c5_135, %c0_136, %c384_137] : memref<8x128x512xbf16, #tpu.memory_space<vmem>>, vector<1x128x128xbf16>
    %404 = vector.shape_cast %403 : vector<1x128x128xbf16> to vector<128x128xbf16>
    %405 = arith.extf %404 : vector<128x128xbf16> to vector<128x128xf32>
    %cst_138 = arith.constant dense<0.000000e+00> : vector<16x128xf32>
    %406 = tpu.matmul %402, %405, %cst_138 {dimension_numbers = #tpu.dot_dimension_numbers<[1], [0], [0], [1], [0, 0, 1, 1], [], []>} : vector<16x128xf32>, vector<128x128xf32>, vector<16x128xf32> -> vector<16x128xf32>
    %c5_139 = arith.constant 5 : index
    %c0_140 = arith.constant 0 : index
    %c384_141 = arith.constant 384 : index
    %407 = vector.load %arg10[%c5_139, %c0_140, %c384_141] : memref<8x1x512xf32, #tpu.memory_space<vmem>>, vector<1x1x128xf32>
    %408 = vector.shape_cast %407 : vector<1x1x128xf32> to vector<1x128xf32>
    %409 = vector.broadcast %408 : vector<1x128xf32> to vector<16x128xf32>
    %410 = arith.addf %406, %409 : vector<16x128xf32>
    %cst_142 = arith.constant 0.000000e+00 : f32
    %411 = vector.broadcast %cst_142 : f32 to vector<16x128xf32>
    %412 = arith.maximumf %410, %411 : vector<16x128xf32>
    %413 = arith.addf %402, %412 : vector<16x128xf32>
    %c6 = arith.constant 6 : index
    %c0_143 = arith.constant 0 : index
    %c0_144 = arith.constant 0 : index
    %414 = vector.load %arg9[%c6, %c0_143, %c0_144] : memref<8x128x512xbf16, #tpu.memory_space<vmem>>, vector<1x128x384xbf16>
    %415 = vector.shape_cast %414 : vector<1x128x384xbf16> to vector<128x384xbf16>
    %416 = arith.extf %415 : vector<128x384xbf16> to vector<128x384xf32>
    %cst_145 = arith.constant dense<0.000000e+00> : vector<16x384xf32>
    %417 = tpu.matmul %413, %416, %cst_145 {dimension_numbers = #tpu.dot_dimension_numbers<[1], [0], [0], [1], [0, 0, 1, 1], [], []>} : vector<16x128xf32>, vector<128x384xf32>, vector<16x384xf32> -> vector<16x384xf32>
    %c6_146 = arith.constant 6 : index
    %c0_147 = arith.constant 0 : index
    %c0_148 = arith.constant 0 : index
    %418 = vector.load %arg10[%c6_146, %c0_147, %c0_148] : memref<8x1x512xf32, #tpu.memory_space<vmem>>, vector<1x1x384xf32>
    %419 = vector.shape_cast %418 : vector<1x1x384xf32> to vector<1x384xf32>
    %420 = vector.broadcast %419 : vector<1x384xf32> to vector<16x384xf32>
    %421 = arith.addf %417, %420 : vector<16x384xf32>
    %422 = vector.extract_strided_slice %421 {offsets = [0, 0], sizes = [16, 128], strides = [1, 1]} : vector<16x384xf32> to vector<16x128xf32>
    %423 = vector.extract_strided_slice %421 {offsets = [0, 128], sizes = [16, 128], strides = [1, 1]} : vector<16x384xf32> to vector<16x128xf32>
    %424 = vector.extract_strided_slice %421 {offsets = [0, 256], sizes = [16, 128], strides = [1, 1]} : vector<16x384xf32> to vector<16x128xf32>
    %425 = vector.broadcast %7 : vector<1x128xf32> to vector<16x128xf32>
    %426 = arith.mulf %422, %425 : vector<16x128xf32>
    %427 = vector.broadcast %14 : vector<1x128xf32> to vector<16x128xf32>
    %428 = arith.mulf %422, %427 : vector<16x128xf32>
    %429 = vector.broadcast %21 : vector<1x128xf32> to vector<16x128xf32>
    %430 = arith.mulf %422, %429 : vector<16x128xf32>
    %431 = vector.broadcast %28 : vector<1x128xf32> to vector<16x128xf32>
    %432 = arith.mulf %422, %431 : vector<16x128xf32>
    %433 = tpu.concatenate %426, %428, %430, %432 in 0 : vector<16x128xf32>, vector<16x128xf32>, vector<16x128xf32>, vector<16x128xf32> -> vector<64x128xf32>
    %cst_149 = arith.constant dense<0.000000e+00> : vector<64x16xf32>
    %434 = tpu.matmul %433, %423, %cst_149 {dimension_numbers = #tpu.dot_dimension_numbers<[1], [1], [0], [0], [0, 0, 1, 0], [], []>} : vector<64x128xf32>, vector<16x128xf32>, vector<64x16xf32> -> vector<64x16xf32>
    %cst_150 = arith.constant 0.0883883461 : f32
    %435 = vector.broadcast %cst_150 : f32 to vector<64x16xf32>
    %436 = arith.mulf %434, %435 : vector<64x16xf32>
    %437 = arith.addf %436, %33 : vector<64x16xf32>
    %cst_151 = arith.constant dense<0xFF800000> : vector<64xf32>
    %438 = vector.multi_reduction <maximumf>, %437, %cst_151 [1] : vector<64x16xf32> to vector<64xf32>
    %439 = vector.shape_cast %438 : vector<64xf32> to vector<64x1xf32>
    %440 = vector.broadcast %439 : vector<64x1xf32> to vector<64x16xf32>
    %441 = arith.subf %437, %440 : vector<64x16xf32>
    %442 = math.exp %441 : vector<64x16xf32>
    %cst_152 = arith.constant dense<0.000000e+00> : vector<64xf32>
    %443 = vector.multi_reduction <add>, %442, %cst_152 [1] : vector<64x16xf32> to vector<64xf32>
    %444 = vector.shape_cast %443 : vector<64xf32> to vector<64x1xf32>
    %445 = vector.broadcast %444 : vector<64x1xf32> to vector<64x16xf32>
    %446 = arith.divf %442, %445 : vector<64x16xf32>
    %cst_153 = arith.constant dense<0.000000e+00> : vector<64x128xf32>
    %447 = tpu.matmul %446, %424, %cst_153 {dimension_numbers = #tpu.dot_dimension_numbers<[1], [0], [0], [1], [0, 0, 1, 1], [], []>} : vector<64x16xf32>, vector<16x128xf32>, vector<64x128xf32> -> vector<64x128xf32>
    %448 = vector.extract_strided_slice %447 {offsets = [0, 0], sizes = [16, 128], strides = [1, 1]} : vector<64x128xf32> to vector<16x128xf32>
    %449 = vector.broadcast %7 : vector<1x128xf32> to vector<16x128xf32>
    %450 = arith.mulf %448, %449 : vector<16x128xf32>
    %451 = arith.addf %422, %450 : vector<16x128xf32>
    %452 = vector.extract_strided_slice %447 {offsets = [16, 0], sizes = [16, 128], strides = [1, 1]} : vector<64x128xf32> to vector<16x128xf32>
    %453 = vector.broadcast %14 : vector<1x128xf32> to vector<16x128xf32>
    %454 = arith.mulf %452, %453 : vector<16x128xf32>
    %455 = arith.addf %451, %454 : vector<16x128xf32>
    %456 = vector.extract_strided_slice %447 {offsets = [32, 0], sizes = [16, 128], strides = [1, 1]} : vector<64x128xf32> to vector<16x128xf32>
    %457 = vector.broadcast %21 : vector<1x128xf32> to vector<16x128xf32>
    %458 = arith.mulf %456, %457 : vector<16x128xf32>
    %459 = arith.addf %455, %458 : vector<16x128xf32>
    %460 = vector.extract_strided_slice %447 {offsets = [48, 0], sizes = [16, 128], strides = [1, 1]} : vector<64x128xf32> to vector<16x128xf32>
    %461 = vector.broadcast %28 : vector<1x128xf32> to vector<16x128xf32>
    %462 = arith.mulf %460, %461 : vector<16x128xf32>
    %463 = arith.addf %459, %462 : vector<16x128xf32>
    %c6_154 = arith.constant 6 : index
    %c0_155 = arith.constant 0 : index
    %c384_156 = arith.constant 384 : index
    %464 = vector.load %arg9[%c6_154, %c0_155, %c384_156] : memref<8x128x512xbf16, #tpu.memory_space<vmem>>, vector<1x128x128xbf16>
    %465 = vector.shape_cast %464 : vector<1x128x128xbf16> to vector<128x128xbf16>
    %466 = arith.extf %465 : vector<128x128xbf16> to vector<128x128xf32>
    %cst_157 = arith.constant dense<0.000000e+00> : vector<16x128xf32>
    %467 = tpu.matmul %463, %466, %cst_157 {dimension_numbers = #tpu.dot_dimension_numbers<[1], [0], [0], [1], [0, 0, 1, 1], [], []>} : vector<16x128xf32>, vector<128x128xf32>, vector<16x128xf32> -> vector<16x128xf32>
    %c6_158 = arith.constant 6 : index
    %c0_159 = arith.constant 0 : index
    %c384_160 = arith.constant 384 : index
    %468 = vector.load %arg10[%c6_158, %c0_159, %c384_160] : memref<8x1x512xf32, #tpu.memory_space<vmem>>, vector<1x1x128xf32>
    %469 = vector.shape_cast %468 : vector<1x1x128xf32> to vector<1x128xf32>
    %470 = vector.broadcast %469 : vector<1x128xf32> to vector<16x128xf32>
    %471 = arith.addf %467, %470 : vector<16x128xf32>
    %cst_161 = arith.constant 0.000000e+00 : f32
    %472 = vector.broadcast %cst_161 : f32 to vector<16x128xf32>
    %473 = arith.maximumf %471, %472 : vector<16x128xf32>
    %474 = arith.addf %463, %473 : vector<16x128xf32>
    %c7 = arith.constant 7 : index
    %c0_162 = arith.constant 0 : index
    %c0_163 = arith.constant 0 : index
    %475 = vector.load %arg9[%c7, %c0_162, %c0_163] : memref<8x128x512xbf16, #tpu.memory_space<vmem>>, vector<1x128x128xbf16>
    %476 = vector.shape_cast %475 : vector<1x128x128xbf16> to vector<128x128xbf16>
    %477 = arith.extf %476 : vector<128x128xbf16> to vector<128x128xf32>
    %cst_164 = arith.constant dense<0.000000e+00> : vector<16x128xf32>
    %478 = tpu.matmul %474, %477, %cst_164 {dimension_numbers = #tpu.dot_dimension_numbers<[1], [0], [0], [1], [0, 0, 1, 1], [], []>} : vector<16x128xf32>, vector<128x128xf32>, vector<16x128xf32> -> vector<16x128xf32>
    %c7_165 = arith.constant 7 : index
    %c0_166 = arith.constant 0 : index
    %c0_167 = arith.constant 0 : index
    %479 = vector.load %arg10[%c7_165, %c0_166, %c0_167] : memref<8x1x512xf32, #tpu.memory_space<vmem>>, vector<1x1x128xf32>
    %480 = vector.shape_cast %479 : vector<1x1x128xf32> to vector<1x128xf32>
    %481 = vector.broadcast %480 : vector<1x128xf32> to vector<16x128xf32>
    %482 = arith.addf %478, %481 : vector<16x128xf32>
    %c0_168 = arith.constant 0 : index
    %c0_169 = arith.constant 0 : index
    %483 = vector.load %arg11[%c0_168, %c0_169] : memref<16x128xf32, #tpu.memory_space<vmem>>, vector<16x128xf32>
    tpu.vector_store %arg11[%c0_168, %c0_169], %482 {strides = array<i32>} : memref<16x128xf32, #tpu.memory_space<vmem>>, vector<16x128xf32>,
    return
  }
  func.func @transform_0(%arg0: i32) -> (i32, i32) {
    %c0_i32 = arith.constant 0 : i32
    %c0_i32_0 = arith.constant 0 : i32
    return %arg0, %c0_i32 : i32, i32
  }
  func.func @transform_1(%arg0: i32) -> (i32, i32) {
    %c0_i32 = arith.constant 0 : i32
    %c0_i32_0 = arith.constant 0 : i32
    %c0_i32_1 = arith.constant 0 : i32
    return %c0_i32, %c0_i32_0 : i32, i32
  }
  func.func @transform_2(%arg0: i32) -> (i32, i32) {
    %c0_i32 = arith.constant 0 : i32
    %c0_i32_0 = arith.constant 0 : i32
    %c0_i32_1 = arith.constant 0 : i32
    return %c0_i32, %c0_i32_0 : i32, i32
  }
  func.func @transform_3(%arg0: i32) -> (i32, i32) {
    %c0_i32 = arith.constant 0 : i32
    %c0_i32_0 = arith.constant 0 : i32
    %c0_i32_1 = arith.constant 0 : i32
    return %c0_i32, %c0_i32_0 : i32, i32
  }
  func.func @transform_4(%arg0: i32) -> (i32, i32) {
    %c0_i32 = arith.constant 0 : i32
    %c0_i32_0 = arith.constant 0 : i32
    %c0_i32_1 = arith.constant 0 : i32
    return %c0_i32, %c0_i32_0 : i32, i32
  }
  func.func @transform_5(%arg0: i32) -> (i32, i32) {
    %c0_i32 = arith.constant 0 : i32
    %c0_i32_0 = arith.constant 0 : i32
    %c0_i32_1 = arith.constant 0 : i32
    return %c0_i32, %c0_i32_0 : i32, i32
  }
  func.func @transform_6(%arg0: i32) -> (i32, i32) {
    %c0_i32 = arith.constant 0 : i32
    %c0_i32_0 = arith.constant 0 : i32
    %c0_i32_1 = arith.constant 0 : i32
    return %c0_i32, %c0_i32_0 : i32, i32
  }
  func.func @transform_7(%arg0: i32) -> (i32, i32) {
    %c0_i32 = arith.constant 0 : i32
    %c0_i32_0 = arith.constant 0 : i32
    %c0_i32_1 = arith.constant 0 : i32
    return %c0_i32, %c0_i32_0 : i32, i32
  }
  func.func @transform_8(%arg0: i32) -> (i32, i32, i32) {
    %c0_i32 = arith.constant 0 : i32
    %c0_i32_0 = arith.constant 0 : i32
    %c0_i32_1 = arith.constant 0 : i32
    %c0_i32_2 = arith.constant 0 : i32
    return %c0_i32, %c0_i32_0, %c0_i32_1 : i32, i32, i32
  }
  func.func @transform_9(%arg0: i32) -> (i32, i32, i32) {
    %c0_i32 = arith.constant 0 : i32
    %c0_i32_0 = arith.constant 0 : i32
    %c0_i32_1 = arith.constant 0 : i32
    %c0_i32_2 = arith.constant 0 : i32
    return %c0_i32, %c0_i32_0, %c0_i32_1 : i32, i32, i32
  }
  func.func @transform_10(%arg0: i32) -> (i32, i32) {
    %c0_i32 = arith.constant 0 : i32
    %c0_i32_0 = arith.constant 0 : i32
    return %arg0, %c0_i32 : i32, i32
  }
}

</mosaic_0001>

<llo_original>
// kernel: tpu_custom_call.1
$region0: #{tpu_custom_call.1}
  #allocation0 [shape = 'u32[]', space=smem, size = 0x4, offset = 0x4, fixed_abs, tag = 'smem constant byte address 0x4 - core index']
  #allocation1 [shape = 'u32[144,128]{1,0:T(1,128)}', space=vmem, size = 0x12000, scoped, tag = 'internal scratch']
  %s0 = inlined_call_operand.vmem [shape: f32[32,128], index: 0, kind: input, shape index: {}]
  %s1 = inlined_call_operand.vmem [shape: f32[64,128], index: 1, kind: input, shape index: {}]
  %s2 = inlined_call_operand.vmem [shape: f32[64,128], index: 2, kind: input, shape index: {}]
  %s3 = inlined_call_operand.vmem [shape: f32[16,128], index: 3, kind: input, shape index: {}]
  %s4 = inlined_call_operand.vmem [shape: f32[256,32], index: 4, kind: input, shape index: {}]
  %s5 = inlined_call_operand.vmem [shape: f32[128,64], index: 5, kind: input, shape index: {}]
  %s6 = inlined_call_operand.vmem [shape: f32[64,32], index: 6, kind: input, shape index: {}]
  %s7 = inlined_call_operand.vmem [shape: f32[64,16], index: 7, kind: input, shape index: {}]
  %s8 = inlined_call_operand.hbm [shape: bf16[8,128,512], index: 8, kind: input, shape index: {}]
  %s9 = inlined_call_operand.vmem [shape: f32[8,1,512], index: 9, kind: input, shape index: {}]
  %s10 = inlined_call_operand.hbm [shape: f32[16,128], index: 10, kind: output, shape index: {}]
  %s11 = sld [smem:[#allocation0]]
  $region54: #{tpu_custom_call.1} parent=0
    _
  %s13 = ssub.s32 1, %s11
  %s14 = scalar_select 0, %s13, %s11
  $region1: #{tpu_custom_call.1} parent=0
    #allocation2 [shape = 'u8[1048576]{0}', space=vmem, size = 0x100000, scoped, tag = 'input window, operand 8, single buffered']
    #allocation3 [shape = 's32[1]{0}', space=sflag, size = 0x4, scoped, tag = 'scoped memory for tpu_custom_call.1']
    #allocation4 [shape = 's32[1]{0}', space=sflag, size = 0x4, scoped, tag = 'scoped memory for tpu_custom_call.1']
    #allocation5 [shape = 'u8[8192]{0}', space=vmem, size = 0x2000, scoped, tag = 'output window, operand 0, single buffered']
    %15 = vsyncpa [#allocation3], 0
    %16 = vsyncpa [#allocation4], 0
    // Predicated region
    $region2: #{tpu_custom_call.1} parent=1 // pred_check
      _
    $region3: #{tpu_custom_call.1} parent=1 // pred_check_branch
      %18 = sbr.rel (0) target = $region5
    $region4: #{tpu_custom_call.1} parent=1 // pred_region
      _
    $region5: #{tpu_custom_call.1} parent=1 // pred_fallthru
      _
    // Predicated region
    $region6: #{tpu_custom_call.1} parent=1 // pred_check
      _
    $region7: #{tpu_custom_call.1} parent=1 // pred_check_branch
      %20 = sbr.rel (0) target = $region9
    $region8: #{tpu_custom_call.1} parent=1 // pred_region
      _
    $region9: #{tpu_custom_call.1} parent=1 // pred_fallthru
      _
    // Predicated region
    $region10: #{tpu_custom_call.1} parent=1 // pred_check
      _
    $region11: #{tpu_custom_call.1} parent=1 // pred_check_branch
      %22 = sbr.rel (0) target = $region13
    $region12: #{tpu_custom_call.1} parent=1 // pred_region
      _
    $region13: #{tpu_custom_call.1} parent=1 // pred_fallthru
      _
    // Predicated region
    $region14: #{tpu_custom_call.1} parent=1 // pred_check
      _
    $region15: #{tpu_custom_call.1} parent=1 // pred_check_branch
      %24 = sbr.rel (0) target = $region17
    $region16: #{tpu_custom_call.1} parent=1 // pred_region
      _
    $region17: #{tpu_custom_call.1} parent=1 // pred_fallthru
      _
    // Predicated region
    $region18: #{tpu_custom_call.1} parent=1 // pred_check
      _
    $region19: #{tpu_custom_call.1} parent=1 // pred_check_branch
      %26 = sbr.rel (0) target = $region21
    $region20: #{tpu_custom_call.1} parent=1 // pred_region
      _
    $region21: #{tpu_custom_call.1} parent=1 // pred_fallthru
      _
    // Predicated region
    $region22: #{tpu_custom_call.1} parent=1 // pred_check
      _
    $region23: #{tpu_custom_call.1} parent=1 // pred_check_branch
      %28 = sbr.rel (0) target = $region25
    $region24: #{tpu_custom_call.1} parent=1 // pred_region
      _
    $region25: #{tpu_custom_call.1} parent=1 // pred_fallthru
      _
    // Predicated region
    $region26: #{tpu_custom_call.1} parent=1 // pred_check
      _
    $region27: #{tpu_custom_call.1} parent=1 // pred_check_branch
      %30 = sbr.rel (0) target = $region29
    $region28: #{tpu_custom_call.1} parent=1 // pred_region
      _
    $region29: #{tpu_custom_call.1} parent=1 // pred_fallthru
      _
    // Predicated region
    $region30: #{tpu_custom_call.1} parent=1 // pred_check
      _
    $region31: #{tpu_custom_call.1} parent=1 // pred_check_branch
      %32 = sbr.rel (0) target = $region33
    $region32: #{tpu_custom_call.1} parent=1 // pred_region
      _
    $region33: #{tpu_custom_call.1} parent=1 // pred_fallthru
      _
    // Predicated region
    $region34: #{tpu_custom_call.1} parent=1 // pred_check
      _
    $region35: #{tpu_custom_call.1} parent=1 // pred_check_branch
      %34 = sbr.rel (0) target = $region37
    $region36: #{tpu_custom_call.1} parent=1 // pred_region
      %s36 = ssub.s32 32768, 32768
      %37 = vsyncadd [#allocation3], %s36
      %s38 = sshll.u32 [#allocation2], 4
      %s39 = int_to_ptr.vmem [resolvable:$true] %s38
      %44 = dma.hbm_to_vmem [thread:$0]  %s8, 32768, %s39, [#allocation3], 256, 256, 16
    $region37: #{tpu_custom_call.1} parent=1 // pred_fallthru
      _
    // Predicated region
    $region38: #{tpu_custom_call.1} parent=1 // pred_check
      _
    $region39: #{tpu_custom_call.1} parent=1 // pred_check_branch
      %46 = sbr.rel (0) target = $region41
    $region40: #{tpu_custom_call.1} parent=1 // pred_region
      _
    $region41: #{tpu_custom_call.1} parent=1 // pred_fallthru
      _
    // Predicated region
    $region42: #{tpu_custom_call.1} parent=1 // pred_check
      _
    $region43: #{tpu_custom_call.1} parent=1 // pred_check_branch
      %48 = sbr.rel (0) target = $region45
    $region44: #{tpu_custom_call.1} parent=1 // pred_region
      %49 = dma.done [#allocation3], 32768
    $region45: #{tpu_custom_call.1} parent=1 // pred_fallthru
      _
    %v50 = vlaneseq
    %v51 = vand.u32 %v50, 127
    %vm52 = vcmp.ge.s32.totalorder %v51, 0
    %vm53 = vcmp.lt.s32.totalorder %v51, 32
    %vm54 = vmand %vm52, %vm53
    %v55 = vsel %vm54, 1, 0
    %v56 = vcvt.s32.f32 %v55
    %vm57 = vcmp.ge.s32.totalorder %v51, 32
    %vm58 = vcmp.lt.s32.totalorder %v51, 64
    %vm59 = vmand %vm57, %vm58
    %v60 = vsel %vm59, 1, 0
    %v61 = vcvt.s32.f32 %v60
    %vm62 = vcmp.ge.s32.totalorder %v51, 64
    %vm63 = vcmp.lt.s32.totalorder %v51, 96
    %vm64 = vmand %vm62, %vm63
    %v65 = vsel %vm64, 1, 0
    %v66 = vcvt.s32.f32 %v65
    %vm67 = vcmp.ge.s32.totalorder %v51, 96
    %vm68 = vcmp.lt.s32.totalorder %v51, 128
    %vm69 = vmand %vm67, %vm68
    %v70 = vsel %vm69, 1, 0
    %v71 = vcvt.s32.f32 %v70
    %v72 = vld [vmem:[%s0] sm:$0xff]
    %v73 = vld [vmem:[%s0 + $0x8] sm:$0xff]
    %v74 = vld [vmem:[%s0 + $0x10] sm:$0xff]
    %v75 = vld [vmem:[%s0 + $0x18] sm:$0xff]
    %v76 = vld [vmem:[%s4] sm:$0xff]
    %v77 = vld [vmem:[%s4 + $0x8] sm:$0xff]
    %v78 = vld [vmem:[%s4 + $0x10] sm:$0xff]
    %v79 = vld [vmem:[%s4 + $0x18] sm:$0xff]
    %v80 = vld [vmem:[%s4 + $0x20] sm:$0xff]
    %v81 = vld [vmem:[%s4 + $0x28] sm:$0xff]
    %v82 = vld [vmem:[%s4 + $0x30] sm:$0xff]
    %v83 = vld [vmem:[%s4 + $0x38] sm:$0xff]
    %v84 = vld [vmem:[%s4 + $0x40] sm:$0xff]
    %v85 = vld [vmem:[%s4 + $0x48] sm:$0xff]
    %v86 = vld [vmem:[%s4 + $0x50] sm:$0xff]
    %v87 = vld [vmem:[%s4 + $0x58] sm:$0xff]
    %v88 = vld [vmem:[%s4 + $0x60] sm:$0xff]
    %v89 = vld [vmem:[%s4 + $0x68] sm:$0xff]
    %v90 = vld [vmem:[%s4 + $0x70] sm:$0xff]
    %v91 = vld [vmem:[%s4 + $0x78] sm:$0xff]
    %v92 = vld [vmem:[%s4 + $0x80] sm:$0xff]
    %v93 = vld [vmem:[%s4 + $0x88] sm:$0xff]
    %v94 = vld [vmem:[%s4 + $0x90] sm:$0xff]
    %v95 = vld [vmem:[%s4 + $0x98] sm:$0xff]
    %v96 = vld [vmem:[%s4 + $0xa0] sm:$0xff]
    %v97 = vld [vmem:[%s4 + $0xa8] sm:$0xff]
    %v98 = vld [vmem:[%s4 + $0xb0] sm:$0xff]
    %v99 = vld [vmem:[%s4 + $0xb8] sm:$0xff]
    %v100 = vld [vmem:[%s4 + $0xc0] sm:$0xff]
    %v101 = vld [vmem:[%s4 + $0xc8] sm:$0xff]
    %v102 = vld [vmem:[%s4 + $0xd0] sm:$0xff]
    %v103 = vld [vmem:[%s4 + $0xd8] sm:$0xff]
    %v104 = vld [vmem:[%s4 + $0xe0] sm:$0xff]
    %v105 = vld [vmem:[%s4 + $0xe8] sm:$0xff]
    %v106 = vld [vmem:[%s4 + $0xf0] sm:$0xff]
    %v107 = vld [vmem:[%s4 + $0xf8] sm:$0xff]
    %v108 = vld [vmem:[%s5] sm:$0xff]
    %v109 = vld [vmem:[%s5 + $0x8] sm:$0xff]
    %v110 = vld [vmem:[%s5 + $0x10] sm:$0xff]
    %v111 = vld [vmem:[%s5 + $0x18] sm:$0xff]
    %v112 = vld [vmem:[%s5 + $0x20] sm:$0xff]
    %v113 = vld [vmem:[%s5 + $0x28] sm:$0xff]
    %v114 = vld [vmem:[%s5 + $0x30] sm:$0xff]
    %v115 = vld [vmem:[%s5 + $0x38] sm:$0xff]
    %v116 = vld [vmem:[%s5 + $0x40] sm:$0xff]
    %v117 = vld [vmem:[%s5 + $0x48] sm:$0xff]
    %v118 = vld [vmem:[%s5 + $0x50] sm:$0xff]
    %v119 = vld [vmem:[%s5 + $0x58] sm:$0xff]
    %v120 = vld [vmem:[%s5 + $0x60] sm:$0xff]
    %v121 = vld [vmem:[%s5 + $0x68] sm:$0xff]
    %v122 = vld [vmem:[%s5 + $0x70] sm:$0xff]
    %v123 = vld [vmem:[%s5 + $0x78] sm:$0xff]
    %v124 = vld [vmem:[%s6] sm:$0xff]
    %v125 = vld [vmem:[%s6 + $0x8] sm:$0xff]
    %v126 = vld [vmem:[%s6 + $0x10] sm:$0xff]
    %v127 = vld [vmem:[%s6 + $0x18] sm:$0xff]
    %v128 = vld [vmem:[%s6 + $0x20] sm:$0xff]
    %v129 = vld [vmem:[%s6 + $0x28] sm:$0xff]
    %v130 = vld [vmem:[%s6 + $0x30] sm:$0xff]
    %v131 = vld [vmem:[%s6 + $0x38] sm:$0xff]
    %v132 = vld [vmem:[%s7] sm:$0xff]
    %v133 = vld [vmem:[%s7 + $0x8] sm:$0xff]
    %v134 = vld [vmem:[%s7 + $0x10] sm:$0xff]
    %v135 = vld [vmem:[%s7 + $0x18] sm:$0xff]
    %v136 = vld [vmem:[%s7 + $0x20] sm:$0xff]
    %v137 = vld [vmem:[%s7 + $0x28] sm:$0xff]
    %v138 = vld [vmem:[%s7 + $0x30] sm:$0xff]
    %v139 = vld [vmem:[%s7 + $0x38] sm:$0xff]
    %v140 = vld [vmem:[%s1] sm:$0xff]
    %v141 = vld [vmem:[%s1 + $0x8] sm:$0xff]
    %v142 = vld [vmem:[%s1 + $0x10] sm:$0xff]
    %v143 = vld [vmem:[%s1 + $0x18] sm:$0xff]
    %v144 = vld [vmem:[%s1 + $0x20] sm:$0xff]
    %v145 = vld [vmem:[%s1 + $0x28] sm:$0xff]
    %v146 = vld [vmem:[%s1 + $0x30] sm:$0xff]
    %v147 = vld [vmem:[%s1 + $0x38] sm:$0xff]
    %v148 = vld [vmem:[#allocation2] sm:$0xff]
    %v149 = vld [vmem:[#allocation2 + $0x10] sm:$0xff]
    %v150 = vld [vmem:[#allocation2 + $0x20] sm:$0xff]
    %v151 = vld [vmem:[#allocation2 + $0x30] sm:$0xff]
    %v152 = vld [vmem:[#allocation2 + $0x40] sm:$0xff]
    %v153 = vld [vmem:[#allocation2 + $0x50] sm:$0xff]
    %v154 = vld [vmem:[#allocation2 + $0x60] sm:$0xff]
    %v155 = vld [vmem:[#allocation2 + $0x70] sm:$0xff]
    %v156 = vld [vmem:[#allocation2 + $0x80] sm:$0xff]
    %v157 = vld [vmem:[#allocation2 + $0x90] sm:$0xff]
    %v158 = vld [vmem:[#allocation2 + $0xa0] sm:$0xff]
    %v159 = vld [vmem:[#allocation2 + $0xb0] sm:$0xff]
    %v160 = vld [vmem:[#allocation2 + $0xc0] sm:$0xff]
    %v161 = vld [vmem:[#allocation2 + $0xd0] sm:$0xff]
    %v162 = vld [vmem:[#allocation2 + $0xe0] sm:$0xff]
    %v163 = vld [vmem:[#allocation2 + $0xf0] sm:$0xff]
    %v164 = vunpack.c.l.bf16 %v148
    %v165 = vunpack.c.h.bf16 %v148
    %v166 = vunpack.c.l.bf16 %v149
    %v167 = vunpack.c.h.bf16 %v149
    %v168 = vunpack.c.l.bf16 %v150
    %v169 = vunpack.c.h.bf16 %v150
    %v170 = vunpack.c.l.bf16 %v151
    %v171 = vunpack.c.h.bf16 %v151
    %v172 = vunpack.c.l.bf16 %v152
    %v173 = vunpack.c.h.bf16 %v152
    %v174 = vunpack.c.l.bf16 %v153
    %v175 = vunpack.c.h.bf16 %v153
    %v176 = vunpack.c.l.bf16 %v154
    %v177 = vunpack.c.h.bf16 %v154
    %v178 = vunpack.c.l.bf16 %v155
    %v179 = vunpack.c.h.bf16 %v155
    %v180 = vunpack.c.l.bf16 %v156
    %v181 = vunpack.c.h.bf16 %v156
    %v182 = vunpack.c.l.bf16 %v157
    %v183 = vunpack.c.h.bf16 %v157
    %v184 = vunpack.c.l.bf16 %v158
    %v185 = vunpack.c.h.bf16 %v158
    %v186 = vunpack.c.l.bf16 %v159
    %v187 = vunpack.c.h.bf16 %v159
    %v188 = vunpack.c.l.bf16 %v160
    %v189 = vunpack.c.h.bf16 %v160
    %v190 = vunpack.c.l.bf16 %v161
    %v191 = vunpack.c.h.bf16 %v161
    %v192 = vunpack.c.l.bf16 %v162
    %v193 = vunpack.c.h.bf16 %v162
    %v194 = vunpack.c.l.bf16 %v163
    %v195 = vunpack.c.h.bf16 %v163
    %v196 = vld [vmem:[%s9] sm:$0x3]
    %v198 = vlaneseq
    %v199 = vshrl.u32 %v198, 7
    %v200 = vsub.s32 0, %v199
    %v201 = vrot.slane %v196, %v200
    %v202 = vlaneseq
    %v203 = vshrl.u32 %v202, 7
    %v204 = vsub.s32 1, %v203
    %v205 = vrot.slane %v196, %v204
    %208 = vmatprep.subr.mxu0 %v195
    %209 = vmatpush1.msra.mxu0 %v194
    %210 = vmatprep.subr.mxu0 %v193
    %211 = vmatpush1.msra.mxu0 %v192
    %212 = vmatprep.subr.mxu0 %v191
    %213 = vmatpush1.msra.mxu0 %v190
    %214 = vmatprep.subr.mxu0 %v189
    %215 = vmatpush1.msra.mxu0 %v188
    %216 = vmatprep.subr.mxu0 %v187
    %217 = vmatpush1.msra.mxu0 %v186
    %218 = vmatprep.subr.mxu0 %v185
    %219 = vmatpush1.msra.mxu0 %v184
    %220 = vmatprep.subr.mxu0 %v183
    %221 = vmatpush1.msra.mxu0 %v182
    %222 = vmatprep.subr.mxu0 %v181
    %223 = vmatpush1.msra.mxu0 %v180
    %224 = vmatprep.subr.mxu0 %v179
    %225 = vmatpush1.msra.mxu0 %v178
    %226 = vmatprep.subr.mxu0 %v177
    %227 = vmatpush1.msra.mxu0 %v176
    %228 = vmatprep.subr.mxu0 %v175
    %229 = vmatpush1.msra.mxu0 %v174
    %230 = vmatprep.subr.mxu0 %v173
    %231 = vmatpush1.msra.mxu0 %v172
    %232 = vmatprep.subr.mxu0 %v171
    %233 = vmatpush1.msra.mxu0 %v170
    %234 = vmatprep.subr.mxu0 %v169
    %235 = vmatpush1.msra.mxu0 %v168
    %236 = vmatprep.subr.mxu0 %v167
    %237 = vmatpush1.msra.mxu0 %v166
    %238 = vmatprep.subr.mxu0 %v165
    %239 = vmatpush1.msra.mxu0 %v164
    %240 = vmatprep.subr.mxu0 0.0
    %241 = vmatpush2.msra.mxu0 0.0
    %242 = vmatprep.subr.mxu0 0.0
    %243 = vmatpush2.msra.mxu0 0.0
    %244 = vmatprep.subr.mxu0 0.0
    %245 = vmatpush2.msra.mxu0 0.0
    %246 = vmatprep.subr.mxu0 0.0
    %247 = vmatpush2.msra.mxu0 0.0
    %248 = vmatprep.subr.mxu0 0.0
    %249 = vmatpush2.msra.mxu0 0.0
    %250 = vmatprep.subr.mxu0 0.0
    %251 = vmatpush2.msra.mxu0 0.0
    %252 = vmatprep.subr.mxu0 0.0
    %253 = vmatpush2.msra.mxu0 0.0
    %254 = vmatprep.subr.mxu0 0.0
    %255 = vmatpush2.msra.mxu0 0.0
    %256 = vmatprep.subr.mxu0 0.0
    %257 = vmatpush2.msra.mxu0 0.0
    %258 = vmatprep.subr.mxu0 0.0
    %259 = vmatpush2.msra.mxu0 0.0
    %260 = vmatprep.subr.mxu0 0.0
    %261 = vmatpush2.msra.mxu0 0.0
    %262 = vmatprep.subr.mxu0 0.0
    %263 = vmatpush2.msra.mxu0 0.0
    %264 = vmatprep.subr.mxu0 0.0
    %265 = vmatpush2.msra.mxu0 0.0
    %266 = vmatprep.subr.mxu0 0.0
    %267 = vmatpush2.msra.mxu0 0.0
    %268 = vmatprep.subr.mxu0 0.0
    %269 = vmatpush2.msra.mxu0 0.0
    %270 = vmatprep.subr.mxu0 0.0
    %271 = vmatpush2.msra.mxu0 0.0
    %272 = vmatprep.mubr.f32.mxu0 0.0
    %273 = vmatmul.mubr.f32.gmra.mxu0 %v72
    %v274 = vpop.f32.mrf.mxu0
    %v275 = vadd.f32 %v201, %v274
    %v276 = vpop.f32.mrf.mxu0
    %v277 = vadd.f32 %v205, %v276
    %278 = vmatprep.mubr.f32.mxu0 0.0
    %279 = vmatmul.mubr.f32.gmra.mxu0 %v73
    %v280 = vpop.f32.mrf.mxu0
    %v281 = vadd.f32 %v201, %v280
    %v282 = vpop.f32.mrf.mxu0
    %v283 = vadd.f32 %v205, %v282
    %284 = vmatprep.mubr.f32.mxu0 0.0
    %285 = vmatmul.mubr.f32.gmra.mxu0 %v74
    %v286 = vpop.f32.mrf.mxu0
    %v287 = vadd.f32 %v201, %v286
    %v288 = vpop.f32.mrf.mxu0
    %v289 = vadd.f32 %v205, %v288
    %290 = vmatprep.mubr.f32.mxu0 0.0
    %291 = vmatmul.mubr.f32.gmra.mxu0 %v75
    %v292 = vpop.f32.mrf.mxu0
    %v293 = vadd.f32 %v201, %v292
    %v294 = vpop.f32.mrf.mxu0
    %v295 = vadd.f32 %v205, %v294
    %296 = vdwg.mxu0
    %v297 = vmul.f32 %v140, %v56
    %v298 = vmul.f32 %v141, %v56
    %v299 = vmul.f32 %v142, %v56
    %v300 = vmul.f32 %v143, %v56
    %v301 = vmul.f32 %v144, %v56
    %v302 = vmul.f32 %v145, %v56
    %v303 = vmul.f32 %v146, %v56
    %v304 = vmul.f32 %v147, %v56
    %v305 = vmul.f32 %v140, %v61
    %v306 = vmul.f32 %v141, %v61
    %v307 = vmul.f32 %v142, %v61
    %v308 = vmul.f32 %v143, %v61
    %v309 = vmul.f32 %v144, %v61
    %v310 = vmul.f32 %v145, %v61
    %v311 = vmul.f32 %v146, %v61
    %v312 = vmul.f32 %v147, %v61
    %v313 = vmul.f32 %v140, %v66
    %v314 = vmul.f32 %v141, %v66
    %v315 = vmul.f32 %v142, %v66
    %v316 = vmul.f32 %v143, %v66
    %v317 = vmul.f32 %v144, %v66
    %v318 = vmul.f32 %v145, %v66
    %v319 = vmul.f32 %v146, %v66
    %v320 = vmul.f32 %v147, %v66
    %v321 = vmul.f32 %v140, %v71
    %v322 = vmul.f32 %v141, %v71
    %v323 = vmul.f32 %v142, %v71
    %v324 = vmul.f32 %v143, %v71
    %v325 = vmul.f32 %v144, %v71
    %v326 = vmul.f32 %v145, %v71
    %v327 = vmul.f32 %v146, %v71
    %v328 = vmul.f32 %v147, %v71
    %329 = vmatprep.subr.mxu0 0.0
    %330 = vmatpush1.xpose.msra.mxu0 0.0
    %331 = vmatprep.subr.mxu0 0.0
    %332 = vmatpush1.xpose.msra.mxu0 0.0
    %333 = vmatprep.subr.mxu0 0.0
    %334 = vmatpush1.xpose.msra.mxu0 0.0
    %335 = vmatprep.subr.mxu0 0.0
    %336 = vmatpush1.xpose.msra.mxu0 0.0
    %337 = vmatprep.subr.mxu0 0.0
    %338 = vmatpush1.xpose.msra.mxu0 0.0
    %339 = vmatprep.subr.mxu0 0.0
    %340 = vmatpush1.xpose.msra.mxu0 0.0
    %341 = vmatprep.subr.mxu0 0.0
    %342 = vmatpush1.xpose.msra.mxu0 0.0
    %343 = vmatprep.subr.mxu0 0.0
    %344 = vmatpush1.xpose.msra.mxu0 0.0
    %345 = vmatprep.subr.mxu0 0.0
    %346 = vmatpush1.xpose.msra.mxu0 0.0
    %347 = vmatprep.subr.mxu0 0.0
    %348 = vmatpush1.xpose.msra.mxu0 0.0
    %349 = vmatprep.subr.mxu0 0.0
    %350 = vmatpush1.xpose.msra.mxu0 0.0
    %351 = vmatprep.subr.mxu0 0.0
    %352 = vmatpush1.xpose.msra.mxu0 0.0
    %353 = vmatprep.subr.mxu0 0.0
    %354 = vmatpush1.xpose.msra.mxu0 %v293
    %355 = vmatprep.subr.mxu0 0.0
    %356 = vmatpush1.xpose.msra.mxu0 %v287
    %357 = vmatprep.subr.mxu0 0.0
    %358 = vmatpush1.xpose.msra.mxu0 %v281
    %359 = vmatprep.subr.mxu0 0.0
    %360 = vmatpush1.xpose.msra.mxu0 %v275
    %361 = vmatprep.subr.mxu0 0.0
    %362 = vmatpush2.xpose.msra.mxu0 0.0
    %363 = vmatprep.subr.mxu0 0.0
    %364 = vmatpush2.xpose.msra.mxu0 0.0
    %365 = vmatprep.subr.mxu0 0.0
    %366 = vmatpush2.xpose.msra.mxu0 0.0
    %367 = vmatprep.subr.mxu0 0.0
    %368 = vmatpush2.xpose.msra.mxu0 0.0
    %369 = vmatprep.subr.mxu0 0.0
    %370 = vmatpush2.xpose.msra.mxu0 0.0
    %371 = vmatprep.subr.mxu0 0.0
    %372 = vmatpush2.xpose.msra.mxu0 0.0
    %373 = vmatprep.subr.mxu0 0.0
    %374 = vmatpush2.xpose.msra.mxu0 0.0
    %375 = vmatprep.subr.mxu0 0.0
    %376 = vmatpush2.xpose.msra.mxu0 0.0
    %377 = vmatprep.subr.mxu0 0.0
    %378 = vmatpush2.xpose.msra.mxu0 0.0
    %379 = vmatprep.subr.mxu0 0.0
    %380 = vmatpush2.xpose.msra.mxu0 0.0
    %381 = vmatprep.subr.mxu0 0.0
    %382 = vmatpush2.xpose.msra.mxu0 0.0
    %383 = vmatprep.subr.mxu0 0.0
    %384 = vmatpush2.xpose.msra.mxu0 0.0
    %385 = vmatprep.subr.mxu0 0.0
    %386 = vmatpush2.xpose.msra.mxu0 0.0
    %387 = vmatprep.subr.mxu0 0.0
    %388 = vmatpush2.xpose.msra.mxu0 0.0
    %389 = vmatprep.subr.mxu0 0.0
    %390 = vmatpush2.xpose.msra.mxu0 0.0
    %391 = vmatprep.subr.mxu0 0.0
    %392 = vmatpush2.xpose.msra.mxu0 0.0
    %393 = vmatprep.mubr.f32.mxu0 0.0
    %394 = vmatmul.mubr.f32.gmra.mxu0 %v297
    %v395 = vpop.f32.mrf.mxu0
    %v396 = vadd.f32 0.0, %v395
    %v397 = vpop.f32.mrf.mxu0
    %398 = vmatprep.mubr.f32.mxu0 0.0
    %399 = vmatmul.mubr.f32.gmra.mxu0 %v298
    %v400 = vpop.f32.mrf.mxu0
    %v401 = vadd.f32 0.0, %v400
    %v402 = vpop.f32.mrf.mxu0
    %403 = vmatprep.mubr.f32.mxu0 0.0
    %404 = vmatmul.mubr.f32.gmra.mxu0 %v299
    %v405 = vpop.f32.mrf.mxu0
    %v406 = vadd.f32 0.0, %v405
    %v407 = vpop.f32.mrf.mxu0
    %408 = vmatprep.mubr.f32.mxu0 0.0
    %409 = vmatmul.mubr.f32.gmra.mxu0 %v300
    %v410 = vpop.f32.mrf.mxu0
    %v411 = vadd.f32 0.0, %v410
    %v412 = vpop.f32.mrf.mxu0
    %413 = vmatprep.mubr.f32.mxu0 0.0
    %414 = vmatmul.mubr.f32.gmra.mxu0 %v301
    %v415 = vpop.f32.mrf.mxu0
    %v416 = vadd.f32 0.0, %v415
    %v417 = vpop.f32.mrf.mxu0
    %418 = vmatprep.mubr.f32.mxu0 0.0
    %419 = vmatmul.mubr.f32.gmra.mxu0 %v302
    %v420 = vpop.f32.mrf.mxu0
    %v421 = vadd.f32 0.0, %v420
    %v422 = vpop.f32.mrf.mxu0
    %423 = vmatprep.mubr.f32.mxu0 0.0
    %424 = vmatmul.mubr.f32.gmra.mxu0 %v303
    %v425 = vpop.f32.mrf.mxu0
    %v426 = vadd.f32 0.0, %v425
    %v427 = vpop.f32.mrf.mxu0
    %428 = vmatprep.mubr.f32.mxu0 0.0
    %429 = vmatmul.mubr.f32.gmra.mxu0 %v304
    %v430 = vpop.f32.mrf.mxu0
    %v431 = vadd.f32 0.0, %v430
    %v432 = vpop.f32.mrf.mxu0
    %433 = vmatprep.mubr.f32.mxu0 0.0
    %434 = vmatmul.mubr.f32.gmra.mxu0 %v305
    %v435 = vpop.f32.mrf.mxu0
    %v436 = vadd.f32 0.0, %v435
    %v437 = vpop.f32.mrf.mxu0
    %438 = vmatprep.mubr.f32.mxu0 0.0
    %439 = vmatmul.mubr.f32.gmra.mxu0 %v306
    %v440 = vpop.f32.mrf.mxu0
    %v441 = vadd.f32 0.0, %v440
    %v442 = vpop.f32.mrf.mxu0
    %443 = vmatprep.mubr.f32.mxu0 0.0
    %444 = vmatmul.mubr.f32.gmra.mxu0 %v307
    %v445 = vpop.f32.mrf.mxu0
    %v446 = vadd.f32 0.0, %v445
    %v447 = vpop.f32.mrf.mxu0
    %448 = vmatprep.mubr.f32.mxu0 0.0
    %449 = vmatmul.mubr.f32.gmra.mxu0 %v308
    %v450 = vpop.f32.mrf.mxu0
    %v451 = vadd.f32 0.0, %v450
    %v452 = vpop.f32.mrf.mxu0
    %453 = vmatprep.mubr.f32.mxu0 0.0
    %454 = vmatmul.mubr.f32.gmra.mxu0 %v309
    %v455 = vpop.f32.mrf.mxu0
    %v456 = vadd.f32 0.0, %v455
    %v457 = vpop.f32.mrf.mxu0
    %458 = vmatprep.mubr.f32.mxu0 0.0
    %459 = vmatmul.mubr.f32.gmra.mxu0 %v310
    %v460 = vpop.f32.mrf.mxu0
    %v461 = vadd.f32 0.0, %v460
    %v462 = vpop.f32.mrf.mxu0
    %463 = vmatprep.mubr.f32.mxu0 0.0
    %464 = vmatmul.mubr.f32.gmra.mxu0 %v311
    %v465 = vpop.f32.mrf.mxu0
    %v466 = vadd.f32 0.0, %v465
    %v467 = vpop.f32.mrf.mxu0
    %468 = vmatprep.mubr.f32.mxu0 0.0
    %469 = vmatmul.mubr.f32.gmra.mxu0 %v312
    %v470 = vpop.f32.mrf.mxu0
    %v471 = vadd.f32 0.0, %v470
    %v472 = vpop.f32.mrf.mxu0
    %473 = vmatprep.mubr.f32.mxu0 0.0
    %474 = vmatmul.mubr.f32.gmra.mxu0 %v313
    %v475 = vpop.f32.mrf.mxu0
    %v476 = vadd.f32 0.0, %v475
    %v477 = vpop.f32.mrf.mxu0
    %478 = vmatprep.mubr.f32.mxu0 0.0
    %479 = vmatmul.mubr.f32.gmra.mxu0 %v314
    %v480 = vpop.f32.mrf.mxu0
    %v481 = vadd.f32 0.0, %v480
    %v482 = vpop.f32.mrf.mxu0
    %483 = vmatprep.mubr.f32.mxu0 0.0
    %484 = vmatmul.mubr.f32.gmra.mxu0 %v315
    %v485 = vpop.f32.mrf.mxu0
    %v486 = vadd.f32 0.0, %v485
    %v487 = vpop.f32.mrf.mxu0
    %488 = vmatprep.mubr.f32.mxu0 0.0
    %489 = vmatmul.mubr.f32.gmra.mxu0 %v316
    %v490 = vpop.f32.mrf.mxu0
    %v491 = vadd.f32 0.0, %v490
    %v492 = vpop.f32.mrf.mxu0
    %493 = vmatprep.mubr.f32.mxu0 0.0
    %494 = vmatmul.mubr.f32.gmra.mxu0 %v317
    %v495 = vpop.f32.mrf.mxu0
    %v496 = vadd.f32 0.0, %v495
    %v497 = vpop.f32.mrf.mxu0
    %498 = vmatprep.mubr.f32.mxu0 0.0
    %499 = vmatmul.mubr.f32.gmra.mxu0 %v318
    %v500 = vpop.f32.mrf.mxu0
    %v501 = vadd.f32 0.0, %v500
    %v502 = vpop.f32.mrf.mxu0
    %503 = vmatprep.mubr.f32.mxu0 0.0
    %504 = vmatmul.mubr.f32.gmra.mxu0 %v319
    %v505 = vpop.f32.mrf.mxu0
    %v506 = vadd.f32 0.0, %v505
    %v507 = vpop.f32.mrf.mxu0
    %508 = vmatprep.mubr.f32.mxu0 0.0
    %509 = vmatmul.mubr.f32.gmra.mxu0 %v320
    %v510 = vpop.f32.mrf.mxu0
    %v511 = vadd.f32 0.0, %v510
    %v512 = vpop.f32.mrf.mxu0
    %513 = vmatprep.mubr.f32.mxu0 0.0
    %514 = vmatmul.mubr.f32.gmra.mxu0 %v321
    %v515 = vpop.f32.mrf.mxu0
    %v516 = vadd.f32 0.0, %v515
    %v517 = vpop.f32.mrf.mxu0
    %518 = vmatprep.mubr.f32.mxu0 0.0
    %519 = vmatmul.mubr.f32.gmra.mxu0 %v322
    %v520 = vpop.f32.mrf.mxu0
    %v521 = vadd.f32 0.0, %v520
    %v522 = vpop.f32.mrf.mxu0
    %523 = vmatprep.mubr.f32.mxu0 0.0
    %524 = vmatmul.mubr.f32.gmra.mxu0 %v323
    %v525 = vpop.f32.mrf.mxu0
    %v526 = vadd.f32 0.0, %v525
    %v527 = vpop.f32.mrf.mxu0
    %528 = vmatprep.mubr.f32.mxu0 0.0
    %529 = vmatmul.mubr.f32.gmra.mxu0 %v324
    %v530 = vpop.f32.mrf.mxu0
    %v531 = vadd.f32 0.0, %v530
    %v532 = vpop.f32.mrf.mxu0
    %533 = vmatprep.mubr.f32.mxu0 0.0
    %534 = vmatmul.mubr.f32.gmra.mxu0 %v325
    %v535 = vpop.f32.mrf.mxu0
    %v536 = vadd.f32 0.0, %v535
    %v537 = vpop.f32.mrf.mxu0
    %538 = vmatprep.mubr.f32.mxu0 0.0
    %539 = vmatmul.mubr.f32.gmra.mxu0 %v326
    %v540 = vpop.f32.mrf.mxu0
    %v541 = vadd.f32 0.0, %v540
    %v542 = vpop.f32.mrf.mxu0
    %543 = vmatprep.mubr.f32.mxu0 0.0
    %544 = vmatmul.mubr.f32.gmra.mxu0 %v327
    %v545 = vpop.f32.mrf.mxu0
    %v546 = vadd.f32 0.0, %v545
    %v547 = vpop.f32.mrf.mxu0
    %548 = vmatprep.mubr.f32.mxu0 0.0
    %549 = vmatmul.mubr.f32.gmra.mxu0 %v328
    %v550 = vpop.f32.mrf.mxu0
    %v551 = vadd.f32 0.0, %v550
    %v552 = vpop.f32.mrf.mxu0
    %553 = vdwg.mxu0
    %v554 = vmul.f32 %v396, 0.088388346
    %v555 = vmul.f32 %v401, 0.088388346
    %v556 = vmul.f32 %v406, 0.088388346
    %v557 = vmul.f32 %v411, 0.088388346
    %v558 = vmul.f32 %v416, 0.088388346
    %v559 = vmul.f32 %v421, 0.088388346
    %v560 = vmul.f32 %v426, 0.088388346
    %v561 = vmul.f32 %v431, 0.088388346
    %v562 = vmul.f32 %v436, 0.088388346
    %v563 = vmul.f32 %v441, 0.088388346
    %v564 = vmul.f32 %v446, 0.088388346
    %v565 = vmul.f32 %v451, 0.088388346
    %v566 = vmul.f32 %v456, 0.088388346
    %v567 = vmul.f32 %v461, 0.088388346
    %v568 = vmul.f32 %v466, 0.088388346
    %v569 = vmul.f32 %v471, 0.088388346
    %v570 = vmul.f32 %v476, 0.088388346
    %v571 = vmul.f32 %v481, 0.088388346
    %v572 = vmul.f32 %v486, 0.088388346
    %v573 = vmul.f32 %v491, 0.088388346
    %v574 = vmul.f32 %v496, 0.088388346
    %v575 = vmul.f32 %v501, 0.088388346
    %v576 = vmul.f32 %v506, 0.088388346
    %v577 = vmul.f32 %v511, 0.088388346
    %v578 = vmul.f32 %v516, 0.088388346
    %v579 = vmul.f32 %v521, 0.088388346
    %v580 = vmul.f32 %v526, 0.088388346
    %v581 = vmul.f32 %v531, 0.088388346
    %v582 = vmul.f32 %v536, 0.088388346
    %v583 = vmul.f32 %v541, 0.088388346
    %v584 = vmul.f32 %v546, 0.088388346
    %v585 = vmul.f32 %v551, 0.088388346
    %v586 = vadd.f32 %v554, %v76
    %v587 = vadd.f32 %v555, %v77
    %v588 = vadd.f32 %v556, %v78
    %v589 = vadd.f32 %v557, %v79
    %v590 = vadd.f32 %v558, %v80
    %v591 = vadd.f32 %v559, %v81
    %v592 = vadd.f32 %v560, %v82
    %v593 = vadd.f32 %v561, %v83
    %v594 = vadd.f32 %v562, %v84
    %v595 = vadd.f32 %v563, %v85
    %v596 = vadd.f32 %v564, %v86
    %v597 = vadd.f32 %v565, %v87
    %v598 = vadd.f32 %v566, %v88
    %v599 = vadd.f32 %v567, %v89
    %v600 = vadd.f32 %v568, %v90
    %v601 = vadd.f32 %v569, %v91
    %v602 = vadd.f32 %v570, %v92
    %v603 = vadd.f32 %v571, %v93
    %v604 = vadd.f32 %v572, %v94
    %v605 = vadd.f32 %v573, %v95
    %v606 = vadd.f32 %v574, %v96
    %v607 = vadd.f32 %v575, %v97
    %v608 = vadd.f32 %v576, %v98
    %v609 = vadd.f32 %v577, %v99
    %v610 = vadd.f32 %v578, %v100
    %v611 = vadd.f32 %v579, %v101
    %v612 = vadd.f32 %v580, %v102
    %v613 = vadd.f32 %v581, %v103
    %v614 = vadd.f32 %v582, %v104
    %v615 = vadd.f32 %v583, %v105
    %v616 = vadd.f32 %v584, %v106
    %v617 = vadd.f32 %v585, %v107
    %vm618 = vcmask 261120
    %v619 = vsel %vm618, %v586, -inf
    %620 = vmax.xlane.f32.xlu0 %v619
    %v621 = vpop.xlane.xlu0 %620
    %v622 = vsel %vm618, %v587, -inf
    %623 = vmax.xlane.f32.xlu0 %v622
    %v624 = vpop.xlane.xlu0 %623
    %v625 = vsel %vm618, %v588, -inf
    %626 = vmax.xlane.f32.xlu0 %v625
    %v627 = vpop.xlane.xlu0 %626
    %v628 = vsel %vm618, %v589, -inf
    %629 = vmax.xlane.f32.xlu0 %v628
    %v630 = vpop.xlane.xlu0 %629
    %v631 = vsel %vm618, %v590, -inf
    %632 = vmax.xlane.f32.xlu0 %v631
    %v633 = vpop.xlane.xlu0 %632
    %v634 = vsel %vm618, %v591, -inf
    %635 = vmax.xlane.f32.xlu0 %v634
    %v636 = vpop.xlane.xlu0 %635
    %v637 = vsel %vm618, %v592, -inf
    %638 = vmax.xlane.f32.xlu0 %v637
    %v639 = vpop.xlane.xlu0 %638
    %v640 = vsel %vm618, %v593, -inf
    %641 = vmax.xlane.f32.xlu0 %v640
    %v642 = vpop.xlane.xlu0 %641
    %v643 = vsel %vm618, %v594, -inf
    %644 = vmax.xlane.f32.xlu0 %v643
    %v645 = vpop.xlane.xlu0 %644
    %v646 = vsel %vm618, %v595, -inf
    %647 = vmax.xlane.f32.xlu0 %v646
    %v648 = vpop.xlane.xlu0 %647
    %v649 = vsel %vm618, %v596, -inf
    %650 = vmax.xlane.f32.xlu0 %v649
    %v651 = vpop.xlane.xlu0 %650
    %v652 = vsel %vm618, %v597, -inf
    %653 = vmax.xlane.f32.xlu0 %v652
    %v654 = vpop.xlane.xlu0 %653
    %v655 = vsel %vm618, %v598, -inf
    %656 = vmax.xlane.f32.xlu0 %v655
    %v657 = vpop.xlane.xlu0 %656
    %v658 = vsel %vm618, %v599, -inf
    %659 = vmax.xlane.f32.xlu0 %v658
    %v660 = vpop.xlane.xlu0 %659
    %v661 = vsel %vm618, %v600, -inf
    %662 = vmax.xlane.f32.xlu0 %v661
    %v663 = vpop.xlane.xlu0 %662
    %v664 = vsel %vm618, %v601, -inf
    %665 = vmax.xlane.f32.xlu0 %v664
    %v666 = vpop.xlane.xlu0 %665
    %v667 = vsel %vm618, %v602, -inf
    %668 = vmax.xlane.f32.xlu0 %v667
    %v669 = vpop.xlane.xlu0 %668
    %v670 = vsel %vm618, %v603, -inf
    %671 = vmax.xlane.f32.xlu0 %v670
    %v672 = vpop.xlane.xlu0 %671
    %v673 = vsel %vm618, %v604, -inf
    %674 = vmax.xlane.f32.xlu0 %v673
    %v675 = vpop.xlane.xlu0 %674
    %v676 = vsel %vm618, %v605, -inf
    %677 = vmax.xlane.f32.xlu0 %v676
    %v678 = vpop.xlane.xlu0 %677
    %v679 = vsel %vm618, %v606, -inf
    %680 = vmax.xlane.f32.xlu0 %v679
    %v681 = vpop.xlane.xlu0 %680
    %v682 = vsel %vm618, %v607, -inf
    %683 = vmax.xlane.f32.xlu0 %v682
    %v684 = vpop.xlane.xlu0 %683
    %v685 = vsel %vm618, %v608, -inf
    %686 = vmax.xlane.f32.xlu0 %v685
    %v687 = vpop.xlane.xlu0 %686
    %v688 = vsel %vm618, %v609, -inf
    %689 = vmax.xlane.f32.xlu0 %v688
    %v690 = vpop.xlane.xlu0 %689
    %v691 = vsel %vm618, %v610, -inf
    %692 = vmax.xlane.f32.xlu0 %v691
    %v693 = vpop.xlane.xlu0 %692
    %v694 = vsel %vm618, %v611, -inf
    %695 = vmax.xlane.f32.xlu0 %v694
    %v696 = vpop.xlane.xlu0 %695
    %v697 = vsel %vm618, %v612, -inf
    %698 = vmax.xlane.f32.xlu0 %v697
    %v699 = vpop.xlane.xlu0 %698
    %v700 = vsel %vm618, %v613, -inf
    %701 = vmax.xlane.f32.xlu0 %v700
    %v702 = vpop.xlane.xlu0 %701
    %v703 = vsel %vm618, %v614, -inf
    %704 = vmax.xlane.f32.xlu0 %v703
    %v705 = vpop.xlane.xlu0 %704
    %v706 = vsel %vm618, %v615, -inf
    %707 = vmax.xlane.f32.xlu0 %v706
    %v708 = vpop.xlane.xlu0 %707
    %v709 = vsel %vm618, %v616, -inf
    %710 = vmax.xlane.f32.xlu0 %v709
    %v711 = vpop.xlane.xlu0 %710
    %v712 = vsel %vm618, %v617, -inf
    %713 = vmax.xlane.f32.xlu0 %v712
    %v714 = vpop.xlane.xlu0 %713
    %v715 = vsub.f32 %v586, %v621
    %v716 = vsub.f32 %v587, %v624
    %v717 = vsub.f32 %v588, %v627
    %v718 = vsub.f32 %v589, %v630
    %v719 = vsub.f32 %v590, %v633
    %v720 = vsub.f32 %v591, %v636
    %v721 = vsub.f32 %v592, %v639
    %v722 = vsub.f32 %v593, %v642
    %v723 = vsub.f32 %v594, %v645
    %v724 = vsub.f32 %v595, %v648
    %v725 = vsub.f32 %v596, %v651
    %v726 = vsub.f32 %v597, %v654
    %v727 = vsub.f32 %v598, %v657
    %v728 = vsub.f32 %v599, %v660
    %v729 = vsub.f32 %v600, %v663
    %v730 = vsub.f32 %v601, %v666
    %v731 = vsub.f32 %v602, %v669
    %v732 = vsub.f32 %v603, %v672
    %v733 = vsub.f32 %v604, %v675
    %v734 = vsub.f32 %v605, %v678
    %v735 = vsub.f32 %v606, %v681
    %v736 = vsub.f32 %v607, %v684
    %v737 = vsub.f32 %v608, %v687
    %v738 = vsub.f32 %v609, %v690
    %v739 = vsub.f32 %v610, %v693
    %v740 = vsub.f32 %v611, %v696
    %v741 = vsub.f32 %v612, %v699
    %v742 = vsub.f32 %v613, %v702
    %v743 = vsub.f32 %v614, %v705
    %v744 = vsub.f32 %v615, %v708
    %v745 = vsub.f32 %v616, %v711
    %v746 = vsub.f32 %v617, %v714
    %v747 = vmul.f32 %v715, 1.442695
    %v748 = vpow.pop %v747
    %v749 = vmul.f32 %v716, 1.442695
    %v750 = vpow.pop %v749
    %v751 = vmul.f32 %v717, 1.442695
    %v752 = vpow.pop %v751
    %v753 = vmul.f32 %v718, 1.442695
    %v754 = vpow.pop %v753
    %v755 = vmul.f32 %v719, 1.442695
    %v756 = vpow.pop %v755
    %v757 = vmul.f32 %v720, 1.442695
    %v758 = vpow.pop %v757
    %v759 = vmul.f32 %v721, 1.442695
    %v760 = vpow.pop %v759
    %v761 = vmul.f32 %v722, 1.442695
    %v762 = vpow.pop %v761
    %v763 = vmul.f32 %v723, 1.442695
    %v764 = vpow.pop %v763
    %v765 = vmul.f32 %v724, 1.442695
    %v766 = vpow.pop %v765
    %v767 = vmul.f32 %v725, 1.442695
    %v768 = vpow.pop %v767
    %v769 = vmul.f32 %v726, 1.442695
    %v770 = vpow.pop %v769
    %v771 = vmul.f32 %v727, 1.442695
    %v772 = vpow.pop %v771
    %v773 = vmul.f32 %v728, 1.442695
    %v774 = vpow.pop %v773
    %v775 = vmul.f32 %v729, 1.442695
    %v776 = vpow.pop %v775
    %v777 = vmul.f32 %v730, 1.442695
    %v778 = vpow.pop %v777
    %v779 = vmul.f32 %v731, 1.442695
    %v780 = vpow.pop %v779
    %v781 = vmul.f32 %v732, 1.442695
    %v782 = vpow.pop %v781
    %v783 = vmul.f32 %v733, 1.442695
    %v784 = vpow.pop %v783
    %v785 = vmul.f32 %v734, 1.442695
    %v786 = vpow.pop %v785
    %v787 = vmul.f32 %v735, 1.442695
    %v788 = vpow.pop %v787
    %v789 = vmul.f32 %v736, 1.442695
    %v790 = vpow.pop %v789
    %v791 = vmul.f32 %v737, 1.442695
    %v792 = vpow.pop %v791
    %v793 = vmul.f32 %v738, 1.442695
    %v794 = vpow.pop %v793
    %v795 = vmul.f32 %v739, 1.442695
    %v796 = vpow.pop %v795
    %v797 = vmul.f32 %v740, 1.442695
    %v798 = vpow.pop %v797
    %v799 = vmul.f32 %v741, 1.442695
    %v800 = vpow.pop %v799
    %v801 = vmul.f32 %v742, 1.442695
    %v802 = vpow.pop %v801
    %v803 = vmul.f32 %v743, 1.442695
    %v804 = vpow.pop %v803
    %v805 = vmul.f32 %v744, 1.442695
    %v806 = vpow.pop %v805
    %v807 = vmul.f32 %v745, 1.442695
    %v808 = vpow.pop %v807
    %v809 = vmul.f32 %v746, 1.442695
    %v810 = vpow.pop %v809
    %v811 = vsel %vm618, %v748, 0.0
    %812 = vadd.xlane.f32.xlu0 %v811
    %v813 = vpop.xlane.xlu0 %812
    %v814 = vsel %vm618, %v750, 0.0
    %815 = vadd.xlane.f32.xlu0 %v814
    %v816 = vpop.xlane.xlu0 %815
    %v817 = vsel %vm618, %v752, 0.0
    %818 = vadd.xlane.f32.xlu0 %v817
    %v819 = vpop.xlane.xlu0 %818
    %v820 = vsel %vm618, %v754, 0.0
    %821 = vadd.xlane.f32.xlu0 %v820
    %v822 = vpop.xlane.xlu0 %821
    %v823 = vsel %vm618, %v756, 0.0
    %824 = vadd.xlane.f32.xlu0 %v823
    %v825 = vpop.xlane.xlu0 %824
    %v826 = vsel %vm618, %v758, 0.0
    %827 = vadd.xlane.f32.xlu0 %v826
    %v828 = vpop.xlane.xlu0 %827
    %v829 = vsel %vm618, %v760, 0.0
    %830 = vadd.xlane.f32.xlu0 %v829
    %v831 = vpop.xlane.xlu0 %830
    %v832 = vsel %vm618, %v762, 0.0
    %833 = vadd.xlane.f32.xlu0 %v832
    %v834 = vpop.xlane.xlu0 %833
    %v835 = vsel %vm618, %v764, 0.0
    %836 = vadd.xlane.f32.xlu0 %v835
    %v837 = vpop.xlane.xlu0 %836
    %v838 = vsel %vm618, %v766, 0.0
    %839 = vadd.xlane.f32.xlu0 %v838
    %v840 = vpop.xlane.xlu0 %839
    %v841 = vsel %vm618, %v768, 0.0
    %842 = vadd.xlane.f32.xlu0 %v841
    %v843 = vpop.xlane.xlu0 %842
    %v844 = vsel %vm618, %v770, 0.0
    %845 = vadd.xlane.f32.xlu0 %v844
    %v846 = vpop.xlane.xlu0 %845
    %v847 = vsel %vm618, %v772, 0.0
    %848 = vadd.xlane.f32.xlu0 %v847
    %v849 = vpop.xlane.xlu0 %848
    %v850 = vsel %vm618, %v774, 0.0
    %851 = vadd.xlane.f32.xlu0 %v850
    %v852 = vpop.xlane.xlu0 %851
    %v853 = vsel %vm618, %v776, 0.0
    %854 = vadd.xlane.f32.xlu0 %v853
    %v855 = vpop.xlane.xlu0 %854
    %v856 = vsel %vm618, %v778, 0.0
    %857 = vadd.xlane.f32.xlu0 %v856
    %v858 = vpop.xlane.xlu0 %857
    %v859 = vsel %vm618, %v780, 0.0
    %860 = vadd.xlane.f32.xlu0 %v859
    %v861 = vpop.xlane.xlu0 %860
    %v862 = vsel %vm618, %v782, 0.0
    %863 = vadd.xlane.f32.xlu0 %v862
    %v864 = vpop.xlane.xlu0 %863
    %v865 = vsel %vm618, %v784, 0.0
    %866 = vadd.xlane.f32.xlu0 %v865
    %v867 = vpop.xlane.xlu0 %866
    %v868 = vsel %vm618, %v786, 0.0
    %869 = vadd.xlane.f32.xlu0 %v868
    %v870 = vpop.xlane.xlu0 %869
    %v871 = vsel %vm618, %v788, 0.0
    %872 = vadd.xlane.f32.xlu0 %v871
    %v873 = vpop.xlane.xlu0 %872
    %v874 = vsel %vm618, %v790, 0.0
    %875 = vadd.xlane.f32.xlu0 %v874
    %v876 = vpop.xlane.xlu0 %875
    %v877 = vsel %vm618, %v792, 0.0
    %878 = vadd.xlane.f32.xlu0 %v877
    %v879 = vpop.xlane.xlu0 %878
    %v880 = vsel %vm618, %v794, 0.0
    %881 = vadd.xlane.f32.xlu0 %v880
    %v882 = vpop.xlane.xlu0 %881
    %v883 = vsel %vm618, %v796, 0.0
    %884 = vadd.xlane.f32.xlu0 %v883
    %v885 = vpop.xlane.xlu0 %884
    %v886 = vsel %vm618, %v798, 0.0
    %887 = vadd.xlane.f32.xlu0 %v886
    %v888 = vpop.xlane.xlu0 %887
    %v889 = vsel %vm618, %v800, 0.0
    %890 = vadd.xlane.f32.xlu0 %v889
    %v891 = vpop.xlane.xlu0 %890
    %v892 = vsel %vm618, %v802, 0.0
    %893 = vadd.xlane.f32.xlu0 %v892
    %v894 = vpop.xlane.xlu0 %893
    %v895 = vsel %vm618, %v804, 0.0
    %896 = vadd.xlane.f32.xlu0 %v895
    %v897 = vpop.xlane.xlu0 %896
    %v898 = vsel %vm618, %v806, 0.0
    %899 = vadd.xlane.f32.xlu0 %v898
    %v900 = vpop.xlane.xlu0 %899
    %v901 = vsel %vm618, %v808, 0.0
    %902 = vadd.xlane.f32.xlu0 %v901
    %v903 = vpop.xlane.xlu0 %902
    %v904 = vsel %vm618, %v810, 0.0
    %905 = vadd.xlane.f32.xlu0 %v904
    %v906 = vpop.xlane.xlu0 %905
    %v907 = vrcp.pop %v813
    %v908 = vmul.f32 %v748, %v907
    %v909 = vrcp.pop %v816
    %v910 = vmul.f32 %v750, %v909
    %v911 = vrcp.pop %v819
    %v912 = vmul.f32 %v752, %v911
    %v913 = vrcp.pop %v822
    %v914 = vmul.f32 %v754, %v913
    %v915 = vrcp.pop %v825
    %v916 = vmul.f32 %v756, %v915
    %v917 = vrcp.pop %v828
    %v918 = vmul.f32 %v758, %v917
    %v919 = vrcp.pop %v831
    %v920 = vmul.f32 %v760, %v919
    %v921 = vrcp.pop %v834
    %v922 = vmul.f32 %v762, %v921
    %v923 = vrcp.pop %v837
    %v924 = vmul.f32 %v764, %v923
    %v925 = vrcp.pop %v840
    %v926 = vmul.f32 %v766, %v925
    %v927 = vrcp.pop %v843
    %v928 = vmul.f32 %v768, %v927
    %v929 = vrcp.pop %v846
    %v930 = vmul.f32 %v770, %v929
    %v931 = vrcp.pop %v849
    %v932 = vmul.f32 %v772, %v931
    %v933 = vrcp.pop %v852
    %v934 = vmul.f32 %v774, %v933
    %v935 = vrcp.pop %v855
    %v936 = vmul.f32 %v776, %v935
    %v937 = vrcp.pop %v858
    %v938 = vmul.f32 %v778, %v937
    %v939 = vrcp.pop %v861
    %v940 = vmul.f32 %v780, %v939
    %v941 = vrcp.pop %v864
    %v942 = vmul.f32 %v782, %v941
    %v943 = vrcp.pop %v867
    %v944 = vmul.f32 %v784, %v943
    %v945 = vrcp.pop %v870
    %v946 = vmul.f32 %v786, %v945
    %v947 = vrcp.pop %v873
    %v948 = vmul.f32 %v788, %v947
    %v949 = vrcp.pop %v876
    %v950 = vmul.f32 %v790, %v949
    %v951 = vrcp.pop %v879
    %v952 = vmul.f32 %v792, %v951
    %v953 = vrcp.pop %v882
    %v954 = vmul.f32 %v794, %v953
    %v955 = vrcp.pop %v885
    %v956 = vmul.f32 %v796, %v955
    %v957 = vrcp.pop %v888
    %v958 = vmul.f32 %v798, %v957
    %v959 = vrcp.pop %v891
    %v960 = vmul.f32 %v800, %v959
    %v961 = vrcp.pop %v894
    %v962 = vmul.f32 %v802, %v961
    %v963 = vrcp.pop %v897
    %v964 = vmul.f32 %v804, %v963
    %v965 = vrcp.pop %v900
    %v966 = vmul.f32 %v806, %v965
    %v967 = vrcp.pop %v903
    %v968 = vmul.f32 %v808, %v967
    %v969 = vrcp.pop %v906
    %v970 = vmul.f32 %v810, %v969
    %v972 = vsel %vm618, %v908, 0
    %v975 = vsel %vm618, %v910, 0
    %v978 = vsel %vm618, %v912, 0
    %v981 = vsel %vm618, %v914, 0
    %v984 = vsel %vm618, %v916, 0
    %v987 = vsel %vm618, %v918, 0
    %v990 = vsel %vm618, %v920, 0
    %v993 = vsel %vm618, %v922, 0
    %v996 = vsel %vm618, %v924, 0
    %v999 = vsel %vm618, %v926, 0
    %v1002 = vsel %vm618, %v928, 0
    %v1005 = vsel %vm618, %v930, 0
    %v1008 = vsel %vm618, %v932, 0
    %v1011 = vsel %vm618, %v934, 0
    %v1014 = vsel %vm618, %v936, 0
    %v1017 = vsel %vm618, %v938, 0
    %v1020 = vsel %vm618, %v940, 0
    %v1023 = vsel %vm618, %v942, 0
    %v1026 = vsel %vm618, %v944, 0
    %v1029 = vsel %vm618, %v946, 0
    %v1032 = vsel %vm618, %v948, 0
    %v1035 = vsel %vm618, %v950, 0
    %v1038 = vsel %vm618, %v952, 0
    %v1041 = vsel %vm618, %v954, 0
    %v1044 = vsel %vm618, %v956, 0
    %v1047 = vsel %vm618, %v958, 0
    %v1050 = vsel %vm618, %v960, 0
    %v1053 = vsel %vm618, %v962, 0
    %v1056 = vsel %vm618, %v964, 0
    %v1059 = vsel %vm618, %v966, 0
    %v1062 = vsel %vm618, %v968, 0
    %v1065 = vsel %vm618, %v970, 0
    %1067 = vmatprep.subr.mxu0 0.0
    %1068 = vmatpush1.msra.mxu0 0.0
    %1069 = vmatprep.subr.mxu0 0.0
    %1070 = vmatpush1.msra.mxu0 0.0
    %1071 = vmatprep.subr.mxu0 0.0
    %1072 = vmatpush1.msra.mxu0 0.0
    %1073 = vmatprep.subr.mxu0 0.0
    %1074 = vmatpush1.msra.mxu0 0.0
    %1075 = vmatprep.subr.mxu0 0.0
    %1076 = vmatpush1.msra.mxu0 0.0
    %1077 = vmatprep.subr.mxu0 0.0
    %1078 = vmatpush1.msra.mxu0 0.0
    %1079 = vmatprep.subr.mxu0 0.0
    %1080 = vmatpush1.msra.mxu0 0.0
    %1081 = vmatprep.subr.mxu0 0.0
    %1082 = vmatpush1.msra.mxu0 0.0
    %1083 = vmatprep.subr.mxu0 0.0
    %1084 = vmatpush1.msra.mxu0 0.0
    %1085 = vmatprep.subr.mxu0 0.0
    %1086 = vmatpush1.msra.mxu0 0.0
    %1087 = vmatprep.subr.mxu0 0.0
    %1088 = vmatpush1.msra.mxu0 0.0
    %1089 = vmatprep.subr.mxu0 0.0
    %1090 = vmatpush1.msra.mxu0 0.0
    %1091 = vmatprep.subr.mxu0 0.0
    %1092 = vmatpush1.msra.mxu0 %v295
    %1093 = vmatprep.subr.mxu0 0.0
    %1094 = vmatpush1.msra.mxu0 %v289
    %1095 = vmatprep.subr.mxu0 0.0
    %1096 = vmatpush1.msra.mxu0 %v283
    %1097 = vmatprep.subr.mxu0 0.0
    %1098 = vmatpush1.msra.mxu0 %v277
    %1099 = vmatprep.subr.mxu0 0.0
    %1100 = vmatpush2.msra.mxu0 0.0
    %1101 = vmatprep.subr.mxu0 0.0
    %1102 = vmatpush2.msra.mxu0 0.0
    %1103 = vmatprep.subr.mxu0 0.0
    %1104 = vmatpush2.msra.mxu0 0.0
    %1105 = vmatprep.subr.mxu0 0.0
    %1106 = vmatpush2.msra.mxu0 0.0
    %1107 = vmatprep.subr.mxu0 0.0
    %1108 = vmatpush2.msra.mxu0 0.0
    %1109 = vmatprep.subr.mxu0 0.0
    %1110 = vmatpush2.msra.mxu0 0.0
    %1111 = vmatprep.subr.mxu0 0.0
    %1112 = vmatpush2.msra.mxu0 0.0
    %1113 = vmatprep.subr.mxu0 0.0
    %1114 = vmatpush2.msra.mxu0 0.0
    %1115 = vmatprep.subr.mxu0 0.0
    %1116 = vmatpush2.msra.mxu0 0.0
    %1117 = vmatprep.subr.mxu0 0.0
    %1118 = vmatpush2.msra.mxu0 0.0
    %1119 = vmatprep.subr.mxu0 0.0
    %1120 = vmatpush2.msra.mxu0 0.0
    %1121 = vmatprep.subr.mxu0 0.0
    %1122 = vmatpush2.msra.mxu0 0.0
    %1123 = vmatprep.subr.mxu0 0.0
    %1124 = vmatpush2.msra.mxu0 0.0
    %1125 = vmatprep.subr.mxu0 0.0
    %1126 = vmatpush2.msra.mxu0 0.0
    %1127 = vmatprep.subr.mxu0 0.0
    %1128 = vmatpush2.msra.mxu0 0.0
    %1129 = vmatprep.subr.mxu0 0.0
    %1130 = vmatpush2.msra.mxu0 0.0
    %1131 = vmatprep.mubr.f32.mxu0 0.0
    %1132 = vmatmul.mubr.f32.gmra.mxu0 %v972
    %v1133 = vpop.f32.mrf.mxu0
    %v1134 = vadd.f32 0.0, %v1133
    %v1135 = vpop.f32.mrf.mxu0
    %1136 = vmatprep.mubr.f32.mxu0 0.0
    %1137 = vmatmul.mubr.f32.gmra.mxu0 %v975
    %v1138 = vpop.f32.mrf.mxu0
    %v1139 = vadd.f32 0.0, %v1138
    %v1140 = vpop.f32.mrf.mxu0
    %1141 = vmatprep.mubr.f32.mxu0 0.0
    %1142 = vmatmul.mubr.f32.gmra.mxu0 %v978
    %v1143 = vpop.f32.mrf.mxu0
    %v1144 = vadd.f32 0.0, %v1143
    %v1145 = vpop.f32.mrf.mxu0
    %1146 = vmatprep.mubr.f32.mxu0 0.0
    %1147 = vmatmul.mubr.f32.gmra.mxu0 %v981
    %v1148 = vpop.f32.mrf.mxu0
    %v1149 = vadd.f32 0.0, %v1148
    %v1150 = vpop.f32.mrf.mxu0
    %1151 = vmatprep.mubr.f32.mxu0 0.0
    %1152 = vmatmul.mubr.f32.gmra.mxu0 %v984
    %v1153 = vpop.f32.mrf.mxu0
    %v1154 = vadd.f32 0.0, %v1153
    %v1155 = vpop.f32.mrf.mxu0
    %1156 = vmatprep.mubr.f32.mxu0 0.0
    %1157 = vmatmul.mubr.f32.gmra.mxu0 %v987
    %v1158 = vpop.f32.mrf.mxu0
    %v1159 = vadd.f32 0.0, %v1158
    %v1160 = vpop.f32.mrf.mxu0
    %1161 = vmatprep.mubr.f32.mxu0 0.0
    %1162 = vmatmul.mubr.f32.gmra.mxu0 %v990
    %v1163 = vpop.f32.mrf.mxu0
    %v1164 = vadd.f32 0.0, %v1163
    %v1165 = vpop.f32.mrf.mxu0
    %1166 = vmatprep.mubr.f32.mxu0 0.0
    %1167 = vmatmul.mubr.f32.gmra.mxu0 %v993
    %v1168 = vpop.f32.mrf.mxu0
    %v1169 = vadd.f32 0.0, %v1168
    %v1170 = vpop.f32.mrf.mxu0
    %1171 = vmatprep.mubr.f32.mxu0 0.0
    %1172 = vmatmul.mubr.f32.gmra.mxu0 %v996
    %v1173 = vpop.f32.mrf.mxu0
    %v1174 = vadd.f32 0.0, %v1173
    %v1175 = vpop.f32.mrf.mxu0
    %1176 = vmatprep.mubr.f32.mxu0 0.0
    %1177 = vmatmul.mubr.f32.gmra.mxu0 %v999
    %v1178 = vpop.f32.mrf.mxu0
    %v1179 = vadd.f32 0.0, %v1178
    %v1180 = vpop.f32.mrf.mxu0
    %1181 = vmatprep.mubr.f32.mxu0 0.0
    %1182 = vmatmul.mubr.f32.gmra.mxu0 %v1002
    %v1183 = vpop.f32.mrf.mxu0
    %v1184 = vadd.f32 0.0, %v1183
    %v1185 = vpop.f32.mrf.mxu0
    %1186 = vmatprep.mubr.f32.mxu0 0.0
    %1187 = vmatmul.mubr.f32.gmra.mxu0 %v1005
    %v1188 = vpop.f32.mrf.mxu0
    %v1189 = vadd.f32 0.0, %v1188
    %v1190 = vpop.f32.mrf.mxu0
    %1191 = vmatprep.mubr.f32.mxu0 0.0
    %1192 = vmatmul.mubr.f32.gmra.mxu0 %v1008
    %v1193 = vpop.f32.mrf.mxu0
    %v1194 = vadd.f32 0.0, %v1193
    %v1195 = vpop.f32.mrf.mxu0
    %1196 = vmatprep.mubr.f32.mxu0 0.0
    %1197 = vmatmul.mubr.f32.gmra.mxu0 %v1011
    %v1198 = vpop.f32.mrf.mxu0
    %v1199 = vadd.f32 0.0, %v1198
    %v1200 = vpop.f32.mrf.mxu0
    %1201 = vmatprep.mubr.f32.mxu0 0.0
    %1202 = vmatmul.mubr.f32.gmra.mxu0 %v1014
    %v1203 = vpop.f32.mrf.mxu0
    %v1204 = vadd.f32 0.0, %v1203
    %v1205 = vpop.f32.mrf.mxu0
    %1206 = vmatprep.mubr.f32.mxu0 0.0
    %1207 = vmatmul.mubr.f32.gmra.mxu0 %v1017
    %v1208 = vpop.f32.mrf.mxu0
    %v1209 = vadd.f32 0.0, %v1208
    %v1210 = vpop.f32.mrf.mxu0
    %1211 = vmatprep.mubr.f32.mxu0 0.0
    %1212 = vmatmul.mubr.f32.gmra.mxu0 %v1020
    %v1213 = vpop.f32.mrf.mxu0
    %v1214 = vadd.f32 0.0, %v1213
    %v1215 = vpop.f32.mrf.mxu0
    %1216 = vmatprep.mubr.f32.mxu0 0.0
    %1217 = vmatmul.mubr.f32.gmra.mxu0 %v1023
    %v1218 = vpop.f32.mrf.mxu0
    %v1219 = vadd.f32 0.0, %v1218
    %v1220 = vpop.f32.mrf.mxu0
    %1221 = vmatprep.mubr.f32.mxu0 0.0
    %1222 = vmatmul.mubr.f32.gmra.mxu0 %v1026
    %v1223 = vpop.f32.mrf.mxu0
    %v1224 = vadd.f32 0.0, %v1223
    %v1225 = vpop.f32.mrf.mxu0
    %1226 = vmatprep.mubr.f32.mxu0 0.0
    %1227 = vmatmul.mubr.f32.gmra.mxu0 %v1029
    %v1228 = vpop.f32.mrf.mxu0
    %v1229 = vadd.f32 0.0, %v1228
    %v1230 = vpop.f32.mrf.mxu0
    %1231 = vmatprep.mubr.f32.mxu0 0.0
    %1232 = vmatmul.mubr.f32.gmra.mxu0 %v1032
    %v1233 = vpop.f32.mrf.mxu0
    %v1234 = vadd.f32 0.0, %v1233
    %v1235 = vpop.f32.mrf.mxu0
    %1236 = vmatprep.mubr.f32.mxu0 0.0
    %1237 = vmatmul.mubr.f32.gmra.mxu0 %v1035
    %v1238 = vpop.f32.mrf.mxu0
    %v1239 = vadd.f32 0.0, %v1238
    %v1240 = vpop.f32.mrf.mxu0
    %1241 = vmatprep.mubr.f32.mxu0 0.0
    %1242 = vmatmul.mubr.f32.gmra.mxu0 %v1038
    %v1243 = vpop.f32.mrf.mxu0
    %v1244 = vadd.f32 0.0, %v1243
    %v1245 = vpop.f32.mrf.mxu0
    %1246 = vmatprep.mubr.f32.mxu0 0.0
    %1247 = vmatmul.mubr.f32.gmra.mxu0 %v1041
    %v1248 = vpop.f32.mrf.mxu0
    %v1249 = vadd.f32 0.0, %v1248
    %v1250 = vpop.f32.mrf.mxu0
    %1251 = vmatprep.mubr.f32.mxu0 0.0
    %1252 = vmatmul.mubr.f32.gmra.mxu0 %v1044
    %v1253 = vpop.f32.mrf.mxu0
    %v1254 = vadd.f32 0.0, %v1253
    %v1255 = vpop.f32.mrf.mxu0
    %1256 = vmatprep.mubr.f32.mxu0 0.0
    %1257 = vmatmul.mubr.f32.gmra.mxu0 %v1047
    %v1258 = vpop.f32.mrf.mxu0
    %v1259 = vadd.f32 0.0, %v1258
    %v1260 = vpop.f32.mrf.mxu0
    %1261 = vmatprep.mubr.f32.mxu0 0.0
    %1262 = vmatmul.mubr.f32.gmra.mxu0 %v1050
    %v1263 = vpop.f32.mrf.mxu0
    %v1264 = vadd.f32 0.0, %v1263
    %v1265 = vpop.f32.mrf.mxu0
    %1266 = vmatprep.mubr.f32.mxu0 0.0
    %1267 = vmatmul.mubr.f32.gmra.mxu0 %v1053
    %v1268 = vpop.f32.mrf.mxu0
    %v1269 = vadd.f32 0.0, %v1268
    %v1270 = vpop.f32.mrf.mxu0
    %1271 = vmatprep.mubr.f32.mxu0 0.0
    %1272 = vmatmul.mubr.f32.gmra.mxu0 %v1056
    %v1273 = vpop.f32.mrf.mxu0
    %v1274 = vadd.f32 0.0, %v1273
    %v1275 = vpop.f32.mrf.mxu0
    %1276 = vmatprep.mubr.f32.mxu0 0.0
    %1277 = vmatmul.mubr.f32.gmra.mxu0 %v1059
    %v1278 = vpop.f32.mrf.mxu0
    %v1279 = vadd.f32 0.0, %v1278
    %v1280 = vpop.f32.mrf.mxu0
    %1281 = vmatprep.mubr.f32.mxu0 0.0
    %1282 = vmatmul.mubr.f32.gmra.mxu0 %v1062
    %v1283 = vpop.f32.mrf.mxu0
    %v1284 = vadd.f32 0.0, %v1283
    %v1285 = vpop.f32.mrf.mxu0
    %1286 = vmatprep.mubr.f32.mxu0 0.0
    %1287 = vmatmul.mubr.f32.gmra.mxu0 %v1065
    %v1288 = vpop.f32.mrf.mxu0
    %v1289 = vadd.f32 0.0, %v1288
    %v1290 = vpop.f32.mrf.mxu0
    %1291 = vdwg.mxu0
    %v1292 = vmul.f32 %v1134, %v56
    %v1293 = vmul.f32 %v1139, %v56
    %v1294 = vmul.f32 %v1144, %v56
    %v1295 = vmul.f32 %v1149, %v56
    %v1296 = vmul.f32 %v1154, %v56
    %v1297 = vmul.f32 %v1159, %v56
    %v1298 = vmul.f32 %v1164, %v56
    %v1299 = vmul.f32 %v1169, %v56
    %v1300 = vadd.f32 %v140, %v1292
    %v1301 = vadd.f32 %v141, %v1293
    %v1302 = vadd.f32 %v142, %v1294
    %v1303 = vadd.f32 %v143, %v1295
    %v1304 = vadd.f32 %v144, %v1296
    %v1305 = vadd.f32 %v145, %v1297
    %v1306 = vadd.f32 %v146, %v1298
    %v1307 = vadd.f32 %v147, %v1299
    %v1308 = vmul.f32 %v1174, %v61
    %v1309 = vmul.f32 %v1179, %v61
    %v1310 = vmul.f32 %v1184, %v61
    %v1311 = vmul.f32 %v1189, %v61
    %v1312 = vmul.f32 %v1194, %v61
    %v1313 = vmul.f32 %v1199, %v61
    %v1314 = vmul.f32 %v1204, %v61
    %v1315 = vmul.f32 %v1209, %v61
    %v1316 = vadd.f32 %v1300, %v1308
    %v1317 = vadd.f32 %v1301, %v1309
    %v1318 = vadd.f32 %v1302, %v1310
    %v1319 = vadd.f32 %v1303, %v1311
    %v1320 = vadd.f32 %v1304, %v1312
    %v1321 = vadd.f32 %v1305, %v1313
    %v1322 = vadd.f32 %v1306, %v1314
    %v1323 = vadd.f32 %v1307, %v1315
    %v1324 = vmul.f32 %v1214, %v66
    %v1325 = vmul.f32 %v1219, %v66
    %v1326 = vmul.f32 %v1224, %v66
    %v1327 = vmul.f32 %v1229, %v66
    %v1328 = vmul.f32 %v1234, %v66
    %v1329 = vmul.f32 %v1239, %v66
    %v1330 = vmul.f32 %v1244, %v66
    %v1331 = vmul.f32 %v1249, %v66
    %v1332 = vadd.f32 %v1316, %v1324
    %v1333 = vadd.f32 %v1317, %v1325
    %v1334 = vadd.f32 %v1318, %v1326
    %v1335 = vadd.f32 %v1319, %v1327
    %v1336 = vadd.f32 %v1320, %v1328
    %v1337 = vadd.f32 %v1321, %v1329
    %v1338 = vadd.f32 %v1322, %v1330
    %v1339 = vadd.f32 %v1323, %v1331
    %v1340 = vmul.f32 %v1254, %v71
    %v1341 = vmul.f32 %v1259, %v71
    %v1342 = vmul.f32 %v1264, %v71
    %v1343 = vmul.f32 %v1269, %v71
    %v1344 = vmul.f32 %v1274, %v71
    %v1345 = vmul.f32 %v1279, %v71
    %v1346 = vmul.f32 %v1284, %v71
    %v1347 = vmul.f32 %v1289, %v71
    %v1348 = vadd.f32 %v1332, %v1340
    %v1349 = vadd.f32 %v1333, %v1341
    %v1350 = vadd.f32 %v1334, %v1342
    %v1351 = vadd.f32 %v1335, %v1343
    %v1352 = vadd.f32 %v1336, %v1344
    %v1353 = vadd.f32 %v1337, %v1345
    %v1354 = vadd.f32 %v1338, %v1346
    %v1355 = vadd.f32 %v1339, %v1347
    %v1356 = vld [vmem:[#allocation2 + $0x8] sm:$0xf]
    %v1357 = vld [vmem:[#allocation2 + $0x18] sm:$0xf]
    %v1358 = vld [vmem:[#allocation2 + $0x28] sm:$0xf]
    %v1359 = vld [vmem:[#allocation2 + $0x38] sm:$0xf]
    %v1360 = vld [vmem:[#allocation2 + $0x48] sm:$0xf]
    %v1361 = vld [vmem:[#allocation2 + $0x58] sm:$0xf]
    %v1362 = vld [vmem:[#allocation2 + $0x68] sm:$0xf]
    %v1363 = vld [vmem:[#allocation2 + $0x78] sm:$0xf]
    %v1364 = vld [vmem:[#allocation2 + $0x88] sm:$0xf]
    %v1365 = vld [vmem:[#allocation2 + $0x98] sm:$0xf]
    %v1366 = vld [vmem:[#allocation2 + $0xa8] sm:$0xf]
    %v1367 = vld [vmem:[#allocation2 + $0xb8] sm:$0xf]
    %v1368 = vld [vmem:[#allocation2 + $0xc8] sm:$0xf]
    %v1369 = vld [vmem:[#allocation2 + $0xd8] sm:$0xf]
    %v1370 = vld [vmem:[#allocation2 + $0xe8] sm:$0xf]
    %v1371 = vld [vmem:[#allocation2 + $0xf8] sm:$0xf]
    %v1372 = vunpack.c.l.bf16 %v1356
    %v1373 = vunpack.c.l.bf16 %v1357
    %v1374 = vunpack.c.l.bf16 %v1358
    %v1375 = vunpack.c.l.bf16 %v1359
    %v1376 = vunpack.c.l.bf16 %v1360
    %v1377 = vunpack.c.l.bf16 %v1361
    %v1378 = vunpack.c.l.bf16 %v1362
    %v1379 = vunpack.c.l.bf16 %v1363
    %v1380 = vunpack.c.l.bf16 %v1364
    %v1381 = vunpack.c.l.bf16 %v1365
    %v1382 = vunpack.c.l.bf16 %v1366
    %v1383 = vunpack.c.l.bf16 %v1367
    %v1384 = vunpack.c.l.bf16 %v1368
    %v1385 = vunpack.c.l.bf16 %v1369
    %v1386 = vunpack.c.l.bf16 %v1370
    %v1387 = vunpack.c.l.bf16 %v1371
    %v1388 = vld [vmem:[%s9 + $0x2] sm:$0x1]
    %v1390 = vlaneseq
    %v1391 = vshrl.u32 %v1390, 7
    %v1392 = vsub.s32 0, %v1391
    %v1393 = vrot.slane %v1388, %v1392
    %1395 = vmatprep.subr.mxu0 0.0
    %1396 = vmatpush1.msra.mxu0 %v1387
    %1397 = vmatprep.subr.mxu0 0.0
    %1398 = vmatpush1.msra.mxu0 %v1386
    %1399 = vmatprep.subr.mxu0 0.0
    %1400 = vmatpush1.msra.mxu0 %v1385
    %1401 = vmatprep.subr.mxu0 0.0
    %1402 = vmatpush1.msra.mxu0 %v1384
    %1403 = vmatprep.subr.mxu0 0.0
    %1404 = vmatpush1.msra.mxu0 %v1383
    %1405 = vmatprep.subr.mxu0 0.0
    %1406 = vmatpush1.msra.mxu0 %v1382
    %1407 = vmatprep.subr.mxu0 0.0
    %1408 = vmatpush1.msra.mxu0 %v1381
    %1409 = vmatprep.subr.mxu0 0.0
    %1410 = vmatpush1.msra.mxu0 %v1380
    %1411 = vmatprep.subr.mxu0 0.0
    %1412 = vmatpush1.msra.mxu0 %v1379
    %1413 = vmatprep.subr.mxu0 0.0
    %1414 = vmatpush1.msra.mxu0 %v1378
    %1415 = vmatprep.subr.mxu0 0.0
    %1416 = vmatpush1.msra.mxu0 %v1377
    %1417 = vmatprep.subr.mxu0 0.0
    %1418 = vmatpush1.msra.mxu0 %v1376
    %1419 = vmatprep.subr.mxu0 0.0
    %1420 = vmatpush1.msra.mxu0 %v1375
    %1421 = vmatprep.subr.mxu0 0.0
    %1422 = vmatpush1.msra.mxu0 %v1374
    %1423 = vmatprep.subr.mxu0 0.0
    %1424 = vmatpush1.msra.mxu0 %v1373
    %1425 = vmatprep.subr.mxu0 0.0
    %1426 = vmatpush1.msra.mxu0 %v1372
    %1427 = vmatprep.subr.mxu0 0.0
    %1428 = vmatpush2.msra.mxu0 0.0
    %1429 = vmatprep.subr.mxu0 0.0
    %1430 = vmatpush2.msra.mxu0 0.0
    %1431 = vmatprep.subr.mxu0 0.0
    %1432 = vmatpush2.msra.mxu0 0.0
    %1433 = vmatprep.subr.mxu0 0.0
    %1434 = vmatpush2.msra.mxu0 0.0
    %1435 = vmatprep.subr.mxu0 0.0
    %1436 = vmatpush2.msra.mxu0 0.0
    %1437 = vmatprep.subr.mxu0 0.0
    %1438 = vmatpush2.msra.mxu0 0.0
    %1439 = vmatprep.subr.mxu0 0.0
    %1440 = vmatpush2.msra.mxu0 0.0
    %1441 = vmatprep.subr.mxu0 0.0
    %1442 = vmatpush2.msra.mxu0 0.0
    %1443 = vmatprep.subr.mxu0 0.0
    %1444 = vmatpush2.msra.mxu0 0.0
    %1445 = vmatprep.subr.mxu0 0.0
    %1446 = vmatpush2.msra.mxu0 0.0
    %1447 = vmatprep.subr.mxu0 0.0
    %1448 = vmatpush2.msra.mxu0 0.0
    %1449 = vmatprep.subr.mxu0 0.0
    %1450 = vmatpush2.msra.mxu0 0.0
    %1451 = vmatprep.subr.mxu0 0.0
    %1452 = vmatpush2.msra.mxu0 0.0
    %1453 = vmatprep.subr.mxu0 0.0
    %1454 = vmatpush2.msra.mxu0 0.0
    %1455 = vmatprep.subr.mxu0 0.0
    %1456 = vmatpush2.msra.mxu0 0.0
    %1457 = vmatprep.subr.mxu0 0.0
    %1458 = vmatpush2.msra.mxu0 0.0
    %1459 = vmatprep.mubr.f32.mxu0 0.0
    %1460 = vmatmul.mubr.f32.gmra.mxu0 %v1348
    %v1461 = vpop.f32.mrf.mxu0
    %v1462 = vadd.f32 %v1393, %v1461
    %v1463 = vpop.f32.mrf.mxu0
    %1464 = vmatprep.mubr.f32.mxu0 0.0
    %1465 = vmatmul.mubr.f32.gmra.mxu0 %v1349
    %v1466 = vpop.f32.mrf.mxu0
    %v1467 = vadd.f32 %v1393, %v1466
    %v1468 = vpop.f32.mrf.mxu0
    %1469 = vmatprep.mubr.f32.mxu0 0.0
    %1470 = vmatmul.mubr.f32.gmra.mxu0 %v1350
    %v1471 = vpop.f32.mrf.mxu0
    %v1472 = vadd.f32 %v1393, %v1471
    %v1473 = vpop.f32.mrf.mxu0
    %1474 = vmatprep.mubr.f32.mxu0 0.0
    %1475 = vmatmul.mubr.f32.gmra.mxu0 %v1351
    %v1476 = vpop.f32.mrf.mxu0
    %v1477 = vadd.f32 %v1393, %v1476
    %v1478 = vpop.f32.mrf.mxu0
    %1479 = vmatprep.mubr.f32.mxu0 0.0
    %1480 = vmatmul.mubr.f32.gmra.mxu0 %v1352
    %v1481 = vpop.f32.mrf.mxu0
    %v1482 = vadd.f32 %v1393, %v1481
    %v1483 = vpop.f32.mrf.mxu0
    %1484 = vmatprep.mubr.f32.mxu0 0.0
    %1485 = vmatmul.mubr.f32.gmra.mxu0 %v1353
    %v1486 = vpop.f32.mrf.mxu0
    %v1487 = vadd.f32 %v1393, %v1486
    %v1488 = vpop.f32.mrf.mxu0
    %1489 = vmatprep.mubr.f32.mxu0 0.0
    %1490 = vmatmul.mubr.f32.gmra.mxu0 %v1354
    %v1491 = vpop.f32.mrf.mxu0
    %v1492 = vadd.f32 %v1393, %v1491
    %v1493 = vpop.f32.mrf.mxu0
    %1494 = vmatprep.mubr.f32.mxu0 0.0
    %1495 = vmatmul.mubr.f32.gmra.mxu0 %v1355
    %v1496 = vpop.f32.mrf.mxu0
    %v1497 = vadd.f32 %v1393, %v1496
    %v1498 = vpop.f32.mrf.mxu0
    %1499 = vdwg.mxu0
    %v1500 = vmax.f32 %v1462, 0.0
    %v1501 = vmax.f32 %v1467, 0.0
    %v1502 = vmax.f32 %v1472, 0.0
    %v1503 = vmax.f32 %v1477, 0.0
    %v1504 = vmax.f32 %v1482, 0.0
    %v1505 = vmax.f32 %v1487, 0.0
    %v1506 = vmax.f32 %v1492, 0.0
    %v1507 = vmax.f32 %v1497, 0.0
    %v1508 = vadd.f32 %v1348, %v1500
    %v1509 = vadd.f32 %v1349, %v1501
    %v1510 = vadd.f32 %v1350, %v1502
    %v1511 = vadd.f32 %v1351, %v1503
    %v1512 = vadd.f32 %v1352, %v1504
    %v1513 = vadd.f32 %v1353, %v1505
    %v1514 = vadd.f32 %v1354, %v1506
    %v1515 = vadd.f32 %v1355, %v1507
    %s1516 = scalar_lea.vmem [#allocation2], 256
    %v1517 = vld [vmem:[%s1516] sm:$0xf]
    %v1518 = vld [vmem:[%s1516 + $0x10] sm:$0xf]
    %v1519 = vld [vmem:[%s1516 + $0x20] sm:$0xf]
    %v1520 = vld [vmem:[%s1516 + $0x30] sm:$0xf]
    %v1521 = vld [vmem:[%s1516 + $0x40] sm:$0xf]
    %v1522 = vld [vmem:[%s1516 + $0x50] sm:$0xf]
    %v1523 = vld [vmem:[%s1516 + $0x60] sm:$0xf]
    %v1524 = vld [vmem:[%s1516 + $0x70] sm:$0xf]
    %v1525 = vld [vmem:[%s1516 + $0x80] sm:$0xf]
    %v1526 = vld [vmem:[%s1516 + $0x90] sm:$0xf]
    %v1527 = vld [vmem:[%s1516 + $0xa0] sm:$0xf]
    %v1528 = vld [vmem:[%s1516 + $0xb0] sm:$0xf]
    %v1529 = vld [vmem:[%s1516 + $0xc0] sm:$0xf]
    %v1530 = vld [vmem:[%s1516 + $0xd0] sm:$0xf]
    %v1531 = vld [vmem:[%s1516 + $0xe0] sm:$0xf]
    %v1532 = vld [vmem:[%s1516 + $0xf0] sm:$0xf]
    %v1533 = vunpack.c.l.bf16 %v1517
    %v1534 = vunpack.c.l.bf16 %v1518
    %v1535 = vunpack.c.l.bf16 %v1519
    %v1536 = vunpack.c.l.bf16 %v1520
    %v1537 = vunpack.c.l.bf16 %v1521
    %v1538 = vunpack.c.l.bf16 %v1522
    %v1539 = vunpack.c.l.bf16 %v1523
    %v1540 = vunpack.c.l.bf16 %v1524
    %v1541 = vunpack.c.l.bf16 %v1525
    %v1542 = vunpack.c.l.bf16 %v1526
    %v1543 = vunpack.c.l.bf16 %v1527
    %v1544 = vunpack.c.l.bf16 %v1528
    %v1545 = vunpack.c.l.bf16 %v1529
    %v1546 = vunpack.c.l.bf16 %v1530
    %v1547 = vunpack.c.l.bf16 %v1531
    %v1548 = vunpack.c.l.bf16 %v1532
    %s1549 = scalar_lea.vmem %s9, 4
    %v1550 = vld [vmem:[%s1549] sm:$0x1]
    %v1552 = vlaneseq
    %v1553 = vshrl.u32 %v1552, 7
    %v1554 = vsub.s32 0, %v1553
    %v1555 = vrot.slane %v1550, %v1554
    %1557 = vmatprep.subr.mxu0 0.0
    %1558 = vmatpush1.msra.mxu0 %v1548
    %1559 = vmatprep.subr.mxu0 0.0
    %1560 = vmatpush1.msra.mxu0 %v1547
    %1561 = vmatprep.subr.mxu0 0.0
    %1562 = vmatpush1.msra.mxu0 %v1546
    %1563 = vmatprep.subr.mxu0 0.0
    %1564 = vmatpush1.msra.mxu0 %v1545
    %1565 = vmatprep.subr.mxu0 0.0
    %1566 = vmatpush1.msra.mxu0 %v1544
    %1567 = vmatprep.subr.mxu0 0.0
    %1568 = vmatpush1.msra.mxu0 %v1543
    %1569 = vmatprep.subr.mxu0 0.0
    %1570 = vmatpush1.msra.mxu0 %v1542
    %1571 = vmatprep.subr.mxu0 0.0
    %1572 = vmatpush1.msra.mxu0 %v1541
    %1573 = vmatprep.subr.mxu0 0.0
    %1574 = vmatpush1.msra.mxu0 %v1540
    %1575 = vmatprep.subr.mxu0 0.0
    %1576 = vmatpush1.msra.mxu0 %v1539
    %1577 = vmatprep.subr.mxu0 0.0
    %1578 = vmatpush1.msra.mxu0 %v1538
    %1579 = vmatprep.subr.mxu0 0.0
    %1580 = vmatpush1.msra.mxu0 %v1537
    %1581 = vmatprep.subr.mxu0 0.0
    %1582 = vmatpush1.msra.mxu0 %v1536
    %1583 = vmatprep.subr.mxu0 0.0
    %1584 = vmatpush1.msra.mxu0 %v1535
    %1585 = vmatprep.subr.mxu0 0.0
    %1586 = vmatpush1.msra.mxu0 %v1534
    %1587 = vmatprep.subr.mxu0 0.0
    %1588 = vmatpush1.msra.mxu0 %v1533
    %1589 = vmatprep.subr.mxu0 0.0
    %1590 = vmatpush2.msra.mxu0 0.0
    %1591 = vmatprep.subr.mxu0 0.0
    %1592 = vmatpush2.msra.mxu0 0.0
    %1593 = vmatprep.subr.mxu0 0.0
    %1594 = vmatpush2.msra.mxu0 0.0
    %1595 = vmatprep.subr.mxu0 0.0
    %1596 = vmatpush2.msra.mxu0 0.0
    %1597 = vmatprep.subr.mxu0 0.0
    %1598 = vmatpush2.msra.mxu0 0.0
    %1599 = vmatprep.subr.mxu0 0.0
    %1600 = vmatpush2.msra.mxu0 0.0
    %1601 = vmatprep.subr.mxu0 0.0
    %1602 = vmatpush2.msra.mxu0 0.0
    %1603 = vmatprep.subr.mxu0 0.0
    %1604 = vmatpush2.msra.mxu0 0.0
    %1605 = vmatprep.subr.mxu0 0.0
    %1606 = vmatpush2.msra.mxu0 0.0
    %1607 = vmatprep.subr.mxu0 0.0
    %1608 = vmatpush2.msra.mxu0 0.0
    %1609 = vmatprep.subr.mxu0 0.0
    %1610 = vmatpush2.msra.mxu0 0.0
    %1611 = vmatprep.subr.mxu0 0.0
    %1612 = vmatpush2.msra.mxu0 0.0
    %1613 = vmatprep.subr.mxu0 0.0
    %1614 = vmatpush2.msra.mxu0 0.0
    %1615 = vmatprep.subr.mxu0 0.0
    %1616 = vmatpush2.msra.mxu0 0.0
    %1617 = vmatprep.subr.mxu0 0.0
    %1618 = vmatpush2.msra.mxu0 0.0
    %1619 = vmatprep.subr.mxu0 0.0
    %1620 = vmatpush2.msra.mxu0 0.0
    %1621 = vmatprep.mubr.f32.mxu0 0.0
    %1622 = vmatmul.mubr.f32.gmra.mxu0 %v72
    %v1623 = vpop.f32.mrf.mxu0
    %v1624 = vadd.f32 %v1555, %v1623
    %v1625 = vpop.f32.mrf.mxu0
    %1626 = vmatprep.mubr.f32.mxu0 0.0
    %1627 = vmatmul.mubr.f32.gmra.mxu0 %v73
    %v1628 = vpop.f32.mrf.mxu0
    %v1629 = vadd.f32 %v1555, %v1628
    %v1630 = vpop.f32.mrf.mxu0
    %1631 = vmatprep.mubr.f32.mxu0 0.0
    %1632 = vmatmul.mubr.f32.gmra.mxu0 %v74
    %v1633 = vpop.f32.mrf.mxu0
    %v1634 = vadd.f32 %v1555, %v1633
    %v1635 = vpop.f32.mrf.mxu0
    %1636 = vmatprep.mubr.f32.mxu0 0.0
    %1637 = vmatmul.mubr.f32.gmra.mxu0 %v75
    %v1638 = vpop.f32.mrf.mxu0
    %v1639 = vadd.f32 %v1555, %v1638
    %v1640 = vpop.f32.mrf.mxu0
    %1641 = vdwg.mxu0
    %v1642 = vld [vmem:[%s1516 + $0x4] sm:$0xff]
    %v1643 = vld [vmem:[%s1516 + $0x14] sm:$0xff]
    %v1644 = vld [vmem:[%s1516 + $0x24] sm:$0xff]
    %v1645 = vld [vmem:[%s1516 + $0x34] sm:$0xff]
    %v1646 = vld [vmem:[%s1516 + $0x44] sm:$0xff]
    %v1647 = vld [vmem:[%s1516 + $0x54] sm:$0xff]
    %v1648 = vld [vmem:[%s1516 + $0x64] sm:$0xff]
    %v1649 = vld [vmem:[%s1516 + $0x74] sm:$0xff]
    %v1650 = vld [vmem:[%s1516 + $0x84] sm:$0xff]
    %v1651 = vld [vmem:[%s1516 + $0x94] sm:$0xff]
    %v1652 = vld [vmem:[%s1516 + $0xa4] sm:$0xff]
    %v1653 = vld [vmem:[%s1516 + $0xb4] sm:$0xff]
    %v1654 = vld [vmem:[%s1516 + $0xc4] sm:$0xff]
    %v1655 = vld [vmem:[%s1516 + $0xd4] sm:$0xff]
    %v1656 = vld [vmem:[%s1516 + $0xe4] sm:$0xff]
    %v1657 = vld [vmem:[%s1516 + $0xf4] sm:$0xff]
    %v1658 = vunpack.c.l.bf16 %v1642
    %v1659 = vunpack.c.h.bf16 %v1642
    %v1660 = vunpack.c.l.bf16 %v1643
    %v1661 = vunpack.c.h.bf16 %v1643
    %v1662 = vunpack.c.l.bf16 %v1644
    %v1663 = vunpack.c.h.bf16 %v1644
    %v1664 = vunpack.c.l.bf16 %v1645
    %v1665 = vunpack.c.h.bf16 %v1645
    %v1666 = vunpack.c.l.bf16 %v1646
    %v1667 = vunpack.c.h.bf16 %v1646
    %v1668 = vunpack.c.l.bf16 %v1647
    %v1669 = vunpack.c.h.bf16 %v1647
    %v1670 = vunpack.c.l.bf16 %v1648
    %v1671 = vunpack.c.h.bf16 %v1648
    %v1672 = vunpack.c.l.bf16 %v1649
    %v1673 = vunpack.c.h.bf16 %v1649
    %v1674 = vunpack.c.l.bf16 %v1650
    %v1675 = vunpack.c.h.bf16 %v1650
    %v1676 = vunpack.c.l.bf16 %v1651
    %v1677 = vunpack.c.h.bf16 %v1651
    %v1678 = vunpack.c.l.bf16 %v1652
    %v1679 = vunpack.c.h.bf16 %v1652
    %v1680 = vunpack.c.l.bf16 %v1653
    %v1681 = vunpack.c.h.bf16 %v1653
    %v1682 = vunpack.c.l.bf16 %v1654
    %v1683 = vunpack.c.h.bf16 %v1654
    %v1684 = vunpack.c.l.bf16 %v1655
    %v1685 = vunpack.c.h.bf16 %v1655
    %v1686 = vunpack.c.l.bf16 %v1656
    %v1687 = vunpack.c.h.bf16 %v1656
    %v1688 = vunpack.c.l.bf16 %v1657
    %v1689 = vunpack.c.h.bf16 %v1657
    %v1690 = vld [vmem:[%s1549 + $0x1] sm:$0x3]
    %v1692 = vlaneseq
    %v1693 = vshrl.u32 %v1692, 7
    %v1694 = vsub.s32 0, %v1693
    %v1695 = vrot.slane %v1690, %v1694
    %v1696 = vlaneseq
    %v1697 = vshrl.u32 %v1696, 7
    %v1698 = vsub.s32 1, %v1697
    %v1699 = vrot.slane %v1690, %v1698
    %1702 = vmatprep.subr.mxu0 %v1689
    %1703 = vmatpush1.msra.mxu0 %v1688
    %1704 = vmatprep.subr.mxu0 %v1687
    %1705 = vmatpush1.msra.mxu0 %v1686
    %1706 = vmatprep.subr.mxu0 %v1685
    %1707 = vmatpush1.msra.mxu0 %v1684
    %1708 = vmatprep.subr.mxu0 %v1683
    %1709 = vmatpush1.msra.mxu0 %v1682
    %1710 = vmatprep.subr.mxu0 %v1681
    %1711 = vmatpush1.msra.mxu0 %v1680
    %1712 = vmatprep.subr.mxu0 %v1679
    %1713 = vmatpush1.msra.mxu0 %v1678
    %1714 = vmatprep.subr.mxu0 %v1677
    %1715 = vmatpush1.msra.mxu0 %v1676
    %1716 = vmatprep.subr.mxu0 %v1675
    %1717 = vmatpush1.msra.mxu0 %v1674
    %1718 = vmatprep.subr.mxu0 %v1673
    %1719 = vmatpush1.msra.mxu0 %v1672
    %1720 = vmatprep.subr.mxu0 %v1671
    %1721 = vmatpush1.msra.mxu0 %v1670
    %1722 = vmatprep.subr.mxu0 %v1669
    %1723 = vmatpush1.msra.mxu0 %v1668
    %1724 = vmatprep.subr.mxu0 %v1667
    %1725 = vmatpush1.msra.mxu0 %v1666
    %1726 = vmatprep.subr.mxu0 %v1665
    %1727 = vmatpush1.msra.mxu0 %v1664
    %1728 = vmatprep.subr.mxu0 %v1663
    %1729 = vmatpush1.msra.mxu0 %v1662
    %1730 = vmatprep.subr.mxu0 %v1661
    %1731 = vmatpush1.msra.mxu0 %v1660
    %1732 = vmatprep.subr.mxu0 %v1659
    %1733 = vmatpush1.msra.mxu0 %v1658
    %1734 = vmatprep.subr.mxu0 0.0
    %1735 = vmatpush2.msra.mxu0 0.0
    %1736 = vmatprep.subr.mxu0 0.0
    %1737 = vmatpush2.msra.mxu0 0.0
    %1738 = vmatprep.subr.mxu0 0.0
    %1739 = vmatpush2.msra.mxu0 0.0
    %1740 = vmatprep.subr.mxu0 0.0
    %1741 = vmatpush2.msra.mxu0 0.0
    %1742 = vmatprep.subr.mxu0 0.0
    %1743 = vmatpush2.msra.mxu0 0.0
    %1744 = vmatprep.subr.mxu0 0.0
    %1745 = vmatpush2.msra.mxu0 0.0
    %1746 = vmatprep.subr.mxu0 0.0
    %1747 = vmatpush2.msra.mxu0 0.0
    %1748 = vmatprep.subr.mxu0 0.0
    %1749 = vmatpush2.msra.mxu0 0.0
    %1750 = vmatprep.subr.mxu0 0.0
    %1751 = vmatpush2.msra.mxu0 0.0
    %1752 = vmatprep.subr.mxu0 0.0
    %1753 = vmatpush2.msra.mxu0 0.0
    %1754 = vmatprep.subr.mxu0 0.0
    %1755 = vmatpush2.msra.mxu0 0.0
    %1756 = vmatprep.subr.mxu0 0.0
    %1757 = vmatpush2.msra.mxu0 0.0
    %1758 = vmatprep.subr.mxu0 0.0
    %1759 = vmatpush2.msra.mxu0 0.0
    %1760 = vmatprep.subr.mxu0 0.0
    %1761 = vmatpush2.msra.mxu0 0.0
    %1762 = vmatprep.subr.mxu0 0.0
    %1763 = vmatpush2.msra.mxu0 0.0
    %1764 = vmatprep.subr.mxu0 0.0
    %1765 = vmatpush2.msra.mxu0 0.0
    %1766 = vmatprep.mubr.f32.mxu0 0.0
    %1767 = vmatmul.mubr.f32.gmra.mxu0 %v1508
    %v1768 = vpop.f32.mrf.mxu0
    %v1769 = vadd.f32 %v1695, %v1768
    %v1770 = vpop.f32.mrf.mxu0
    %v1771 = vadd.f32 %v1699, %v1770
    %1772 = vmatprep.mubr.f32.mxu0 0.0
    %1773 = vmatmul.mubr.f32.gmra.mxu0 %v1509
    %v1774 = vpop.f32.mrf.mxu0
    %v1775 = vadd.f32 %v1695, %v1774
    %v1776 = vpop.f32.mrf.mxu0
    %v1777 = vadd.f32 %v1699, %v1776
    %1778 = vmatprep.mubr.f32.mxu0 0.0
    %1779 = vmatmul.mubr.f32.gmra.mxu0 %v1510
    %v1780 = vpop.f32.mrf.mxu0
    %v1781 = vadd.f32 %v1695, %v1780
    %v1782 = vpop.f32.mrf.mxu0
    %v1783 = vadd.f32 %v1699, %v1782
    %1784 = vmatprep.mubr.f32.mxu0 0.0
    %1785 = vmatmul.mubr.f32.gmra.mxu0 %v1511
    %v1786 = vpop.f32.mrf.mxu0
    %v1787 = vadd.f32 %v1695, %v1786
    %v1788 = vpop.f32.mrf.mxu0
    %v1789 = vadd.f32 %v1699, %v1788
    %1790 = vmatprep.mubr.f32.mxu0 0.0
    %1791 = vmatmul.mubr.f32.gmra.mxu0 %v1512
    %v1792 = vpop.f32.mrf.mxu0
    %v1793 = vadd.f32 %v1695, %v1792
    %v1794 = vpop.f32.mrf.mxu0
    %v1795 = vadd.f32 %v1699, %v1794
    %1796 = vmatprep.mubr.f32.mxu0 0.0
    %1797 = vmatmul.mubr.f32.gmra.mxu0 %v1513
    %v1798 = vpop.f32.mrf.mxu0
    %v1799 = vadd.f32 %v1695, %v1798
    %v1800 = vpop.f32.mrf.mxu0
    %v1801 = vadd.f32 %v1699, %v1800
    %1802 = vmatprep.mubr.f32.mxu0 0.0
    %1803 = vmatmul.mubr.f32.gmra.mxu0 %v1514
    %v1804 = vpop.f32.mrf.mxu0
    %v1805 = vadd.f32 %v1695, %v1804
    %v1806 = vpop.f32.mrf.mxu0
    %v1807 = vadd.f32 %v1699, %v1806
    %1808 = vmatprep.mubr.f32.mxu0 0.0
    %1809 = vmatmul.mubr.f32.gmra.mxu0 %v1515
    %v1810 = vpop.f32.mrf.mxu0
    %v1811 = vadd.f32 %v1695, %v1810
    %v1812 = vpop.f32.mrf.mxu0
    %v1813 = vadd.f32 %v1699, %v1812
    %1814 = vdwg.mxu0
    %v1815 = vmul.f32 %v1624, %v56
    %v1816 = vmul.f32 %v1629, %v56
    %v1817 = vmul.f32 %v1634, %v56
    %v1818 = vmul.f32 %v1639, %v56
    %v1819 = vmul.f32 %v1624, %v61
    %v1820 = vmul.f32 %v1629, %v61
    %v1821 = vmul.f32 %v1634, %v61
    %v1822 = vmul.f32 %v1639, %v61
    %v1823 = vmul.f32 %v1624, %v66
    %v1824 = vmul.f32 %v1629, %v66
    %v1825 = vmul.f32 %v1634, %v66
    %v1826 = vmul.f32 %v1639, %v66
    %v1827 = vmul.f32 %v1624, %v71
    %v1828 = vmul.f32 %v1629, %v71
    %v1829 = vmul.f32 %v1634, %v71
    %v1830 = vmul.f32 %v1639, %v71
    %1831 = vmatprep.subr.mxu0 0.0
    %1832 = vmatpush1.xpose.msra.mxu0 0.0
    %1833 = vmatprep.subr.mxu0 0.0
    %1834 = vmatpush1.xpose.msra.mxu0 0.0
    %1835 = vmatprep.subr.mxu0 0.0
    %1836 = vmatpush1.xpose.msra.mxu0 0.0
    %1837 = vmatprep.subr.mxu0 0.0
    %1838 = vmatpush1.xpose.msra.mxu0 0.0
    %1839 = vmatprep.subr.mxu0 0.0
    %1840 = vmatpush1.xpose.msra.mxu0 0.0
    %1841 = vmatprep.subr.mxu0 0.0
    %1842 = vmatpush1.xpose.msra.mxu0 0.0
    %1843 = vmatprep.subr.mxu0 0.0
    %1844 = vmatpush1.xpose.msra.mxu0 0.0
    %1845 = vmatprep.subr.mxu0 0.0
    %1846 = vmatpush1.xpose.msra.mxu0 0.0
    %1847 = vmatprep.subr.mxu0 0.0
    %1848 = vmatpush1.xpose.msra.mxu0 %v1811
    %1849 = vmatprep.subr.mxu0 0.0
    %1850 = vmatpush1.xpose.msra.mxu0 %v1805
    %1851 = vmatprep.subr.mxu0 0.0
    %1852 = vmatpush1.xpose.msra.mxu0 %v1799
    %1853 = vmatprep.subr.mxu0 0.0
    %1854 = vmatpush1.xpose.msra.mxu0 %v1793
    %1855 = vmatprep.subr.mxu0 0.0
    %1856 = vmatpush1.xpose.msra.mxu0 %v1787
    %1857 = vmatprep.subr.mxu0 0.0
    %1858 = vmatpush1.xpose.msra.mxu0 %v1781
    %1859 = vmatprep.subr.mxu0 0.0
    %1860 = vmatpush1.xpose.msra.mxu0 %v1775
    %1861 = vmatprep.subr.mxu0 0.0
    %1862 = vmatpush1.xpose.msra.mxu0 %v1769
    %1863 = vmatprep.subr.mxu0 0.0
    %1864 = vmatpush2.xpose.msra.mxu0 0.0
    %1865 = vmatprep.subr.mxu0 0.0
    %1866 = vmatpush2.xpose.msra.mxu0 0.0
    %1867 = vmatprep.subr.mxu0 0.0
    %1868 = vmatpush2.xpose.msra.mxu0 0.0
    %1869 = vmatprep.subr.mxu0 0.0
    %1870 = vmatpush2.xpose.msra.mxu0 0.0
    %1871 = vmatprep.subr.mxu0 0.0
    %1872 = vmatpush2.xpose.msra.mxu0 0.0
    %1873 = vmatprep.subr.mxu0 0.0
    %1874 = vmatpush2.xpose.msra.mxu0 0.0
    %1875 = vmatprep.subr.mxu0 0.0
    %1876 = vmatpush2.xpose.msra.mxu0 0.0
    %1877 = vmatprep.subr.mxu0 0.0
    %1878 = vmatpush2.xpose.msra.mxu0 0.0
    %1879 = vmatprep.subr.mxu0 0.0
    %1880 = vmatpush2.xpose.msra.mxu0 0.0
    %1881 = vmatprep.subr.mxu0 0.0
    %1882 = vmatpush2.xpose.msra.mxu0 0.0
    %1883 = vmatprep.subr.mxu0 0.0
    %1884 = vmatpush2.xpose.msra.mxu0 0.0
    %1885 = vmatprep.subr.mxu0 0.0
    %1886 = vmatpush2.xpose.msra.mxu0 0.0
    %1887 = vmatprep.subr.mxu0 0.0
    %1888 = vmatpush2.xpose.msra.mxu0 0.0
    %1889 = vmatprep.subr.mxu0 0.0
    %1890 = vmatpush2.xpose.msra.mxu0 0.0
    %1891 = vmatprep.subr.mxu0 0.0
    %1892 = vmatpush2.xpose.msra.mxu0 0.0
    %1893 = vmatprep.subr.mxu0 0.0
    %1894 = vmatpush2.xpose.msra.mxu0 0.0
    %1895 = vmatprep.mubr.f32.mxu0 0.0
    %1896 = vmatmul.mubr.f32.gmra.mxu0 %v1815
    %v1897 = vpop.f32.mrf.mxu0
    %v1898 = vadd.f32 0.0, %v1897
    %v1899 = vpop.f32.mrf.mxu0
    %1900 = vmatprep.mubr.f32.mxu0 0.0
    %1901 = vmatmul.mubr.f32.gmra.mxu0 %v1816
    %v1902 = vpop.f32.mrf.mxu0
    %v1903 = vadd.f32 0.0, %v1902
    %v1904 = vpop.f32.mrf.mxu0
    %1905 = vmatprep.mubr.f32.mxu0 0.0
    %1906 = vmatmul.mubr.f32.gmra.mxu0 %v1817
    %v1907 = vpop.f32.mrf.mxu0
    %v1908 = vadd.f32 0.0, %v1907
    %v1909 = vpop.f32.mrf.mxu0
    %1910 = vmatprep.mubr.f32.mxu0 0.0
    %1911 = vmatmul.mubr.f32.gmra.mxu0 %v1818
    %v1912 = vpop.f32.mrf.mxu0
    %v1913 = vadd.f32 0.0, %v1912
    %v1914 = vpop.f32.mrf.mxu0
    %1915 = vmatprep.mubr.f32.mxu0 0.0
    %1916 = vmatmul.mubr.f32.gmra.mxu0 %v1819
    %v1917 = vpop.f32.mrf.mxu0
    %v1918 = vadd.f32 0.0, %v1917
    %v1919 = vpop.f32.mrf.mxu0
    %1920 = vmatprep.mubr.f32.mxu0 0.0
    %1921 = vmatmul.mubr.f32.gmra.mxu0 %v1820
    %v1922 = vpop.f32.mrf.mxu0
    %v1923 = vadd.f32 0.0, %v1922
    %v1924 = vpop.f32.mrf.mxu0
    %1925 = vmatprep.mubr.f32.mxu0 0.0
    %1926 = vmatmul.mubr.f32.gmra.mxu0 %v1821
    %v1927 = vpop.f32.mrf.mxu0
    %v1928 = vadd.f32 0.0, %v1927
    %v1929 = vpop.f32.mrf.mxu0
    %1930 = vmatprep.mubr.f32.mxu0 0.0
    %1931 = vmatmul.mubr.f32.gmra.mxu0 %v1822
    %v1932 = vpop.f32.mrf.mxu0
    %v1933 = vadd.f32 0.0, %v1932
    %v1934 = vpop.f32.mrf.mxu0
    %1935 = vmatprep.mubr.f32.mxu0 0.0
    %1936 = vmatmul.mubr.f32.gmra.mxu0 %v1823
    %v1937 = vpop.f32.mrf.mxu0
    %v1938 = vadd.f32 0.0, %v1937
    %v1939 = vpop.f32.mrf.mxu0
    %1940 = vmatprep.mubr.f32.mxu0 0.0
    %1941 = vmatmul.mubr.f32.gmra.mxu0 %v1824
    %v1942 = vpop.f32.mrf.mxu0
    %v1943 = vadd.f32 0.0, %v1942
    %v1944 = vpop.f32.mrf.mxu0
    %1945 = vmatprep.mubr.f32.mxu0 0.0
    %1946 = vmatmul.mubr.f32.gmra.mxu0 %v1825
    %v1947 = vpop.f32.mrf.mxu0
    %v1948 = vadd.f32 0.0, %v1947
    %v1949 = vpop.f32.mrf.mxu0
    %1950 = vmatprep.mubr.f32.mxu0 0.0
    %1951 = vmatmul.mubr.f32.gmra.mxu0 %v1826
    %v1952 = vpop.f32.mrf.mxu0
    %v1953 = vadd.f32 0.0, %v1952
    %v1954 = vpop.f32.mrf.mxu0
    %1955 = vmatprep.mubr.f32.mxu0 0.0
    %1956 = vmatmul.mubr.f32.gmra.mxu0 %v1827
    %v1957 = vpop.f32.mrf.mxu0
    %v1958 = vadd.f32 0.0, %v1957
    %v1959 = vpop.f32.mrf.mxu0
    %1960 = vmatprep.mubr.f32.mxu0 0.0
    %1961 = vmatmul.mubr.f32.gmra.mxu0 %v1828
    %v1962 = vpop.f32.mrf.mxu0
    %v1963 = vadd.f32 0.0, %v1962
    %v1964 = vpop.f32.mrf.mxu0
    %1965 = vmatprep.mubr.f32.mxu0 0.0
    %1966 = vmatmul.mubr.f32.gmra.mxu0 %v1829
    %v1967 = vpop.f32.mrf.mxu0
    %v1968 = vadd.f32 0.0, %v1967
    %v1969 = vpop.f32.mrf.mxu0
    %1970 = vmatprep.mubr.f32.mxu0 0.0
    %1971 = vmatmul.mubr.f32.gmra.mxu0 %v1830
    %v1972 = vpop.f32.mrf.mxu0
    %v1973 = vadd.f32 0.0, %v1972
    %v1974 = vpop.f32.mrf.mxu0
    %1975 = vdwg.mxu0
    %v1976 = vmul.f32 %v1898, 0.088388346
    %v1977 = vmul.f32 %v1903, 0.088388346
    %v1978 = vmul.f32 %v1908, 0.088388346
    %v1979 = vmul.f32 %v1913, 0.088388346
    %v1980 = vmul.f32 %v1918, 0.088388346
    %v1981 = vmul.f32 %v1923, 0.088388346
    %v1982 = vmul.f32 %v1928, 0.088388346
    %v1983 = vmul.f32 %v1933, 0.088388346
    %v1984 = vmul.f32 %v1938, 0.088388346
    %v1985 = vmul.f32 %v1943, 0.088388346
    %v1986 = vmul.f32 %v1948, 0.088388346
    %v1987 = vmul.f32 %v1953, 0.088388346
    %v1988 = vmul.f32 %v1958, 0.088388346
    %v1989 = vmul.f32 %v1963, 0.088388346
    %v1990 = vmul.f32 %v1968, 0.088388346
    %v1991 = vmul.f32 %v1973, 0.088388346
    %v1992 = vadd.f32 %v1976, %v108
    %v1993 = vadd.f32 %v1977, %v109
    %v1994 = vadd.f32 %v1978, %v110
    %v1995 = vadd.f32 %v1979, %v111
    %v1996 = vadd.f32 %v1980, %v112
    %v1997 = vadd.f32 %v1981, %v113
    %v1998 = vadd.f32 %v1982, %v114
    %v1999 = vadd.f32 %v1983, %v115
    %v2000 = vadd.f32 %v1984, %v116
    %v2001 = vadd.f32 %v1985, %v117
    %v2002 = vadd.f32 %v1986, %v118
    %v2003 = vadd.f32 %v1987, %v119
    %v2004 = vadd.f32 %v1988, %v120
    %v2005 = vadd.f32 %v1989, %v121
    %v2006 = vadd.f32 %v1990, %v122
    %v2007 = vadd.f32 %v1991, %v123
    %vm2008 = vcmask 523264
    %v2009 = vsel %vm2008, %v1992, -inf
    %2010 = vmax.xlane.f32.xlu0 %v2009
    %v2011 = vpop.xlane.xlu0 %2010
    %v2012 = vsel %vm2008, %v1993, -inf
    %2013 = vmax.xlane.f32.xlu0 %v2012
    %v2014 = vpop.xlane.xlu0 %2013
    %v2015 = vsel %vm2008, %v1994, -inf
    %2016 = vmax.xlane.f32.xlu0 %v2015
    %v2017 = vpop.xlane.xlu0 %2016
    %v2018 = vsel %vm2008, %v1995, -inf
    %2019 = vmax.xlane.f32.xlu0 %v2018
    %v2020 = vpop.xlane.xlu0 %2019
    %v2021 = vsel %vm2008, %v1996, -inf
    %2022 = vmax.xlane.f32.xlu0 %v2021
    %v2023 = vpop.xlane.xlu0 %2022
    %v2024 = vsel %vm2008, %v1997, -inf
    %2025 = vmax.xlane.f32.xlu0 %v2024
    %v2026 = vpop.xlane.xlu0 %2025
    %v2027 = vsel %vm2008, %v1998, -inf
    %2028 = vmax.xlane.f32.xlu0 %v2027
    %v2029 = vpop.xlane.xlu0 %2028
    %v2030 = vsel %vm2008, %v1999, -inf
    %2031 = vmax.xlane.f32.xlu0 %v2030
    %v2032 = vpop.xlane.xlu0 %2031
    %v2033 = vsel %vm2008, %v2000, -inf
    %2034 = vmax.xlane.f32.xlu0 %v2033
    %v2035 = vpop.xlane.xlu0 %2034
    %v2036 = vsel %vm2008, %v2001, -inf
    %2037 = vmax.xlane.f32.xlu0 %v2036
    %v2038 = vpop.xlane.xlu0 %2037
    %v2039 = vsel %vm2008, %v2002, -inf
    %2040 = vmax.xlane.f32.xlu0 %v2039
    %v2041 = vpop.xlane.xlu0 %2040
    %v2042 = vsel %vm2008, %v2003, -inf
    %2043 = vmax.xlane.f32.xlu0 %v2042
    %v2044 = vpop.xlane.xlu0 %2043
    %v2045 = vsel %vm2008, %v2004, -inf
    %2046 = vmax.xlane.f32.xlu0 %v2045
    %v2047 = vpop.xlane.xlu0 %2046
    %v2048 = vsel %vm2008, %v2005, -inf
    %2049 = vmax.xlane.f32.xlu0 %v2048
    %v2050 = vpop.xlane.xlu0 %2049
    %v2051 = vsel %vm2008, %v2006, -inf
    %2052 = vmax.xlane.f32.xlu0 %v2051
    %v2053 = vpop.xlane.xlu0 %2052
    %v2054 = vsel %vm2008, %v2007, -inf
    %2055 = vmax.xlane.f32.xlu0 %v2054
    %v2056 = vpop.xlane.xlu0 %2055
    %v2057 = vsub.f32 %v1992, %v2011
    %v2058 = vsub.f32 %v1993, %v2014
    %v2059 = vsub.f32 %v1994, %v2017
    %v2060 = vsub.f32 %v1995, %v2020
    %v2061 = vsub.f32 %v1996, %v2023
    %v2062 = vsub.f32 %v1997, %v2026
    %v2063 = vsub.f32 %v1998, %v2029
    %v2064 = vsub.f32 %v1999, %v2032
    %v2065 = vsub.f32 %v2000, %v2035
    %v2066 = vsub.f32 %v2001, %v2038
    %v2067 = vsub.f32 %v2002, %v2041
    %v2068 = vsub.f32 %v2003, %v2044
    %v2069 = vsub.f32 %v2004, %v2047
    %v2070 = vsub.f32 %v2005, %v2050
    %v2071 = vsub.f32 %v2006, %v2053
    %v2072 = vsub.f32 %v2007, %v2056
    %v2073 = vmul.f32 %v2057, 1.442695
    %v2074 = vpow.pop %v2073
    %v2075 = vmul.f32 %v2058, 1.442695
    %v2076 = vpow.pop %v2075
    %v2077 = vmul.f32 %v2059, 1.442695
    %v2078 = vpow.pop %v2077
    %v2079 = vmul.f32 %v2060, 1.442695
    %v2080 = vpow.pop %v2079
    %v2081 = vmul.f32 %v2061, 1.442695
    %v2082 = vpow.pop %v2081
    %v2083 = vmul.f32 %v2062, 1.442695
    %v2084 = vpow.pop %v2083
    %v2085 = vmul.f32 %v2063, 1.442695
    %v2086 = vpow.pop %v2085
    %v2087 = vmul.f32 %v2064, 1.442695
    %v2088 = vpow.pop %v2087
    %v2089 = vmul.f32 %v2065, 1.442695
    %v2090 = vpow.pop %v2089
    %v2091 = vmul.f32 %v2066, 1.442695
    %v2092 = vpow.pop %v2091
    %v2093 = vmul.f32 %v2067, 1.442695
    %v2094 = vpow.pop %v2093
    %v2095 = vmul.f32 %v2068, 1.442695
    %v2096 = vpow.pop %v2095
    %v2097 = vmul.f32 %v2069, 1.442695
    %v2098 = vpow.pop %v2097
    %v2099 = vmul.f32 %v2070, 1.442695
    %v2100 = vpow.pop %v2099
    %v2101 = vmul.f32 %v2071, 1.442695
    %v2102 = vpow.pop %v2101
    %v2103 = vmul.f32 %v2072, 1.442695
    %v2104 = vpow.pop %v2103
    %v2105 = vsel %vm2008, %v2074, 0.0
    %2106 = vadd.xlane.f32.xlu0 %v2105
    %v2107 = vpop.xlane.xlu0 %2106
    %v2108 = vsel %vm2008, %v2076, 0.0
    %2109 = vadd.xlane.f32.xlu0 %v2108
    %v2110 = vpop.xlane.xlu0 %2109
    %v2111 = vsel %vm2008, %v2078, 0.0
    %2112 = vadd.xlane.f32.xlu0 %v2111
    %v2113 = vpop.xlane.xlu0 %2112
    %v2114 = vsel %vm2008, %v2080, 0.0
    %2115 = vadd.xlane.f32.xlu0 %v2114
    %v2116 = vpop.xlane.xlu0 %2115
    %v2117 = vsel %vm2008, %v2082, 0.0
    %2118 = vadd.xlane.f32.xlu0 %v2117
    %v2119 = vpop.xlane.xlu0 %2118
    %v2120 = vsel %vm2008, %v2084, 0.0
    %2121 = vadd.xlane.f32.xlu0 %v2120
    %v2122 = vpop.xlane.xlu0 %2121
    %v2123 = vsel %vm2008, %v2086, 0.0
    %2124 = vadd.xlane.f32.xlu0 %v2123
    %v2125 = vpop.xlane.xlu0 %2124
    %v2126 = vsel %vm2008, %v2088, 0.0
    %2127 = vadd.xlane.f32.xlu0 %v2126
    %v2128 = vpop.xlane.xlu0 %2127
    %v2129 = vsel %vm2008, %v2090, 0.0
    %2130 = vadd.xlane.f32.xlu0 %v2129
    %v2131 = vpop.xlane.xlu0 %2130
    %v2132 = vsel %vm2008, %v2092, 0.0
    %2133 = vadd.xlane.f32.xlu0 %v2132
    %v2134 = vpop.xlane.xlu0 %2133
    %v2135 = vsel %vm2008, %v2094, 0.0
    %2136 = vadd.xlane.f32.xlu0 %v2135
    %v2137 = vpop.xlane.xlu0 %2136
    %v2138 = vsel %vm2008, %v2096, 0.0
    %2139 = vadd.xlane.f32.xlu0 %v2138
    %v2140 = vpop.xlane.xlu0 %2139
    %v2141 = vsel %vm2008, %v2098, 0.0
    %2142 = vadd.xlane.f32.xlu0 %v2141
    %v2143 = vpop.xlane.xlu0 %2142
    %v2144 = vsel %vm2008, %v2100, 0.0
    %2145 = vadd.xlane.f32.xlu0 %v2144
    %v2146 = vpop.xlane.xlu0 %2145
    %v2147 = vsel %vm2008, %v2102, 0.0
    %2148 = vadd.xlane.f32.xlu0 %v2147
    %v2149 = vpop.xlane.xlu0 %2148
    %v2150 = vsel %vm2008, %v2104, 0.0
    %2151 = vadd.xlane.f32.xlu0 %v2150
    %v2152 = vpop.xlane.xlu0 %2151
    %v2153 = vrcp.pop %v2107
    %v2154 = vmul.f32 %v2074, %v2153
    %v2155 = vrcp.pop %v2110
    %v2156 = vmul.f32 %v2076, %v2155
    %v2157 = vrcp.pop %v2113
    %v2158 = vmul.f32 %v2078, %v2157
    %v2159 = vrcp.pop %v2116
    %v2160 = vmul.f32 %v2080, %v2159
    %v2161 = vrcp.pop %v2119
    %v2162 = vmul.f32 %v2082, %v2161
    %v2163 = vrcp.pop %v2122
    %v2164 = vmul.f32 %v2084, %v2163
    %v2165 = vrcp.pop %v2125
    %v2166 = vmul.f32 %v2086, %v2165
    %v2167 = vrcp.pop %v2128
    %v2168 = vmul.f32 %v2088, %v2167
    %v2169 = vrcp.pop %v2131
    %v2170 = vmul.f32 %v2090, %v2169
    %v2171 = vrcp.pop %v2134
    %v2172 = vmul.f32 %v2092, %v2171
    %v2173 = vrcp.pop %v2137
    %v2174 = vmul.f32 %v2094, %v2173
    %v2175 = vrcp.pop %v2140
    %v2176 = vmul.f32 %v2096, %v2175
    %v2177 = vrcp.pop %v2143
    %v2178 = vmul.f32 %v2098, %v2177
    %v2179 = vrcp.pop %v2146
    %v2180 = vmul.f32 %v2100, %v2179
    %v2181 = vrcp.pop %v2149
    %v2182 = vmul.f32 %v2102, %v2181
    %v2183 = vrcp.pop %v2152
    %v2184 = vmul.f32 %v2104, %v2183
    %v2186 = vsel %vm2008, %v2154, 0
    %v2189 = vsel %vm2008, %v2156, 0
    %v2192 = vsel %vm2008, %v2158, 0
    %v2195 = vsel %vm2008, %v2160, 0
    %v2198 = vsel %vm2008, %v2162, 0
    %v2201 = vsel %vm2008, %v2164, 0
    %v2204 = vsel %vm2008, %v2166, 0
    %v2207 = vsel %vm2008, %v2168, 0
    %v2210 = vsel %vm2008, %v2170, 0
    %v2213 = vsel %vm2008, %v2172, 0
    %v2216 = vsel %vm2008, %v2174, 0
    %v2219 = vsel %vm2008, %v2176, 0
    %v2222 = vsel %vm2008, %v2178, 0
    %v2225 = vsel %vm2008, %v2180, 0
    %v2228 = vsel %vm2008, %v2182, 0
    %v2231 = vsel %vm2008, %v2184, 0
    %2233 = vmatprep.subr.mxu0 0.0
    %2234 = vmatpush1.msra.mxu0 0.0
    %2235 = vmatprep.subr.mxu0 0.0
    %2236 = vmatpush1.msra.mxu0 0.0
    %2237 = vmatprep.subr.mxu0 0.0
    %2238 = vmatpush1.msra.mxu0 0.0
    %2239 = vmatprep.subr.mxu0 0.0
    %2240 = vmatpush1.msra.mxu0 0.0
    %2241 = vmatprep.subr.mxu0 0.0
    %2242 = vmatpush1.msra.mxu0 0.0
    %2243 = vmatprep.subr.mxu0 0.0
    %2244 = vmatpush1.msra.mxu0 0.0
    %2245 = vmatprep.subr.mxu0 0.0
    %2246 = vmatpush1.msra.mxu0 0.0
    %2247 = vmatprep.subr.mxu0 0.0
    %2248 = vmatpush1.msra.mxu0 0.0
    %2249 = vmatprep.subr.mxu0 0.0
    %2250 = vmatpush1.msra.mxu0 %v1813
    %2251 = vmatprep.subr.mxu0 0.0
    %2252 = vmatpush1.msra.mxu0 %v1807
    %2253 = vmatprep.subr.mxu0 0.0
    %2254 = vmatpush1.msra.mxu0 %v1801
    %2255 = vmatprep.subr.mxu0 0.0
    %2256 = vmatpush1.msra.mxu0 %v1795
    %2257 = vmatprep.subr.mxu0 0.0
    %2258 = vmatpush1.msra.mxu0 %v1789
    %2259 = vmatprep.subr.mxu0 0.0
    %2260 = vmatpush1.msra.mxu0 %v1783
    %2261 = vmatprep.subr.mxu0 0.0
    %2262 = vmatpush1.msra.mxu0 %v1777
    %2263 = vmatprep.subr.mxu0 0.0
    %2264 = vmatpush1.msra.mxu0 %v1771
    %2265 = vmatprep.subr.mxu0 0.0
    %2266 = vmatpush2.msra.mxu0 0.0
    %2267 = vmatprep.subr.mxu0 0.0
    %2268 = vmatpush2.msra.mxu0 0.0
    %2269 = vmatprep.subr.mxu0 0.0
    %2270 = vmatpush2.msra.mxu0 0.0
    %2271 = vmatprep.subr.mxu0 0.0
    %2272 = vmatpush2.msra.mxu0 0.0
    %2273 = vmatprep.subr.mxu0 0.0
    %2274 = vmatpush2.msra.mxu0 0.0
    %2275 = vmatprep.subr.mxu0 0.0
    %2276 = vmatpush2.msra.mxu0 0.0
    %2277 = vmatprep.subr.mxu0 0.0
    %2278 = vmatpush2.msra.mxu0 0.0
    %2279 = vmatprep.subr.mxu0 0.0
    %2280 = vmatpush2.msra.mxu0 0.0
    %2281 = vmatprep.subr.mxu0 0.0
    %2282 = vmatpush2.msra.mxu0 0.0
    %2283 = vmatprep.subr.mxu0 0.0
    %2284 = vmatpush2.msra.mxu0 0.0
    %2285 = vmatprep.subr.mxu0 0.0
    %2286 = vmatpush2.msra.mxu0 0.0
    %2287 = vmatprep.subr.mxu0 0.0
    %2288 = vmatpush2.msra.mxu0 0.0
    %2289 = vmatprep.subr.mxu0 0.0
    %2290 = vmatpush2.msra.mxu0 0.0
    %2291 = vmatprep.subr.mxu0 0.0
    %2292 = vmatpush2.msra.mxu0 0.0
    %2293 = vmatprep.subr.mxu0 0.0
    %2294 = vmatpush2.msra.mxu0 0.0
    %2295 = vmatprep.subr.mxu0 0.0
    %2296 = vmatpush2.msra.mxu0 0.0
    %2297 = vmatprep.mubr.f32.mxu0 0.0
    %2298 = vmatmul.mubr.f32.gmra.mxu0 %v2186
    %v2299 = vpop.f32.mrf.mxu0
    %v2300 = vadd.f32 0.0, %v2299
    %v2301 = vpop.f32.mrf.mxu0
    %2302 = vmatprep.mubr.f32.mxu0 0.0
    %2303 = vmatmul.mubr.f32.gmra.mxu0 %v2189
    %v2304 = vpop.f32.mrf.mxu0
    %v2305 = vadd.f32 0.0, %v2304
    %v2306 = vpop.f32.mrf.mxu0
    %2307 = vmatprep.mubr.f32.mxu0 0.0
    %2308 = vmatmul.mubr.f32.gmra.mxu0 %v2192
    %v2309 = vpop.f32.mrf.mxu0
    %v2310 = vadd.f32 0.0, %v2309
    %v2311 = vpop.f32.mrf.mxu0
    %2312 = vmatprep.mubr.f32.mxu0 0.0
    %2313 = vmatmul.mubr.f32.gmra.mxu0 %v2195
    %v2314 = vpop.f32.mrf.mxu0
    %v2315 = vadd.f32 0.0, %v2314
    %v2316 = vpop.f32.mrf.mxu0
    %2317 = vmatprep.mubr.f32.mxu0 0.0
    %2318 = vmatmul.mubr.f32.gmra.mxu0 %v2198
    %v2319 = vpop.f32.mrf.mxu0
    %v2320 = vadd.f32 0.0, %v2319
    %v2321 = vpop.f32.mrf.mxu0
    %2322 = vmatprep.mubr.f32.mxu0 0.0
    %2323 = vmatmul.mubr.f32.gmra.mxu0 %v2201
    %v2324 = vpop.f32.mrf.mxu0
    %v2325 = vadd.f32 0.0, %v2324
    %v2326 = vpop.f32.mrf.mxu0
    %2327 = vmatprep.mubr.f32.mxu0 0.0
    %2328 = vmatmul.mubr.f32.gmra.mxu0 %v2204
    %v2329 = vpop.f32.mrf.mxu0
    %v2330 = vadd.f32 0.0, %v2329
    %v2331 = vpop.f32.mrf.mxu0
    %2332 = vmatprep.mubr.f32.mxu0 0.0
    %2333 = vmatmul.mubr.f32.gmra.mxu0 %v2207
    %v2334 = vpop.f32.mrf.mxu0
    %v2335 = vadd.f32 0.0, %v2334
    %v2336 = vpop.f32.mrf.mxu0
    %2337 = vmatprep.mubr.f32.mxu0 0.0
    %2338 = vmatmul.mubr.f32.gmra.mxu0 %v2210
    %v2339 = vpop.f32.mrf.mxu0
    %v2340 = vadd.f32 0.0, %v2339
    %v2341 = vpop.f32.mrf.mxu0
    %2342 = vmatprep.mubr.f32.mxu0 0.0
    %2343 = vmatmul.mubr.f32.gmra.mxu0 %v2213
    %v2344 = vpop.f32.mrf.mxu0
    %v2345 = vadd.f32 0.0, %v2344
    %v2346 = vpop.f32.mrf.mxu0
    %2347 = vmatprep.mubr.f32.mxu0 0.0
    %2348 = vmatmul.mubr.f32.gmra.mxu0 %v2216
    %v2349 = vpop.f32.mrf.mxu0
    %v2350 = vadd.f32 0.0, %v2349
    %v2351 = vpop.f32.mrf.mxu0
    %2352 = vmatprep.mubr.f32.mxu0 0.0
    %2353 = vmatmul.mubr.f32.gmra.mxu0 %v2219
    %v2354 = vpop.f32.mrf.mxu0
    %v2355 = vadd.f32 0.0, %v2354
    %v2356 = vpop.f32.mrf.mxu0
    %2357 = vmatprep.mubr.f32.mxu0 0.0
    %2358 = vmatmul.mubr.f32.gmra.mxu0 %v2222
    %v2359 = vpop.f32.mrf.mxu0
    %v2360 = vadd.f32 0.0, %v2359
    %v2361 = vpop.f32.mrf.mxu0
    %2362 = vmatprep.mubr.f32.mxu0 0.0
    %2363 = vmatmul.mubr.f32.gmra.mxu0 %v2225
    %v2364 = vpop.f32.mrf.mxu0
    %v2365 = vadd.f32 0.0, %v2364
    %v2366 = vpop.f32.mrf.mxu0
    %2367 = vmatprep.mubr.f32.mxu0 0.0
    %2368 = vmatmul.mubr.f32.gmra.mxu0 %v2228
    %v2369 = vpop.f32.mrf.mxu0
    %v2370 = vadd.f32 0.0, %v2369
    %v2371 = vpop.f32.mrf.mxu0
    %2372 = vmatprep.mubr.f32.mxu0 0.0
    %2373 = vmatmul.mubr.f32.gmra.mxu0 %v2231
    %v2374 = vpop.f32.mrf.mxu0
    %v2375 = vadd.f32 0.0, %v2374
    %v2376 = vpop.f32.mrf.mxu0
    %2377 = vdwg.mxu0
    %v2378 = vmul.f32 %v2300, %v56
    %v2379 = vmul.f32 %v2305, %v56
    %v2380 = vmul.f32 %v2310, %v56
    %v2381 = vmul.f32 %v2315, %v56
    %v2382 = vadd.f32 %v1624, %v2378
    %v2383 = vadd.f32 %v1629, %v2379
    %v2384 = vadd.f32 %v1634, %v2380
    %v2385 = vadd.f32 %v1639, %v2381
    %v2386 = vmul.f32 %v2320, %v61
    %v2387 = vmul.f32 %v2325, %v61
    %v2388 = vmul.f32 %v2330, %v61
    %v2389 = vmul.f32 %v2335, %v61
    %v2390 = vadd.f32 %v2382, %v2386
    %v2391 = vadd.f32 %v2383, %v2387
    %v2392 = vadd.f32 %v2384, %v2388
    %v2393 = vadd.f32 %v2385, %v2389
    %v2394 = vmul.f32 %v2340, %v66
    %v2395 = vmul.f32 %v2345, %v66
    %v2396 = vmul.f32 %v2350, %v66
    %v2397 = vmul.f32 %v2355, %v66
    %v2398 = vadd.f32 %v2390, %v2394
    %v2399 = vadd.f32 %v2391, %v2395
    %v2400 = vadd.f32 %v2392, %v2396
    %v2401 = vadd.f32 %v2393, %v2397
    %v2402 = vmul.f32 %v2360, %v71
    %v2403 = vmul.f32 %v2365, %v71
    %v2404 = vmul.f32 %v2370, %v71
    %v2405 = vmul.f32 %v2375, %v71
    %v2406 = vadd.f32 %v2398, %v2402
    %v2407 = vadd.f32 %v2399, %v2403
    %v2408 = vadd.f32 %v2400, %v2404
    %v2409 = vadd.f32 %v2401, %v2405
    %v2410 = vld [vmem:[%s1516 + $0xc] sm:$0xf]
    %v2411 = vld [vmem:[%s1516 + $0x1c] sm:$0xf]
    %v2412 = vld [vmem:[%s1516 + $0x2c] sm:$0xf]
    %v2413 = vld [vmem:[%s1516 + $0x3c] sm:$0xf]
    %v2414 = vld [vmem:[%s1516 + $0x4c] sm:$0xf]
    %v2415 = vld [vmem:[%s1516 + $0x5c] sm:$0xf]
    %v2416 = vld [vmem:[%s1516 + $0x6c] sm:$0xf]
    %v2417 = vld [vmem:[%s1516 + $0x7c] sm:$0xf]
    %v2418 = vld [vmem:[%s1516 + $0x8c] sm:$0xf]
    %v2419 = vld [vmem:[%s1516 + $0x9c] sm:$0xf]
    %v2420 = vld [vmem:[%s1516 + $0xac] sm:$0xf]
    %v2421 = vld [vmem:[%s1516 + $0xbc] sm:$0xf]
    %v2422 = vld [vmem:[%s1516 + $0xcc] sm:$0xf]
    %v2423 = vld [vmem:[%s1516 + $0xdc] sm:$0xf]
    %v2424 = vld [vmem:[%s1516 + $0xec] sm:$0xf]
    %v2425 = vld [vmem:[%s1516 + $0xfc] sm:$0xf]
    %v2426 = vunpack.c.l.bf16 %v2410
    %v2427 = vunpack.c.l.bf16 %v2411
    %v2428 = vunpack.c.l.bf16 %v2412
    %v2429 = vunpack.c.l.bf16 %v2413
    %v2430 = vunpack.c.l.bf16 %v2414
    %v2431 = vunpack.c.l.bf16 %v2415
    %v2432 = vunpack.c.l.bf16 %v2416
    %v2433 = vunpack.c.l.bf16 %v2417
    %v2434 = vunpack.c.l.bf16 %v2418
    %v2435 = vunpack.c.l.bf16 %v2419
    %v2436 = vunpack.c.l.bf16 %v2420
    %v2437 = vunpack.c.l.bf16 %v2421
    %v2438 = vunpack.c.l.bf16 %v2422
    %v2439 = vunpack.c.l.bf16 %v2423
    %v2440 = vunpack.c.l.bf16 %v2424
    %v2441 = vunpack.c.l.bf16 %v2425
    %v2442 = vld [vmem:[%s1549 + $0x3] sm:$0x1]
    %v2444 = vlaneseq
    %v2445 = vshrl.u32 %v2444, 7
    %v2446 = vsub.s32 0, %v2445
    %v2447 = vrot.slane %v2442, %v2446
    %2449 = vmatprep.subr.mxu0 0.0
    %2450 = vmatpush1.msra.mxu0 %v2441
    %2451 = vmatprep.subr.mxu0 0.0
    %2452 = vmatpush1.msra.mxu0 %v2440
    %2453 = vmatprep.subr.mxu0 0.0
    %2454 = vmatpush1.msra.mxu0 %v2439
    %2455 = vmatprep.subr.mxu0 0.0
    %2456 = vmatpush1.msra.mxu0 %v2438
    %2457 = vmatprep.subr.mxu0 0.0
    %2458 = vmatpush1.msra.mxu0 %v2437
    %2459 = vmatprep.subr.mxu0 0.0
    %2460 = vmatpush1.msra.mxu0 %v2436
    %2461 = vmatprep.subr.mxu0 0.0
    %2462 = vmatpush1.msra.mxu0 %v2435
    %2463 = vmatprep.subr.mxu0 0.0
    %2464 = vmatpush1.msra.mxu0 %v2434
    %2465 = vmatprep.subr.mxu0 0.0
    %2466 = vmatpush1.msra.mxu0 %v2433
    %2467 = vmatprep.subr.mxu0 0.0
    %2468 = vmatpush1.msra.mxu0 %v2432
    %2469 = vmatprep.subr.mxu0 0.0
    %2470 = vmatpush1.msra.mxu0 %v2431
    %2471 = vmatprep.subr.mxu0 0.0
    %2472 = vmatpush1.msra.mxu0 %v2430
    %2473 = vmatprep.subr.mxu0 0.0
    %2474 = vmatpush1.msra.mxu0 %v2429
    %2475 = vmatprep.subr.mxu0 0.0
    %2476 = vmatpush1.msra.mxu0 %v2428
    %2477 = vmatprep.subr.mxu0 0.0
    %2478 = vmatpush1.msra.mxu0 %v2427
    %2479 = vmatprep.subr.mxu0 0.0
    %2480 = vmatpush1.msra.mxu0 %v2426
    %2481 = vmatprep.subr.mxu0 0.0
    %2482 = vmatpush2.msra.mxu0 0.0
    %2483 = vmatprep.subr.mxu0 0.0
    %2484 = vmatpush2.msra.mxu0 0.0
    %2485 = vmatprep.subr.mxu0 0.0
    %2486 = vmatpush2.msra.mxu0 0.0
    %2487 = vmatprep.subr.mxu0 0.0
    %2488 = vmatpush2.msra.mxu0 0.0
    %2489 = vmatprep.subr.mxu0 0.0
    %2490 = vmatpush2.msra.mxu0 0.0
    %2491 = vmatprep.subr.mxu0 0.0
    %2492 = vmatpush2.msra.mxu0 0.0
    %2493 = vmatprep.subr.mxu0 0.0
    %2494 = vmatpush2.msra.mxu0 0.0
    %2495 = vmatprep.subr.mxu0 0.0
    %2496 = vmatpush2.msra.mxu0 0.0
    %2497 = vmatprep.subr.mxu0 0.0
    %2498 = vmatpush2.msra.mxu0 0.0
    %2499 = vmatprep.subr.mxu0 0.0
    %2500 = vmatpush2.msra.mxu0 0.0
    %2501 = vmatprep.subr.mxu0 0.0
    %2502 = vmatpush2.msra.mxu0 0.0
    %2503 = vmatprep.subr.mxu0 0.0
    %2504 = vmatpush2.msra.mxu0 0.0
    %2505 = vmatprep.subr.mxu0 0.0
    %2506 = vmatpush2.msra.mxu0 0.0
    %2507 = vmatprep.subr.mxu0 0.0
    %2508 = vmatpush2.msra.mxu0 0.0
    %2509 = vmatprep.subr.mxu0 0.0
    %2510 = vmatpush2.msra.mxu0 0.0
    %2511 = vmatprep.subr.mxu0 0.0
    %2512 = vmatpush2.msra.mxu0 0.0
    %2513 = vmatprep.mubr.f32.mxu0 0.0
    %2514 = vmatmul.mubr.f32.gmra.mxu0 %v2406
    %v2515 = vpop.f32.mrf.mxu0
    %v2516 = vadd.f32 %v2447, %v2515
    %v2517 = vpop.f32.mrf.mxu0
    %2518 = vmatprep.mubr.f32.mxu0 0.0
    %2519 = vmatmul.mubr.f32.gmra.mxu0 %v2407
    %v2520 = vpop.f32.mrf.mxu0
    %v2521 = vadd.f32 %v2447, %v2520
    %v2522 = vpop.f32.mrf.mxu0
    %2523 = vmatprep.mubr.f32.mxu0 0.0
    %2524 = vmatmul.mubr.f32.gmra.mxu0 %v2408
    %v2525 = vpop.f32.mrf.mxu0
    %v2526 = vadd.f32 %v2447, %v2525
    %v2527 = vpop.f32.mrf.mxu0
    %2528 = vmatprep.mubr.f32.mxu0 0.0
    %2529 = vmatmul.mubr.f32.gmra.mxu0 %v2409
    %v2530 = vpop.f32.mrf.mxu0
    %v2531 = vadd.f32 %v2447, %v2530
    %v2532 = vpop.f32.mrf.mxu0
    %2533 = vdwg.mxu0
    %v2534 = vmax.f32 %v2516, 0.0
    %v2535 = vmax.f32 %v2521, 0.0
    %v2536 = vmax.f32 %v2526, 0.0
    %v2537 = vmax.f32 %v2531, 0.0
    %v2538 = vadd.f32 %v2406, %v2534
    %v2539 = vadd.f32 %v2407, %v2535
    %v2540 = vadd.f32 %v2408, %v2536
    %v2541 = vadd.f32 %v2409, %v2537
    %v2542 = vld [vmem:[%s2] sm:$0xff]
    %v2543 = vld [vmem:[%s2 + $0x8] sm:$0xff]
    %v2544 = vld [vmem:[%s2 + $0x10] sm:$0xff]
    %v2545 = vld [vmem:[%s2 + $0x18] sm:$0xff]
    %v2546 = vld [vmem:[%s2 + $0x20] sm:$0xff]
    %v2547 = vld [vmem:[%s2 + $0x28] sm:$0xff]
    %v2548 = vld [vmem:[%s2 + $0x30] sm:$0xff]
    %v2549 = vld [vmem:[%s2 + $0x38] sm:$0xff]
    %s2550 = scalar_lea.vmem [#allocation2], 512
    %v2551 = vld [vmem:[%s2550] sm:$0xff]
    %v2552 = vld [vmem:[%s2550 + $0x10] sm:$0xff]
    %v2553 = vld [vmem:[%s2550 + $0x20] sm:$0xff]
    %v2554 = vld [vmem:[%s2550 + $0x30] sm:$0xff]
    %v2555 = vld [vmem:[%s2550 + $0x40] sm:$0xff]
    %v2556 = vld [vmem:[%s2550 + $0x50] sm:$0xff]
    %v2557 = vld [vmem:[%s2550 + $0x60] sm:$0xff]
    %v2558 = vld [vmem:[%s2550 + $0x70] sm:$0xff]
    %v2559 = vld [vmem:[%s2550 + $0x80] sm:$0xff]
    %v2560 = vld [vmem:[%s2550 + $0x90] sm:$0xff]
    %v2561 = vld [vmem:[%s2550 + $0xa0] sm:$0xff]
    %v2562 = vld [vmem:[%s2550 + $0xb0] sm:$0xff]
    %v2563 = vld [vmem:[%s2550 + $0xc0] sm:$0xff]
    %v2564 = vld [vmem:[%s2550 + $0xd0] sm:$0xff]
    %v2565 = vld [vmem:[%s2550 + $0xe0] sm:$0xff]
    %v2566 = vld [vmem:[%s2550 + $0xf0] sm:$0xff]
    %v2567 = vunpack.c.l.bf16 %v2551
    %v2568 = vunpack.c.h.bf16 %v2551
    %v2569 = vunpack.c.l.bf16 %v2552
    %v2570 = vunpack.c.h.bf16 %v2552
    %v2571 = vunpack.c.l.bf16 %v2553
    %v2572 = vunpack.c.h.bf16 %v2553
    %v2573 = vunpack.c.l.bf16 %v2554
    %v2574 = vunpack.c.h.bf16 %v2554
    %v2575 = vunpack.c.l.bf16 %v2555
    %v2576 = vunpack.c.h.bf16 %v2555
    %v2577 = vunpack.c.l.bf16 %v2556
    %v2578 = vunpack.c.h.bf16 %v2556
    %v2579 = vunpack.c.l.bf16 %v2557
    %v2580 = vunpack.c.h.bf16 %v2557
    %v2581 = vunpack.c.l.bf16 %v2558
    %v2582 = vunpack.c.h.bf16 %v2558
    %v2583 = vunpack.c.l.bf16 %v2559
    %v2584 = vunpack.c.h.bf16 %v2559
    %v2585 = vunpack.c.l.bf16 %v2560
    %v2586 = vunpack.c.h.bf16 %v2560
    %v2587 = vunpack.c.l.bf16 %v2561
    %v2588 = vunpack.c.h.bf16 %v2561
    %v2589 = vunpack.c.l.bf16 %v2562
    %v2590 = vunpack.c.h.bf16 %v2562
    %v2591 = vunpack.c.l.bf16 %v2563
    %v2592 = vunpack.c.h.bf16 %v2563
    %v2593 = vunpack.c.l.bf16 %v2564
    %v2594 = vunpack.c.h.bf16 %v2564
    %v2595 = vunpack.c.l.bf16 %v2565
    %v2596 = vunpack.c.h.bf16 %v2565
    %v2597 = vunpack.c.l.bf16 %v2566
    %v2598 = vunpack.c.h.bf16 %v2566
    %s2599 = scalar_lea.vmem %s9, 8
    %v2600 = vld [vmem:[%s2599] sm:$0x3]
    %v2602 = vlaneseq
    %v2603 = vshrl.u32 %v2602, 7
    %v2604 = vsub.s32 0, %v2603
    %v2605 = vrot.slane %v2600, %v2604
    %v2606 = vlaneseq
    %v2607 = vshrl.u32 %v2606, 7
    %v2608 = vsub.s32 1, %v2607
    %v2609 = vrot.slane %v2600, %v2608
    %2612 = vmatprep.subr.mxu0 %v2598
    %2613 = vmatpush1.msra.mxu0 %v2597
    %2614 = vmatprep.subr.mxu0 %v2596
    %2615 = vmatpush1.msra.mxu0 %v2595
    %2616 = vmatprep.subr.mxu0 %v2594
    %2617 = vmatpush1.msra.mxu0 %v2593
    %2618 = vmatprep.subr.mxu0 %v2592
    %2619 = vmatpush1.msra.mxu0 %v2591
    %2620 = vmatprep.subr.mxu0 %v2590
    %2621 = vmatpush1.msra.mxu0 %v2589
    %2622 = vmatprep.subr.mxu0 %v2588
    %2623 = vmatpush1.msra.mxu0 %v2587
    %2624 = vmatprep.subr.mxu0 %v2586
    %2625 = vmatpush1.msra.mxu0 %v2585
    %2626 = vmatprep.subr.mxu0 %v2584
    %2627 = vmatpush1.msra.mxu0 %v2583
    %2628 = vmatprep.subr.mxu0 %v2582
    %2629 = vmatpush1.msra.mxu0 %v2581
    %2630 = vmatprep.subr.mxu0 %v2580
    %2631 = vmatpush1.msra.mxu0 %v2579
    %2632 = vmatprep.subr.mxu0 %v2578
    %2633 = vmatpush1.msra.mxu0 %v2577
    %2634 = vmatprep.subr.mxu0 %v2576
    %2635 = vmatpush1.msra.mxu0 %v2575
    %2636 = vmatprep.subr.mxu0 %v2574
    %2637 = vmatpush1.msra.mxu0 %v2573
    %2638 = vmatprep.subr.mxu0 %v2572
    %2639 = vmatpush1.msra.mxu0 %v2571
    %2640 = vmatprep.subr.mxu0 %v2570
    %2641 = vmatpush1.msra.mxu0 %v2569
    %2642 = vmatprep.subr.mxu0 %v2568
    %2643 = vmatpush1.msra.mxu0 %v2567
    %2644 = vmatprep.subr.mxu0 0.0
    %2645 = vmatpush2.msra.mxu0 0.0
    %2646 = vmatprep.subr.mxu0 0.0
    %2647 = vmatpush2.msra.mxu0 0.0
    %2648 = vmatprep.subr.mxu0 0.0
    %2649 = vmatpush2.msra.mxu0 0.0
    %2650 = vmatprep.subr.mxu0 0.0
    %2651 = vmatpush2.msra.mxu0 0.0
    %2652 = vmatprep.subr.mxu0 0.0
    %2653 = vmatpush2.msra.mxu0 0.0
    %2654 = vmatprep.subr.mxu0 0.0
    %2655 = vmatpush2.msra.mxu0 0.0
    %2656 = vmatprep.subr.mxu0 0.0
    %2657 = vmatpush2.msra.mxu0 0.0
    %2658 = vmatprep.subr.mxu0 0.0
    %2659 = vmatpush2.msra.mxu0 0.0
    %2660 = vmatprep.subr.mxu0 0.0
    %2661 = vmatpush2.msra.mxu0 0.0
    %2662 = vmatprep.subr.mxu0 0.0
    %2663 = vmatpush2.msra.mxu0 0.0
    %2664 = vmatprep.subr.mxu0 0.0
    %2665 = vmatpush2.msra.mxu0 0.0
    %2666 = vmatprep.subr.mxu0 0.0
    %2667 = vmatpush2.msra.mxu0 0.0
    %2668 = vmatprep.subr.mxu0 0.0
    %2669 = vmatpush2.msra.mxu0 0.0
    %2670 = vmatprep.subr.mxu0 0.0
    %2671 = vmatpush2.msra.mxu0 0.0
    %2672 = vmatprep.subr.mxu0 0.0
    %2673 = vmatpush2.msra.mxu0 0.0
    %2674 = vmatprep.subr.mxu0 0.0
    %2675 = vmatpush2.msra.mxu0 0.0
    %2676 = vmatprep.mubr.f32.mxu0 0.0
    %2677 = vmatmul.mubr.f32.gmra.mxu0 %v2538
    %v2678 = vpop.f32.mrf.mxu0
    %v2679 = vadd.f32 %v2605, %v2678
    %v2680 = vpop.f32.mrf.mxu0
    %v2681 = vadd.f32 %v2609, %v2680
    %2682 = vmatprep.mubr.f32.mxu0 0.0
    %2683 = vmatmul.mubr.f32.gmra.mxu0 %v2539
    %v2684 = vpop.f32.mrf.mxu0
    %v2685 = vadd.f32 %v2605, %v2684
    %v2686 = vpop.f32.mrf.mxu0
    %v2687 = vadd.f32 %v2609, %v2686
    %2688 = vmatprep.mubr.f32.mxu0 0.0
    %2689 = vmatmul.mubr.f32.gmra.mxu0 %v2540
    %v2690 = vpop.f32.mrf.mxu0
    %v2691 = vadd.f32 %v2605, %v2690
    %v2692 = vpop.f32.mrf.mxu0
    %v2693 = vadd.f32 %v2609, %v2692
    %2694 = vmatprep.mubr.f32.mxu0 0.0
    %2695 = vmatmul.mubr.f32.gmra.mxu0 %v2541
    %v2696 = vpop.f32.mrf.mxu0
    %v2697 = vadd.f32 %v2605, %v2696
    %v2698 = vpop.f32.mrf.mxu0
    %v2699 = vadd.f32 %v2609, %v2698
    %2700 = vdwg.mxu0
    %v2701 = vmul.f32 %v2542, %v56
    %v2702 = vmul.f32 %v2543, %v56
    %v2703 = vmul.f32 %v2544, %v56
    %v2704 = vmul.f32 %v2545, %v56
    %v2705 = vmul.f32 %v2546, %v56
    %v2706 = vmul.f32 %v2547, %v56
    %v2707 = vmul.f32 %v2548, %v56
    %v2708 = vmul.f32 %v2549, %v56
    %v2709 = vmul.f32 %v2542, %v61
    %v2710 = vmul.f32 %v2543, %v61
    %v2711 = vmul.f32 %v2544, %v61
    %v2712 = vmul.f32 %v2545, %v61
    %v2713 = vmul.f32 %v2546, %v61
    %v2714 = vmul.f32 %v2547, %v61
    %v2715 = vmul.f32 %v2548, %v61
    %v2716 = vmul.f32 %v2549, %v61
    %v2717 = vmul.f32 %v2542, %v66
    %v2718 = vmul.f32 %v2543, %v66
    %v2719 = vmul.f32 %v2544, %v66
    %v2720 = vmul.f32 %v2545, %v66
    %v2721 = vmul.f32 %v2546, %v66
    %v2722 = vmul.f32 %v2547, %v66
    %v2723 = vmul.f32 %v2548, %v66
    %v2724 = vmul.f32 %v2549, %v66
    %v2725 = vmul.f32 %v2542, %v71
    %v2726 = vmul.f32 %v2543, %v71
    %v2727 = vmul.f32 %v2544, %v71
    %v2728 = vmul.f32 %v2545, %v71
    %v2729 = vmul.f32 %v2546, %v71
    %v2730 = vmul.f32 %v2547, %v71
    %v2731 = vmul.f32 %v2548, %v71
    %v2732 = vmul.f32 %v2549, %v71
    %2733 = vmatprep.subr.mxu0 0.0
    %2734 = vmatpush1.xpose.msra.mxu0 0.0
    %2735 = vmatprep.subr.mxu0 0.0
    %2736 = vmatpush1.xpose.msra.mxu0 0.0
    %2737 = vmatprep.subr.mxu0 0.0
    %2738 = vmatpush1.xpose.msra.mxu0 0.0
    %2739 = vmatprep.subr.mxu0 0.0
    %2740 = vmatpush1.xpose.msra.mxu0 0.0
    %2741 = vmatprep.subr.mxu0 0.0
    %2742 = vmatpush1.xpose.msra.mxu0 0.0
    %2743 = vmatprep.subr.mxu0 0.0
    %2744 = vmatpush1.xpose.msra.mxu0 0.0
    %2745 = vmatprep.subr.mxu0 0.0
    %2746 = vmatpush1.xpose.msra.mxu0 0.0
    %2747 = vmatprep.subr.mxu0 0.0
    %2748 = vmatpush1.xpose.msra.mxu0 0.0
    %2749 = vmatprep.subr.mxu0 0.0
    %2750 = vmatpush1.xpose.msra.mxu0 0.0
    %2751 = vmatprep.subr.mxu0 0.0
    %2752 = vmatpush1.xpose.msra.mxu0 0.0
    %2753 = vmatprep.subr.mxu0 0.0
    %2754 = vmatpush1.xpose.msra.mxu0 0.0
    %2755 = vmatprep.subr.mxu0 0.0
    %2756 = vmatpush1.xpose.msra.mxu0 0.0
    %2757 = vmatprep.subr.mxu0 0.0
    %2758 = vmatpush1.xpose.msra.mxu0 %v2697
    %2759 = vmatprep.subr.mxu0 0.0
    %2760 = vmatpush1.xpose.msra.mxu0 %v2691
    %2761 = vmatprep.subr.mxu0 0.0
    %2762 = vmatpush1.xpose.msra.mxu0 %v2685
    %2763 = vmatprep.subr.mxu0 0.0
    %2764 = vmatpush1.xpose.msra.mxu0 %v2679
    %2765 = vmatprep.subr.mxu0 0.0
    %2766 = vmatpush2.xpose.msra.mxu0 0.0
    %2767 = vmatprep.subr.mxu0 0.0
    %2768 = vmatpush2.xpose.msra.mxu0 0.0
    %2769 = vmatprep.subr.mxu0 0.0
    %2770 = vmatpush2.xpose.msra.mxu0 0.0
    %2771 = vmatprep.subr.mxu0 0.0
    %2772 = vmatpush2.xpose.msra.mxu0 0.0
    %2773 = vmatprep.subr.mxu0 0.0
    %2774 = vmatpush2.xpose.msra.mxu0 0.0
    %2775 = vmatprep.subr.mxu0 0.0
    %2776 = vmatpush2.xpose.msra.mxu0 0.0
    %2777 = vmatprep.subr.mxu0 0.0
    %2778 = vmatpush2.xpose.msra.mxu0 0.0
    %2779 = vmatprep.subr.mxu0 0.0
    %2780 = vmatpush2.xpose.msra.mxu0 0.0
    %2781 = vmatprep.subr.mxu0 0.0
    %2782 = vmatpush2.xpose.msra.mxu0 0.0
    %2783 = vmatprep.subr.mxu0 0.0
    %2784 = vmatpush2.xpose.msra.mxu0 0.0
    %2785 = vmatprep.subr.mxu0 0.0
    %2786 = vmatpush2.xpose.msra.mxu0 0.0
    %2787 = vmatprep.subr.mxu0 0.0
    %2788 = vmatpush2.xpose.msra.mxu0 0.0
    %2789 = vmatprep.subr.mxu0 0.0
    %2790 = vmatpush2.xpose.msra.mxu0 0.0
    %2791 = vmatprep.subr.mxu0 0.0
    %2792 = vmatpush2.xpose.msra.mxu0 0.0
    %2793 = vmatprep.subr.mxu0 0.0
    %2794 = vmatpush2.xpose.msra.mxu0 0.0
    %2795 = vmatprep.subr.mxu0 0.0
    %2796 = vmatpush2.xpose.msra.mxu0 0.0
    %2797 = vmatprep.mubr.f32.mxu0 0.0
    %2798 = vmatmul.mubr.f32.gmra.mxu0 %v2701
    %v2799 = vpop.f32.mrf.mxu0
    %v2800 = vadd.f32 0.0, %v2799
    %v2801 = vpop.f32.mrf.mxu0
    %2802 = vmatprep.mubr.f32.mxu0 0.0
    %2803 = vmatmul.mubr.f32.gmra.mxu0 %v2702
    %v2804 = vpop.f32.mrf.mxu0
    %v2805 = vadd.f32 0.0, %v2804
    %v2806 = vpop.f32.mrf.mxu0
    %2807 = vmatprep.mubr.f32.mxu0 0.0
    %2808 = vmatmul.mubr.f32.gmra.mxu0 %v2703
    %v2809 = vpop.f32.mrf.mxu0
    %v2810 = vadd.f32 0.0, %v2809
    %v2811 = vpop.f32.mrf.mxu0
    %2812 = vmatprep.mubr.f32.mxu0 0.0
    %2813 = vmatmul.mubr.f32.gmra.mxu0 %v2704
    %v2814 = vpop.f32.mrf.mxu0
    %v2815 = vadd.f32 0.0, %v2814
    %v2816 = vpop.f32.mrf.mxu0
    %2817 = vmatprep.mubr.f32.mxu0 0.0
    %2818 = vmatmul.mubr.f32.gmra.mxu0 %v2705
    %v2819 = vpop.f32.mrf.mxu0
    %v2820 = vadd.f32 0.0, %v2819
    %v2821 = vpop.f32.mrf.mxu0
    %2822 = vmatprep.mubr.f32.mxu0 0.0
    %2823 = vmatmul.mubr.f32.gmra.mxu0 %v2706
    %v2824 = vpop.f32.mrf.mxu0
    %v2825 = vadd.f32 0.0, %v2824
    %v2826 = vpop.f32.mrf.mxu0
    %2827 = vmatprep.mubr.f32.mxu0 0.0
    %2828 = vmatmul.mubr.f32.gmra.mxu0 %v2707
    %v2829 = vpop.f32.mrf.mxu0
    %v2830 = vadd.f32 0.0, %v2829
    %v2831 = vpop.f32.mrf.mxu0
    %2832 = vmatprep.mubr.f32.mxu0 0.0
    %2833 = vmatmul.mubr.f32.gmra.mxu0 %v2708
    %v2834 = vpop.f32.mrf.mxu0
    %v2835 = vadd.f32 0.0, %v2834
    %v2836 = vpop.f32.mrf.mxu0
    %2837 = vmatprep.mubr.f32.mxu0 0.0
    %2838 = vmatmul.mubr.f32.gmra.mxu0 %v2709
    %v2839 = vpop.f32.mrf.mxu0
    %v2840 = vadd.f32 0.0, %v2839
    %v2841 = vpop.f32.mrf.mxu0
    %2842 = vmatprep.mubr.f32.mxu0 0.0
    %2843 = vmatmul.mubr.f32.gmra.mxu0 %v2710
    %v2844 = vpop.f32.mrf.mxu0
    %v2845 = vadd.f32 0.0, %v2844
    %v2846 = vpop.f32.mrf.mxu0
    %2847 = vmatprep.mubr.f32.mxu0 0.0
    %2848 = vmatmul.mubr.f32.gmra.mxu0 %v2711
    %v2849 = vpop.f32.mrf.mxu0
    %v2850 = vadd.f32 0.0, %v2849
    %v2851 = vpop.f32.mrf.mxu0
    %2852 = vmatprep.mubr.f32.mxu0 0.0
    %2853 = vmatmul.mubr.f32.gmra.mxu0 %v2712
    %v2854 = vpop.f32.mrf.mxu0
    %v2855 = vadd.f32 0.0, %v2854
    %v2856 = vpop.f32.mrf.mxu0
    %2857 = vmatprep.mubr.f32.mxu0 0.0
    %2858 = vmatmul.mubr.f32.gmra.mxu0 %v2713
    %v2859 = vpop.f32.mrf.mxu0
    %v2860 = vadd.f32 0.0, %v2859
    %v2861 = vpop.f32.mrf.mxu0
    %2862 = vmatprep.mubr.f32.mxu0 0.0
    %2863 = vmatmul.mubr.f32.gmra.mxu0 %v2714
    %v2864 = vpop.f32.mrf.mxu0
    %v2865 = vadd.f32 0.0, %v2864
    %v2866 = vpop.f32.mrf.mxu0
    %2867 = vmatprep.mubr.f32.mxu0 0.0
    %2868 = vmatmul.mubr.f32.gmra.mxu0 %v2715
    %v2869 = vpop.f32.mrf.mxu0
    %v2870 = vadd.f32 0.0, %v2869
    %v2871 = vpop.f32.mrf.mxu0
    %2872 = vmatprep.mubr.f32.mxu0 0.0
    %2873 = vmatmul.mubr.f32.gmra.mxu0 %v2716
    %v2874 = vpop.f32.mrf.mxu0
    %v2875 = vadd.f32 0.0, %v2874
    %v2876 = vpop.f32.mrf.mxu0
    %2877 = vmatprep.mubr.f32.mxu0 0.0
    %2878 = vmatmul.mubr.f32.gmra.mxu0 %v2717
    %v2879 = vpop.f32.mrf.mxu0
    %v2880 = vadd.f32 0.0, %v2879
    %v2881 = vpop.f32.mrf.mxu0
    %2882 = vmatprep.mubr.f32.mxu0 0.0
    %2883 = vmatmul.mubr.f32.gmra.mxu0 %v2718
    %v2884 = vpop.f32.mrf.mxu0
    %v2885 = vadd.f32 0.0, %v2884
    %v2886 = vpop.f32.mrf.mxu0
    %2887 = vmatprep.mubr.f32.mxu0 0.0
    %2888 = vmatmul.mubr.f32.gmra.mxu0 %v2719
    %v2889 = vpop.f32.mrf.mxu0
    %v2890 = vadd.f32 0.0, %v2889
    %v2891 = vpop.f32.mrf.mxu0
    %2892 = vmatprep.mubr.f32.mxu0 0.0
    %2893 = vmatmul.mubr.f32.gmra.mxu0 %v2720
    %v2894 = vpop.f32.mrf.mxu0
    %v2895 = vadd.f32 0.0, %v2894
    %v2896 = vpop.f32.mrf.mxu0
    %2897 = vmatprep.mubr.f32.mxu0 0.0
    %2898 = vmatmul.mubr.f32.gmra.mxu0 %v2721
    %v2899 = vpop.f32.mrf.mxu0
    %v2900 = vadd.f32 0.0, %v2899
    %v2901 = vpop.f32.mrf.mxu0
    %2902 = vmatprep.mubr.f32.mxu0 0.0
    %2903 = vmatmul.mubr.f32.gmra.mxu0 %v2722
    %v2904 = vpop.f32.mrf.mxu0
    %v2905 = vadd.f32 0.0, %v2904
    %v2906 = vpop.f32.mrf.mxu0
    %2907 = vmatprep.mubr.f32.mxu0 0.0
    %2908 = vmatmul.mubr.f32.gmra.mxu0 %v2723
    %v2909 = vpop.f32.mrf.mxu0
    %v2910 = vadd.f32 0.0, %v2909
    %v2911 = vpop.f32.mrf.mxu0
    %2912 = vmatprep.mubr.f32.mxu0 0.0
    %2913 = vmatmul.mubr.f32.gmra.mxu0 %v2724
    %v2914 = vpop.f32.mrf.mxu0
    %v2915 = vadd.f32 0.0, %v2914
    %v2916 = vpop.f32.mrf.mxu0
    %2917 = vmatprep.mubr.f32.mxu0 0.0
    %2918 = vmatmul.mubr.f32.gmra.mxu0 %v2725
    %v2919 = vpop.f32.mrf.mxu0
    %v2920 = vadd.f32 0.0, %v2919
    %v2921 = vpop.f32.mrf.mxu0
    %2922 = vmatprep.mubr.f32.mxu0 0.0
    %2923 = vmatmul.mubr.f32.gmra.mxu0 %v2726
    %v2924 = vpop.f32.mrf.mxu0
    %v2925 = vadd.f32 0.0, %v2924
    %v2926 = vpop.f32.mrf.mxu0
    %2927 = vmatprep.mubr.f32.mxu0 0.0
    %2928 = vmatmul.mubr.f32.gmra.mxu0 %v2727
    %v2929 = vpop.f32.mrf.mxu0
    %v2930 = vadd.f32 0.0, %v2929
    %v2931 = vpop.f32.mrf.mxu0
    %2932 = vmatprep.mubr.f32.mxu0 0.0
    %2933 = vmatmul.mubr.f32.gmra.mxu0 %v2728
    %v2934 = vpop.f32.mrf.mxu0
    %v2935 = vadd.f32 0.0, %v2934
    %v2936 = vpop.f32.mrf.mxu0
    %2937 = vmatprep.mubr.f32.mxu0 0.0
    %2938 = vmatmul.mubr.f32.gmra.mxu0 %v2729
    %v2939 = vpop.f32.mrf.mxu0
    %v2940 = vadd.f32 0.0, %v2939
    %v2941 = vpop.f32.mrf.mxu0
    %2942 = vmatprep.mubr.f32.mxu0 0.0
    %2943 = vmatmul.mubr.f32.gmra.mxu0 %v2730
    %v2944 = vpop.f32.mrf.mxu0
    %v2945 = vadd.f32 0.0, %v2944
    %v2946 = vpop.f32.mrf.mxu0
    %2947 = vmatprep.mubr.f32.mxu0 0.0
    %2948 = vmatmul.mubr.f32.gmra.mxu0 %v2731
    %v2949 = vpop.f32.mrf.mxu0
    %v2950 = vadd.f32 0.0, %v2949
    %v2951 = vpop.f32.mrf.mxu0
    %2952 = vmatprep.mubr.f32.mxu0 0.0
    %2953 = vmatmul.mubr.f32.gmra.mxu0 %v2732
    %v2954 = vpop.f32.mrf.mxu0
    %v2955 = vadd.f32 0.0, %v2954
    %v2956 = vpop.f32.mrf.mxu0
    %2957 = vdwg.mxu0
    %v2958 = vmul.f32 %v2800, 0.088388346
    %v2959 = vmul.f32 %v2805, 0.088388346
    %v2960 = vmul.f32 %v2810, 0.088388346
    %v2961 = vmul.f32 %v2815, 0.088388346
    %v2962 = vmul.f32 %v2820, 0.088388346
    %v2963 = vmul.f32 %v2825, 0.088388346
    %v2964 = vmul.f32 %v2830, 0.088388346
    %v2965 = vmul.f32 %v2835, 0.088388346
    %v2966 = vmul.f32 %v2840, 0.088388346
    %v2967 = vmul.f32 %v2845, 0.088388346
    %v2968 = vmul.f32 %v2850, 0.088388346
    %v2969 = vmul.f32 %v2855, 0.088388346
    %v2970 = vmul.f32 %v2860, 0.088388346
    %v2971 = vmul.f32 %v2865, 0.088388346
    %v2972 = vmul.f32 %v2870, 0.088388346
    %v2973 = vmul.f32 %v2875, 0.088388346
    %v2974 = vmul.f32 %v2880, 0.088388346
    %v2975 = vmul.f32 %v2885, 0.088388346
    %v2976 = vmul.f32 %v2890, 0.088388346
    %v2977 = vmul.f32 %v2895, 0.088388346
    %v2978 = vmul.f32 %v2900, 0.088388346
    %v2979 = vmul.f32 %v2905, 0.088388346
    %v2980 = vmul.f32 %v2910, 0.088388346
    %v2981 = vmul.f32 %v2915, 0.088388346
    %v2982 = vmul.f32 %v2920, 0.088388346
    %v2983 = vmul.f32 %v2925, 0.088388346
    %v2984 = vmul.f32 %v2930, 0.088388346
    %v2985 = vmul.f32 %v2935, 0.088388346
    %v2986 = vmul.f32 %v2940, 0.088388346
    %v2987 = vmul.f32 %v2945, 0.088388346
    %v2988 = vmul.f32 %v2950, 0.088388346
    %v2989 = vmul.f32 %v2955, 0.088388346
    %v2990 = vadd.f32 %v2958, %v76
    %v2991 = vadd.f32 %v2959, %v77
    %v2992 = vadd.f32 %v2960, %v78
    %v2993 = vadd.f32 %v2961, %v79
    %v2994 = vadd.f32 %v2962, %v80
    %v2995 = vadd.f32 %v2963, %v81
    %v2996 = vadd.f32 %v2964, %v82
    %v2997 = vadd.f32 %v2965, %v83
    %v2998 = vadd.f32 %v2966, %v84
    %v2999 = vadd.f32 %v2967, %v85
    %v3000 = vadd.f32 %v2968, %v86
    %v3001 = vadd.f32 %v2969, %v87
    %v3002 = vadd.f32 %v2970, %v88
    %v3003 = vadd.f32 %v2971, %v89
    %v3004 = vadd.f32 %v2972, %v90
    %v3005 = vadd.f32 %v2973, %v91
    %v3006 = vadd.f32 %v2974, %v92
    %v3007 = vadd.f32 %v2975, %v93
    %v3008 = vadd.f32 %v2976, %v94
    %v3009 = vadd.f32 %v2977, %v95
    %v3010 = vadd.f32 %v2978, %v96
    %v3011 = vadd.f32 %v2979, %v97
    %v3012 = vadd.f32 %v2980, %v98
    %v3013 = vadd.f32 %v2981, %v99
    %v3014 = vadd.f32 %v2982, %v100
    %v3015 = vadd.f32 %v2983, %v101
    %v3016 = vadd.f32 %v2984, %v102
    %v3017 = vadd.f32 %v2985, %v103
    %v3018 = vadd.f32 %v2986, %v104
    %v3019 = vadd.f32 %v2987, %v105
    %v3020 = vadd.f32 %v2988, %v106
    %v3021 = vadd.f32 %v2989, %v107
    %v3022 = vsel %vm618, %v2990, -inf
    %3023 = vmax.xlane.f32.xlu0 %v3022
    %v3024 = vpop.xlane.xlu0 %3023
    %v3025 = vsel %vm618, %v2991, -inf
    %3026 = vmax.xlane.f32.xlu0 %v3025
    %v3027 = vpop.xlane.xlu0 %3026
    %v3028 = vsel %vm618, %v2992, -inf
    %3029 = vmax.xlane.f32.xlu0 %v3028
    %v3030 = vpop.xlane.xlu0 %3029
    %v3031 = vsel %vm618, %v2993, -inf
    %3032 = vmax.xlane.f32.xlu0 %v3031
    %v3033 = vpop.xlane.xlu0 %3032
    %v3034 = vsel %vm618, %v2994, -inf
    %3035 = vmax.xlane.f32.xlu0 %v3034
    %v3036 = vpop.xlane.xlu0 %3035
    %v3037 = vsel %vm618, %v2995, -inf
    %3038 = vmax.xlane.f32.xlu0 %v3037
    %v3039 = vpop.xlane.xlu0 %3038
    %v3040 = vsel %vm618, %v2996, -inf
    %3041 = vmax.xlane.f32.xlu0 %v3040
    %v3042 = vpop.xlane.xlu0 %3041
    %v3043 = vsel %vm618, %v2997, -inf
    %3044 = vmax.xlane.f32.xlu0 %v3043
    %v3045 = vpop.xlane.xlu0 %3044
    %v3046 = vsel %vm618, %v2998, -inf
    %3047 = vmax.xlane.f32.xlu0 %v3046
    %v3048 = vpop.xlane.xlu0 %3047
    %v3049 = vsel %vm618, %v2999, -inf
    %3050 = vmax.xlane.f32.xlu0 %v3049
    %v3051 = vpop.xlane.xlu0 %3050
    %v3052 = vsel %vm618, %v3000, -inf
    %3053 = vmax.xlane.f32.xlu0 %v3052
    %v3054 = vpop.xlane.xlu0 %3053
    %v3055 = vsel %vm618, %v3001, -inf
    %3056 = vmax.xlane.f32.xlu0 %v3055
    %v3057 = vpop.xlane.xlu0 %3056
    %v3058 = vsel %vm618, %v3002, -inf
    %3059 = vmax.xlane.f32.xlu0 %v3058
    %v3060 = vpop.xlane.xlu0 %3059
    %v3061 = vsel %vm618, %v3003, -inf
    %3062 = vmax.xlane.f32.xlu0 %v3061
    %v3063 = vpop.xlane.xlu0 %3062
    %v3064 = vsel %vm618, %v3004, -inf
    %3065 = vmax.xlane.f32.xlu0 %v3064
    %v3066 = vpop.xlane.xlu0 %3065
    %v3067 = vsel %vm618, %v3005, -inf
    %3068 = vmax.xlane.f32.xlu0 %v3067
    %v3069 = vpop.xlane.xlu0 %3068
    %v3070 = vsel %vm618, %v3006, -inf
    %3071 = vmax.xlane.f32.xlu0 %v3070
    %v3072 = vpop.xlane.xlu0 %3071
    %v3073 = vsel %vm618, %v3007, -inf
    %3074 = vmax.xlane.f32.xlu0 %v3073
    %v3075 = vpop.xlane.xlu0 %3074
    %v3076 = vsel %vm618, %v3008, -inf
    %3077 = vmax.xlane.f32.xlu0 %v3076
    %v3078 = vpop.xlane.xlu0 %3077
    %v3079 = vsel %vm618, %v3009, -inf
    %3080 = vmax.xlane.f32.xlu0 %v3079
    %v3081 = vpop.xlane.xlu0 %3080
    %v3082 = vsel %vm618, %v3010, -inf
    %3083 = vmax.xlane.f32.xlu0 %v3082
    %v3084 = vpop.xlane.xlu0 %3083
    %v3085 = vsel %vm618, %v3011, -inf
    %3086 = vmax.xlane.f32.xlu0 %v3085
    %v3087 = vpop.xlane.xlu0 %3086
    %v3088 = vsel %vm618, %v3012, -inf
    %3089 = vmax.xlane.f32.xlu0 %v3088
    %v3090 = vpop.xlane.xlu0 %3089
    %v3091 = vsel %vm618, %v3013, -inf
    %3092 = vmax.xlane.f32.xlu0 %v3091
    %v3093 = vpop.xlane.xlu0 %3092
    %v3094 = vsel %vm618, %v3014, -inf
    %3095 = vmax.xlane.f32.xlu0 %v3094
    %v3096 = vpop.xlane.xlu0 %3095
    %v3097 = vsel %vm618, %v3015, -inf
    %3098 = vmax.xlane.f32.xlu0 %v3097
    %v3099 = vpop.xlane.xlu0 %3098
    %v3100 = vsel %vm618, %v3016, -inf
    %3101 = vmax.xlane.f32.xlu0 %v3100
    %v3102 = vpop.xlane.xlu0 %3101
    %v3103 = vsel %vm618, %v3017, -inf
    %3104 = vmax.xlane.f32.xlu0 %v3103
    %v3105 = vpop.xlane.xlu0 %3104
    %v3106 = vsel %vm618, %v3018, -inf
    %3107 = vmax.xlane.f32.xlu0 %v3106
    %v3108 = vpop.xlane.xlu0 %3107
    %v3109 = vsel %vm618, %v3019, -inf
    %3110 = vmax.xlane.f32.xlu0 %v3109
    %v3111 = vpop.xlane.xlu0 %3110
    %v3112 = vsel %vm618, %v3020, -inf
    %3113 = vmax.xlane.f32.xlu0 %v3112
    %v3114 = vpop.xlane.xlu0 %3113
    %v3115 = vsel %vm618, %v3021, -inf
    %3116 = vmax.xlane.f32.xlu0 %v3115
    %v3117 = vpop.xlane.xlu0 %3116
    %v3118 = vsub.f32 %v2990, %v3024
    %v3119 = vsub.f32 %v2991, %v3027
    %v3120 = vsub.f32 %v2992, %v3030
    %v3121 = vsub.f32 %v2993, %v3033
    %v3122 = vsub.f32 %v2994, %v3036
    %v3123 = vsub.f32 %v2995, %v3039
    %v3124 = vsub.f32 %v2996, %v3042
    %v3125 = vsub.f32 %v2997, %v3045
    %v3126 = vsub.f32 %v2998, %v3048
    %v3127 = vsub.f32 %v2999, %v3051
    %v3128 = vsub.f32 %v3000, %v3054
    %v3129 = vsub.f32 %v3001, %v3057
    %v3130 = vsub.f32 %v3002, %v3060
    %v3131 = vsub.f32 %v3003, %v3063
    %v3132 = vsub.f32 %v3004, %v3066
    %v3133 = vsub.f32 %v3005, %v3069
    %v3134 = vsub.f32 %v3006, %v3072
    %v3135 = vsub.f32 %v3007, %v3075
    %v3136 = vsub.f32 %v3008, %v3078
    %v3137 = vsub.f32 %v3009, %v3081
    %v3138 = vsub.f32 %v3010, %v3084
    %v3139 = vsub.f32 %v3011, %v3087
    %v3140 = vsub.f32 %v3012, %v3090
    %v3141 = vsub.f32 %v3013, %v3093
    %v3142 = vsub.f32 %v3014, %v3096
    %v3143 = vsub.f32 %v3015, %v3099
    %v3144 = vsub.f32 %v3016, %v3102
    %v3145 = vsub.f32 %v3017, %v3105
    %v3146 = vsub.f32 %v3018, %v3108
    %v3147 = vsub.f32 %v3019, %v3111
    %v3148 = vsub.f32 %v3020, %v3114
    %v3149 = vsub.f32 %v3021, %v3117
    %v3150 = vmul.f32 %v3118, 1.442695
    %v3151 = vpow.pop %v3150
    %v3152 = vmul.f32 %v3119, 1.442695
    %v3153 = vpow.pop %v3152
    %v3154 = vmul.f32 %v3120, 1.442695
    %v3155 = vpow.pop %v3154
    %v3156 = vmul.f32 %v3121, 1.442695
    %v3157 = vpow.pop %v3156
    %v3158 = vmul.f32 %v3122, 1.442695
    %v3159 = vpow.pop %v3158
    %v3160 = vmul.f32 %v3123, 1.442695
    %v3161 = vpow.pop %v3160
    %v3162 = vmul.f32 %v3124, 1.442695
    %v3163 = vpow.pop %v3162
    %v3164 = vmul.f32 %v3125, 1.442695
    %v3165 = vpow.pop %v3164
    %v3166 = vmul.f32 %v3126, 1.442695
    %v3167 = vpow.pop %v3166
    %v3168 = vmul.f32 %v3127, 1.442695
    %v3169 = vpow.pop %v3168
    %v3170 = vmul.f32 %v3128, 1.442695
    %v3171 = vpow.pop %v3170
    %v3172 = vmul.f32 %v3129, 1.442695
    %v3173 = vpow.pop %v3172
    %v3174 = vmul.f32 %v3130, 1.442695
    %v3175 = vpow.pop %v3174
    %v3176 = vmul.f32 %v3131, 1.442695
    %v3177 = vpow.pop %v3176
    %v3178 = vmul.f32 %v3132, 1.442695
    %v3179 = vpow.pop %v3178
    %v3180 = vmul.f32 %v3133, 1.442695
    %v3181 = vpow.pop %v3180
    %v3182 = vmul.f32 %v3134, 1.442695
    %v3183 = vpow.pop %v3182
    %v3184 = vmul.f32 %v3135, 1.442695
    %v3185 = vpow.pop %v3184
    %v3186 = vmul.f32 %v3136, 1.442695
    %v3187 = vpow.pop %v3186
    %v3188 = vmul.f32 %v3137, 1.442695
    %v3189 = vpow.pop %v3188
    %v3190 = vmul.f32 %v3138, 1.442695
    %v3191 = vpow.pop %v3190
    %v3192 = vmul.f32 %v3139, 1.442695
    %v3193 = vpow.pop %v3192
    %v3194 = vmul.f32 %v3140, 1.442695
    %v3195 = vpow.pop %v3194
    %v3196 = vmul.f32 %v3141, 1.442695
    %v3197 = vpow.pop %v3196
    %v3198 = vmul.f32 %v3142, 1.442695
    %v3199 = vpow.pop %v3198
    %v3200 = vmul.f32 %v3143, 1.442695
    %v3201 = vpow.pop %v3200
    %v3202 = vmul.f32 %v3144, 1.442695
    %v3203 = vpow.pop %v3202
    %v3204 = vmul.f32 %v3145, 1.442695
    %v3205 = vpow.pop %v3204
    %v3206 = vmul.f32 %v3146, 1.442695
    %v3207 = vpow.pop %v3206
    %v3208 = vmul.f32 %v3147, 1.442695
    %v3209 = vpow.pop %v3208
    %v3210 = vmul.f32 %v3148, 1.442695
    %v3211 = vpow.pop %v3210
    %v3212 = vmul.f32 %v3149, 1.442695
    %v3213 = vpow.pop %v3212
    %v3214 = vsel %vm618, %v3151, 0.0
    %3215 = vadd.xlane.f32.xlu0 %v3214
    %v3216 = vpop.xlane.xlu0 %3215
    %v3217 = vsel %vm618, %v3153, 0.0
    %3218 = vadd.xlane.f32.xlu0 %v3217
    %v3219 = vpop.xlane.xlu0 %3218
    %v3220 = vsel %vm618, %v3155, 0.0
    %3221 = vadd.xlane.f32.xlu0 %v3220
    %v3222 = vpop.xlane.xlu0 %3221
    %v3223 = vsel %vm618, %v3157, 0.0
    %3224 = vadd.xlane.f32.xlu0 %v3223
    %v3225 = vpop.xlane.xlu0 %3224
    %v3226 = vsel %vm618, %v3159, 0.0
    %3227 = vadd.xlane.f32.xlu0 %v3226
    %v3228 = vpop.xlane.xlu0 %3227
    %v3229 = vsel %vm618, %v3161, 0.0
    %3230 = vadd.xlane.f32.xlu0 %v3229
    %v3231 = vpop.xlane.xlu0 %3230
    %v3232 = vsel %vm618, %v3163, 0.0
    %3233 = vadd.xlane.f32.xlu0 %v3232
    %v3234 = vpop.xlane.xlu0 %3233
    %v3235 = vsel %vm618, %v3165, 0.0
    %3236 = vadd.xlane.f32.xlu0 %v3235
    %v3237 = vpop.xlane.xlu0 %3236
    %v3238 = vsel %vm618, %v3167, 0.0
    %3239 = vadd.xlane.f32.xlu0 %v3238
    %v3240 = vpop.xlane.xlu0 %3239
    %v3241 = vsel %vm618, %v3169, 0.0
    %3242 = vadd.xlane.f32.xlu0 %v3241
    %v3243 = vpop.xlane.xlu0 %3242
    %v3244 = vsel %vm618, %v3171, 0.0
    %3245 = vadd.xlane.f32.xlu0 %v3244
    %v3246 = vpop.xlane.xlu0 %3245
    %v3247 = vsel %vm618, %v3173, 0.0
    %3248 = vadd.xlane.f32.xlu0 %v3247
    %v3249 = vpop.xlane.xlu0 %3248
    %v3250 = vsel %vm618, %v3175, 0.0
    %3251 = vadd.xlane.f32.xlu0 %v3250
    %v3252 = vpop.xlane.xlu0 %3251
    %v3253 = vsel %vm618, %v3177, 0.0
    %3254 = vadd.xlane.f32.xlu0 %v3253
    %v3255 = vpop.xlane.xlu0 %3254
    %v3256 = vsel %vm618, %v3179, 0.0
    %3257 = vadd.xlane.f32.xlu0 %v3256
    %v3258 = vpop.xlane.xlu0 %3257
    %v3259 = vsel %vm618, %v3181, 0.0
    %3260 = vadd.xlane.f32.xlu0 %v3259
    %v3261 = vpop.xlane.xlu0 %3260
    %v3262 = vsel %vm618, %v3183, 0.0
    %3263 = vadd.xlane.f32.xlu0 %v3262
    %v3264 = vpop.xlane.xlu0 %3263
    %v3265 = vsel %vm618, %v3185, 0.0
    %3266 = vadd.xlane.f32.xlu0 %v3265
    %v3267 = vpop.xlane.xlu0 %3266
    %v3268 = vsel %vm618, %v3187, 0.0
    %3269 = vadd.xlane.f32.xlu0 %v3268
    %v3270 = vpop.xlane.xlu0 %3269
    %v3271 = vsel %vm618, %v3189, 0.0
    %3272 = vadd.xlane.f32.xlu0 %v3271
    %v3273 = vpop.xlane.xlu0 %3272
    %v3274 = vsel %vm618, %v3191, 0.0
    %3275 = vadd.xlane.f32.xlu0 %v3274
    %v3276 = vpop.xlane.xlu0 %3275
    %v3277 = vsel %vm618, %v3193, 0.0
    %3278 = vadd.xlane.f32.xlu0 %v3277
    %v3279 = vpop.xlane.xlu0 %3278
    %v3280 = vsel %vm618, %v3195, 0.0
    %3281 = vadd.xlane.f32.xlu0 %v3280
    %v3282 = vpop.xlane.xlu0 %3281
    %v3283 = vsel %vm618, %v3197, 0.0
    %3284 = vadd.xlane.f32.xlu0 %v3283
    %v3285 = vpop.xlane.xlu0 %3284
    %v3286 = vsel %vm618, %v3199, 0.0
    %3287 = vadd.xlane.f32.xlu0 %v3286
    %v3288 = vpop.xlane.xlu0 %3287
    %v3289 = vsel %vm618, %v3201, 0.0
    %3290 = vadd.xlane.f32.xlu0 %v3289
    %v3291 = vpop.xlane.xlu0 %3290
    %v3292 = vsel %vm618, %v3203, 0.0
    %3293 = vadd.xlane.f32.xlu0 %v3292
    %v3294 = vpop.xlane.xlu0 %3293
    %v3295 = vsel %vm618, %v3205, 0.0
    %3296 = vadd.xlane.f32.xlu0 %v3295
    %v3297 = vpop.xlane.xlu0 %3296
    %v3298 = vsel %vm618, %v3207, 0.0
    %3299 = vadd.xlane.f32.xlu0 %v3298
    %v3300 = vpop.xlane.xlu0 %3299
    %v3301 = vsel %vm618, %v3209, 0.0
    %3302 = vadd.xlane.f32.xlu0 %v3301
    %v3303 = vpop.xlane.xlu0 %3302
    %v3304 = vsel %vm618, %v3211, 0.0
    %3305 = vadd.xlane.f32.xlu0 %v3304
    %v3306 = vpop.xlane.xlu0 %3305
    %v3307 = vsel %vm618, %v3213, 0.0
    %3308 = vadd.xlane.f32.xlu0 %v3307
    %v3309 = vpop.xlane.xlu0 %3308
    %v3310 = vrcp.pop %v3216
    %v3311 = vmul.f32 %v3151, %v3310
    %v3312 = vrcp.pop %v3219
    %v3313 = vmul.f32 %v3153, %v3312
    %v3314 = vrcp.pop %v3222
    %v3315 = vmul.f32 %v3155, %v3314
    %v3316 = vrcp.pop %v3225
    %v3317 = vmul.f32 %v3157, %v3316
    %v3318 = vrcp.pop %v3228
    %v3319 = vmul.f32 %v3159, %v3318
    %v3320 = vrcp.pop %v3231
    %v3321 = vmul.f32 %v3161, %v3320
    %v3322 = vrcp.pop %v3234
    %v3323 = vmul.f32 %v3163, %v3322
    %v3324 = vrcp.pop %v3237
    %v3325 = vmul.f32 %v3165, %v3324
    %v3326 = vrcp.pop %v3240
    %v3327 = vmul.f32 %v3167, %v3326
    %v3328 = vrcp.pop %v3243
    %v3329 = vmul.f32 %v3169, %v3328
    %v3330 = vrcp.pop %v3246
    %v3331 = vmul.f32 %v3171, %v3330
    %v3332 = vrcp.pop %v3249
    %v3333 = vmul.f32 %v3173, %v3332
    %v3334 = vrcp.pop %v3252
    %v3335 = vmul.f32 %v3175, %v3334
    %v3336 = vrcp.pop %v3255
    %v3337 = vmul.f32 %v3177, %v3336
    %v3338 = vrcp.pop %v3258
    %v3339 = vmul.f32 %v3179, %v3338
    %v3340 = vrcp.pop %v3261
    %v3341 = vmul.f32 %v3181, %v3340
    %v3342 = vrcp.pop %v3264
    %v3343 = vmul.f32 %v3183, %v3342
    %v3344 = vrcp.pop %v3267
    %v3345 = vmul.f32 %v3185, %v3344
    %v3346 = vrcp.pop %v3270
    %v3347 = vmul.f32 %v3187, %v3346
    %v3348 = vrcp.pop %v3273
    %v3349 = vmul.f32 %v3189, %v3348
    %v3350 = vrcp.pop %v3276
    %v3351 = vmul.f32 %v3191, %v3350
    %v3352 = vrcp.pop %v3279
    %v3353 = vmul.f32 %v3193, %v3352
    %v3354 = vrcp.pop %v3282
    %v3355 = vmul.f32 %v3195, %v3354
    %v3356 = vrcp.pop %v3285
    %v3357 = vmul.f32 %v3197, %v3356
    %v3358 = vrcp.pop %v3288
    %v3359 = vmul.f32 %v3199, %v3358
    %v3360 = vrcp.pop %v3291
    %v3361 = vmul.f32 %v3201, %v3360
    %v3362 = vrcp.pop %v3294
    %v3363 = vmul.f32 %v3203, %v3362
    %v3364 = vrcp.pop %v3297
    %v3365 = vmul.f32 %v3205, %v3364
    %v3366 = vrcp.pop %v3300
    %v3367 = vmul.f32 %v3207, %v3366
    %v3368 = vrcp.pop %v3303
    %v3369 = vmul.f32 %v3209, %v3368
    %v3370 = vrcp.pop %v3306
    %v3371 = vmul.f32 %v3211, %v3370
    %v3372 = vrcp.pop %v3309
    %v3373 = vmul.f32 %v3213, %v3372
    %v3375 = vsel %vm618, %v3311, 0
    %v3378 = vsel %vm618, %v3313, 0
    %v3381 = vsel %vm618, %v3315, 0
    %v3384 = vsel %vm618, %v3317, 0
    %v3387 = vsel %vm618, %v3319, 0
    %v3390 = vsel %vm618, %v3321, 0
    %v3393 = vsel %vm618, %v3323, 0
    %v3396 = vsel %vm618, %v3325, 0
    %v3399 = vsel %vm618, %v3327, 0
    %v3402 = vsel %vm618, %v3329, 0
    %v3405 = vsel %vm618, %v3331, 0
    %v3408 = vsel %vm618, %v3333, 0
    %v3411 = vsel %vm618, %v3335, 0
    %v3414 = vsel %vm618, %v3337, 0
    %v3417 = vsel %vm618, %v3339, 0
    %v3420 = vsel %vm618, %v3341, 0
    %v3423 = vsel %vm618, %v3343, 0
    %v3426 = vsel %vm618, %v3345, 0
    %v3429 = vsel %vm618, %v3347, 0
    %v3432 = vsel %vm618, %v3349, 0
    %v3435 = vsel %vm618, %v3351, 0
    %v3438 = vsel %vm618, %v3353, 0
    %v3441 = vsel %vm618, %v3355, 0
    %v3444 = vsel %vm618, %v3357, 0
    %v3447 = vsel %vm618, %v3359, 0
    %v3450 = vsel %vm618, %v3361, 0
    %v3453 = vsel %vm618, %v3363, 0
    %v3456 = vsel %vm618, %v3365, 0
    %v3459 = vsel %vm618, %v3367, 0
    %v3462 = vsel %vm618, %v3369, 0
    %v3465 = vsel %vm618, %v3371, 0
    %v3468 = vsel %vm618, %v3373, 0
    %3470 = vmatprep.subr.mxu0 0.0
    %3471 = vmatpush1.msra.mxu0 0.0
    %3472 = vmatprep.subr.mxu0 0.0
    %3473 = vmatpush1.msra.mxu0 0.0
    %3474 = vmatprep.subr.mxu0 0.0
    %3475 = vmatpush1.msra.mxu0 0.0
    %3476 = vmatprep.subr.mxu0 0.0
    %3477 = vmatpush1.msra.mxu0 0.0
    %3478 = vmatprep.subr.mxu0 0.0
    %3479 = vmatpush1.msra.mxu0 0.0
    %3480 = vmatprep.subr.mxu0 0.0
    %3481 = vmatpush1.msra.mxu0 0.0
    %3482 = vmatprep.subr.mxu0 0.0
    %3483 = vmatpush1.msra.mxu0 0.0
    %3484 = vmatprep.subr.mxu0 0.0
    %3485 = vmatpush1.msra.mxu0 0.0
    %3486 = vmatprep.subr.mxu0 0.0
    %3487 = vmatpush1.msra.mxu0 0.0
    %3488 = vmatprep.subr.mxu0 0.0
    %3489 = vmatpush1.msra.mxu0 0.0
    %3490 = vmatprep.subr.mxu0 0.0
    %3491 = vmatpush1.msra.mxu0 0.0
    %3492 = vmatprep.subr.mxu0 0.0
    %3493 = vmatpush1.msra.mxu0 0.0
    %3494 = vmatprep.subr.mxu0 0.0
    %3495 = vmatpush1.msra.mxu0 %v2699
    %3496 = vmatprep.subr.mxu0 0.0
    %3497 = vmatpush1.msra.mxu0 %v2693
    %3498 = vmatprep.subr.mxu0 0.0
    %3499 = vmatpush1.msra.mxu0 %v2687
    %3500 = vmatprep.subr.mxu0 0.0
    %3501 = vmatpush1.msra.mxu0 %v2681
    %3502 = vmatprep.subr.mxu0 0.0
    %3503 = vmatpush2.msra.mxu0 0.0
    %3504 = vmatprep.subr.mxu0 0.0
    %3505 = vmatpush2.msra.mxu0 0.0
    %3506 = vmatprep.subr.mxu0 0.0
    %3507 = vmatpush2.msra.mxu0 0.0
    %3508 = vmatprep.subr.mxu0 0.0
    %3509 = vmatpush2.msra.mxu0 0.0
    %3510 = vmatprep.subr.mxu0 0.0
    %3511 = vmatpush2.msra.mxu0 0.0
    %3512 = vmatprep.subr.mxu0 0.0
    %3513 = vmatpush2.msra.mxu0 0.0
    %3514 = vmatprep.subr.mxu0 0.0
    %3515 = vmatpush2.msra.mxu0 0.0
    %3516 = vmatprep.subr.mxu0 0.0
    %3517 = vmatpush2.msra.mxu0 0.0
    %3518 = vmatprep.subr.mxu0 0.0
    %3519 = vmatpush2.msra.mxu0 0.0
    %3520 = vmatprep.subr.mxu0 0.0
    %3521 = vmatpush2.msra.mxu0 0.0
    %3522 = vmatprep.subr.mxu0 0.0
    %3523 = vmatpush2.msra.mxu0 0.0
    %3524 = vmatprep.subr.mxu0 0.0
    %3525 = vmatpush2.msra.mxu0 0.0
    %3526 = vmatprep.subr.mxu0 0.0
    %3527 = vmatpush2.msra.mxu0 0.0
    %3528 = vmatprep.subr.mxu0 0.0
    %3529 = vmatpush2.msra.mxu0 0.0
    %3530 = vmatprep.subr.mxu0 0.0
    %3531 = vmatpush2.msra.mxu0 0.0
    %3532 = vmatprep.subr.mxu0 0.0
    %3533 = vmatpush2.msra.mxu0 0.0
    %3534 = vmatprep.mubr.f32.mxu0 0.0
    %3535 = vmatmul.mubr.f32.gmra.mxu0 %v3375
    %v3536 = vpop.f32.mrf.mxu0
    %v3537 = vadd.f32 0.0, %v3536
    %v3538 = vpop.f32.mrf.mxu0
    %3539 = vmatprep.mubr.f32.mxu0 0.0
    %3540 = vmatmul.mubr.f32.gmra.mxu0 %v3378
    %v3541 = vpop.f32.mrf.mxu0
    %v3542 = vadd.f32 0.0, %v3541
    %v3543 = vpop.f32.mrf.mxu0
    %3544 = vmatprep.mubr.f32.mxu0 0.0
    %3545 = vmatmul.mubr.f32.gmra.mxu0 %v3381
    %v3546 = vpop.f32.mrf.mxu0
    %v3547 = vadd.f32 0.0, %v3546
    %v3548 = vpop.f32.mrf.mxu0
    %3549 = vmatprep.mubr.f32.mxu0 0.0
    %3550 = vmatmul.mubr.f32.gmra.mxu0 %v3384
    %v3551 = vpop.f32.mrf.mxu0
    %v3552 = vadd.f32 0.0, %v3551
    %v3553 = vpop.f32.mrf.mxu0
    %3554 = vmatprep.mubr.f32.mxu0 0.0
    %3555 = vmatmul.mubr.f32.gmra.mxu0 %v3387
    %v3556 = vpop.f32.mrf.mxu0
    %v3557 = vadd.f32 0.0, %v3556
    %v3558 = vpop.f32.mrf.mxu0
    %3559 = vmatprep.mubr.f32.mxu0 0.0
    %3560 = vmatmul.mubr.f32.gmra.mxu0 %v3390
    %v3561 = vpop.f32.mrf.mxu0
    %v3562 = vadd.f32 0.0, %v3561
    %v3563 = vpop.f32.mrf.mxu0
    %3564 = vmatprep.mubr.f32.mxu0 0.0
    %3565 = vmatmul.mubr.f32.gmra.mxu0 %v3393
    %v3566 = vpop.f32.mrf.mxu0
    %v3567 = vadd.f32 0.0, %v3566
    %v3568 = vpop.f32.mrf.mxu0
    %3569 = vmatprep.mubr.f32.mxu0 0.0
    %3570 = vmatmul.mubr.f32.gmra.mxu0 %v3396
    %v3571 = vpop.f32.mrf.mxu0
    %v3572 = vadd.f32 0.0, %v3571
    %v3573 = vpop.f32.mrf.mxu0
    %3574 = vmatprep.mubr.f32.mxu0 0.0
    %3575 = vmatmul.mubr.f32.gmra.mxu0 %v3399
    %v3576 = vpop.f32.mrf.mxu0
    %v3577 = vadd.f32 0.0, %v3576
    %v3578 = vpop.f32.mrf.mxu0
    %3579 = vmatprep.mubr.f32.mxu0 0.0
    %3580 = vmatmul.mubr.f32.gmra.mxu0 %v3402
    %v3581 = vpop.f32.mrf.mxu0
    %v3582 = vadd.f32 0.0, %v3581
    %v3583 = vpop.f32.mrf.mxu0
    %3584 = vmatprep.mubr.f32.mxu0 0.0
    %3585 = vmatmul.mubr.f32.gmra.mxu0 %v3405
    %v3586 = vpop.f32.mrf.mxu0
    %v3587 = vadd.f32 0.0, %v3586
    %v3588 = vpop.f32.mrf.mxu0
    %3589 = vmatprep.mubr.f32.mxu0 0.0
    %3590 = vmatmul.mubr.f32.gmra.mxu0 %v3408
    %v3591 = vpop.f32.mrf.mxu0
    %v3592 = vadd.f32 0.0, %v3591
    %v3593 = vpop.f32.mrf.mxu0
    %3594 = vmatprep.mubr.f32.mxu0 0.0
    %3595 = vmatmul.mubr.f32.gmra.mxu0 %v3411
    %v3596 = vpop.f32.mrf.mxu0
    %v3597 = vadd.f32 0.0, %v3596
    %v3598 = vpop.f32.mrf.mxu0
    %3599 = vmatprep.mubr.f32.mxu0 0.0
    %3600 = vmatmul.mubr.f32.gmra.mxu0 %v3414
    %v3601 = vpop.f32.mrf.mxu0
    %v3602 = vadd.f32 0.0, %v3601
    %v3603 = vpop.f32.mrf.mxu0
    %3604 = vmatprep.mubr.f32.mxu0 0.0
    %3605 = vmatmul.mubr.f32.gmra.mxu0 %v3417
    %v3606 = vpop.f32.mrf.mxu0
    %v3607 = vadd.f32 0.0, %v3606
    %v3608 = vpop.f32.mrf.mxu0
    %3609 = vmatprep.mubr.f32.mxu0 0.0
    %3610 = vmatmul.mubr.f32.gmra.mxu0 %v3420
    %v3611 = vpop.f32.mrf.mxu0
    %v3612 = vadd.f32 0.0, %v3611
    %v3613 = vpop.f32.mrf.mxu0
    %3614 = vmatprep.mubr.f32.mxu0 0.0
    %3615 = vmatmul.mubr.f32.gmra.mxu0 %v3423
    %v3616 = vpop.f32.mrf.mxu0
    %v3617 = vadd.f32 0.0, %v3616
    %v3618 = vpop.f32.mrf.mxu0
    %3619 = vmatprep.mubr.f32.mxu0 0.0
    %3620 = vmatmul.mubr.f32.gmra.mxu0 %v3426
    %v3621 = vpop.f32.mrf.mxu0
    %v3622 = vadd.f32 0.0, %v3621
    %v3623 = vpop.f32.mrf.mxu0
    %3624 = vmatprep.mubr.f32.mxu0 0.0
    %3625 = vmatmul.mubr.f32.gmra.mxu0 %v3429
    %v3626 = vpop.f32.mrf.mxu0
    %v3627 = vadd.f32 0.0, %v3626
    %v3628 = vpop.f32.mrf.mxu0
    %3629 = vmatprep.mubr.f32.mxu0 0.0
    %3630 = vmatmul.mubr.f32.gmra.mxu0 %v3432
    %v3631 = vpop.f32.mrf.mxu0
    %v3632 = vadd.f32 0.0, %v3631
    %v3633 = vpop.f32.mrf.mxu0
    %3634 = vmatprep.mubr.f32.mxu0 0.0
    %3635 = vmatmul.mubr.f32.gmra.mxu0 %v3435
    %v3636 = vpop.f32.mrf.mxu0
    %v3637 = vadd.f32 0.0, %v3636
    %v3638 = vpop.f32.mrf.mxu0
    %3639 = vmatprep.mubr.f32.mxu0 0.0
    %3640 = vmatmul.mubr.f32.gmra.mxu0 %v3438
    %v3641 = vpop.f32.mrf.mxu0
    %v3642 = vadd.f32 0.0, %v3641
    %v3643 = vpop.f32.mrf.mxu0
    %3644 = vmatprep.mubr.f32.mxu0 0.0
    %3645 = vmatmul.mubr.f32.gmra.mxu0 %v3441
    %v3646 = vpop.f32.mrf.mxu0
    %v3647 = vadd.f32 0.0, %v3646
    %v3648 = vpop.f32.mrf.mxu0
    %3649 = vmatprep.mubr.f32.mxu0 0.0
    %3650 = vmatmul.mubr.f32.gmra.mxu0 %v3444
    %v3651 = vpop.f32.mrf.mxu0
    %v3652 = vadd.f32 0.0, %v3651
    %v3653 = vpop.f32.mrf.mxu0
    %3654 = vmatprep.mubr.f32.mxu0 0.0
    %3655 = vmatmul.mubr.f32.gmra.mxu0 %v3447
    %v3656 = vpop.f32.mrf.mxu0
    %v3657 = vadd.f32 0.0, %v3656
    %v3658 = vpop.f32.mrf.mxu0
    %3659 = vmatprep.mubr.f32.mxu0 0.0
    %3660 = vmatmul.mubr.f32.gmra.mxu0 %v3450
    %v3661 = vpop.f32.mrf.mxu0
    %v3662 = vadd.f32 0.0, %v3661
    %v3663 = vpop.f32.mrf.mxu0
    %3664 = vmatprep.mubr.f32.mxu0 0.0
    %3665 = vmatmul.mubr.f32.gmra.mxu0 %v3453
    %v3666 = vpop.f32.mrf.mxu0
    %v3667 = vadd.f32 0.0, %v3666
    %v3668 = vpop.f32.mrf.mxu0
    %3669 = vmatprep.mubr.f32.mxu0 0.0
    %3670 = vmatmul.mubr.f32.gmra.mxu0 %v3456
    %v3671 = vpop.f32.mrf.mxu0
    %v3672 = vadd.f32 0.0, %v3671
    %v3673 = vpop.f32.mrf.mxu0
    %3674 = vmatprep.mubr.f32.mxu0 0.0
    %3675 = vmatmul.mubr.f32.gmra.mxu0 %v3459
    %v3676 = vpop.f32.mrf.mxu0
    %v3677 = vadd.f32 0.0, %v3676
    %v3678 = vpop.f32.mrf.mxu0
    %3679 = vmatprep.mubr.f32.mxu0 0.0
    %3680 = vmatmul.mubr.f32.gmra.mxu0 %v3462
    %v3681 = vpop.f32.mrf.mxu0
    %v3682 = vadd.f32 0.0, %v3681
    %v3683 = vpop.f32.mrf.mxu0
    %3684 = vmatprep.mubr.f32.mxu0 0.0
    %3685 = vmatmul.mubr.f32.gmra.mxu0 %v3465
    %v3686 = vpop.f32.mrf.mxu0
    %v3687 = vadd.f32 0.0, %v3686
    %v3688 = vpop.f32.mrf.mxu0
    %3689 = vmatprep.mubr.f32.mxu0 0.0
    %3690 = vmatmul.mubr.f32.gmra.mxu0 %v3468
    %v3691 = vpop.f32.mrf.mxu0
    %v3692 = vadd.f32 0.0, %v3691
    %v3693 = vpop.f32.mrf.mxu0
    %3694 = vdwg.mxu0
    %v3695 = vmul.f32 %v3537, %v56
    %v3696 = vmul.f32 %v3542, %v56
    %v3697 = vmul.f32 %v3547, %v56
    %v3698 = vmul.f32 %v3552, %v56
    %v3699 = vmul.f32 %v3557, %v56
    %v3700 = vmul.f32 %v3562, %v56
    %v3701 = vmul.f32 %v3567, %v56
    %v3702 = vmul.f32 %v3572, %v56
    %v3703 = vadd.f32 %v2542, %v3695
    %v3704 = vadd.f32 %v2543, %v3696
    %v3705 = vadd.f32 %v2544, %v3697
    %v3706 = vadd.f32 %v2545, %v3698
    %v3707 = vadd.f32 %v2546, %v3699
    %v3708 = vadd.f32 %v2547, %v3700
    %v3709 = vadd.f32 %v2548, %v3701
    %v3710 = vadd.f32 %v2549, %v3702
    %v3711 = vmul.f32 %v3577, %v61
    %v3712 = vmul.f32 %v3582, %v61
    %v3713 = vmul.f32 %v3587, %v61
    %v3714 = vmul.f32 %v3592, %v61
    %v3715 = vmul.f32 %v3597, %v61
    %v3716 = vmul.f32 %v3602, %v61
    %v3717 = vmul.f32 %v3607, %v61
    %v3718 = vmul.f32 %v3612, %v61
    %v3719 = vadd.f32 %v3703, %v3711
    %v3720 = vadd.f32 %v3704, %v3712
    %v3721 = vadd.f32 %v3705, %v3713
    %v3722 = vadd.f32 %v3706, %v3714
    %v3723 = vadd.f32 %v3707, %v3715
    %v3724 = vadd.f32 %v3708, %v3716
    %v3725 = vadd.f32 %v3709, %v3717
    %v3726 = vadd.f32 %v3710, %v3718
    %v3727 = vmul.f32 %v3617, %v66
    %v3728 = vmul.f32 %v3622, %v66
    %v3729 = vmul.f32 %v3627, %v66
    %v3730 = vmul.f32 %v3632, %v66
    %v3731 = vmul.f32 %v3637, %v66
    %v3732 = vmul.f32 %v3642, %v66
    %v3733 = vmul.f32 %v3647, %v66
    %v3734 = vmul.f32 %v3652, %v66
    %v3735 = vadd.f32 %v3719, %v3727
    %v3736 = vadd.f32 %v3720, %v3728
    %v3737 = vadd.f32 %v3721, %v3729
    %v3738 = vadd.f32 %v3722, %v3730
    %v3739 = vadd.f32 %v3723, %v3731
    %v3740 = vadd.f32 %v3724, %v3732
    %v3741 = vadd.f32 %v3725, %v3733
    %v3742 = vadd.f32 %v3726, %v3734
    %v3743 = vmul.f32 %v3657, %v71
    %v3744 = vmul.f32 %v3662, %v71
    %v3745 = vmul.f32 %v3667, %v71
    %v3746 = vmul.f32 %v3672, %v71
    %v3747 = vmul.f32 %v3677, %v71
    %v3748 = vmul.f32 %v3682, %v71
    %v3749 = vmul.f32 %v3687, %v71
    %v3750 = vmul.f32 %v3692, %v71
    %v3751 = vadd.f32 %v3735, %v3743
    %v3752 = vadd.f32 %v3736, %v3744
    %v3753 = vadd.f32 %v3737, %v3745
    %v3754 = vadd.f32 %v3738, %v3746
    %v3755 = vadd.f32 %v3739, %v3747
    %v3756 = vadd.f32 %v3740, %v3748
    %v3757 = vadd.f32 %v3741, %v3749
    %v3758 = vadd.f32 %v3742, %v3750
    %v3759 = vld [vmem:[%s2550 + $0x8] sm:$0xf]
    %v3760 = vld [vmem:[%s2550 + $0x18] sm:$0xf]
    %v3761 = vld [vmem:[%s2550 + $0x28] sm:$0xf]
    %v3762 = vld [vmem:[%s2550 + $0x38] sm:$0xf]
    %v3763 = vld [vmem:[%s2550 + $0x48] sm:$0xf]
    %v3764 = vld [vmem:[%s2550 + $0x58] sm:$0xf]
    %v3765 = vld [vmem:[%s2550 + $0x68] sm:$0xf]
    %v3766 = vld [vmem:[%s2550 + $0x78] sm:$0xf]
    %v3767 = vld [vmem:[%s2550 + $0x88] sm:$0xf]
    %v3768 = vld [vmem:[%s2550 + $0x98] sm:$0xf]
    %v3769 = vld [vmem:[%s2550 + $0xa8] sm:$0xf]
    %v3770 = vld [vmem:[%s2550 + $0xb8] sm:$0xf]
    %v3771 = vld [vmem:[%s2550 + $0xc8] sm:$0xf]
    %v3772 = vld [vmem:[%s2550 + $0xd8] sm:$0xf]
    %v3773 = vld [vmem:[%s2550 + $0xe8] sm:$0xf]
    %v3774 = vld [vmem:[%s2550 + $0xf8] sm:$0xf]
    %v3775 = vunpack.c.l.bf16 %v3759
    %v3776 = vunpack.c.l.bf16 %v3760
    %v3777 = vunpack.c.l.bf16 %v3761
    %v3778 = vunpack.c.l.bf16 %v3762
    %v3779 = vunpack.c.l.bf16 %v3763
    %v3780 = vunpack.c.l.bf16 %v3764
    %v3781 = vunpack.c.l.bf16 %v3765
    %v3782 = vunpack.c.l.bf16 %v3766
    %v3783 = vunpack.c.l.bf16 %v3767
    %v3784 = vunpack.c.l.bf16 %v3768
    %v3785 = vunpack.c.l.bf16 %v3769
    %v3786 = vunpack.c.l.bf16 %v3770
    %v3787 = vunpack.c.l.bf16 %v3771
    %v3788 = vunpack.c.l.bf16 %v3772
    %v3789 = vunpack.c.l.bf16 %v3773
    %v3790 = vunpack.c.l.bf16 %v3774
    %v3791 = vld [vmem:[%s2599 + $0x2] sm:$0x1]
    %v3793 = vlaneseq
    %v3794 = vshrl.u32 %v3793, 7
    %v3795 = vsub.s32 0, %v3794
    %v3796 = vrot.slane %v3791, %v3795
    %3798 = vmatprep.subr.mxu0 0.0
    %3799 = vmatpush1.msra.mxu0 %v3790
    %3800 = vmatprep.subr.mxu0 0.0
    %3801 = vmatpush1.msra.mxu0 %v3789
    %3802 = vmatprep.subr.mxu0 0.0
    %3803 = vmatpush1.msra.mxu0 %v3788
    %3804 = vmatprep.subr.mxu0 0.0
    %3805 = vmatpush1.msra.mxu0 %v3787
    %3806 = vmatprep.subr.mxu0 0.0
    %3807 = vmatpush1.msra.mxu0 %v3786
    %3808 = vmatprep.subr.mxu0 0.0
    %3809 = vmatpush1.msra.mxu0 %v3785
    %3810 = vmatprep.subr.mxu0 0.0
    %3811 = vmatpush1.msra.mxu0 %v3784
    %3812 = vmatprep.subr.mxu0 0.0
    %3813 = vmatpush1.msra.mxu0 %v3783
    %3814 = vmatprep.subr.mxu0 0.0
    %3815 = vmatpush1.msra.mxu0 %v3782
    %3816 = vmatprep.subr.mxu0 0.0
    %3817 = vmatpush1.msra.mxu0 %v3781
    %3818 = vmatprep.subr.mxu0 0.0
    %3819 = vmatpush1.msra.mxu0 %v3780
    %3820 = vmatprep.subr.mxu0 0.0
    %3821 = vmatpush1.msra.mxu0 %v3779
    %3822 = vmatprep.subr.mxu0 0.0
    %3823 = vmatpush1.msra.mxu0 %v3778
    %3824 = vmatprep.subr.mxu0 0.0
    %3825 = vmatpush1.msra.mxu0 %v3777
    %3826 = vmatprep.subr.mxu0 0.0
    %3827 = vmatpush1.msra.mxu0 %v3776
    %3828 = vmatprep.subr.mxu0 0.0
    %3829 = vmatpush1.msra.mxu0 %v3775
    %3830 = vmatprep.subr.mxu0 0.0
    %3831 = vmatpush2.msra.mxu0 0.0
    %3832 = vmatprep.subr.mxu0 0.0
    %3833 = vmatpush2.msra.mxu0 0.0
    %3834 = vmatprep.subr.mxu0 0.0
    %3835 = vmatpush2.msra.mxu0 0.0
    %3836 = vmatprep.subr.mxu0 0.0
    %3837 = vmatpush2.msra.mxu0 0.0
    %3838 = vmatprep.subr.mxu0 0.0
    %3839 = vmatpush2.msra.mxu0 0.0
    %3840 = vmatprep.subr.mxu0 0.0
    %3841 = vmatpush2.msra.mxu0 0.0
    %3842 = vmatprep.subr.mxu0 0.0
    %3843 = vmatpush2.msra.mxu0 0.0
    %3844 = vmatprep.subr.mxu0 0.0
    %3845 = vmatpush2.msra.mxu0 0.0
    %3846 = vmatprep.subr.mxu0 0.0
    %3847 = vmatpush2.msra.mxu0 0.0
    %3848 = vmatprep.subr.mxu0 0.0
    %3849 = vmatpush2.msra.mxu0 0.0
    %3850 = vmatprep.subr.mxu0 0.0
    %3851 = vmatpush2.msra.mxu0 0.0
    %3852 = vmatprep.subr.mxu0 0.0
    %3853 = vmatpush2.msra.mxu0 0.0
    %3854 = vmatprep.subr.mxu0 0.0
    %3855 = vmatpush2.msra.mxu0 0.0
    %3856 = vmatprep.subr.mxu0 0.0
    %3857 = vmatpush2.msra.mxu0 0.0
    %3858 = vmatprep.subr.mxu0 0.0
    %3859 = vmatpush2.msra.mxu0 0.0
    %3860 = vmatprep.subr.mxu0 0.0
    %3861 = vmatpush2.msra.mxu0 0.0
    %3862 = vmatprep.mubr.f32.mxu0 0.0
    %3863 = vmatmul.mubr.f32.gmra.mxu0 %v3751
    %v3864 = vpop.f32.mrf.mxu0
    %v3865 = vadd.f32 %v3796, %v3864
    %v3866 = vpop.f32.mrf.mxu0
    %3867 = vmatprep.mubr.f32.mxu0 0.0
    %3868 = vmatmul.mubr.f32.gmra.mxu0 %v3752
    %v3869 = vpop.f32.mrf.mxu0
    %v3870 = vadd.f32 %v3796, %v3869
    %v3871 = vpop.f32.mrf.mxu0
    %3872 = vmatprep.mubr.f32.mxu0 0.0
    %3873 = vmatmul.mubr.f32.gmra.mxu0 %v3753
    %v3874 = vpop.f32.mrf.mxu0
    %v3875 = vadd.f32 %v3796, %v3874
    %v3876 = vpop.f32.mrf.mxu0
    %3877 = vmatprep.mubr.f32.mxu0 0.0
    %3878 = vmatmul.mubr.f32.gmra.mxu0 %v3754
    %v3879 = vpop.f32.mrf.mxu0
    %v3880 = vadd.f32 %v3796, %v3879
    %v3881 = vpop.f32.mrf.mxu0
    %3882 = vmatprep.mubr.f32.mxu0 0.0
    %3883 = vmatmul.mubr.f32.gmra.mxu0 %v3755
    %v3884 = vpop.f32.mrf.mxu0
    %v3885 = vadd.f32 %v3796, %v3884
    %v3886 = vpop.f32.mrf.mxu0
    %3887 = vmatprep.mubr.f32.mxu0 0.0
    %3888 = vmatmul.mubr.f32.gmra.mxu0 %v3756
    %v3889 = vpop.f32.mrf.mxu0
    %v3890 = vadd.f32 %v3796, %v3889
    %v3891 = vpop.f32.mrf.mxu0
    %3892 = vmatprep.mubr.f32.mxu0 0.0
    %3893 = vmatmul.mubr.f32.gmra.mxu0 %v3757
    %v3894 = vpop.f32.mrf.mxu0
    %v3895 = vadd.f32 %v3796, %v3894
    %v3896 = vpop.f32.mrf.mxu0
    %3897 = vmatprep.mubr.f32.mxu0 0.0
    %3898 = vmatmul.mubr.f32.gmra.mxu0 %v3758
    %v3899 = vpop.f32.mrf.mxu0
    %v3900 = vadd.f32 %v3796, %v3899
    %v3901 = vpop.f32.mrf.mxu0
    %3902 = vdwg.mxu0
    %v3903 = vmax.f32 %v3865, 0.0
    %v3904 = vmax.f32 %v3870, 0.0
    %v3905 = vmax.f32 %v3875, 0.0
    %v3906 = vmax.f32 %v3880, 0.0
    %v3907 = vmax.f32 %v3885, 0.0
    %v3908 = vmax.f32 %v3890, 0.0
    %v3909 = vmax.f32 %v3895, 0.0
    %v3910 = vmax.f32 %v3900, 0.0
    %v3911 = vadd.f32 %v3751, %v3903
    %v3912 = vadd.f32 %v3752, %v3904
    %v3913 = vadd.f32 %v3753, %v3905
    %v3914 = vadd.f32 %v3754, %v3906
    %v3915 = vadd.f32 %v3755, %v3907
    %v3916 = vadd.f32 %v3756, %v3908
    %v3917 = vadd.f32 %v3757, %v3909
    %v3918 = vadd.f32 %v3758, %v3910
    %s3919 = scalar_lea.vmem [#allocation2], 768
    %v3920 = vld [vmem:[%s3919] sm:$0xf]
    %v3921 = vld [vmem:[%s3919 + $0x10] sm:$0xf]
    %v3922 = vld [vmem:[%s3919 + $0x20] sm:$0xf]
    %v3923 = vld [vmem:[%s3919 + $0x30] sm:$0xf]
    %v3924 = vld [vmem:[%s3919 + $0x40] sm:$0xf]
    %v3925 = vld [vmem:[%s3919 + $0x50] sm:$0xf]
    %v3926 = vld [vmem:[%s3919 + $0x60] sm:$0xf]
    %v3927 = vld [vmem:[%s3919 + $0x70] sm:$0xf]
    %v3928 = vld [vmem:[%s3919 + $0x80] sm:$0xf]
    %v3929 = vld [vmem:[%s3919 + $0x90] sm:$0xf]
    %v3930 = vld [vmem:[%s3919 + $0xa0] sm:$0xf]
    %v3931 = vld [vmem:[%s3919 + $0xb0] sm:$0xf]
    %v3932 = vld [vmem:[%s3919 + $0xc0] sm:$0xf]
    %v3933 = vld [vmem:[%s3919 + $0xd0] sm:$0xf]
    %v3934 = vld [vmem:[%s3919 + $0xe0] sm:$0xf]
    %v3935 = vld [vmem:[%s3919 + $0xf0] sm:$0xf]
    %v3936 = vunpack.c.l.bf16 %v3920
    %v3937 = vunpack.c.l.bf16 %v3921
    %v3938 = vunpack.c.l.bf16 %v3922
    %v3939 = vunpack.c.l.bf16 %v3923
    %v3940 = vunpack.c.l.bf16 %v3924
    %v3941 = vunpack.c.l.bf16 %v3925
    %v3942 = vunpack.c.l.bf16 %v3926
    %v3943 = vunpack.c.l.bf16 %v3927
    %v3944 = vunpack.c.l.bf16 %v3928
    %v3945 = vunpack.c.l.bf16 %v3929
    %v3946 = vunpack.c.l.bf16 %v3930
    %v3947 = vunpack.c.l.bf16 %v3931
    %v3948 = vunpack.c.l.bf16 %v3932
    %v3949 = vunpack.c.l.bf16 %v3933
    %v3950 = vunpack.c.l.bf16 %v3934
    %v3951 = vunpack.c.l.bf16 %v3935
    %s3952 = scalar_lea.vmem %s9, 12
    %v3953 = vld [vmem:[%s3952] sm:$0x1]
    %v3955 = vlaneseq
    %v3956 = vshrl.u32 %v3955, 7
    %v3957 = vsub.s32 0, %v3956
    %v3958 = vrot.slane %v3953, %v3957
    %3960 = vmatprep.subr.mxu0 0.0
    %3961 = vmatpush1.msra.mxu0 %v3951
    %3962 = vmatprep.subr.mxu0 0.0
    %3963 = vmatpush1.msra.mxu0 %v3950
    %3964 = vmatprep.subr.mxu0 0.0
    %3965 = vmatpush1.msra.mxu0 %v3949
    %3966 = vmatprep.subr.mxu0 0.0
    %3967 = vmatpush1.msra.mxu0 %v3948
    %3968 = vmatprep.subr.mxu0 0.0
    %3969 = vmatpush1.msra.mxu0 %v3947
    %3970 = vmatprep.subr.mxu0 0.0
    %3971 = vmatpush1.msra.mxu0 %v3946
    %3972 = vmatprep.subr.mxu0 0.0
    %3973 = vmatpush1.msra.mxu0 %v3945
    %3974 = vmatprep.subr.mxu0 0.0
    %3975 = vmatpush1.msra.mxu0 %v3944
    %3976 = vmatprep.subr.mxu0 0.0
    %3977 = vmatpush1.msra.mxu0 %v3943
    %3978 = vmatprep.subr.mxu0 0.0
    %3979 = vmatpush1.msra.mxu0 %v3942
    %3980 = vmatprep.subr.mxu0 0.0
    %3981 = vmatpush1.msra.mxu0 %v3941
    %3982 = vmatprep.subr.mxu0 0.0
    %3983 = vmatpush1.msra.mxu0 %v3940
    %3984 = vmatprep.subr.mxu0 0.0
    %3985 = vmatpush1.msra.mxu0 %v3939
    %3986 = vmatprep.subr.mxu0 0.0
    %3987 = vmatpush1.msra.mxu0 %v3938
    %3988 = vmatprep.subr.mxu0 0.0
    %3989 = vmatpush1.msra.mxu0 %v3937
    %3990 = vmatprep.subr.mxu0 0.0
    %3991 = vmatpush1.msra.mxu0 %v3936
    %3992 = vmatprep.subr.mxu0 0.0
    %3993 = vmatpush2.msra.mxu0 0.0
    %3994 = vmatprep.subr.mxu0 0.0
    %3995 = vmatpush2.msra.mxu0 0.0
    %3996 = vmatprep.subr.mxu0 0.0
    %3997 = vmatpush2.msra.mxu0 0.0
    %3998 = vmatprep.subr.mxu0 0.0
    %3999 = vmatpush2.msra.mxu0 0.0
    %4000 = vmatprep.subr.mxu0 0.0
    %4001 = vmatpush2.msra.mxu0 0.0
    %4002 = vmatprep.subr.mxu0 0.0
    %4003 = vmatpush2.msra.mxu0 0.0
    %4004 = vmatprep.subr.mxu0 0.0
    %4005 = vmatpush2.msra.mxu0 0.0
    %4006 = vmatprep.subr.mxu0 0.0
    %4007 = vmatpush2.msra.mxu0 0.0
    %4008 = vmatprep.subr.mxu0 0.0
    %4009 = vmatpush2.msra.mxu0 0.0
    %4010 = vmatprep.subr.mxu0 0.0
    %4011 = vmatpush2.msra.mxu0 0.0
    %4012 = vmatprep.subr.mxu0 0.0
    %4013 = vmatpush2.msra.mxu0 0.0
    %4014 = vmatprep.subr.mxu0 0.0
    %4015 = vmatpush2.msra.mxu0 0.0
    %4016 = vmatprep.subr.mxu0 0.0
    %4017 = vmatpush2.msra.mxu0 0.0
    %4018 = vmatprep.subr.mxu0 0.0
    %4019 = vmatpush2.msra.mxu0 0.0
    %4020 = vmatprep.subr.mxu0 0.0
    %4021 = vmatpush2.msra.mxu0 0.0
    %4022 = vmatprep.subr.mxu0 0.0
    %4023 = vmatpush2.msra.mxu0 0.0
    %4024 = vmatprep.mubr.f32.mxu0 0.0
    %4025 = vmatmul.mubr.f32.gmra.mxu0 %v2538
    %v4026 = vpop.f32.mrf.mxu0
    %v4027 = vadd.f32 %v3958, %v4026
    %v4028 = vpop.f32.mrf.mxu0
    %4029 = vmatprep.mubr.f32.mxu0 0.0
    %4030 = vmatmul.mubr.f32.gmra.mxu0 %v2539
    %v4031 = vpop.f32.mrf.mxu0
    %v4032 = vadd.f32 %v3958, %v4031
    %v4033 = vpop.f32.mrf.mxu0
    %4034 = vmatprep.mubr.f32.mxu0 0.0
    %4035 = vmatmul.mubr.f32.gmra.mxu0 %v2540
    %v4036 = vpop.f32.mrf.mxu0
    %v4037 = vadd.f32 %v3958, %v4036
    %v4038 = vpop.f32.mrf.mxu0
    %4039 = vmatprep.mubr.f32.mxu0 0.0
    %4040 = vmatmul.mubr.f32.gmra.mxu0 %v2541
    %v4041 = vpop.f32.mrf.mxu0
    %v4042 = vadd.f32 %v3958, %v4041
    %v4043 = vpop.f32.mrf.mxu0
    %4044 = vdwg.mxu0
    %v4045 = vld [vmem:[%s3919 + $0x4] sm:$0xff]
    %v4046 = vld [vmem:[%s3919 + $0x14] sm:$0xff]
    %v4047 = vld [vmem:[%s3919 + $0x24] sm:$0xff]
    %v4048 = vld [vmem:[%s3919 + $0x34] sm:$0xff]
    %v4049 = vld [vmem:[%s3919 + $0x44] sm:$0xff]
    %v4050 = vld [vmem:[%s3919 + $0x54] sm:$0xff]
    %v4051 = vld [vmem:[%s3919 + $0x64] sm:$0xff]
    %v4052 = vld [vmem:[%s3919 + $0x74] sm:$0xff]
    %v4053 = vld [vmem:[%s3919 + $0x84] sm:$0xff]
    %v4054 = vld [vmem:[%s3919 + $0x94] sm:$0xff]
    %v4055 = vld [vmem:[%s3919 + $0xa4] sm:$0xff]
    %v4056 = vld [vmem:[%s3919 + $0xb4] sm:$0xff]
    %v4057 = vld [vmem:[%s3919 + $0xc4] sm:$0xff]
    %v4058 = vld [vmem:[%s3919 + $0xd4] sm:$0xff]
    %v4059 = vld [vmem:[%s3919 + $0xe4] sm:$0xff]
    %v4060 = vld [vmem:[%s3919 + $0xf4] sm:$0xff]
    %v4061 = vunpack.c.l.bf16 %v4045
    %v4062 = vunpack.c.h.bf16 %v4045
    %v4063 = vunpack.c.l.bf16 %v4046
    %v4064 = vunpack.c.h.bf16 %v4046
    %v4065 = vunpack.c.l.bf16 %v4047
    %v4066 = vunpack.c.h.bf16 %v4047
    %v4067 = vunpack.c.l.bf16 %v4048
    %v4068 = vunpack.c.h.bf16 %v4048
    %v4069 = vunpack.c.l.bf16 %v4049
    %v4070 = vunpack.c.h.bf16 %v4049
    %v4071 = vunpack.c.l.bf16 %v4050
    %v4072 = vunpack.c.h.bf16 %v4050
    %v4073 = vunpack.c.l.bf16 %v4051
    %v4074 = vunpack.c.h.bf16 %v4051
    %v4075 = vunpack.c.l.bf16 %v4052
    %v4076 = vunpack.c.h.bf16 %v4052
    %v4077 = vunpack.c.l.bf16 %v4053
    %v4078 = vunpack.c.h.bf16 %v4053
    %v4079 = vunpack.c.l.bf16 %v4054
    %v4080 = vunpack.c.h.bf16 %v4054
    %v4081 = vunpack.c.l.bf16 %v4055
    %v4082 = vunpack.c.h.bf16 %v4055
    %v4083 = vunpack.c.l.bf16 %v4056
    %v4084 = vunpack.c.h.bf16 %v4056
    %v4085 = vunpack.c.l.bf16 %v4057
    %v4086 = vunpack.c.h.bf16 %v4057
    %v4087 = vunpack.c.l.bf16 %v4058
    %v4088 = vunpack.c.h.bf16 %v4058
    %v4089 = vunpack.c.l.bf16 %v4059
    %v4090 = vunpack.c.h.bf16 %v4059
    %v4091 = vunpack.c.l.bf16 %v4060
    %v4092 = vunpack.c.h.bf16 %v4060
    %v4093 = vld [vmem:[%s3952 + $0x1] sm:$0x3]
    %v4095 = vlaneseq
    %v4096 = vshrl.u32 %v4095, 7
    %v4097 = vsub.s32 0, %v4096
    %v4098 = vrot.slane %v4093, %v4097
    %v4099 = vlaneseq
    %v4100 = vshrl.u32 %v4099, 7
    %v4101 = vsub.s32 1, %v4100
    %v4102 = vrot.slane %v4093, %v4101
    %4105 = vmatprep.subr.mxu0 %v4092
    %4106 = vmatpush1.msra.mxu0 %v4091
    %4107 = vmatprep.subr.mxu0 %v4090
    %4108 = vmatpush1.msra.mxu0 %v4089
    %4109 = vmatprep.subr.mxu0 %v4088
    %4110 = vmatpush1.msra.mxu0 %v4087
    %4111 = vmatprep.subr.mxu0 %v4086
    %4112 = vmatpush1.msra.mxu0 %v4085
    %4113 = vmatprep.subr.mxu0 %v4084
    %4114 = vmatpush1.msra.mxu0 %v4083
    %4115 = vmatprep.subr.mxu0 %v4082
    %4116 = vmatpush1.msra.mxu0 %v4081
    %4117 = vmatprep.subr.mxu0 %v4080
    %4118 = vmatpush1.msra.mxu0 %v4079
    %4119 = vmatprep.subr.mxu0 %v4078
    %4120 = vmatpush1.msra.mxu0 %v4077
    %4121 = vmatprep.subr.mxu0 %v4076
    %4122 = vmatpush1.msra.mxu0 %v4075
    %4123 = vmatprep.subr.mxu0 %v4074
    %4124 = vmatpush1.msra.mxu0 %v4073
    %4125 = vmatprep.subr.mxu0 %v4072
    %4126 = vmatpush1.msra.mxu0 %v4071
    %4127 = vmatprep.subr.mxu0 %v4070
    %4128 = vmatpush1.msra.mxu0 %v4069
    %4129 = vmatprep.subr.mxu0 %v4068
    %4130 = vmatpush1.msra.mxu0 %v4067
    %4131 = vmatprep.subr.mxu0 %v4066
    %4132 = vmatpush1.msra.mxu0 %v4065
    %4133 = vmatprep.subr.mxu0 %v4064
    %4134 = vmatpush1.msra.mxu0 %v4063
    %4135 = vmatprep.subr.mxu0 %v4062
    %4136 = vmatpush1.msra.mxu0 %v4061
    %4137 = vmatprep.subr.mxu0 0.0
    %4138 = vmatpush2.msra.mxu0 0.0
    %4139 = vmatprep.subr.mxu0 0.0
    %4140 = vmatpush2.msra.mxu0 0.0
    %4141 = vmatprep.subr.mxu0 0.0
    %4142 = vmatpush2.msra.mxu0 0.0
    %4143 = vmatprep.subr.mxu0 0.0
    %4144 = vmatpush2.msra.mxu0 0.0
    %4145 = vmatprep.subr.mxu0 0.0
    %4146 = vmatpush2.msra.mxu0 0.0
    %4147 = vmatprep.subr.mxu0 0.0
    %4148 = vmatpush2.msra.mxu0 0.0
    %4149 = vmatprep.subr.mxu0 0.0
    %4150 = vmatpush2.msra.mxu0 0.0
    %4151 = vmatprep.subr.mxu0 0.0
    %4152 = vmatpush2.msra.mxu0 0.0
    %4153 = vmatprep.subr.mxu0 0.0
    %4154 = vmatpush2.msra.mxu0 0.0
    %4155 = vmatprep.subr.mxu0 0.0
    %4156 = vmatpush2.msra.mxu0 0.0
    %4157 = vmatprep.subr.mxu0 0.0
    %4158 = vmatpush2.msra.mxu0 0.0
    %4159 = vmatprep.subr.mxu0 0.0
    %4160 = vmatpush2.msra.mxu0 0.0
    %4161 = vmatprep.subr.mxu0 0.0
    %4162 = vmatpush2.msra.mxu0 0.0
    %4163 = vmatprep.subr.mxu0 0.0
    %4164 = vmatpush2.msra.mxu0 0.0
    %4165 = vmatprep.subr.mxu0 0.0
    %4166 = vmatpush2.msra.mxu0 0.0
    %4167 = vmatprep.subr.mxu0 0.0
    %4168 = vmatpush2.msra.mxu0 0.0
    %4169 = vmatprep.mubr.f32.mxu0 0.0
    %4170 = vmatmul.mubr.f32.gmra.mxu0 %v3911
    %v4171 = vpop.f32.mrf.mxu0
    %v4172 = vadd.f32 %v4098, %v4171
    %v4173 = vpop.f32.mrf.mxu0
    %v4174 = vadd.f32 %v4102, %v4173
    %4175 = vmatprep.mubr.f32.mxu0 0.0
    %4176 = vmatmul.mubr.f32.gmra.mxu0 %v3912
    %v4177 = vpop.f32.mrf.mxu0
    %v4178 = vadd.f32 %v4098, %v4177
    %v4179 = vpop.f32.mrf.mxu0
    %v4180 = vadd.f32 %v4102, %v4179
    %4181 = vmatprep.mubr.f32.mxu0 0.0
    %4182 = vmatmul.mubr.f32.gmra.mxu0 %v3913
    %v4183 = vpop.f32.mrf.mxu0
    %v4184 = vadd.f32 %v4098, %v4183
    %v4185 = vpop.f32.mrf.mxu0
    %v4186 = vadd.f32 %v4102, %v4185
    %4187 = vmatprep.mubr.f32.mxu0 0.0
    %4188 = vmatmul.mubr.f32.gmra.mxu0 %v3914
    %v4189 = vpop.f32.mrf.mxu0
    %v4190 = vadd.f32 %v4098, %v4189
    %v4191 = vpop.f32.mrf.mxu0
    %v4192 = vadd.f32 %v4102, %v4191
    %4193 = vmatprep.mubr.f32.mxu0 0.0
    %4194 = vmatmul.mubr.f32.gmra.mxu0 %v3915
    %v4195 = vpop.f32.mrf.mxu0
    %v4196 = vadd.f32 %v4098, %v4195
    %v4197 = vpop.f32.mrf.mxu0
    %v4198 = vadd.f32 %v4102, %v4197
    %4199 = vmatprep.mubr.f32.mxu0 0.0
    %4200 = vmatmul.mubr.f32.gmra.mxu0 %v3916
    %v4201 = vpop.f32.mrf.mxu0
    %v4202 = vadd.f32 %v4098, %v4201
    %v4203 = vpop.f32.mrf.mxu0
    %v4204 = vadd.f32 %v4102, %v4203
    %4205 = vmatprep.mubr.f32.mxu0 0.0
    %4206 = vmatmul.mubr.f32.gmra.mxu0 %v3917
    %v4207 = vpop.f32.mrf.mxu0
    %v4208 = vadd.f32 %v4098, %v4207
    %v4209 = vpop.f32.mrf.mxu0
    %v4210 = vadd.f32 %v4102, %v4209
    %4211 = vmatprep.mubr.f32.mxu0 0.0
    %4212 = vmatmul.mubr.f32.gmra.mxu0 %v3918
    %v4213 = vpop.f32.mrf.mxu0
    %v4214 = vadd.f32 %v4098, %v4213
    %v4215 = vpop.f32.mrf.mxu0
    %v4216 = vadd.f32 %v4102, %v4215
    %4217 = vdwg.mxu0
    %v4218 = vmul.f32 %v4027, %v56
    %v4219 = vmul.f32 %v4032, %v56
    %v4220 = vmul.f32 %v4037, %v56
    %v4221 = vmul.f32 %v4042, %v56
    %v4222 = vmul.f32 %v4027, %v61
    %v4223 = vmul.f32 %v4032, %v61
    %v4224 = vmul.f32 %v4037, %v61
    %v4225 = vmul.f32 %v4042, %v61
    %v4226 = vmul.f32 %v4027, %v66
    %v4227 = vmul.f32 %v4032, %v66
    %v4228 = vmul.f32 %v4037, %v66
    %v4229 = vmul.f32 %v4042, %v66
    %v4230 = vmul.f32 %v4027, %v71
    %v4231 = vmul.f32 %v4032, %v71
    %v4232 = vmul.f32 %v4037, %v71
    %v4233 = vmul.f32 %v4042, %v71
    %4234 = vmatprep.subr.mxu0 0.0
    %4235 = vmatpush1.xpose.msra.mxu0 0.0
    %4236 = vmatprep.subr.mxu0 0.0
    %4237 = vmatpush1.xpose.msra.mxu0 0.0
    %4238 = vmatprep.subr.mxu0 0.0
    %4239 = vmatpush1.xpose.msra.mxu0 0.0
    %4240 = vmatprep.subr.mxu0 0.0
    %4241 = vmatpush1.xpose.msra.mxu0 0.0
    %4242 = vmatprep.subr.mxu0 0.0
    %4243 = vmatpush1.xpose.msra.mxu0 0.0
    %4244 = vmatprep.subr.mxu0 0.0
    %4245 = vmatpush1.xpose.msra.mxu0 0.0
    %4246 = vmatprep.subr.mxu0 0.0
    %4247 = vmatpush1.xpose.msra.mxu0 0.0
    %4248 = vmatprep.subr.mxu0 0.0
    %4249 = vmatpush1.xpose.msra.mxu0 0.0
    %4250 = vmatprep.subr.mxu0 0.0
    %4251 = vmatpush1.xpose.msra.mxu0 %v4214
    %4252 = vmatprep.subr.mxu0 0.0
    %4253 = vmatpush1.xpose.msra.mxu0 %v4208
    %4254 = vmatprep.subr.mxu0 0.0
    %4255 = vmatpush1.xpose.msra.mxu0 %v4202
    %4256 = vmatprep.subr.mxu0 0.0
    %4257 = vmatpush1.xpose.msra.mxu0 %v4196
    %4258 = vmatprep.subr.mxu0 0.0
    %4259 = vmatpush1.xpose.msra.mxu0 %v4190
    %4260 = vmatprep.subr.mxu0 0.0
    %4261 = vmatpush1.xpose.msra.mxu0 %v4184
    %4262 = vmatprep.subr.mxu0 0.0
    %4263 = vmatpush1.xpose.msra.mxu0 %v4178
    %4264 = vmatprep.subr.mxu0 0.0
    %4265 = vmatpush1.xpose.msra.mxu0 %v4172
    %4266 = vmatprep.subr.mxu0 0.0
    %4267 = vmatpush2.xpose.msra.mxu0 0.0
    %4268 = vmatprep.subr.mxu0 0.0
    %4269 = vmatpush2.xpose.msra.mxu0 0.0
    %4270 = vmatprep.subr.mxu0 0.0
    %4271 = vmatpush2.xpose.msra.mxu0 0.0
    %4272 = vmatprep.subr.mxu0 0.0
    %4273 = vmatpush2.xpose.msra.mxu0 0.0
    %4274 = vmatprep.subr.mxu0 0.0
    %4275 = vmatpush2.xpose.msra.mxu0 0.0
    %4276 = vmatprep.subr.mxu0 0.0
    %4277 = vmatpush2.xpose.msra.mxu0 0.0
    %4278 = vmatprep.subr.mxu0 0.0
    %4279 = vmatpush2.xpose.msra.mxu0 0.0
    %4280 = vmatprep.subr.mxu0 0.0
    %4281 = vmatpush2.xpose.msra.mxu0 0.0
    %4282 = vmatprep.subr.mxu0 0.0
    %4283 = vmatpush2.xpose.msra.mxu0 0.0
    %4284 = vmatprep.subr.mxu0 0.0
    %4285 = vmatpush2.xpose.msra.mxu0 0.0
    %4286 = vmatprep.subr.mxu0 0.0
    %4287 = vmatpush2.xpose.msra.mxu0 0.0
    %4288 = vmatprep.subr.mxu0 0.0
    %4289 = vmatpush2.xpose.msra.mxu0 0.0
    %4290 = vmatprep.subr.mxu0 0.0
    %4291 = vmatpush2.xpose.msra.mxu0 0.0
    %4292 = vmatprep.subr.mxu0 0.0
    %4293 = vmatpush2.xpose.msra.mxu0 0.0
    %4294 = vmatprep.subr.mxu0 0.0
    %4295 = vmatpush2.xpose.msra.mxu0 0.0
    %4296 = vmatprep.subr.mxu0 0.0
    %4297 = vmatpush2.xpose.msra.mxu0 0.0
    %4298 = vmatprep.mubr.f32.mxu0 0.0
    %4299 = vmatmul.mubr.f32.gmra.mxu0 %v4218
    %v4300 = vpop.f32.mrf.mxu0
    %v4301 = vadd.f32 0.0, %v4300
    %v4302 = vpop.f32.mrf.mxu0
    %4303 = vmatprep.mubr.f32.mxu0 0.0
    %4304 = vmatmul.mubr.f32.gmra.mxu0 %v4219
    %v4305 = vpop.f32.mrf.mxu0
    %v4306 = vadd.f32 0.0, %v4305
    %v4307 = vpop.f32.mrf.mxu0
    %4308 = vmatprep.mubr.f32.mxu0 0.0
    %4309 = vmatmul.mubr.f32.gmra.mxu0 %v4220
    %v4310 = vpop.f32.mrf.mxu0
    %v4311 = vadd.f32 0.0, %v4310
    %v4312 = vpop.f32.mrf.mxu0
    %4313 = vmatprep.mubr.f32.mxu0 0.0
    %4314 = vmatmul.mubr.f32.gmra.mxu0 %v4221
    %v4315 = vpop.f32.mrf.mxu0
    %v4316 = vadd.f32 0.0, %v4315
    %v4317 = vpop.f32.mrf.mxu0
    %4318 = vmatprep.mubr.f32.mxu0 0.0
    %4319 = vmatmul.mubr.f32.gmra.mxu0 %v4222
    %v4320 = vpop.f32.mrf.mxu0
    %v4321 = vadd.f32 0.0, %v4320
    %v4322 = vpop.f32.mrf.mxu0
    %4323 = vmatprep.mubr.f32.mxu0 0.0
    %4324 = vmatmul.mubr.f32.gmra.mxu0 %v4223
    %v4325 = vpop.f32.mrf.mxu0
    %v4326 = vadd.f32 0.0, %v4325
    %v4327 = vpop.f32.mrf.mxu0
    %4328 = vmatprep.mubr.f32.mxu0 0.0
    %4329 = vmatmul.mubr.f32.gmra.mxu0 %v4224
    %v4330 = vpop.f32.mrf.mxu0
    %v4331 = vadd.f32 0.0, %v4330
    %v4332 = vpop.f32.mrf.mxu0
    %4333 = vmatprep.mubr.f32.mxu0 0.0
    %4334 = vmatmul.mubr.f32.gmra.mxu0 %v4225
    %v4335 = vpop.f32.mrf.mxu0
    %v4336 = vadd.f32 0.0, %v4335
    %v4337 = vpop.f32.mrf.mxu0
    %4338 = vmatprep.mubr.f32.mxu0 0.0
    %4339 = vmatmul.mubr.f32.gmra.mxu0 %v4226
    %v4340 = vpop.f32.mrf.mxu0
    %v4341 = vadd.f32 0.0, %v4340
    %v4342 = vpop.f32.mrf.mxu0
    %4343 = vmatprep.mubr.f32.mxu0 0.0
    %4344 = vmatmul.mubr.f32.gmra.mxu0 %v4227
    %v4345 = vpop.f32.mrf.mxu0
    %v4346 = vadd.f32 0.0, %v4345
    %v4347 = vpop.f32.mrf.mxu0
    %4348 = vmatprep.mubr.f32.mxu0 0.0
    %4349 = vmatmul.mubr.f32.gmra.mxu0 %v4228
    %v4350 = vpop.f32.mrf.mxu0
    %v4351 = vadd.f32 0.0, %v4350
    %v4352 = vpop.f32.mrf.mxu0
    %4353 = vmatprep.mubr.f32.mxu0 0.0
    %4354 = vmatmul.mubr.f32.gmra.mxu0 %v4229
    %v4355 = vpop.f32.mrf.mxu0
    %v4356 = vadd.f32 0.0, %v4355
    %v4357 = vpop.f32.mrf.mxu0
    %4358 = vmatprep.mubr.f32.mxu0 0.0
    %4359 = vmatmul.mubr.f32.gmra.mxu0 %v4230
    %v4360 = vpop.f32.mrf.mxu0
    %v4361 = vadd.f32 0.0, %v4360
    %v4362 = vpop.f32.mrf.mxu0
    %4363 = vmatprep.mubr.f32.mxu0 0.0
    %4364 = vmatmul.mubr.f32.gmra.mxu0 %v4231
    %v4365 = vpop.f32.mrf.mxu0
    %v4366 = vadd.f32 0.0, %v4365
    %v4367 = vpop.f32.mrf.mxu0
    %4368 = vmatprep.mubr.f32.mxu0 0.0
    %4369 = vmatmul.mubr.f32.gmra.mxu0 %v4232
    %v4370 = vpop.f32.mrf.mxu0
    %v4371 = vadd.f32 0.0, %v4370
    %v4372 = vpop.f32.mrf.mxu0
    %4373 = vmatprep.mubr.f32.mxu0 0.0
    %4374 = vmatmul.mubr.f32.gmra.mxu0 %v4233
    %v4375 = vpop.f32.mrf.mxu0
    %v4376 = vadd.f32 0.0, %v4375
    %v4377 = vpop.f32.mrf.mxu0
    %4378 = vdwg.mxu0
    %v4379 = vmul.f32 %v4301, 0.088388346
    %v4380 = vmul.f32 %v4306, 0.088388346
    %v4381 = vmul.f32 %v4311, 0.088388346
    %v4382 = vmul.f32 %v4316, 0.088388346
    %v4383 = vmul.f32 %v4321, 0.088388346
    %v4384 = vmul.f32 %v4326, 0.088388346
    %v4385 = vmul.f32 %v4331, 0.088388346
    %v4386 = vmul.f32 %v4336, 0.088388346
    %v4387 = vmul.f32 %v4341, 0.088388346
    %v4388 = vmul.f32 %v4346, 0.088388346
    %v4389 = vmul.f32 %v4351, 0.088388346
    %v4390 = vmul.f32 %v4356, 0.088388346
    %v4391 = vmul.f32 %v4361, 0.088388346
    %v4392 = vmul.f32 %v4366, 0.088388346
    %v4393 = vmul.f32 %v4371, 0.088388346
    %v4394 = vmul.f32 %v4376, 0.088388346
    %v4395 = vadd.f32 %v4379, %v108
    %v4396 = vadd.f32 %v4380, %v109
    %v4397 = vadd.f32 %v4381, %v110
    %v4398 = vadd.f32 %v4382, %v111
    %v4399 = vadd.f32 %v4383, %v112
    %v4400 = vadd.f32 %v4384, %v113
    %v4401 = vadd.f32 %v4385, %v114
    %v4402 = vadd.f32 %v4386, %v115
    %v4403 = vadd.f32 %v4387, %v116
    %v4404 = vadd.f32 %v4388, %v117
    %v4405 = vadd.f32 %v4389, %v118
    %v4406 = vadd.f32 %v4390, %v119
    %v4407 = vadd.f32 %v4391, %v120
    %v4408 = vadd.f32 %v4392, %v121
    %v4409 = vadd.f32 %v4393, %v122
    %v4410 = vadd.f32 %v4394, %v123
    %v4411 = vsel %vm2008, %v4395, -inf
    %4412 = vmax.xlane.f32.xlu0 %v4411
    %v4413 = vpop.xlane.xlu0 %4412
    %v4414 = vsel %vm2008, %v4396, -inf
    %4415 = vmax.xlane.f32.xlu0 %v4414
    %v4416 = vpop.xlane.xlu0 %4415
    %v4417 = vsel %vm2008, %v4397, -inf
    %4418 = vmax.xlane.f32.xlu0 %v4417
    %v4419 = vpop.xlane.xlu0 %4418
    %v4420 = vsel %vm2008, %v4398, -inf
    %4421 = vmax.xlane.f32.xlu0 %v4420
    %v4422 = vpop.xlane.xlu0 %4421
    %v4423 = vsel %vm2008, %v4399, -inf
    %4424 = vmax.xlane.f32.xlu0 %v4423
    %v4425 = vpop.xlane.xlu0 %4424
    %v4426 = vsel %vm2008, %v4400, -inf
    %4427 = vmax.xlane.f32.xlu0 %v4426
    %v4428 = vpop.xlane.xlu0 %4427
    %v4429 = vsel %vm2008, %v4401, -inf
    %4430 = vmax.xlane.f32.xlu0 %v4429
    %v4431 = vpop.xlane.xlu0 %4430
    %v4432 = vsel %vm2008, %v4402, -inf
    %4433 = vmax.xlane.f32.xlu0 %v4432
    %v4434 = vpop.xlane.xlu0 %4433
    %v4435 = vsel %vm2008, %v4403, -inf
    %4436 = vmax.xlane.f32.xlu0 %v4435
    %v4437 = vpop.xlane.xlu0 %4436
    %v4438 = vsel %vm2008, %v4404, -inf
    %4439 = vmax.xlane.f32.xlu0 %v4438
    %v4440 = vpop.xlane.xlu0 %4439
    %v4441 = vsel %vm2008, %v4405, -inf
    %4442 = vmax.xlane.f32.xlu0 %v4441
    %v4443 = vpop.xlane.xlu0 %4442
    %v4444 = vsel %vm2008, %v4406, -inf
    %4445 = vmax.xlane.f32.xlu0 %v4444
    %v4446 = vpop.xlane.xlu0 %4445
    %v4447 = vsel %vm2008, %v4407, -inf
    %4448 = vmax.xlane.f32.xlu0 %v4447
    %v4449 = vpop.xlane.xlu0 %4448
    %v4450 = vsel %vm2008, %v4408, -inf
    %4451 = vmax.xlane.f32.xlu0 %v4450
    %v4452 = vpop.xlane.xlu0 %4451
    %v4453 = vsel %vm2008, %v4409, -inf
    %4454 = vmax.xlane.f32.xlu0 %v4453
    %v4455 = vpop.xlane.xlu0 %4454
    %v4456 = vsel %vm2008, %v4410, -inf
    %4457 = vmax.xlane.f32.xlu0 %v4456
    %v4458 = vpop.xlane.xlu0 %4457
    %v4459 = vsub.f32 %v4395, %v4413
    %v4460 = vsub.f32 %v4396, %v4416
    %v4461 = vsub.f32 %v4397, %v4419
    %v4462 = vsub.f32 %v4398, %v4422
    %v4463 = vsub.f32 %v4399, %v4425
    %v4464 = vsub.f32 %v4400, %v4428
    %v4465 = vsub.f32 %v4401, %v4431
    %v4466 = vsub.f32 %v4402, %v4434
    %v4467 = vsub.f32 %v4403, %v4437
    %v4468 = vsub.f32 %v4404, %v4440
    %v4469 = vsub.f32 %v4405, %v4443
    %v4470 = vsub.f32 %v4406, %v4446
    %v4471 = vsub.f32 %v4407, %v4449
    %v4472 = vsub.f32 %v4408, %v4452
    %v4473 = vsub.f32 %v4409, %v4455
    %v4474 = vsub.f32 %v4410, %v4458
    %v4475 = vmul.f32 %v4459, 1.442695
    %v4476 = vpow.pop %v4475
    %v4477 = vmul.f32 %v4460, 1.442695
    %v4478 = vpow.pop %v4477
    %v4479 = vmul.f32 %v4461, 1.442695
    %v4480 = vpow.pop %v4479
    %v4481 = vmul.f32 %v4462, 1.442695
    %v4482 = vpow.pop %v4481
    %v4483 = vmul.f32 %v4463, 1.442695
    %v4484 = vpow.pop %v4483
    %v4485 = vmul.f32 %v4464, 1.442695
    %v4486 = vpow.pop %v4485
    %v4487 = vmul.f32 %v4465, 1.442695
    %v4488 = vpow.pop %v4487
    %v4489 = vmul.f32 %v4466, 1.442695
    %v4490 = vpow.pop %v4489
    %v4491 = vmul.f32 %v4467, 1.442695
    %v4492 = vpow.pop %v4491
    %v4493 = vmul.f32 %v4468, 1.442695
    %v4494 = vpow.pop %v4493
    %v4495 = vmul.f32 %v4469, 1.442695
    %v4496 = vpow.pop %v4495
    %v4497 = vmul.f32 %v4470, 1.442695
    %v4498 = vpow.pop %v4497
    %v4499 = vmul.f32 %v4471, 1.442695
    %v4500 = vpow.pop %v4499
    %v4501 = vmul.f32 %v4472, 1.442695
    %v4502 = vpow.pop %v4501
    %v4503 = vmul.f32 %v4473, 1.442695
    %v4504 = vpow.pop %v4503
    %v4505 = vmul.f32 %v4474, 1.442695
    %v4506 = vpow.pop %v4505
    %v4507 = vsel %vm2008, %v4476, 0.0
    %4508 = vadd.xlane.f32.xlu0 %v4507
    %v4509 = vpop.xlane.xlu0 %4508
    %v4510 = vsel %vm2008, %v4478, 0.0
    %4511 = vadd.xlane.f32.xlu0 %v4510
    %v4512 = vpop.xlane.xlu0 %4511
    %v4513 = vsel %vm2008, %v4480, 0.0
    %4514 = vadd.xlane.f32.xlu0 %v4513
    %v4515 = vpop.xlane.xlu0 %4514
    %v4516 = vsel %vm2008, %v4482, 0.0
    %4517 = vadd.xlane.f32.xlu0 %v4516
    %v4518 = vpop.xlane.xlu0 %4517
    %v4519 = vsel %vm2008, %v4484, 0.0
    %4520 = vadd.xlane.f32.xlu0 %v4519
    %v4521 = vpop.xlane.xlu0 %4520
    %v4522 = vsel %vm2008, %v4486, 0.0
    %4523 = vadd.xlane.f32.xlu0 %v4522
    %v4524 = vpop.xlane.xlu0 %4523
    %v4525 = vsel %vm2008, %v4488, 0.0
    %4526 = vadd.xlane.f32.xlu0 %v4525
    %v4527 = vpop.xlane.xlu0 %4526
    %v4528 = vsel %vm2008, %v4490, 0.0
    %4529 = vadd.xlane.f32.xlu0 %v4528
    %v4530 = vpop.xlane.xlu0 %4529
    %v4531 = vsel %vm2008, %v4492, 0.0
    %4532 = vadd.xlane.f32.xlu0 %v4531
    %v4533 = vpop.xlane.xlu0 %4532
    %v4534 = vsel %vm2008, %v4494, 0.0
    %4535 = vadd.xlane.f32.xlu0 %v4534
    %v4536 = vpop.xlane.xlu0 %4535
    %v4537 = vsel %vm2008, %v4496, 0.0
    %4538 = vadd.xlane.f32.xlu0 %v4537
    %v4539 = vpop.xlane.xlu0 %4538
    %v4540 = vsel %vm2008, %v4498, 0.0
    %4541 = vadd.xlane.f32.xlu0 %v4540
    %v4542 = vpop.xlane.xlu0 %4541
    %v4543 = vsel %vm2008, %v4500, 0.0
    %4544 = vadd.xlane.f32.xlu0 %v4543
    %v4545 = vpop.xlane.xlu0 %4544
    %v4546 = vsel %vm2008, %v4502, 0.0
    %4547 = vadd.xlane.f32.xlu0 %v4546
    %v4548 = vpop.xlane.xlu0 %4547
    %v4549 = vsel %vm2008, %v4504, 0.0
    %4550 = vadd.xlane.f32.xlu0 %v4549
    %v4551 = vpop.xlane.xlu0 %4550
    %v4552 = vsel %vm2008, %v4506, 0.0
    %4553 = vadd.xlane.f32.xlu0 %v4552
    %v4554 = vpop.xlane.xlu0 %4553
    %v4555 = vrcp.pop %v4509
    %v4556 = vmul.f32 %v4476, %v4555
    %v4557 = vrcp.pop %v4512
    %v4558 = vmul.f32 %v4478, %v4557
    %v4559 = vrcp.pop %v4515
    %v4560 = vmul.f32 %v4480, %v4559
    %v4561 = vrcp.pop %v4518
    %v4562 = vmul.f32 %v4482, %v4561
    %v4563 = vrcp.pop %v4521
    %v4564 = vmul.f32 %v4484, %v4563
    %v4565 = vrcp.pop %v4524
    %v4566 = vmul.f32 %v4486, %v4565
    %v4567 = vrcp.pop %v4527
    %v4568 = vmul.f32 %v4488, %v4567
    %v4569 = vrcp.pop %v4530
    %v4570 = vmul.f32 %v4490, %v4569
    %v4571 = vrcp.pop %v4533
    %v4572 = vmul.f32 %v4492, %v4571
    %v4573 = vrcp.pop %v4536
    %v4574 = vmul.f32 %v4494, %v4573
    %v4575 = vrcp.pop %v4539
    %v4576 = vmul.f32 %v4496, %v4575
    %v4577 = vrcp.pop %v4542
    %v4578 = vmul.f32 %v4498, %v4577
    %v4579 = vrcp.pop %v4545
    %v4580 = vmul.f32 %v4500, %v4579
    %v4581 = vrcp.pop %v4548
    %v4582 = vmul.f32 %v4502, %v4581
    %v4583 = vrcp.pop %v4551
    %v4584 = vmul.f32 %v4504, %v4583
    %v4585 = vrcp.pop %v4554
    %v4586 = vmul.f32 %v4506, %v4585
    %v4588 = vsel %vm2008, %v4556, 0
    %v4591 = vsel %vm2008, %v4558, 0
    %v4594 = vsel %vm2008, %v4560, 0
    %v4597 = vsel %vm2008, %v4562, 0
    %v4600 = vsel %vm2008, %v4564, 0
    %v4603 = vsel %vm2008, %v4566, 0
    %v4606 = vsel %vm2008, %v4568, 0
    %v4609 = vsel %vm2008, %v4570, 0
    %v4612 = vsel %vm2008, %v4572, 0
    %v4615 = vsel %vm2008, %v4574, 0
    %v4618 = vsel %vm2008, %v4576, 0
    %v4621 = vsel %vm2008, %v4578, 0
    %v4624 = vsel %vm2008, %v4580, 0
    %v4627 = vsel %vm2008, %v4582, 0
    %v4630 = vsel %vm2008, %v4584, 0
    %v4633 = vsel %vm2008, %v4586, 0
    %4635 = vmatprep.subr.mxu0 0.0
    %4636 = vmatpush1.msra.mxu0 0.0
    %4637 = vmatprep.subr.mxu0 0.0
    %4638 = vmatpush1.msra.mxu0 0.0
    %4639 = vmatprep.subr.mxu0 0.0
    %4640 = vmatpush1.msra.mxu0 0.0
    %4641 = vmatprep.subr.mxu0 0.0
    %4642 = vmatpush1.msra.mxu0 0.0
    %4643 = vmatprep.subr.mxu0 0.0
    %4644 = vmatpush1.msra.mxu0 0.0
    %4645 = vmatprep.subr.mxu0 0.0
    %4646 = vmatpush1.msra.mxu0 0.0
    %4647 = vmatprep.subr.mxu0 0.0
    %4648 = vmatpush1.msra.mxu0 0.0
    %4649 = vmatprep.subr.mxu0 0.0
    %4650 = vmatpush1.msra.mxu0 0.0
    %4651 = vmatprep.subr.mxu0 0.0
    %4652 = vmatpush1.msra.mxu0 %v4216
    %4653 = vmatprep.subr.mxu0 0.0
    %4654 = vmatpush1.msra.mxu0 %v4210
    %4655 = vmatprep.subr.mxu0 0.0
    %4656 = vmatpush1.msra.mxu0 %v4204
    %4657 = vmatprep.subr.mxu0 0.0
    %4658 = vmatpush1.msra.mxu0 %v4198
    %4659 = vmatprep.subr.mxu0 0.0
    %4660 = vmatpush1.msra.mxu0 %v4192
    %4661 = vmatprep.subr.mxu0 0.0
    %4662 = vmatpush1.msra.mxu0 %v4186
    %4663 = vmatprep.subr.mxu0 0.0
    %4664 = vmatpush1.msra.mxu0 %v4180
    %4665 = vmatprep.subr.mxu0 0.0
    %4666 = vmatpush1.msra.mxu0 %v4174
    %4667 = vmatprep.subr.mxu0 0.0
    %4668 = vmatpush2.msra.mxu0 0.0
    %4669 = vmatprep.subr.mxu0 0.0
    %4670 = vmatpush2.msra.mxu0 0.0
    %4671 = vmatprep.subr.mxu0 0.0
    %4672 = vmatpush2.msra.mxu0 0.0
    %4673 = vmatprep.subr.mxu0 0.0
    %4674 = vmatpush2.msra.mxu0 0.0
    %4675 = vmatprep.subr.mxu0 0.0
    %4676 = vmatpush2.msra.mxu0 0.0
    %4677 = vmatprep.subr.mxu0 0.0
    %4678 = vmatpush2.msra.mxu0 0.0
    %4679 = vmatprep.subr.mxu0 0.0
    %4680 = vmatpush2.msra.mxu0 0.0
    %4681 = vmatprep.subr.mxu0 0.0
    %4682 = vmatpush2.msra.mxu0 0.0
    %4683 = vmatprep.subr.mxu0 0.0
    %4684 = vmatpush2.msra.mxu0 0.0
    %4685 = vmatprep.subr.mxu0 0.0
    %4686 = vmatpush2.msra.mxu0 0.0
    %4687 = vmatprep.subr.mxu0 0.0
    %4688 = vmatpush2.msra.mxu0 0.0
    %4689 = vmatprep.subr.mxu0 0.0
    %4690 = vmatpush2.msra.mxu0 0.0
    %4691 = vmatprep.subr.mxu0 0.0
    %4692 = vmatpush2.msra.mxu0 0.0
    %4693 = vmatprep.subr.mxu0 0.0
    %4694 = vmatpush2.msra.mxu0 0.0
    %4695 = vmatprep.subr.mxu0 0.0
    %4696 = vmatpush2.msra.mxu0 0.0
    %4697 = vmatprep.subr.mxu0 0.0
    %4698 = vmatpush2.msra.mxu0 0.0
    %4699 = vmatprep.mubr.f32.mxu0 0.0
    %4700 = vmatmul.mubr.f32.gmra.mxu0 %v4588
    %v4701 = vpop.f32.mrf.mxu0
    %v4702 = vadd.f32 0.0, %v4701
    %v4703 = vpop.f32.mrf.mxu0
    %4704 = vmatprep.mubr.f32.mxu0 0.0
    %4705 = vmatmul.mubr.f32.gmra.mxu0 %v4591
    %v4706 = vpop.f32.mrf.mxu0
    %v4707 = vadd.f32 0.0, %v4706
    %v4708 = vpop.f32.mrf.mxu0
    %4709 = vmatprep.mubr.f32.mxu0 0.0
    %4710 = vmatmul.mubr.f32.gmra.mxu0 %v4594
    %v4711 = vpop.f32.mrf.mxu0
    %v4712 = vadd.f32 0.0, %v4711
    %v4713 = vpop.f32.mrf.mxu0
    %4714 = vmatprep.mubr.f32.mxu0 0.0
    %4715 = vmatmul.mubr.f32.gmra.mxu0 %v4597
    %v4716 = vpop.f32.mrf.mxu0
    %v4717 = vadd.f32 0.0, %v4716
    %v4718 = vpop.f32.mrf.mxu0
    %4719 = vmatprep.mubr.f32.mxu0 0.0
    %4720 = vmatmul.mubr.f32.gmra.mxu0 %v4600
    %v4721 = vpop.f32.mrf.mxu0
    %v4722 = vadd.f32 0.0, %v4721
    %v4723 = vpop.f32.mrf.mxu0
    %4724 = vmatprep.mubr.f32.mxu0 0.0
    %4725 = vmatmul.mubr.f32.gmra.mxu0 %v4603
    %v4726 = vpop.f32.mrf.mxu0
    %v4727 = vadd.f32 0.0, %v4726
    %v4728 = vpop.f32.mrf.mxu0
    %4729 = vmatprep.mubr.f32.mxu0 0.0
    %4730 = vmatmul.mubr.f32.gmra.mxu0 %v4606
    %v4731 = vpop.f32.mrf.mxu0
    %v4732 = vadd.f32 0.0, %v4731
    %v4733 = vpop.f32.mrf.mxu0
    %4734 = vmatprep.mubr.f32.mxu0 0.0
    %4735 = vmatmul.mubr.f32.gmra.mxu0 %v4609
    %v4736 = vpop.f32.mrf.mxu0
    %v4737 = vadd.f32 0.0, %v4736
    %v4738 = vpop.f32.mrf.mxu0
    %4739 = vmatprep.mubr.f32.mxu0 0.0
    %4740 = vmatmul.mubr.f32.gmra.mxu0 %v4612
    %v4741 = vpop.f32.mrf.mxu0
    %v4742 = vadd.f32 0.0, %v4741
    %v4743 = vpop.f32.mrf.mxu0
    %4744 = vmatprep.mubr.f32.mxu0 0.0
    %4745 = vmatmul.mubr.f32.gmra.mxu0 %v4615
    %v4746 = vpop.f32.mrf.mxu0
    %v4747 = vadd.f32 0.0, %v4746
    %v4748 = vpop.f32.mrf.mxu0
    %4749 = vmatprep.mubr.f32.mxu0 0.0
    %4750 = vmatmul.mubr.f32.gmra.mxu0 %v4618
    %v4751 = vpop.f32.mrf.mxu0
    %v4752 = vadd.f32 0.0, %v4751
    %v4753 = vpop.f32.mrf.mxu0
    %4754 = vmatprep.mubr.f32.mxu0 0.0
    %4755 = vmatmul.mubr.f32.gmra.mxu0 %v4621
    %v4756 = vpop.f32.mrf.mxu0
    %v4757 = vadd.f32 0.0, %v4756
    %v4758 = vpop.f32.mrf.mxu0
    %4759 = vmatprep.mubr.f32.mxu0 0.0
    %4760 = vmatmul.mubr.f32.gmra.mxu0 %v4624
    %v4761 = vpop.f32.mrf.mxu0
    %v4762 = vadd.f32 0.0, %v4761
    %v4763 = vpop.f32.mrf.mxu0
    %4764 = vmatprep.mubr.f32.mxu0 0.0
    %4765 = vmatmul.mubr.f32.gmra.mxu0 %v4627
    %v4766 = vpop.f32.mrf.mxu0
    %v4767 = vadd.f32 0.0, %v4766
    %v4768 = vpop.f32.mrf.mxu0
    %4769 = vmatprep.mubr.f32.mxu0 0.0
    %4770 = vmatmul.mubr.f32.gmra.mxu0 %v4630
    %v4771 = vpop.f32.mrf.mxu0
    %v4772 = vadd.f32 0.0, %v4771
    %v4773 = vpop.f32.mrf.mxu0
    %4774 = vmatprep.mubr.f32.mxu0 0.0
    %4775 = vmatmul.mubr.f32.gmra.mxu0 %v4633
    %v4776 = vpop.f32.mrf.mxu0
    %v4777 = vadd.f32 0.0, %v4776
    %v4778 = vpop.f32.mrf.mxu0
    %4779 = vdwg.mxu0
    %v4780 = vmul.f32 %v4702, %v56
    %v4781 = vmul.f32 %v4707, %v56
    %v4782 = vmul.f32 %v4712, %v56
    %v4783 = vmul.f32 %v4717, %v56
    %v4784 = vadd.f32 %v4027, %v4780
    %v4785 = vadd.f32 %v4032, %v4781
    %v4786 = vadd.f32 %v4037, %v4782
    %v4787 = vadd.f32 %v4042, %v4783
    %v4788 = vmul.f32 %v4722, %v61
    %v4789 = vmul.f32 %v4727, %v61
    %v4790 = vmul.f32 %v4732, %v61
    %v4791 = vmul.f32 %v4737, %v61
    %v4792 = vadd.f32 %v4784, %v4788
    %v4793 = vadd.f32 %v4785, %v4789
    %v4794 = vadd.f32 %v4786, %v4790
    %v4795 = vadd.f32 %v4787, %v4791
    %v4796 = vmul.f32 %v4742, %v66
    %v4797 = vmul.f32 %v4747, %v66
    %v4798 = vmul.f32 %v4752, %v66
    %v4799 = vmul.f32 %v4757, %v66
    %v4800 = vadd.f32 %v4792, %v4796
    %v4801 = vadd.f32 %v4793, %v4797
    %v4802 = vadd.f32 %v4794, %v4798
    %v4803 = vadd.f32 %v4795, %v4799
    %v4804 = vmul.f32 %v4762, %v71
    %v4805 = vmul.f32 %v4767, %v71
    %v4806 = vmul.f32 %v4772, %v71
    %v4807 = vmul.f32 %v4777, %v71
    %v4808 = vadd.f32 %v4800, %v4804
    %v4809 = vadd.f32 %v4801, %v4805
    %v4810 = vadd.f32 %v4802, %v4806
    %v4811 = vadd.f32 %v4803, %v4807
    %v4812 = vld [vmem:[%s3919 + $0xc] sm:$0xf]
    %v4813 = vld [vmem:[%s3919 + $0x1c] sm:$0xf]
    %v4814 = vld [vmem:[%s3919 + $0x2c] sm:$0xf]
    %v4815 = vld [vmem:[%s3919 + $0x3c] sm:$0xf]
    %v4816 = vld [vmem:[%s3919 + $0x4c] sm:$0xf]
    %v4817 = vld [vmem:[%s3919 + $0x5c] sm:$0xf]
    %v4818 = vld [vmem:[%s3919 + $0x6c] sm:$0xf]
    %v4819 = vld [vmem:[%s3919 + $0x7c] sm:$0xf]
    %v4820 = vld [vmem:[%s3919 + $0x8c] sm:$0xf]
    %v4821 = vld [vmem:[%s3919 + $0x9c] sm:$0xf]
    %v4822 = vld [vmem:[%s3919 + $0xac] sm:$0xf]
    %v4823 = vld [vmem:[%s3919 + $0xbc] sm:$0xf]
    %v4824 = vld [vmem:[%s3919 + $0xcc] sm:$0xf]
    %v4825 = vld [vmem:[%s3919 + $0xdc] sm:$0xf]
    %v4826 = vld [vmem:[%s3919 + $0xec] sm:$0xf]
    %v4827 = vld [vmem:[%s3919 + $0xfc] sm:$0xf]
    %v4828 = vunpack.c.l.bf16 %v4812
    %v4829 = vunpack.c.l.bf16 %v4813
    %v4830 = vunpack.c.l.bf16 %v4814
    %v4831 = vunpack.c.l.bf16 %v4815
    %v4832 = vunpack.c.l.bf16 %v4816
    %v4833 = vunpack.c.l.bf16 %v4817
    %v4834 = vunpack.c.l.bf16 %v4818
    %v4835 = vunpack.c.l.bf16 %v4819
    %v4836 = vunpack.c.l.bf16 %v4820
    %v4837 = vunpack.c.l.bf16 %v4821
    %v4838 = vunpack.c.l.bf16 %v4822
    %v4839 = vunpack.c.l.bf16 %v4823
    %v4840 = vunpack.c.l.bf16 %v4824
    %v4841 = vunpack.c.l.bf16 %v4825
    %v4842 = vunpack.c.l.bf16 %v4826
    %v4843 = vunpack.c.l.bf16 %v4827
    %v4844 = vld [vmem:[%s3952 + $0x3] sm:$0x1]
    %v4846 = vlaneseq
    %v4847 = vshrl.u32 %v4846, 7
    %v4848 = vsub.s32 0, %v4847
    %v4849 = vrot.slane %v4844, %v4848
    %4851 = vmatprep.subr.mxu0 0.0
    %4852 = vmatpush1.msra.mxu0 %v4843
    %4853 = vmatprep.subr.mxu0 0.0
    %4854 = vmatpush1.msra.mxu0 %v4842
    %4855 = vmatprep.subr.mxu0 0.0
    %4856 = vmatpush1.msra.mxu0 %v4841
    %4857 = vmatprep.subr.mxu0 0.0
    %4858 = vmatpush1.msra.mxu0 %v4840
    %4859 = vmatprep.subr.mxu0 0.0
    %4860 = vmatpush1.msra.mxu0 %v4839
    %4861 = vmatprep.subr.mxu0 0.0
    %4862 = vmatpush1.msra.mxu0 %v4838
    %4863 = vmatprep.subr.mxu0 0.0
    %4864 = vmatpush1.msra.mxu0 %v4837
    %4865 = vmatprep.subr.mxu0 0.0
    %4866 = vmatpush1.msra.mxu0 %v4836
    %4867 = vmatprep.subr.mxu0 0.0
    %4868 = vmatpush1.msra.mxu0 %v4835
    %4869 = vmatprep.subr.mxu0 0.0
    %4870 = vmatpush1.msra.mxu0 %v4834
    %4871 = vmatprep.subr.mxu0 0.0
    %4872 = vmatpush1.msra.mxu0 %v4833
    %4873 = vmatprep.subr.mxu0 0.0
    %4874 = vmatpush1.msra.mxu0 %v4832
    %4875 = vmatprep.subr.mxu0 0.0
    %4876 = vmatpush1.msra.mxu0 %v4831
    %4877 = vmatprep.subr.mxu0 0.0
    %4878 = vmatpush1.msra.mxu0 %v4830
    %4879 = vmatprep.subr.mxu0 0.0
    %4880 = vmatpush1.msra.mxu0 %v4829
    %4881 = vmatprep.subr.mxu0 0.0
    %4882 = vmatpush1.msra.mxu0 %v4828
    %4883 = vmatprep.subr.mxu0 0.0
    %4884 = vmatpush2.msra.mxu0 0.0
    %4885 = vmatprep.subr.mxu0 0.0
    %4886 = vmatpush2.msra.mxu0 0.0
    %4887 = vmatprep.subr.mxu0 0.0
    %4888 = vmatpush2.msra.mxu0 0.0
    %4889 = vmatprep.subr.mxu0 0.0
    %4890 = vmatpush2.msra.mxu0 0.0
    %4891 = vmatprep.subr.mxu0 0.0
    %4892 = vmatpush2.msra.mxu0 0.0
    %4893 = vmatprep.subr.mxu0 0.0
    %4894 = vmatpush2.msra.mxu0 0.0
    %4895 = vmatprep.subr.mxu0 0.0
    %4896 = vmatpush2.msra.mxu0 0.0
    %4897 = vmatprep.subr.mxu0 0.0
    %4898 = vmatpush2.msra.mxu0 0.0
    %4899 = vmatprep.subr.mxu0 0.0
    %4900 = vmatpush2.msra.mxu0 0.0
    %4901 = vmatprep.subr.mxu0 0.0
    %4902 = vmatpush2.msra.mxu0 0.0
    %4903 = vmatprep.subr.mxu0 0.0
    %4904 = vmatpush2.msra.mxu0 0.0
    %4905 = vmatprep.subr.mxu0 0.0
    %4906 = vmatpush2.msra.mxu0 0.0
    %4907 = vmatprep.subr.mxu0 0.0
    %4908 = vmatpush2.msra.mxu0 0.0
    %4909 = vmatprep.subr.mxu0 0.0
    %4910 = vmatpush2.msra.mxu0 0.0
    %4911 = vmatprep.subr.mxu0 0.0
    %4912 = vmatpush2.msra.mxu0 0.0
    %4913 = vmatprep.subr.mxu0 0.0
    %4914 = vmatpush2.msra.mxu0 0.0
    %4915 = vmatprep.mubr.f32.mxu0 0.0
    %4916 = vmatmul.mubr.f32.gmra.mxu0 %v4808
    %v4917 = vpop.f32.mrf.mxu0
    %v4918 = vadd.f32 %v4849, %v4917
    %v4919 = vpop.f32.mrf.mxu0
    %4920 = vmatprep.mubr.f32.mxu0 0.0
    %4921 = vmatmul.mubr.f32.gmra.mxu0 %v4809
    %v4922 = vpop.f32.mrf.mxu0
    %v4923 = vadd.f32 %v4849, %v4922
    %v4924 = vpop.f32.mrf.mxu0
    %4925 = vmatprep.mubr.f32.mxu0 0.0
    %4926 = vmatmul.mubr.f32.gmra.mxu0 %v4810
    %v4927 = vpop.f32.mrf.mxu0
    %v4928 = vadd.f32 %v4849, %v4927
    %v4929 = vpop.f32.mrf.mxu0
    %4930 = vmatprep.mubr.f32.mxu0 0.0
    %4931 = vmatmul.mubr.f32.gmra.mxu0 %v4811
    %v4932 = vpop.f32.mrf.mxu0
    %v4933 = vadd.f32 %v4849, %v4932
    %v4934 = vpop.f32.mrf.mxu0
    %4935 = vdwg.mxu0
    %v4936 = vmax.f32 %v4918, 0.0
    %v4937 = vmax.f32 %v4923, 0.0
    %v4938 = vmax.f32 %v4928, 0.0
    %v4939 = vmax.f32 %v4933, 0.0
    %v4940 = vadd.f32 %v4808, %v4936
    %v4941 = vadd.f32 %v4809, %v4937
    %v4942 = vadd.f32 %v4810, %v4938
    %v4943 = vadd.f32 %v4811, %v4939
    %v4944 = vld [vmem:[%s3] sm:$0xff]
    %v4945 = vld [vmem:[%s3 + $0x8] sm:$0xff]
    %s4946 = scalar_lea.vmem [#allocation2], 1024
    %v4947 = vld [vmem:[%s4946] sm:$0xff]
    %v4948 = vld [vmem:[%s4946 + $0x10] sm:$0xff]
    %v4949 = vld [vmem:[%s4946 + $0x20] sm:$0xff]
    %v4950 = vld [vmem:[%s4946 + $0x30] sm:$0xff]
    %v4951 = vld [vmem:[%s4946 + $0x40] sm:$0xff]
    %v4952 = vld [vmem:[%s4946 + $0x50] sm:$0xff]
    %v4953 = vld [vmem:[%s4946 + $0x60] sm:$0xff]
    %v4954 = vld [vmem:[%s4946 + $0x70] sm:$0xff]
    %v4955 = vld [vmem:[%s4946 + $0x80] sm:$0xff]
    %v4956 = vld [vmem:[%s4946 + $0x90] sm:$0xff]
    %v4957 = vld [vmem:[%s4946 + $0xa0] sm:$0xff]
    %v4958 = vld [vmem:[%s4946 + $0xb0] sm:$0xff]
    %v4959 = vld [vmem:[%s4946 + $0xc0] sm:$0xff]
    %v4960 = vld [vmem:[%s4946 + $0xd0] sm:$0xff]
    %v4961 = vld [vmem:[%s4946 + $0xe0] sm:$0xff]
    %v4962 = vld [vmem:[%s4946 + $0xf0] sm:$0xff]
    %v4963 = vunpack.c.l.bf16 %v4947
    %v4964 = vunpack.c.h.bf16 %v4947
    %v4965 = vunpack.c.l.bf16 %v4948
    %v4966 = vunpack.c.h.bf16 %v4948
    %v4967 = vunpack.c.l.bf16 %v4949
    %v4968 = vunpack.c.h.bf16 %v4949
    %v4969 = vunpack.c.l.bf16 %v4950
    %v4970 = vunpack.c.h.bf16 %v4950
    %v4971 = vunpack.c.l.bf16 %v4951
    %v4972 = vunpack.c.h.bf16 %v4951
    %v4973 = vunpack.c.l.bf16 %v4952
    %v4974 = vunpack.c.h.bf16 %v4952
    %v4975 = vunpack.c.l.bf16 %v4953
    %v4976 = vunpack.c.h.bf16 %v4953
    %v4977 = vunpack.c.l.bf16 %v4954
    %v4978 = vunpack.c.h.bf16 %v4954
    %v4979 = vunpack.c.l.bf16 %v4955
    %v4980 = vunpack.c.h.bf16 %v4955
    %v4981 = vunpack.c.l.bf16 %v4956
    %v4982 = vunpack.c.h.bf16 %v4956
    %v4983 = vunpack.c.l.bf16 %v4957
    %v4984 = vunpack.c.h.bf16 %v4957
    %v4985 = vunpack.c.l.bf16 %v4958
    %v4986 = vunpack.c.h.bf16 %v4958
    %v4987 = vunpack.c.l.bf16 %v4959
    %v4988 = vunpack.c.h.bf16 %v4959
    %v4989 = vunpack.c.l.bf16 %v4960
    %v4990 = vunpack.c.h.bf16 %v4960
    %v4991 = vunpack.c.l.bf16 %v4961
    %v4992 = vunpack.c.h.bf16 %v4961
    %v4993 = vunpack.c.l.bf16 %v4962
    %v4994 = vunpack.c.h.bf16 %v4962
    %s4995 = scalar_lea.vmem %s9, 16
    %v4996 = vld [vmem:[%s4995] sm:$0x3]
    %v4998 = vlaneseq
    %v4999 = vshrl.u32 %v4998, 7
    %v5000 = vsub.s32 0, %v4999
    %v5001 = vrot.slane %v4996, %v5000
    %v5002 = vlaneseq
    %v5003 = vshrl.u32 %v5002, 7
    %v5004 = vsub.s32 1, %v5003
    %v5005 = vrot.slane %v4996, %v5004
    %5008 = vmatprep.subr.mxu0 %v4994
    %5009 = vmatpush1.msra.mxu0 %v4993
    %5010 = vmatprep.subr.mxu0 %v4992
    %5011 = vmatpush1.msra.mxu0 %v4991
    %5012 = vmatprep.subr.mxu0 %v4990
    %5013 = vmatpush1.msra.mxu0 %v4989
    %5014 = vmatprep.subr.mxu0 %v4988
    %5015 = vmatpush1.msra.mxu0 %v4987
    %5016 = vmatprep.subr.mxu0 %v4986
    %5017 = vmatpush1.msra.mxu0 %v4985
    %5018 = vmatprep.subr.mxu0 %v4984
    %5019 = vmatpush1.msra.mxu0 %v4983
    %5020 = vmatprep.subr.mxu0 %v4982
    %5021 = vmatpush1.msra.mxu0 %v4981
    %5022 = vmatprep.subr.mxu0 %v4980
    %5023 = vmatpush1.msra.mxu0 %v4979
    %5024 = vmatprep.subr.mxu0 %v4978
    %5025 = vmatpush1.msra.mxu0 %v4977
    %5026 = vmatprep.subr.mxu0 %v4976
    %5027 = vmatpush1.msra.mxu0 %v4975
    %5028 = vmatprep.subr.mxu0 %v4974
    %5029 = vmatpush1.msra.mxu0 %v4973
    %5030 = vmatprep.subr.mxu0 %v4972
    %5031 = vmatpush1.msra.mxu0 %v4971
    %5032 = vmatprep.subr.mxu0 %v4970
    %5033 = vmatpush1.msra.mxu0 %v4969
    %5034 = vmatprep.subr.mxu0 %v4968
    %5035 = vmatpush1.msra.mxu0 %v4967
    %5036 = vmatprep.subr.mxu0 %v4966
    %5037 = vmatpush1.msra.mxu0 %v4965
    %5038 = vmatprep.subr.mxu0 %v4964
    %5039 = vmatpush1.msra.mxu0 %v4963
    %5040 = vmatprep.subr.mxu0 0.0
    %5041 = vmatpush2.msra.mxu0 0.0
    %5042 = vmatprep.subr.mxu0 0.0
    %5043 = vmatpush2.msra.mxu0 0.0
    %5044 = vmatprep.subr.mxu0 0.0
    %5045 = vmatpush2.msra.mxu0 0.0
    %5046 = vmatprep.subr.mxu0 0.0
    %5047 = vmatpush2.msra.mxu0 0.0
    %5048 = vmatprep.subr.mxu0 0.0
    %5049 = vmatpush2.msra.mxu0 0.0
    %5050 = vmatprep.subr.mxu0 0.0
    %5051 = vmatpush2.msra.mxu0 0.0
    %5052 = vmatprep.subr.mxu0 0.0
    %5053 = vmatpush2.msra.mxu0 0.0
    %5054 = vmatprep.subr.mxu0 0.0
    %5055 = vmatpush2.msra.mxu0 0.0
    %5056 = vmatprep.subr.mxu0 0.0
    %5057 = vmatpush2.msra.mxu0 0.0
    %5058 = vmatprep.subr.mxu0 0.0
    %5059 = vmatpush2.msra.mxu0 0.0
    %5060 = vmatprep.subr.mxu0 0.0
    %5061 = vmatpush2.msra.mxu0 0.0
    %5062 = vmatprep.subr.mxu0 0.0
    %5063 = vmatpush2.msra.mxu0 0.0
    %5064 = vmatprep.subr.mxu0 0.0
    %5065 = vmatpush2.msra.mxu0 0.0
    %5066 = vmatprep.subr.mxu0 0.0
    %5067 = vmatpush2.msra.mxu0 0.0
    %5068 = vmatprep.subr.mxu0 0.0
    %5069 = vmatpush2.msra.mxu0 0.0
    %5070 = vmatprep.subr.mxu0 0.0
    %5071 = vmatpush2.msra.mxu0 0.0
    %5072 = vmatprep.mubr.f32.mxu0 0.0
    %5073 = vmatmul.mubr.f32.gmra.mxu0 %v4940
    %v5074 = vpop.f32.mrf.mxu0
    %v5075 = vadd.f32 %v5001, %v5074
    %v5076 = vpop.f32.mrf.mxu0
    %v5077 = vadd.f32 %v5005, %v5076
    %5078 = vmatprep.mubr.f32.mxu0 0.0
    %5079 = vmatmul.mubr.f32.gmra.mxu0 %v4941
    %v5080 = vpop.f32.mrf.mxu0
    %v5081 = vadd.f32 %v5001, %v5080
    %v5082 = vpop.f32.mrf.mxu0
    %v5083 = vadd.f32 %v5005, %v5082
    %5084 = vmatprep.mubr.f32.mxu0 0.0
    %5085 = vmatmul.mubr.f32.gmra.mxu0 %v4942
    %v5086 = vpop.f32.mrf.mxu0
    %v5087 = vadd.f32 %v5001, %v5086
    %v5088 = vpop.f32.mrf.mxu0
    %v5089 = vadd.f32 %v5005, %v5088
    %5090 = vmatprep.mubr.f32.mxu0 0.0
    %5091 = vmatmul.mubr.f32.gmra.mxu0 %v4943
    %v5092 = vpop.f32.mrf.mxu0
    %v5093 = vadd.f32 %v5001, %v5092
    %v5094 = vpop.f32.mrf.mxu0
    %v5095 = vadd.f32 %v5005, %v5094
    %5096 = vdwg.mxu0
    %v5097 = vmul.f32 %v4944, %v56
    %v5098 = vmul.f32 %v4945, %v56
    %v5099 = vmul.f32 %v4944, %v61
    %v5100 = vmul.f32 %v4945, %v61
    %v5101 = vmul.f32 %v4944, %v66
    %v5102 = vmul.f32 %v4945, %v66
    %v5103 = vmul.f32 %v4944, %v71
    %v5104 = vmul.f32 %v4945, %v71
    %5105 = vmatprep.subr.mxu0 0.0
    %5106 = vmatpush1.xpose.msra.mxu0 0.0
    %5107 = vmatprep.subr.mxu0 0.0
    %5108 = vmatpush1.xpose.msra.mxu0 0.0
    %5109 = vmatprep.subr.mxu0 0.0
    %5110 = vmatpush1.xpose.msra.mxu0 0.0
    %5111 = vmatprep.subr.mxu0 0.0
    %5112 = vmatpush1.xpose.msra.mxu0 0.0
    %5113 = vmatprep.subr.mxu0 0.0
    %5114 = vmatpush1.xpose.msra.mxu0 0.0
    %5115 = vmatprep.subr.mxu0 0.0
    %5116 = vmatpush1.xpose.msra.mxu0 0.0
    %5117 = vmatprep.subr.mxu0 0.0
    %5118 = vmatpush1.xpose.msra.mxu0 0.0
    %5119 = vmatprep.subr.mxu0 0.0
    %5120 = vmatpush1.xpose.msra.mxu0 0.0
    %5121 = vmatprep.subr.mxu0 0.0
    %5122 = vmatpush1.xpose.msra.mxu0 0.0
    %5123 = vmatprep.subr.mxu0 0.0
    %5124 = vmatpush1.xpose.msra.mxu0 0.0
    %5125 = vmatprep.subr.mxu0 0.0
    %5126 = vmatpush1.xpose.msra.mxu0 0.0
    %5127 = vmatprep.subr.mxu0 0.0
    %5128 = vmatpush1.xpose.msra.mxu0 0.0
    %5129 = vmatprep.subr.mxu0 0.0
    %5130 = vmatpush1.xpose.msra.mxu0 %v5093
    %5131 = vmatprep.subr.mxu0 0.0
    %5132 = vmatpush1.xpose.msra.mxu0 %v5087
    %5133 = vmatprep.subr.mxu0 0.0
    %5134 = vmatpush1.xpose.msra.mxu0 %v5081
    %5135 = vmatprep.subr.mxu0 0.0
    %5136 = vmatpush1.xpose.msra.mxu0 %v5075
    %5137 = vmatprep.subr.mxu0 0.0
    %5138 = vmatpush2.xpose.msra.mxu0 0.0
    %5139 = vmatprep.subr.mxu0 0.0
    %5140 = vmatpush2.xpose.msra.mxu0 0.0
    %5141 = vmatprep.subr.mxu0 0.0
    %5142 = vmatpush2.xpose.msra.mxu0 0.0
    %5143 = vmatprep.subr.mxu0 0.0
    %5144 = vmatpush2.xpose.msra.mxu0 0.0
    %5145 = vmatprep.subr.mxu0 0.0
    %5146 = vmatpush2.xpose.msra.mxu0 0.0
    %5147 = vmatprep.subr.mxu0 0.0
    %5148 = vmatpush2.xpose.msra.mxu0 0.0
    %5149 = vmatprep.subr.mxu0 0.0
    %5150 = vmatpush2.xpose.msra.mxu0 0.0
    %5151 = vmatprep.subr.mxu0 0.0
    %5152 = vmatpush2.xpose.msra.mxu0 0.0
    %5153 = vmatprep.subr.mxu0 0.0
    %5154 = vmatpush2.xpose.msra.mxu0 0.0
    %5155 = vmatprep.subr.mxu0 0.0
    %5156 = vmatpush2.xpose.msra.mxu0 0.0
    %5157 = vmatprep.subr.mxu0 0.0
    %5158 = vmatpush2.xpose.msra.mxu0 0.0
    %5159 = vmatprep.subr.mxu0 0.0
    %5160 = vmatpush2.xpose.msra.mxu0 0.0
    %5161 = vmatprep.subr.mxu0 0.0
    %5162 = vmatpush2.xpose.msra.mxu0 0.0
    %5163 = vmatprep.subr.mxu0 0.0
    %5164 = vmatpush2.xpose.msra.mxu0 0.0
    %5165 = vmatprep.subr.mxu0 0.0
    %5166 = vmatpush2.xpose.msra.mxu0 0.0
    %5167 = vmatprep.subr.mxu0 0.0
    %5168 = vmatpush2.xpose.msra.mxu0 0.0
    %5169 = vmatprep.mubr.f32.mxu0 0.0
    %5170 = vmatmul.mubr.f32.gmra.mxu0 %v5097
    %v5171 = vpop.f32.mrf.mxu0
    %v5172 = vadd.f32 0.0, %v5171
    %v5173 = vpop.f32.mrf.mxu0
    %5174 = vmatprep.mubr.f32.mxu0 0.0
    %5175 = vmatmul.mubr.f32.gmra.mxu0 %v5098
    %v5176 = vpop.f32.mrf.mxu0
    %v5177 = vadd.f32 0.0, %v5176
    %v5178 = vpop.f32.mrf.mxu0
    %5179 = vmatprep.mubr.f32.mxu0 0.0
    %5180 = vmatmul.mubr.f32.gmra.mxu0 %v5099
    %v5181 = vpop.f32.mrf.mxu0
    %v5182 = vadd.f32 0.0, %v5181
    %v5183 = vpop.f32.mrf.mxu0
    %5184 = vmatprep.mubr.f32.mxu0 0.0
    %5185 = vmatmul.mubr.f32.gmra.mxu0 %v5100
    %v5186 = vpop.f32.mrf.mxu0
    %v5187 = vadd.f32 0.0, %v5186
    %v5188 = vpop.f32.mrf.mxu0
    %5189 = vmatprep.mubr.f32.mxu0 0.0
    %5190 = vmatmul.mubr.f32.gmra.mxu0 %v5101
    %v5191 = vpop.f32.mrf.mxu0
    %v5192 = vadd.f32 0.0, %v5191
    %v5193 = vpop.f32.mrf.mxu0
    %5194 = vmatprep.mubr.f32.mxu0 0.0
    %5195 = vmatmul.mubr.f32.gmra.mxu0 %v5102
    %v5196 = vpop.f32.mrf.mxu0
    %v5197 = vadd.f32 0.0, %v5196
    %v5198 = vpop.f32.mrf.mxu0
    %5199 = vmatprep.mubr.f32.mxu0 0.0
    %5200 = vmatmul.mubr.f32.gmra.mxu0 %v5103
    %v5201 = vpop.f32.mrf.mxu0
    %v5202 = vadd.f32 0.0, %v5201
    %v5203 = vpop.f32.mrf.mxu0
    %5204 = vmatprep.mubr.f32.mxu0 0.0
    %5205 = vmatmul.mubr.f32.gmra.mxu0 %v5104
    %v5206 = vpop.f32.mrf.mxu0
    %v5207 = vadd.f32 0.0, %v5206
    %v5208 = vpop.f32.mrf.mxu0
    %5209 = vdwg.mxu0
    %v5210 = vmul.f32 %v5172, 0.088388346
    %v5211 = vmul.f32 %v5177, 0.088388346
    %v5212 = vmul.f32 %v5182, 0.088388346
    %v5213 = vmul.f32 %v5187, 0.088388346
    %v5214 = vmul.f32 %v5192, 0.088388346
    %v5215 = vmul.f32 %v5197, 0.088388346
    %v5216 = vmul.f32 %v5202, 0.088388346
    %v5217 = vmul.f32 %v5207, 0.088388346
    %v5218 = vadd.f32 %v5210, %v124
    %v5219 = vadd.f32 %v5211, %v125
    %v5220 = vadd.f32 %v5212, %v126
    %v5221 = vadd.f32 %v5213, %v127
    %v5222 = vadd.f32 %v5214, %v128
    %v5223 = vadd.f32 %v5215, %v129
    %v5224 = vadd.f32 %v5216, %v130
    %v5225 = vadd.f32 %v5217, %v131
    %v5226 = vsel %vm618, %v5218, -inf
    %5227 = vmax.xlane.f32.xlu0 %v5226
    %v5228 = vpop.xlane.xlu0 %5227
    %v5229 = vsel %vm618, %v5219, -inf
    %5230 = vmax.xlane.f32.xlu0 %v5229
    %v5231 = vpop.xlane.xlu0 %5230
    %v5232 = vsel %vm618, %v5220, -inf
    %5233 = vmax.xlane.f32.xlu0 %v5232
    %v5234 = vpop.xlane.xlu0 %5233
    %v5235 = vsel %vm618, %v5221, -inf
    %5236 = vmax.xlane.f32.xlu0 %v5235
    %v5237 = vpop.xlane.xlu0 %5236
    %v5238 = vsel %vm618, %v5222, -inf
    %5239 = vmax.xlane.f32.xlu0 %v5238
    %v5240 = vpop.xlane.xlu0 %5239
    %v5241 = vsel %vm618, %v5223, -inf
    %5242 = vmax.xlane.f32.xlu0 %v5241
    %v5243 = vpop.xlane.xlu0 %5242
    %v5244 = vsel %vm618, %v5224, -inf
    %5245 = vmax.xlane.f32.xlu0 %v5244
    %v5246 = vpop.xlane.xlu0 %5245
    %v5247 = vsel %vm618, %v5225, -inf
    %5248 = vmax.xlane.f32.xlu0 %v5247
    %v5249 = vpop.xlane.xlu0 %5248
    %v5250 = vsub.f32 %v5218, %v5228
    %v5251 = vsub.f32 %v5219, %v5231
    %v5252 = vsub.f32 %v5220, %v5234
    %v5253 = vsub.f32 %v5221, %v5237
    %v5254 = vsub.f32 %v5222, %v5240
    %v5255 = vsub.f32 %v5223, %v5243
    %v5256 = vsub.f32 %v5224, %v5246
    %v5257 = vsub.f32 %v5225, %v5249
    %v5258 = vmul.f32 %v5250, 1.442695
    %v5259 = vpow.pop %v5258
    %v5260 = vmul.f32 %v5251, 1.442695
    %v5261 = vpow.pop %v5260
    %v5262 = vmul.f32 %v5252, 1.442695
    %v5263 = vpow.pop %v5262
    %v5264 = vmul.f32 %v5253, 1.442695
    %v5265 = vpow.pop %v5264
    %v5266 = vmul.f32 %v5254, 1.442695
    %v5267 = vpow.pop %v5266
    %v5268 = vmul.f32 %v5255, 1.442695
    %v5269 = vpow.pop %v5268
    %v5270 = vmul.f32 %v5256, 1.442695
    %v5271 = vpow.pop %v5270
    %v5272 = vmul.f32 %v5257, 1.442695
    %v5273 = vpow.pop %v5272
    %v5274 = vsel %vm618, %v5259, 0.0
    %5275 = vadd.xlane.f32.xlu0 %v5274
    %v5276 = vpop.xlane.xlu0 %5275
    %v5277 = vsel %vm618, %v5261, 0.0
    %5278 = vadd.xlane.f32.xlu0 %v5277
    %v5279 = vpop.xlane.xlu0 %5278
    %v5280 = vsel %vm618, %v5263, 0.0
    %5281 = vadd.xlane.f32.xlu0 %v5280
    %v5282 = vpop.xlane.xlu0 %5281
    %v5283 = vsel %vm618, %v5265, 0.0
    %5284 = vadd.xlane.f32.xlu0 %v5283
    %v5285 = vpop.xlane.xlu0 %5284
    %v5286 = vsel %vm618, %v5267, 0.0
    %5287 = vadd.xlane.f32.xlu0 %v5286
    %v5288 = vpop.xlane.xlu0 %5287
    %v5289 = vsel %vm618, %v5269, 0.0
    %5290 = vadd.xlane.f32.xlu0 %v5289
    %v5291 = vpop.xlane.xlu0 %5290
    %v5292 = vsel %vm618, %v5271, 0.0
    %5293 = vadd.xlane.f32.xlu0 %v5292
    %v5294 = vpop.xlane.xlu0 %5293
    %v5295 = vsel %vm618, %v5273, 0.0
    %5296 = vadd.xlane.f32.xlu0 %v5295
    %v5297 = vpop.xlane.xlu0 %5296
    %v5298 = vrcp.pop %v5276
    %v5299 = vmul.f32 %v5259, %v5298
    %v5300 = vrcp.pop %v5279
    %v5301 = vmul.f32 %v5261, %v5300
    %v5302 = vrcp.pop %v5282
    %v5303 = vmul.f32 %v5263, %v5302
    %v5304 = vrcp.pop %v5285
    %v5305 = vmul.f32 %v5265, %v5304
    %v5306 = vrcp.pop %v5288
    %v5307 = vmul.f32 %v5267, %v5306
    %v5308 = vrcp.pop %v5291
    %v5309 = vmul.f32 %v5269, %v5308
    %v5310 = vrcp.pop %v5294
    %v5311 = vmul.f32 %v5271, %v5310
    %v5312 = vrcp.pop %v5297
    %v5313 = vmul.f32 %v5273, %v5312
    %v5315 = vsel %vm618, %v5299, 0
    %v5318 = vsel %vm618, %v5301, 0
    %v5321 = vsel %vm618, %v5303, 0
    %v5324 = vsel %vm618, %v5305, 0
    %v5327 = vsel %vm618, %v5307, 0
    %v5330 = vsel %vm618, %v5309, 0
    %v5333 = vsel %vm618, %v5311, 0
    %v5336 = vsel %vm618, %v5313, 0
    %5338 = vmatprep.subr.mxu0 0.0
    %5339 = vmatpush1.msra.mxu0 0.0
    %5340 = vmatprep.subr.mxu0 0.0
    %5341 = vmatpush1.msra.mxu0 0.0
    %5342 = vmatprep.subr.mxu0 0.0
    %5343 = vmatpush1.msra.mxu0 0.0
    %5344 = vmatprep.subr.mxu0 0.0
    %5345 = vmatpush1.msra.mxu0 0.0
    %5346 = vmatprep.subr.mxu0 0.0
    %5347 = vmatpush1.msra.mxu0 0.0
    %5348 = vmatprep.subr.mxu0 0.0
    %5349 = vmatpush1.msra.mxu0 0.0
    %5350 = vmatprep.subr.mxu0 0.0
    %5351 = vmatpush1.msra.mxu0 0.0
    %5352 = vmatprep.subr.mxu0 0.0
    %5353 = vmatpush1.msra.mxu0 0.0
    %5354 = vmatprep.subr.mxu0 0.0
    %5355 = vmatpush1.msra.mxu0 0.0
    %5356 = vmatprep.subr.mxu0 0.0
    %5357 = vmatpush1.msra.mxu0 0.0
    %5358 = vmatprep.subr.mxu0 0.0
    %5359 = vmatpush1.msra.mxu0 0.0
    %5360 = vmatprep.subr.mxu0 0.0
    %5361 = vmatpush1.msra.mxu0 0.0
    %5362 = vmatprep.subr.mxu0 0.0
    %5363 = vmatpush1.msra.mxu0 %v5095
    %5364 = vmatprep.subr.mxu0 0.0
    %5365 = vmatpush1.msra.mxu0 %v5089
    %5366 = vmatprep.subr.mxu0 0.0
    %5367 = vmatpush1.msra.mxu0 %v5083
    %5368 = vmatprep.subr.mxu0 0.0
    %5369 = vmatpush1.msra.mxu0 %v5077
    %5370 = vmatprep.subr.mxu0 0.0
    %5371 = vmatpush2.msra.mxu0 0.0
    %5372 = vmatprep.subr.mxu0 0.0
    %5373 = vmatpush2.msra.mxu0 0.0
    %5374 = vmatprep.subr.mxu0 0.0
    %5375 = vmatpush2.msra.mxu0 0.0
    %5376 = vmatprep.subr.mxu0 0.0
    %5377 = vmatpush2.msra.mxu0 0.0
    %5378 = vmatprep.subr.mxu0 0.0
    %5379 = vmatpush2.msra.mxu0 0.0
    %5380 = vmatprep.subr.mxu0 0.0
    %5381 = vmatpush2.msra.mxu0 0.0
    %5382 = vmatprep.subr.mxu0 0.0
    %5383 = vmatpush2.msra.mxu0 0.0
    %5384 = vmatprep.subr.mxu0 0.0
    %5385 = vmatpush2.msra.mxu0 0.0
    %5386 = vmatprep.subr.mxu0 0.0
    %5387 = vmatpush2.msra.mxu0 0.0
    %5388 = vmatprep.subr.mxu0 0.0
    %5389 = vmatpush2.msra.mxu0 0.0
    %5390 = vmatprep.subr.mxu0 0.0
    %5391 = vmatpush2.msra.mxu0 0.0
    %5392 = vmatprep.subr.mxu0 0.0
    %5393 = vmatpush2.msra.mxu0 0.0
    %5394 = vmatprep.subr.mxu0 0.0
    %5395 = vmatpush2.msra.mxu0 0.0
    %5396 = vmatprep.subr.mxu0 0.0
    %5397 = vmatpush2.msra.mxu0 0.0
    %5398 = vmatprep.subr.mxu0 0.0
    %5399 = vmatpush2.msra.mxu0 0.0
    %5400 = vmatprep.subr.mxu0 0.0
    %5401 = vmatpush2.msra.mxu0 0.0
    %5402 = vmatprep.mubr.f32.mxu0 0.0
    %5403 = vmatmul.mubr.f32.gmra.mxu0 %v5315
    %v5404 = vpop.f32.mrf.mxu0
    %v5405 = vadd.f32 0.0, %v5404
    %v5406 = vpop.f32.mrf.mxu0
    %5407 = vmatprep.mubr.f32.mxu0 0.0
    %5408 = vmatmul.mubr.f32.gmra.mxu0 %v5318
    %v5409 = vpop.f32.mrf.mxu0
    %v5410 = vadd.f32 0.0, %v5409
    %v5411 = vpop.f32.mrf.mxu0
    %5412 = vmatprep.mubr.f32.mxu0 0.0
    %5413 = vmatmul.mubr.f32.gmra.mxu0 %v5321
    %v5414 = vpop.f32.mrf.mxu0
    %v5415 = vadd.f32 0.0, %v5414
    %v5416 = vpop.f32.mrf.mxu0
    %5417 = vmatprep.mubr.f32.mxu0 0.0
    %5418 = vmatmul.mubr.f32.gmra.mxu0 %v5324
    %v5419 = vpop.f32.mrf.mxu0
    %v5420 = vadd.f32 0.0, %v5419
    %v5421 = vpop.f32.mrf.mxu0
    %5422 = vmatprep.mubr.f32.mxu0 0.0
    %5423 = vmatmul.mubr.f32.gmra.mxu0 %v5327
    %v5424 = vpop.f32.mrf.mxu0
    %v5425 = vadd.f32 0.0, %v5424
    %v5426 = vpop.f32.mrf.mxu0
    %5427 = vmatprep.mubr.f32.mxu0 0.0
    %5428 = vmatmul.mubr.f32.gmra.mxu0 %v5330
    %v5429 = vpop.f32.mrf.mxu0
    %v5430 = vadd.f32 0.0, %v5429
    %v5431 = vpop.f32.mrf.mxu0
    %5432 = vmatprep.mubr.f32.mxu0 0.0
    %5433 = vmatmul.mubr.f32.gmra.mxu0 %v5333
    %v5434 = vpop.f32.mrf.mxu0
    %v5435 = vadd.f32 0.0, %v5434
    %v5436 = vpop.f32.mrf.mxu0
    %5437 = vmatprep.mubr.f32.mxu0 0.0
    %5438 = vmatmul.mubr.f32.gmra.mxu0 %v5336
    %v5439 = vpop.f32.mrf.mxu0
    %v5440 = vadd.f32 0.0, %v5439
    %v5441 = vpop.f32.mrf.mxu0
    %5442 = vdwg.mxu0
    %v5443 = vmul.f32 %v5405, %v56
    %v5444 = vmul.f32 %v5410, %v56
    %v5445 = vadd.f32 %v4944, %v5443
    %v5446 = vadd.f32 %v4945, %v5444
    %v5447 = vmul.f32 %v5415, %v61
    %v5448 = vmul.f32 %v5420, %v61
    %v5449 = vadd.f32 %v5445, %v5447
    %v5450 = vadd.f32 %v5446, %v5448
    %v5451 = vmul.f32 %v5425, %v66
    %v5452 = vmul.f32 %v5430, %v66
    %v5453 = vadd.f32 %v5449, %v5451
    %v5454 = vadd.f32 %v5450, %v5452
    %v5455 = vmul.f32 %v5435, %v71
    %v5456 = vmul.f32 %v5440, %v71
    %v5457 = vadd.f32 %v5453, %v5455
    %v5458 = vadd.f32 %v5454, %v5456
    %v5459 = vld [vmem:[%s4946 + $0x8] sm:$0xf]
    %v5460 = vld [vmem:[%s4946 + $0x18] sm:$0xf]
    %v5461 = vld [vmem:[%s4946 + $0x28] sm:$0xf]
    %v5462 = vld [vmem:[%s4946 + $0x38] sm:$0xf]
    %v5463 = vld [vmem:[%s4946 + $0x48] sm:$0xf]
    %v5464 = vld [vmem:[%s4946 + $0x58] sm:$0xf]
    %v5465 = vld [vmem:[%s4946 + $0x68] sm:$0xf]
    %v5466 = vld [vmem:[%s4946 + $0x78] sm:$0xf]
    %v5467 = vld [vmem:[%s4946 + $0x88] sm:$0xf]
    %v5468 = vld [vmem:[%s4946 + $0x98] sm:$0xf]
    %v5469 = vld [vmem:[%s4946 + $0xa8] sm:$0xf]
    %v5470 = vld [vmem:[%s4946 + $0xb8] sm:$0xf]
    %v5471 = vld [vmem:[%s4946 + $0xc8] sm:$0xf]
    %v5472 = vld [vmem:[%s4946 + $0xd8] sm:$0xf]
    %v5473 = vld [vmem:[%s4946 + $0xe8] sm:$0xf]
    %v5474 = vld [vmem:[%s4946 + $0xf8] sm:$0xf]
    %v5475 = vunpack.c.l.bf16 %v5459
    %v5476 = vunpack.c.l.bf16 %v5460
    %v5477 = vunpack.c.l.bf16 %v5461
    %v5478 = vunpack.c.l.bf16 %v5462
    %v5479 = vunpack.c.l.bf16 %v5463
    %v5480 = vunpack.c.l.bf16 %v5464
    %v5481 = vunpack.c.l.bf16 %v5465
    %v5482 = vunpack.c.l.bf16 %v5466
    %v5483 = vunpack.c.l.bf16 %v5467
    %v5484 = vunpack.c.l.bf16 %v5468
    %v5485 = vunpack.c.l.bf16 %v5469
    %v5486 = vunpack.c.l.bf16 %v5470
    %v5487 = vunpack.c.l.bf16 %v5471
    %v5488 = vunpack.c.l.bf16 %v5472
    %v5489 = vunpack.c.l.bf16 %v5473
    %v5490 = vunpack.c.l.bf16 %v5474
    %v5491 = vld [vmem:[%s4995 + $0x2] sm:$0x1]
    %v5493 = vlaneseq
    %v5494 = vshrl.u32 %v5493, 7
    %v5495 = vsub.s32 0, %v5494
    %v5496 = vrot.slane %v5491, %v5495
    %5498 = vmatprep.subr.mxu0 0.0
    %5499 = vmatpush1.msra.mxu0 %v5490
    %5500 = vmatprep.subr.mxu0 0.0
    %5501 = vmatpush1.msra.mxu0 %v5489
    %5502 = vmatprep.subr.mxu0 0.0
    %5503 = vmatpush1.msra.mxu0 %v5488
    %5504 = vmatprep.subr.mxu0 0.0
    %5505 = vmatpush1.msra.mxu0 %v5487
    %5506 = vmatprep.subr.mxu0 0.0
    %5507 = vmatpush1.msra.mxu0 %v5486
    %5508 = vmatprep.subr.mxu0 0.0
    %5509 = vmatpush1.msra.mxu0 %v5485
    %5510 = vmatprep.subr.mxu0 0.0
    %5511 = vmatpush1.msra.mxu0 %v5484
    %5512 = vmatprep.subr.mxu0 0.0
    %5513 = vmatpush1.msra.mxu0 %v5483
    %5514 = vmatprep.subr.mxu0 0.0
    %5515 = vmatpush1.msra.mxu0 %v5482
    %5516 = vmatprep.subr.mxu0 0.0
    %5517 = vmatpush1.msra.mxu0 %v5481
    %5518 = vmatprep.subr.mxu0 0.0
    %5519 = vmatpush1.msra.mxu0 %v5480
    %5520 = vmatprep.subr.mxu0 0.0
    %5521 = vmatpush1.msra.mxu0 %v5479
    %5522 = vmatprep.subr.mxu0 0.0
    %5523 = vmatpush1.msra.mxu0 %v5478
    %5524 = vmatprep.subr.mxu0 0.0
    %5525 = vmatpush1.msra.mxu0 %v5477
    %5526 = vmatprep.subr.mxu0 0.0
    %5527 = vmatpush1.msra.mxu0 %v5476
    %5528 = vmatprep.subr.mxu0 0.0
    %5529 = vmatpush1.msra.mxu0 %v5475
    %5530 = vmatprep.subr.mxu0 0.0
    %5531 = vmatpush2.msra.mxu0 0.0
    %5532 = vmatprep.subr.mxu0 0.0
    %5533 = vmatpush2.msra.mxu0 0.0
    %5534 = vmatprep.subr.mxu0 0.0
    %5535 = vmatpush2.msra.mxu0 0.0
    %5536 = vmatprep.subr.mxu0 0.0
    %5537 = vmatpush2.msra.mxu0 0.0
    %5538 = vmatprep.subr.mxu0 0.0
    %5539 = vmatpush2.msra.mxu0 0.0
    %5540 = vmatprep.subr.mxu0 0.0
    %5541 = vmatpush2.msra.mxu0 0.0
    %5542 = vmatprep.subr.mxu0 0.0
    %5543 = vmatpush2.msra.mxu0 0.0
    %5544 = vmatprep.subr.mxu0 0.0
    %5545 = vmatpush2.msra.mxu0 0.0
    %5546 = vmatprep.subr.mxu0 0.0
    %5547 = vmatpush2.msra.mxu0 0.0
    %5548 = vmatprep.subr.mxu0 0.0
    %5549 = vmatpush2.msra.mxu0 0.0
    %5550 = vmatprep.subr.mxu0 0.0
    %5551 = vmatpush2.msra.mxu0 0.0
    %5552 = vmatprep.subr.mxu0 0.0
    %5553 = vmatpush2.msra.mxu0 0.0
    %5554 = vmatprep.subr.mxu0 0.0
    %5555 = vmatpush2.msra.mxu0 0.0
    %5556 = vmatprep.subr.mxu0 0.0
    %5557 = vmatpush2.msra.mxu0 0.0
    %5558 = vmatprep.subr.mxu0 0.0
    %5559 = vmatpush2.msra.mxu0 0.0
    %5560 = vmatprep.subr.mxu0 0.0
    %5561 = vmatpush2.msra.mxu0 0.0
    %5562 = vmatprep.mubr.f32.mxu0 0.0
    %5563 = vmatmul.mubr.f32.gmra.mxu0 %v5457
    %v5564 = vpop.f32.mrf.mxu0
    %v5565 = vadd.f32 %v5496, %v5564
    %v5566 = vpop.f32.mrf.mxu0
    %5567 = vmatprep.mubr.f32.mxu0 0.0
    %5568 = vmatmul.mubr.f32.gmra.mxu0 %v5458
    %v5569 = vpop.f32.mrf.mxu0
    %v5570 = vadd.f32 %v5496, %v5569
    %v5571 = vpop.f32.mrf.mxu0
    %5572 = vdwg.mxu0
    %v5573 = vmax.f32 %v5565, 0.0
    %v5574 = vmax.f32 %v5570, 0.0
    %v5575 = vadd.f32 %v5457, %v5573
    %v5576 = vadd.f32 %v5458, %v5574
    %s5577 = scalar_lea.vmem [#allocation2], 1280
    %v5578 = vld [vmem:[%s5577] sm:$0xff]
    %v5579 = vld [vmem:[%s5577 + $0x8] sm:$0xf]
    %v5580 = vld [vmem:[%s5577 + $0x10] sm:$0xff]
    %v5581 = vld [vmem:[%s5577 + $0x18] sm:$0xf]
    %v5582 = vld [vmem:[%s5577 + $0x20] sm:$0xff]
    %v5583 = vld [vmem:[%s5577 + $0x28] sm:$0xf]
    %v5584 = vld [vmem:[%s5577 + $0x30] sm:$0xff]
    %v5585 = vld [vmem:[%s5577 + $0x38] sm:$0xf]
    %v5586 = vld [vmem:[%s5577 + $0x40] sm:$0xff]
    %v5587 = vld [vmem:[%s5577 + $0x48] sm:$0xf]
    %v5588 = vld [vmem:[%s5577 + $0x50] sm:$0xff]
    %v5589 = vld [vmem:[%s5577 + $0x58] sm:$0xf]
    %v5590 = vld [vmem:[%s5577 + $0x60] sm:$0xff]
    %v5591 = vld [vmem:[%s5577 + $0x68] sm:$0xf]
    %v5592 = vld [vmem:[%s5577 + $0x70] sm:$0xff]
    %v5593 = vld [vmem:[%s5577 + $0x78] sm:$0xf]
    %v5594 = vld [vmem:[%s5577 + $0x80] sm:$0xff]
    %v5595 = vld [vmem:[%s5577 + $0x88] sm:$0xf]
    %v5596 = vld [vmem:[%s5577 + $0x90] sm:$0xff]
    %v5597 = vld [vmem:[%s5577 + $0x98] sm:$0xf]
    %v5598 = vld [vmem:[%s5577 + $0xa0] sm:$0xff]
    %v5599 = vld [vmem:[%s5577 + $0xa8] sm:$0xf]
    %v5600 = vld [vmem:[%s5577 + $0xb0] sm:$0xff]
    %v5601 = vld [vmem:[%s5577 + $0xb8] sm:$0xf]
    %v5602 = vld [vmem:[%s5577 + $0xc0] sm:$0xff]
    %v5603 = vld [vmem:[%s5577 + $0xc8] sm:$0xf]
    %v5604 = vld [vmem:[%s5577 + $0xd0] sm:$0xff]
    %v5605 = vld [vmem:[%s5577 + $0xd8] sm:$0xf]
    %v5606 = vld [vmem:[%s5577 + $0xe0] sm:$0xff]
    %v5607 = vld [vmem:[%s5577 + $0xe8] sm:$0xf]
    %v5608 = vld [vmem:[%s5577 + $0xf0] sm:$0xff]
    %v5609 = vld [vmem:[%s5577 + $0xf8] sm:$0xf]
    %v5610 = vunpack.c.l.bf16 %v5578
    %v5611 = vunpack.c.h.bf16 %v5578
    %v5612 = vunpack.c.l.bf16 %v5579
    %v5613 = vunpack.c.l.bf16 %v5580
    %v5614 = vunpack.c.h.bf16 %v5580
    %v5615 = vunpack.c.l.bf16 %v5581
    %v5616 = vunpack.c.l.bf16 %v5582
    %v5617 = vunpack.c.h.bf16 %v5582
    %v5618 = vunpack.c.l.bf16 %v5583
    %v5619 = vunpack.c.l.bf16 %v5584
    %v5620 = vunpack.c.h.bf16 %v5584
    %v5621 = vunpack.c.l.bf16 %v5585
    %v5622 = vunpack.c.l.bf16 %v5586
    %v5623 = vunpack.c.h.bf16 %v5586
    %v5624 = vunpack.c.l.bf16 %v5587
    %v5625 = vunpack.c.l.bf16 %v5588
    %v5626 = vunpack.c.h.bf16 %v5588
    %v5627 = vunpack.c.l.bf16 %v5589
    %v5628 = vunpack.c.l.bf16 %v5590
    %v5629 = vunpack.c.h.bf16 %v5590
    %v5630 = vunpack.c.l.bf16 %v5591
    %v5631 = vunpack.c.l.bf16 %v5592
    %v5632 = vunpack.c.h.bf16 %v5592
    %v5633 = vunpack.c.l.bf16 %v5593
    %v5634 = vunpack.c.l.bf16 %v5594
    %v5635 = vunpack.c.h.bf16 %v5594
    %v5636 = vunpack.c.l.bf16 %v5595
    %v5637 = vunpack.c.l.bf16 %v5596
    %v5638 = vunpack.c.h.bf16 %v5596
    %v5639 = vunpack.c.l.bf16 %v5597
    %v5640 = vunpack.c.l.bf16 %v5598
    %v5641 = vunpack.c.h.bf16 %v5598
    %v5642 = vunpack.c.l.bf16 %v5599
    %v5643 = vunpack.c.l.bf16 %v5600
    %v5644 = vunpack.c.h.bf16 %v5600
    %v5645 = vunpack.c.l.bf16 %v5601
    %v5646 = vunpack.c.l.bf16 %v5602
    %v5647 = vunpack.c.h.bf16 %v5602
    %v5648 = vunpack.c.l.bf16 %v5603
    %v5649 = vunpack.c.l.bf16 %v5604
    %v5650 = vunpack.c.h.bf16 %v5604
    %v5651 = vunpack.c.l.bf16 %v5605
    %v5652 = vunpack.c.l.bf16 %v5606
    %v5653 = vunpack.c.h.bf16 %v5606
    %v5654 = vunpack.c.l.bf16 %v5607
    %v5655 = vunpack.c.l.bf16 %v5608
    %v5656 = vunpack.c.h.bf16 %v5608
    %v5657 = vunpack.c.l.bf16 %v5609
    %s5658 = scalar_lea.vmem %s9, 20
    %v5659 = vld [vmem:[%s5658] sm:$0x7]
    %v5661 = vlaneseq
    %v5662 = vshrl.u32 %v5661, 7
    %v5663 = vsub.s32 0, %v5662
    %v5664 = vrot.slane %v5659, %v5663
    %v5665 = vlaneseq
    %v5666 = vshrl.u32 %v5665, 7
    %v5667 = vsub.s32 1, %v5666
    %v5668 = vrot.slane %v5659, %v5667
    %v5669 = vlaneseq
    %v5670 = vshrl.u32 %v5669, 7
    %v5671 = vsub.s32 2, %v5670
    %v5672 = vrot.slane %v5659, %v5671
    %5676 = vmatprep.subr.mxu0 %v5656
    %5677 = vmatpush1.msra.mxu0 %v5655
    %5678 = vmatprep.subr.mxu0 %v5653
    %5679 = vmatpush1.msra.mxu0 %v5652
    %5680 = vmatprep.subr.mxu0 %v5650
    %5681 = vmatpush1.msra.mxu0 %v5649
    %5682 = vmatprep.subr.mxu0 %v5647
    %5683 = vmatpush1.msra.mxu0 %v5646
    %5684 = vmatprep.subr.mxu0 %v5644
    %5685 = vmatpush1.msra.mxu0 %v5643
    %5686 = vmatprep.subr.mxu0 %v5641
    %5687 = vmatpush1.msra.mxu0 %v5640
    %5688 = vmatprep.subr.mxu0 %v5638
    %5689 = vmatpush1.msra.mxu0 %v5637
    %5690 = vmatprep.subr.mxu0 %v5635
    %5691 = vmatpush1.msra.mxu0 %v5634
    %5692 = vmatprep.subr.mxu0 %v5632
    %5693 = vmatpush1.msra.mxu0 %v5631
    %5694 = vmatprep.subr.mxu0 %v5629
    %5695 = vmatpush1.msra.mxu0 %v5628
    %5696 = vmatprep.subr.mxu0 %v5626
    %5697 = vmatpush1.msra.mxu0 %v5625
    %5698 = vmatprep.subr.mxu0 %v5623
    %5699 = vmatpush1.msra.mxu0 %v5622
    %5700 = vmatprep.subr.mxu0 %v5620
    %5701 = vmatpush1.msra.mxu0 %v5619
    %5702 = vmatprep.subr.mxu0 %v5617
    %5703 = vmatpush1.msra.mxu0 %v5616
    %5704 = vmatprep.subr.mxu0 %v5614
    %5705 = vmatpush1.msra.mxu0 %v5613
    %5706 = vmatprep.subr.mxu0 %v5611
    %5707 = vmatpush1.msra.mxu0 %v5610
    %5708 = vmatprep.subr.mxu0 0.0
    %5709 = vmatpush2.msra.mxu0 0.0
    %5710 = vmatprep.subr.mxu0 0.0
    %5711 = vmatpush2.msra.mxu0 0.0
    %5712 = vmatprep.subr.mxu0 0.0
    %5713 = vmatpush2.msra.mxu0 0.0
    %5714 = vmatprep.subr.mxu0 0.0
    %5715 = vmatpush2.msra.mxu0 0.0
    %5716 = vmatprep.subr.mxu0 0.0
    %5717 = vmatpush2.msra.mxu0 0.0
    %5718 = vmatprep.subr.mxu0 0.0
    %5719 = vmatpush2.msra.mxu0 0.0
    %5720 = vmatprep.subr.mxu0 0.0
    %5721 = vmatpush2.msra.mxu0 0.0
    %5722 = vmatprep.subr.mxu0 0.0
    %5723 = vmatpush2.msra.mxu0 0.0
    %5724 = vmatprep.subr.mxu0 0.0
    %5725 = vmatpush2.msra.mxu0 0.0
    %5726 = vmatprep.subr.mxu0 0.0
    %5727 = vmatpush2.msra.mxu0 0.0
    %5728 = vmatprep.subr.mxu0 0.0
    %5729 = vmatpush2.msra.mxu0 0.0
    %5730 = vmatprep.subr.mxu0 0.0
    %5731 = vmatpush2.msra.mxu0 0.0
    %5732 = vmatprep.subr.mxu0 0.0
    %5733 = vmatpush2.msra.mxu0 0.0
    %5734 = vmatprep.subr.mxu0 0.0
    %5735 = vmatpush2.msra.mxu0 0.0
    %5736 = vmatprep.subr.mxu0 0.0
    %5737 = vmatpush2.msra.mxu0 0.0
    %5738 = vmatprep.subr.mxu0 0.0
    %5739 = vmatpush2.msra.mxu0 0.0
    %5740 = vmatprep.mubr.f32.mxu0 0.0
    %5741 = vmatmul.mubr.f32.gmra.mxu0 %v5575
    %v5742 = vpop.f32.mrf.mxu0
    %v5743 = vadd.f32 %v5664, %v5742
    %v5744 = vpop.f32.mrf.mxu0
    %v5745 = vadd.f32 %v5668, %v5744
    %5746 = vmatprep.mubr.f32.mxu0 0.0
    %5747 = vmatmul.mubr.f32.gmra.mxu0 %v5576
    %v5748 = vpop.f32.mrf.mxu0
    %v5749 = vadd.f32 %v5664, %v5748
    %v5750 = vpop.f32.mrf.mxu0
    %v5751 = vadd.f32 %v5668, %v5750
    %5752 = vdwg.mxu0
    %5753 = vmatprep.subr.mxu0 0.0
    %5754 = vmatpush1.msra.mxu0 %v5657
    %5755 = vmatprep.subr.mxu0 0.0
    %5756 = vmatpush1.msra.mxu0 %v5654
    %5757 = vmatprep.subr.mxu0 0.0
    %5758 = vmatpush1.msra.mxu0 %v5651
    %5759 = vmatprep.subr.mxu0 0.0
    %5760 = vmatpush1.msra.mxu0 %v5648
    %5761 = vmatprep.subr.mxu0 0.0
    %5762 = vmatpush1.msra.mxu0 %v5645
    %5763 = vmatprep.subr.mxu0 0.0
    %5764 = vmatpush1.msra.mxu0 %v5642
    %5765 = vmatprep.subr.mxu0 0.0
    %5766 = vmatpush1.msra.mxu0 %v5639
    %5767 = vmatprep.subr.mxu0 0.0
    %5768 = vmatpush1.msra.mxu0 %v5636
    %5769 = vmatprep.subr.mxu0 0.0
    %5770 = vmatpush1.msra.mxu0 %v5633
    %5771 = vmatprep.subr.mxu0 0.0
    %5772 = vmatpush1.msra.mxu0 %v5630
    %5773 = vmatprep.subr.mxu0 0.0
    %5774 = vmatpush1.msra.mxu0 %v5627
    %5775 = vmatprep.subr.mxu0 0.0
    %5776 = vmatpush1.msra.mxu0 %v5624
    %5777 = vmatprep.subr.mxu0 0.0
    %5778 = vmatpush1.msra.mxu0 %v5621
    %5779 = vmatprep.subr.mxu0 0.0
    %5780 = vmatpush1.msra.mxu0 %v5618
    %5781 = vmatprep.subr.mxu0 0.0
    %5782 = vmatpush1.msra.mxu0 %v5615
    %5783 = vmatprep.subr.mxu0 0.0
    %5784 = vmatpush1.msra.mxu0 %v5612
    %5785 = vmatprep.subr.mxu0 0.0
    %5786 = vmatpush2.msra.mxu0 0.0
    %5787 = vmatprep.subr.mxu0 0.0
    %5788 = vmatpush2.msra.mxu0 0.0
    %5789 = vmatprep.subr.mxu0 0.0
    %5790 = vmatpush2.msra.mxu0 0.0
    %5791 = vmatprep.subr.mxu0 0.0
    %5792 = vmatpush2.msra.mxu0 0.0
    %5793 = vmatprep.subr.mxu0 0.0
    %5794 = vmatpush2.msra.mxu0 0.0
    %5795 = vmatprep.subr.mxu0 0.0
    %5796 = vmatpush2.msra.mxu0 0.0
    %5797 = vmatprep.subr.mxu0 0.0
    %5798 = vmatpush2.msra.mxu0 0.0
    %5799 = vmatprep.subr.mxu0 0.0
    %5800 = vmatpush2.msra.mxu0 0.0
    %5801 = vmatprep.subr.mxu0 0.0
    %5802 = vmatpush2.msra.mxu0 0.0
    %5803 = vmatprep.subr.mxu0 0.0
    %5804 = vmatpush2.msra.mxu0 0.0
    %5805 = vmatprep.subr.mxu0 0.0
    %5806 = vmatpush2.msra.mxu0 0.0
    %5807 = vmatprep.subr.mxu0 0.0
    %5808 = vmatpush2.msra.mxu0 0.0
    %5809 = vmatprep.subr.mxu0 0.0
    %5810 = vmatpush2.msra.mxu0 0.0
    %5811 = vmatprep.subr.mxu0 0.0
    %5812 = vmatpush2.msra.mxu0 0.0
    %5813 = vmatprep.subr.mxu0 0.0
    %5814 = vmatpush2.msra.mxu0 0.0
    %5815 = vmatprep.subr.mxu0 0.0
    %5816 = vmatpush2.msra.mxu0 0.0
    %5817 = vmatprep.mubr.f32.mxu0 0.0
    %5818 = vmatmul.mubr.f32.gmra.mxu0 %v5575
    %v5819 = vpop.f32.mrf.mxu0
    %v5820 = vadd.f32 %v5672, %v5819
    %v5821 = vpop.f32.mrf.mxu0
    %5822 = vmatprep.mubr.f32.mxu0 0.0
    %5823 = vmatmul.mubr.f32.gmra.mxu0 %v5576
    %v5824 = vpop.f32.mrf.mxu0
    %v5825 = vadd.f32 %v5672, %v5824
    %v5826 = vpop.f32.mrf.mxu0
    %5827 = vdwg.mxu0
    %v5828 = vmul.f32 %v5743, %v56
    %v5829 = vmul.f32 %v5749, %v56
    %v5830 = vmul.f32 %v5743, %v61
    %v5831 = vmul.f32 %v5749, %v61
    %v5832 = vmul.f32 %v5743, %v66
    %v5833 = vmul.f32 %v5749, %v66
    %v5834 = vmul.f32 %v5743, %v71
    %v5835 = vmul.f32 %v5749, %v71
    %5836 = vmatprep.subr.mxu0 0.0
    %5837 = vmatpush1.xpose.msra.mxu0 0.0
    %5838 = vmatprep.subr.mxu0 0.0
    %5839 = vmatpush1.xpose.msra.mxu0 0.0
    %5840 = vmatprep.subr.mxu0 0.0
    %5841 = vmatpush1.xpose.msra.mxu0 0.0
    %5842 = vmatprep.subr.mxu0 0.0
    %5843 = vmatpush1.xpose.msra.mxu0 0.0
    %5844 = vmatprep.subr.mxu0 0.0
    %5845 = vmatpush1.xpose.msra.mxu0 0.0
    %5846 = vmatprep.subr.mxu0 0.0
    %5847 = vmatpush1.xpose.msra.mxu0 0.0
    %5848 = vmatprep.subr.mxu0 0.0
    %5849 = vmatpush1.xpose.msra.mxu0 0.0
    %5850 = vmatprep.subr.mxu0 0.0
    %5851 = vmatpush1.xpose.msra.mxu0 0.0
    %5852 = vmatprep.subr.mxu0 0.0
    %5853 = vmatpush1.xpose.msra.mxu0 0.0
    %5854 = vmatprep.subr.mxu0 0.0
    %5855 = vmatpush1.xpose.msra.mxu0 0.0
    %5856 = vmatprep.subr.mxu0 0.0
    %5857 = vmatpush1.xpose.msra.mxu0 0.0
    %5858 = vmatprep.subr.mxu0 0.0
    %5859 = vmatpush1.xpose.msra.mxu0 0.0
    %5860 = vmatprep.subr.mxu0 0.0
    %5861 = vmatpush1.xpose.msra.mxu0 0.0
    %5862 = vmatprep.subr.mxu0 0.0
    %5863 = vmatpush1.xpose.msra.mxu0 0.0
    %5864 = vmatprep.subr.mxu0 0.0
    %5865 = vmatpush1.xpose.msra.mxu0 %v5751
    %5866 = vmatprep.subr.mxu0 0.0
    %5867 = vmatpush1.xpose.msra.mxu0 %v5745
    %5868 = vmatprep.subr.mxu0 0.0
    %5869 = vmatpush2.xpose.msra.mxu0 0.0
    %5870 = vmatprep.subr.mxu0 0.0
    %5871 = vmatpush2.xpose.msra.mxu0 0.0
    %5872 = vmatprep.subr.mxu0 0.0
    %5873 = vmatpush2.xpose.msra.mxu0 0.0
    %5874 = vmatprep.subr.mxu0 0.0
    %5875 = vmatpush2.xpose.msra.mxu0 0.0
    %5876 = vmatprep.subr.mxu0 0.0
    %5877 = vmatpush2.xpose.msra.mxu0 0.0
    %5878 = vmatprep.subr.mxu0 0.0
    %5879 = vmatpush2.xpose.msra.mxu0 0.0
    %5880 = vmatprep.subr.mxu0 0.0
    %5881 = vmatpush2.xpose.msra.mxu0 0.0
    %5882 = vmatprep.subr.mxu0 0.0
    %5883 = vmatpush2.xpose.msra.mxu0 0.0
    %5884 = vmatprep.subr.mxu0 0.0
    %5885 = vmatpush2.xpose.msra.mxu0 0.0
    %5886 = vmatprep.subr.mxu0 0.0
    %5887 = vmatpush2.xpose.msra.mxu0 0.0
    %5888 = vmatprep.subr.mxu0 0.0
    %5889 = vmatpush2.xpose.msra.mxu0 0.0
    %5890 = vmatprep.subr.mxu0 0.0
    %5891 = vmatpush2.xpose.msra.mxu0 0.0
    %5892 = vmatprep.subr.mxu0 0.0
    %5893 = vmatpush2.xpose.msra.mxu0 0.0
    %5894 = vmatprep.subr.mxu0 0.0
    %5895 = vmatpush2.xpose.msra.mxu0 0.0
    %5896 = vmatprep.subr.mxu0 0.0
    %5897 = vmatpush2.xpose.msra.mxu0 0.0
    %5898 = vmatprep.subr.mxu0 0.0
    %5899 = vmatpush2.xpose.msra.mxu0 0.0
    %5900 = vmatprep.mubr.f32.mxu0 0.0
    %5901 = vmatmul.mubr.f32.gmra.mxu0 %v5828
    %v5902 = vpop.f32.mrf.mxu0
    %v5903 = vadd.f32 0.0, %v5902
    %v5904 = vpop.f32.mrf.mxu0
    %5905 = vmatprep.mubr.f32.mxu0 0.0
    %5906 = vmatmul.mubr.f32.gmra.mxu0 %v5829
    %v5907 = vpop.f32.mrf.mxu0
    %v5908 = vadd.f32 0.0, %v5907
    %v5909 = vpop.f32.mrf.mxu0
    %5910 = vmatprep.mubr.f32.mxu0 0.0
    %5911 = vmatmul.mubr.f32.gmra.mxu0 %v5830
    %v5912 = vpop.f32.mrf.mxu0
    %v5913 = vadd.f32 0.0, %v5912
    %v5914 = vpop.f32.mrf.mxu0
    %5915 = vmatprep.mubr.f32.mxu0 0.0
    %5916 = vmatmul.mubr.f32.gmra.mxu0 %v5831
    %v5917 = vpop.f32.mrf.mxu0
    %v5918 = vadd.f32 0.0, %v5917
    %v5919 = vpop.f32.mrf.mxu0
    %5920 = vmatprep.mubr.f32.mxu0 0.0
    %5921 = vmatmul.mubr.f32.gmra.mxu0 %v5832
    %v5922 = vpop.f32.mrf.mxu0
    %v5923 = vadd.f32 0.0, %v5922
    %v5924 = vpop.f32.mrf.mxu0
    %5925 = vmatprep.mubr.f32.mxu0 0.0
    %5926 = vmatmul.mubr.f32.gmra.mxu0 %v5833
    %v5927 = vpop.f32.mrf.mxu0
    %v5928 = vadd.f32 0.0, %v5927
    %v5929 = vpop.f32.mrf.mxu0
    %5930 = vmatprep.mubr.f32.mxu0 0.0
    %5931 = vmatmul.mubr.f32.gmra.mxu0 %v5834
    %v5932 = vpop.f32.mrf.mxu0
    %v5933 = vadd.f32 0.0, %v5932
    %v5934 = vpop.f32.mrf.mxu0
    %5935 = vmatprep.mubr.f32.mxu0 0.0
    %5936 = vmatmul.mubr.f32.gmra.mxu0 %v5835
    %v5937 = vpop.f32.mrf.mxu0
    %v5938 = vadd.f32 0.0, %v5937
    %v5939 = vpop.f32.mrf.mxu0
    %5940 = vdwg.mxu0
    %v5941 = vmul.f32 %v5903, 0.088388346
    %v5942 = vmul.f32 %v5908, 0.088388346
    %v5943 = vmul.f32 %v5913, 0.088388346
    %v5944 = vmul.f32 %v5918, 0.088388346
    %v5945 = vmul.f32 %v5923, 0.088388346
    %v5946 = vmul.f32 %v5928, 0.088388346
    %v5947 = vmul.f32 %v5933, 0.088388346
    %v5948 = vmul.f32 %v5938, 0.088388346
    %v5949 = vadd.f32 %v5941, %v132
    %v5950 = vadd.f32 %v5942, %v133
    %v5951 = vadd.f32 %v5943, %v134
    %v5952 = vadd.f32 %v5944, %v135
    %v5953 = vadd.f32 %v5945, %v136
    %v5954 = vadd.f32 %v5946, %v137
    %v5955 = vadd.f32 %v5947, %v138
    %v5956 = vadd.f32 %v5948, %v139
    %vm5957 = vcmask 130048
    %v5958 = vsel %vm5957, %v5949, -inf
    %5959 = vmax.xlane.f32.xlu0 %v5958
    %v5960 = vpop.xlane.xlu0 %5959
    %v5961 = vsel %vm5957, %v5950, -inf
    %5962 = vmax.xlane.f32.xlu0 %v5961
    %v5963 = vpop.xlane.xlu0 %5962
    %v5964 = vsel %vm5957, %v5951, -inf
    %5965 = vmax.xlane.f32.xlu0 %v5964
    %v5966 = vpop.xlane.xlu0 %5965
    %v5967 = vsel %vm5957, %v5952, -inf
    %5968 = vmax.xlane.f32.xlu0 %v5967
    %v5969 = vpop.xlane.xlu0 %5968
    %v5970 = vsel %vm5957, %v5953, -inf
    %5971 = vmax.xlane.f32.xlu0 %v5970
    %v5972 = vpop.xlane.xlu0 %5971
    %v5973 = vsel %vm5957, %v5954, -inf
    %5974 = vmax.xlane.f32.xlu0 %v5973
    %v5975 = vpop.xlane.xlu0 %5974
    %v5976 = vsel %vm5957, %v5955, -inf
    %5977 = vmax.xlane.f32.xlu0 %v5976
    %v5978 = vpop.xlane.xlu0 %5977
    %v5979 = vsel %vm5957, %v5956, -inf
    %5980 = vmax.xlane.f32.xlu0 %v5979
    %v5981 = vpop.xlane.xlu0 %5980
    %v5982 = vsub.f32 %v5949, %v5960
    %v5983 = vsub.f32 %v5950, %v5963
    %v5984 = vsub.f32 %v5951, %v5966
    %v5985 = vsub.f32 %v5952, %v5969
    %v5986 = vsub.f32 %v5953, %v5972
    %v5987 = vsub.f32 %v5954, %v5975
    %v5988 = vsub.f32 %v5955, %v5978
    %v5989 = vsub.f32 %v5956, %v5981
    %v5990 = vmul.f32 %v5982, 1.442695
    %v5991 = vpow.pop %v5990
    %v5992 = vmul.f32 %v5983, 1.442695
    %v5993 = vpow.pop %v5992
    %v5994 = vmul.f32 %v5984, 1.442695
    %v5995 = vpow.pop %v5994
    %v5996 = vmul.f32 %v5985, 1.442695
    %v5997 = vpow.pop %v5996
    %v5998 = vmul.f32 %v5986, 1.442695
    %v5999 = vpow.pop %v5998
    %v6000 = vmul.f32 %v5987, 1.442695
    %v6001 = vpow.pop %v6000
    %v6002 = vmul.f32 %v5988, 1.442695
    %v6003 = vpow.pop %v6002
    %v6004 = vmul.f32 %v5989, 1.442695
    %v6005 = vpow.pop %v6004
    %v6006 = vsel %vm5957, %v5991, 0.0
    %6007 = vadd.xlane.f32.xlu0 %v6006
    %v6008 = vpop.xlane.xlu0 %6007
    %v6009 = vsel %vm5957, %v5993, 0.0
    %6010 = vadd.xlane.f32.xlu0 %v6009
    %v6011 = vpop.xlane.xlu0 %6010
    %v6012 = vsel %vm5957, %v5995, 0.0
    %6013 = vadd.xlane.f32.xlu0 %v6012
    %v6014 = vpop.xlane.xlu0 %6013
    %v6015 = vsel %vm5957, %v5997, 0.0
    %6016 = vadd.xlane.f32.xlu0 %v6015
    %v6017 = vpop.xlane.xlu0 %6016
    %v6018 = vsel %vm5957, %v5999, 0.0
    %6019 = vadd.xlane.f32.xlu0 %v6018
    %v6020 = vpop.xlane.xlu0 %6019
    %v6021 = vsel %vm5957, %v6001, 0.0
    %6022 = vadd.xlane.f32.xlu0 %v6021
    %v6023 = vpop.xlane.xlu0 %6022
    %v6024 = vsel %vm5957, %v6003, 0.0
    %6025 = vadd.xlane.f32.xlu0 %v6024
    %v6026 = vpop.xlane.xlu0 %6025
    %v6027 = vsel %vm5957, %v6005, 0.0
    %6028 = vadd.xlane.f32.xlu0 %v6027
    %v6029 = vpop.xlane.xlu0 %6028
    %v6030 = vrcp.pop %v6008
    %v6031 = vmul.f32 %v5991, %v6030
    %v6032 = vrcp.pop %v6011
    %v6033 = vmul.f32 %v5993, %v6032
    %v6034 = vrcp.pop %v6014
    %v6035 = vmul.f32 %v5995, %v6034
    %v6036 = vrcp.pop %v6017
    %v6037 = vmul.f32 %v5997, %v6036
    %v6038 = vrcp.pop %v6020
    %v6039 = vmul.f32 %v5999, %v6038
    %v6040 = vrcp.pop %v6023
    %v6041 = vmul.f32 %v6001, %v6040
    %v6042 = vrcp.pop %v6026
    %v6043 = vmul.f32 %v6003, %v6042
    %v6044 = vrcp.pop %v6029
    %v6045 = vmul.f32 %v6005, %v6044
    %v6047 = vsel %vm5957, %v6031, 0
    %v6050 = vsel %vm5957, %v6033, 0
    %v6053 = vsel %vm5957, %v6035, 0
    %v6056 = vsel %vm5957, %v6037, 0
    %v6059 = vsel %vm5957, %v6039, 0
    %v6062 = vsel %vm5957, %v6041, 0
    %v6065 = vsel %vm5957, %v6043, 0
    %v6068 = vsel %vm5957, %v6045, 0
    %6070 = vmatprep.subr.mxu0 0.0
    %6071 = vmatpush1.msra.mxu0 0.0
    %6072 = vmatprep.subr.mxu0 0.0
    %6073 = vmatpush1.msra.mxu0 0.0
    %6074 = vmatprep.subr.mxu0 0.0
    %6075 = vmatpush1.msra.mxu0 0.0
    %6076 = vmatprep.subr.mxu0 0.0
    %6077 = vmatpush1.msra.mxu0 0.0
    %6078 = vmatprep.subr.mxu0 0.0
    %6079 = vmatpush1.msra.mxu0 0.0
    %6080 = vmatprep.subr.mxu0 0.0
    %6081 = vmatpush1.msra.mxu0 0.0
    %6082 = vmatprep.subr.mxu0 0.0
    %6083 = vmatpush1.msra.mxu0 0.0
    %6084 = vmatprep.subr.mxu0 0.0
    %6085 = vmatpush1.msra.mxu0 0.0
    %6086 = vmatprep.subr.mxu0 0.0
    %6087 = vmatpush1.msra.mxu0 0.0
    %6088 = vmatprep.subr.mxu0 0.0
    %6089 = vmatpush1.msra.mxu0 0.0
    %6090 = vmatprep.subr.mxu0 0.0
    %6091 = vmatpush1.msra.mxu0 0.0
    %6092 = vmatprep.subr.mxu0 0.0
    %6093 = vmatpush1.msra.mxu0 0.0
    %6094 = vmatprep.subr.mxu0 0.0
    %6095 = vmatpush1.msra.mxu0 0.0
    %6096 = vmatprep.subr.mxu0 0.0
    %6097 = vmatpush1.msra.mxu0 0.0
    %6098 = vmatprep.subr.mxu0 0.0
    %6099 = vmatpush1.msra.mxu0 %v5825
    %6100 = vmatprep.subr.mxu0 0.0
    %6101 = vmatpush1.msra.mxu0 %v5820
    %6102 = vmatprep.subr.mxu0 0.0
    %6103 = vmatpush2.msra.mxu0 0.0
    %6104 = vmatprep.subr.mxu0 0.0
    %6105 = vmatpush2.msra.mxu0 0.0
    %6106 = vmatprep.subr.mxu0 0.0
    %6107 = vmatpush2.msra.mxu0 0.0
    %6108 = vmatprep.subr.mxu0 0.0
    %6109 = vmatpush2.msra.mxu0 0.0
    %6110 = vmatprep.subr.mxu0 0.0
    %6111 = vmatpush2.msra.mxu0 0.0
    %6112 = vmatprep.subr.mxu0 0.0
    %6113 = vmatpush2.msra.mxu0 0.0
    %6114 = vmatprep.subr.mxu0 0.0
    %6115 = vmatpush2.msra.mxu0 0.0
    %6116 = vmatprep.subr.mxu0 0.0
    %6117 = vmatpush2.msra.mxu0 0.0
    %6118 = vmatprep.subr.mxu0 0.0
    %6119 = vmatpush2.msra.mxu0 0.0
    %6120 = vmatprep.subr.mxu0 0.0
    %6121 = vmatpush2.msra.mxu0 0.0
    %6122 = vmatprep.subr.mxu0 0.0
    %6123 = vmatpush2.msra.mxu0 0.0
    %6124 = vmatprep.subr.mxu0 0.0
    %6125 = vmatpush2.msra.mxu0 0.0
    %6126 = vmatprep.subr.mxu0 0.0
    %6127 = vmatpush2.msra.mxu0 0.0
    %6128 = vmatprep.subr.mxu0 0.0
    %6129 = vmatpush2.msra.mxu0 0.0
    %6130 = vmatprep.subr.mxu0 0.0
    %6131 = vmatpush2.msra.mxu0 0.0
    %6132 = vmatprep.subr.mxu0 0.0
    %6133 = vmatpush2.msra.mxu0 0.0
    %6134 = vmatprep.mubr.f32.mxu0 0.0
    %6135 = vmatmul.mubr.f32.gmra.mxu0 %v6047
    %v6136 = vpop.f32.mrf.mxu0
    %v6137 = vadd.f32 0.0, %v6136
    %v6138 = vpop.f32.mrf.mxu0
    %6139 = vmatprep.mubr.f32.mxu0 0.0
    %6140 = vmatmul.mubr.f32.gmra.mxu0 %v6050
    %v6141 = vpop.f32.mrf.mxu0
    %v6142 = vadd.f32 0.0, %v6141
    %v6143 = vpop.f32.mrf.mxu0
    %6144 = vmatprep.mubr.f32.mxu0 0.0
    %6145 = vmatmul.mubr.f32.gmra.mxu0 %v6053
    %v6146 = vpop.f32.mrf.mxu0
    %v6147 = vadd.f32 0.0, %v6146
    %v6148 = vpop.f32.mrf.mxu0
    %6149 = vmatprep.mubr.f32.mxu0 0.0
    %6150 = vmatmul.mubr.f32.gmra.mxu0 %v6056
    %v6151 = vpop.f32.mrf.mxu0
    %v6152 = vadd.f32 0.0, %v6151
    %v6153 = vpop.f32.mrf.mxu0
    %6154 = vmatprep.mubr.f32.mxu0 0.0
    %6155 = vmatmul.mubr.f32.gmra.mxu0 %v6059
    %v6156 = vpop.f32.mrf.mxu0
    %v6157 = vadd.f32 0.0, %v6156
    %v6158 = vpop.f32.mrf.mxu0
    %6159 = vmatprep.mubr.f32.mxu0 0.0
    %6160 = vmatmul.mubr.f32.gmra.mxu0 %v6062
    %v6161 = vpop.f32.mrf.mxu0
    %v6162 = vadd.f32 0.0, %v6161
    %v6163 = vpop.f32.mrf.mxu0
    %6164 = vmatprep.mubr.f32.mxu0 0.0
    %6165 = vmatmul.mubr.f32.gmra.mxu0 %v6065
    %v6166 = vpop.f32.mrf.mxu0
    %v6167 = vadd.f32 0.0, %v6166
    %v6168 = vpop.f32.mrf.mxu0
    %6169 = vmatprep.mubr.f32.mxu0 0.0
    %6170 = vmatmul.mubr.f32.gmra.mxu0 %v6068
    %v6171 = vpop.f32.mrf.mxu0
    %v6172 = vadd.f32 0.0, %v6171
    %v6173 = vpop.f32.mrf.mxu0
    %6174 = vdwg.mxu0
    %v6175 = vmul.f32 %v6137, %v56
    %v6176 = vmul.f32 %v6142, %v56
    %v6177 = vadd.f32 %v5743, %v6175
    %v6178 = vadd.f32 %v5749, %v6176
    %v6179 = vmul.f32 %v6147, %v61
    %v6180 = vmul.f32 %v6152, %v61
    %v6181 = vadd.f32 %v6177, %v6179
    %v6182 = vadd.f32 %v6178, %v6180
    %v6183 = vmul.f32 %v6157, %v66
    %v6184 = vmul.f32 %v6162, %v66
    %v6185 = vadd.f32 %v6181, %v6183
    %v6186 = vadd.f32 %v6182, %v6184
    %v6187 = vmul.f32 %v6167, %v71
    %v6188 = vmul.f32 %v6172, %v71
    %v6189 = vadd.f32 %v6185, %v6187
    %v6190 = vadd.f32 %v6186, %v6188
    %v6191 = vld [vmem:[%s5577 + $0xc] sm:$0xf]
    %v6192 = vld [vmem:[%s5577 + $0x1c] sm:$0xf]
    %v6193 = vld [vmem:[%s5577 + $0x2c] sm:$0xf]
    %v6194 = vld [vmem:[%s5577 + $0x3c] sm:$0xf]
    %v6195 = vld [vmem:[%s5577 + $0x4c] sm:$0xf]
    %v6196 = vld [vmem:[%s5577 + $0x5c] sm:$0xf]
    %v6197 = vld [vmem:[%s5577 + $0x6c] sm:$0xf]
    %v6198 = vld [vmem:[%s5577 + $0x7c] sm:$0xf]
    %v6199 = vld [vmem:[%s5577 + $0x8c] sm:$0xf]
    %v6200 = vld [vmem:[%s5577 + $0x9c] sm:$0xf]
    %v6201 = vld [vmem:[%s5577 + $0xac] sm:$0xf]
    %v6202 = vld [vmem:[%s5577 + $0xbc] sm:$0xf]
    %v6203 = vld [vmem:[%s5577 + $0xcc] sm:$0xf]
    %v6204 = vld [vmem:[%s5577 + $0xdc] sm:$0xf]
    %v6205 = vld [vmem:[%s5577 + $0xec] sm:$0xf]
    %v6206 = vld [vmem:[%s5577 + $0xfc] sm:$0xf]
    %v6207 = vunpack.c.l.bf16 %v6191
    %v6208 = vunpack.c.l.bf16 %v6192
    %v6209 = vunpack.c.l.bf16 %v6193
    %v6210 = vunpack.c.l.bf16 %v6194
    %v6211 = vunpack.c.l.bf16 %v6195
    %v6212 = vunpack.c.l.bf16 %v6196
    %v6213 = vunpack.c.l.bf16 %v6197
    %v6214 = vunpack.c.l.bf16 %v6198
    %v6215 = vunpack.c.l.bf16 %v6199
    %v6216 = vunpack.c.l.bf16 %v6200
    %v6217 = vunpack.c.l.bf16 %v6201
    %v6218 = vunpack.c.l.bf16 %v6202
    %v6219 = vunpack.c.l.bf16 %v6203
    %v6220 = vunpack.c.l.bf16 %v6204
    %v6221 = vunpack.c.l.bf16 %v6205
    %v6222 = vunpack.c.l.bf16 %v6206
    %v6223 = vld [vmem:[%s5658 + $0x3] sm:$0x1]
    %v6225 = vlaneseq
    %v6226 = vshrl.u32 %v6225, 7
    %v6227 = vsub.s32 0, %v6226
    %v6228 = vrot.slane %v6223, %v6227
    %6230 = vmatprep.subr.mxu0 0.0
    %6231 = vmatpush1.msra.mxu0 %v6222
    %6232 = vmatprep.subr.mxu0 0.0
    %6233 = vmatpush1.msra.mxu0 %v6221
    %6234 = vmatprep.subr.mxu0 0.0
    %6235 = vmatpush1.msra.mxu0 %v6220
    %6236 = vmatprep.subr.mxu0 0.0
    %6237 = vmatpush1.msra.mxu0 %v6219
    %6238 = vmatprep.subr.mxu0 0.0
    %6239 = vmatpush1.msra.mxu0 %v6218
    %6240 = vmatprep.subr.mxu0 0.0
    %6241 = vmatpush1.msra.mxu0 %v6217
    %6242 = vmatprep.subr.mxu0 0.0
    %6243 = vmatpush1.msra.mxu0 %v6216
    %6244 = vmatprep.subr.mxu0 0.0
    %6245 = vmatpush1.msra.mxu0 %v6215
    %6246 = vmatprep.subr.mxu0 0.0
    %6247 = vmatpush1.msra.mxu0 %v6214
    %6248 = vmatprep.subr.mxu0 0.0
    %6249 = vmatpush1.msra.mxu0 %v6213
    %6250 = vmatprep.subr.mxu0 0.0
    %6251 = vmatpush1.msra.mxu0 %v6212
    %6252 = vmatprep.subr.mxu0 0.0
    %6253 = vmatpush1.msra.mxu0 %v6211
    %6254 = vmatprep.subr.mxu0 0.0
    %6255 = vmatpush1.msra.mxu0 %v6210
    %6256 = vmatprep.subr.mxu0 0.0
    %6257 = vmatpush1.msra.mxu0 %v6209
    %6258 = vmatprep.subr.mxu0 0.0
    %6259 = vmatpush1.msra.mxu0 %v6208
    %6260 = vmatprep.subr.mxu0 0.0
    %6261 = vmatpush1.msra.mxu0 %v6207
    %6262 = vmatprep.subr.mxu0 0.0
    %6263 = vmatpush2.msra.mxu0 0.0
    %6264 = vmatprep.subr.mxu0 0.0
    %6265 = vmatpush2.msra.mxu0 0.0
    %6266 = vmatprep.subr.mxu0 0.0
    %6267 = vmatpush2.msra.mxu0 0.0
    %6268 = vmatprep.subr.mxu0 0.0
    %6269 = vmatpush2.msra.mxu0 0.0
    %6270 = vmatprep.subr.mxu0 0.0
    %6271 = vmatpush2.msra.mxu0 0.0
    %6272 = vmatprep.subr.mxu0 0.0
    %6273 = vmatpush2.msra.mxu0 0.0
    %6274 = vmatprep.subr.mxu0 0.0
    %6275 = vmatpush2.msra.mxu0 0.0
    %6276 = vmatprep.subr.mxu0 0.0
    %6277 = vmatpush2.msra.mxu0 0.0
    %6278 = vmatprep.subr.mxu0 0.0
    %6279 = vmatpush2.msra.mxu0 0.0
    %6280 = vmatprep.subr.mxu0 0.0
    %6281 = vmatpush2.msra.mxu0 0.0
    %6282 = vmatprep.subr.mxu0 0.0
    %6283 = vmatpush2.msra.mxu0 0.0
    %6284 = vmatprep.subr.mxu0 0.0
    %6285 = vmatpush2.msra.mxu0 0.0
    %6286 = vmatprep.subr.mxu0 0.0
    %6287 = vmatpush2.msra.mxu0 0.0
    %6288 = vmatprep.subr.mxu0 0.0
    %6289 = vmatpush2.msra.mxu0 0.0
    %6290 = vmatprep.subr.mxu0 0.0
    %6291 = vmatpush2.msra.mxu0 0.0
    %6292 = vmatprep.subr.mxu0 0.0
    %6293 = vmatpush2.msra.mxu0 0.0
    %6294 = vmatprep.mubr.f32.mxu0 0.0
    %6295 = vmatmul.mubr.f32.gmra.mxu0 %v6189
    %v6296 = vpop.f32.mrf.mxu0
    %v6297 = vadd.f32 %v6228, %v6296
    %v6298 = vpop.f32.mrf.mxu0
    %6299 = vmatprep.mubr.f32.mxu0 0.0
    %6300 = vmatmul.mubr.f32.gmra.mxu0 %v6190
    %v6301 = vpop.f32.mrf.mxu0
    %v6302 = vadd.f32 %v6228, %v6301
    %v6303 = vpop.f32.mrf.mxu0
    %6304 = vdwg.mxu0
    %v6305 = vmax.f32 %v6297, 0.0
    %v6306 = vmax.f32 %v6302, 0.0
    %v6307 = vadd.f32 %v6189, %v6305
    %v6308 = vadd.f32 %v6190, %v6306
    %s6309 = scalar_lea.vmem [#allocation2], 1536
    %v6310 = vld [vmem:[%s6309] sm:$0xff]
    %v6311 = vld [vmem:[%s6309 + $0x8] sm:$0xf]
    %v6312 = vld [vmem:[%s6309 + $0x10] sm:$0xff]
    %v6313 = vld [vmem:[%s6309 + $0x18] sm:$0xf]
    %v6314 = vld [vmem:[%s6309 + $0x20] sm:$0xff]
    %v6315 = vld [vmem:[%s6309 + $0x28] sm:$0xf]
    %v6316 = vld [vmem:[%s6309 + $0x30] sm:$0xff]
    %v6317 = vld [vmem:[%s6309 + $0x38] sm:$0xf]
    %v6318 = vld [vmem:[%s6309 + $0x40] sm:$0xff]
    %v6319 = vld [vmem:[%s6309 + $0x48] sm:$0xf]
    %v6320 = vld [vmem:[%s6309 + $0x50] sm:$0xff]
    %v6321 = vld [vmem:[%s6309 + $0x58] sm:$0xf]
    %v6322 = vld [vmem:[%s6309 + $0x60] sm:$0xff]
    %v6323 = vld [vmem:[%s6309 + $0x68] sm:$0xf]
    %v6324 = vld [vmem:[%s6309 + $0x70] sm:$0xff]
    %v6325 = vld [vmem:[%s6309 + $0x78] sm:$0xf]
    %v6326 = vld [vmem:[%s6309 + $0x80] sm:$0xff]
    %v6327 = vld [vmem:[%s6309 + $0x88] sm:$0xf]
    %v6328 = vld [vmem:[%s6309 + $0x90] sm:$0xff]
    %v6329 = vld [vmem:[%s6309 + $0x98] sm:$0xf]
    %v6330 = vld [vmem:[%s6309 + $0xa0] sm:$0xff]
    %v6331 = vld [vmem:[%s6309 + $0xa8] sm:$0xf]
    %v6332 = vld [vmem:[%s6309 + $0xb0] sm:$0xff]
    %v6333 = vld [vmem:[%s6309 + $0xb8] sm:$0xf]
    %v6334 = vld [vmem:[%s6309 + $0xc0] sm:$0xff]
    %v6335 = vld [vmem:[%s6309 + $0xc8] sm:$0xf]
    %v6336 = vld [vmem:[%s6309 + $0xd0] sm:$0xff]
    %v6337 = vld [vmem:[%s6309 + $0xd8] sm:$0xf]
    %v6338 = vld [vmem:[%s6309 + $0xe0] sm:$0xff]
    %v6339 = vld [vmem:[%s6309 + $0xe8] sm:$0xf]
    %v6340 = vld [vmem:[%s6309 + $0xf0] sm:$0xff]
    %v6341 = vld [vmem:[%s6309 + $0xf8] sm:$0xf]
    %v6342 = vunpack.c.l.bf16 %v6310
    %v6343 = vunpack.c.h.bf16 %v6310
    %v6344 = vunpack.c.l.bf16 %v6311
    %v6345 = vunpack.c.l.bf16 %v6312
    %v6346 = vunpack.c.h.bf16 %v6312
    %v6347 = vunpack.c.l.bf16 %v6313
    %v6348 = vunpack.c.l.bf16 %v6314
    %v6349 = vunpack.c.h.bf16 %v6314
    %v6350 = vunpack.c.l.bf16 %v6315
    %v6351 = vunpack.c.l.bf16 %v6316
    %v6352 = vunpack.c.h.bf16 %v6316
    %v6353 = vunpack.c.l.bf16 %v6317
    %v6354 = vunpack.c.l.bf16 %v6318
    %v6355 = vunpack.c.h.bf16 %v6318
    %v6356 = vunpack.c.l.bf16 %v6319
    %v6357 = vunpack.c.l.bf16 %v6320
    %v6358 = vunpack.c.h.bf16 %v6320
    %v6359 = vunpack.c.l.bf16 %v6321
    %v6360 = vunpack.c.l.bf16 %v6322
    %v6361 = vunpack.c.h.bf16 %v6322
    %v6362 = vunpack.c.l.bf16 %v6323
    %v6363 = vunpack.c.l.bf16 %v6324
    %v6364 = vunpack.c.h.bf16 %v6324
    %v6365 = vunpack.c.l.bf16 %v6325
    %v6366 = vunpack.c.l.bf16 %v6326
    %v6367 = vunpack.c.h.bf16 %v6326
    %v6368 = vunpack.c.l.bf16 %v6327
    %v6369 = vunpack.c.l.bf16 %v6328
    %v6370 = vunpack.c.h.bf16 %v6328
    %v6371 = vunpack.c.l.bf16 %v6329
    %v6372 = vunpack.c.l.bf16 %v6330
    %v6373 = vunpack.c.h.bf16 %v6330
    %v6374 = vunpack.c.l.bf16 %v6331
    %v6375 = vunpack.c.l.bf16 %v6332
    %v6376 = vunpack.c.h.bf16 %v6332
    %v6377 = vunpack.c.l.bf16 %v6333
    %v6378 = vunpack.c.l.bf16 %v6334
    %v6379 = vunpack.c.h.bf16 %v6334
    %v6380 = vunpack.c.l.bf16 %v6335
    %v6381 = vunpack.c.l.bf16 %v6336
    %v6382 = vunpack.c.h.bf16 %v6336
    %v6383 = vunpack.c.l.bf16 %v6337
    %v6384 = vunpack.c.l.bf16 %v6338
    %v6385 = vunpack.c.h.bf16 %v6338
    %v6386 = vunpack.c.l.bf16 %v6339
    %v6387 = vunpack.c.l.bf16 %v6340
    %v6388 = vunpack.c.h.bf16 %v6340
    %v6389 = vunpack.c.l.bf16 %v6341
    %s6390 = scalar_lea.vmem %s9, 24
    %v6391 = vld [vmem:[%s6390] sm:$0x7]
    %v6393 = vlaneseq
    %v6394 = vshrl.u32 %v6393, 7
    %v6395 = vsub.s32 0, %v6394
    %v6396 = vrot.slane %v6391, %v6395
    %v6397 = vlaneseq
    %v6398 = vshrl.u32 %v6397, 7
    %v6399 = vsub.s32 1, %v6398
    %v6400 = vrot.slane %v6391, %v6399
    %v6401 = vlaneseq
    %v6402 = vshrl.u32 %v6401, 7
    %v6403 = vsub.s32 2, %v6402
    %v6404 = vrot.slane %v6391, %v6403
    %6408 = vmatprep.subr.mxu0 %v6388
    %6409 = vmatpush1.msra.mxu0 %v6387
    %6410 = vmatprep.subr.mxu0 %v6385
    %6411 = vmatpush1.msra.mxu0 %v6384
    %6412 = vmatprep.subr.mxu0 %v6382
    %6413 = vmatpush1.msra.mxu0 %v6381
    %6414 = vmatprep.subr.mxu0 %v6379
    %6415 = vmatpush1.msra.mxu0 %v6378
    %6416 = vmatprep.subr.mxu0 %v6376
    %6417 = vmatpush1.msra.mxu0 %v6375
    %6418 = vmatprep.subr.mxu0 %v6373
    %6419 = vmatpush1.msra.mxu0 %v6372
    %6420 = vmatprep.subr.mxu0 %v6370
    %6421 = vmatpush1.msra.mxu0 %v6369
    %6422 = vmatprep.subr.mxu0 %v6367
    %6423 = vmatpush1.msra.mxu0 %v6366
    %6424 = vmatprep.subr.mxu0 %v6364
    %6425 = vmatpush1.msra.mxu0 %v6363
    %6426 = vmatprep.subr.mxu0 %v6361
    %6427 = vmatpush1.msra.mxu0 %v6360
    %6428 = vmatprep.subr.mxu0 %v6358
    %6429 = vmatpush1.msra.mxu0 %v6357
    %6430 = vmatprep.subr.mxu0 %v6355
    %6431 = vmatpush1.msra.mxu0 %v6354
    %6432 = vmatprep.subr.mxu0 %v6352
    %6433 = vmatpush1.msra.mxu0 %v6351
    %6434 = vmatprep.subr.mxu0 %v6349
    %6435 = vmatpush1.msra.mxu0 %v6348
    %6436 = vmatprep.subr.mxu0 %v6346
    %6437 = vmatpush1.msra.mxu0 %v6345
    %6438 = vmatprep.subr.mxu0 %v6343
    %6439 = vmatpush1.msra.mxu0 %v6342
    %6440 = vmatprep.subr.mxu0 0.0
    %6441 = vmatpush2.msra.mxu0 0.0
    %6442 = vmatprep.subr.mxu0 0.0
    %6443 = vmatpush2.msra.mxu0 0.0
    %6444 = vmatprep.subr.mxu0 0.0
    %6445 = vmatpush2.msra.mxu0 0.0
    %6446 = vmatprep.subr.mxu0 0.0
    %6447 = vmatpush2.msra.mxu0 0.0
    %6448 = vmatprep.subr.mxu0 0.0
    %6449 = vmatpush2.msra.mxu0 0.0
    %6450 = vmatprep.subr.mxu0 0.0
    %6451 = vmatpush2.msra.mxu0 0.0
    %6452 = vmatprep.subr.mxu0 0.0
    %6453 = vmatpush2.msra.mxu0 0.0
    %6454 = vmatprep.subr.mxu0 0.0
    %6455 = vmatpush2.msra.mxu0 0.0
    %6456 = vmatprep.subr.mxu0 0.0
    %6457 = vmatpush2.msra.mxu0 0.0
    %6458 = vmatprep.subr.mxu0 0.0
    %6459 = vmatpush2.msra.mxu0 0.0
    %6460 = vmatprep.subr.mxu0 0.0
    %6461 = vmatpush2.msra.mxu0 0.0
    %6462 = vmatprep.subr.mxu0 0.0
    %6463 = vmatpush2.msra.mxu0 0.0
    %6464 = vmatprep.subr.mxu0 0.0
    %6465 = vmatpush2.msra.mxu0 0.0
    %6466 = vmatprep.subr.mxu0 0.0
    %6467 = vmatpush2.msra.mxu0 0.0
    %6468 = vmatprep.subr.mxu0 0.0
    %6469 = vmatpush2.msra.mxu0 0.0
    %6470 = vmatprep.subr.mxu0 0.0
    %6471 = vmatpush2.msra.mxu0 0.0
    %6472 = vmatprep.mubr.f32.mxu0 0.0
    %6473 = vmatmul.mubr.f32.gmra.mxu0 %v6307
    %v6474 = vpop.f32.mrf.mxu0
    %v6475 = vadd.f32 %v6396, %v6474
    %v6476 = vpop.f32.mrf.mxu0
    %v6477 = vadd.f32 %v6400, %v6476
    %6478 = vmatprep.mubr.f32.mxu0 0.0
    %6479 = vmatmul.mubr.f32.gmra.mxu0 %v6308
    %v6480 = vpop.f32.mrf.mxu0
    %v6481 = vadd.f32 %v6396, %v6480
    %v6482 = vpop.f32.mrf.mxu0
    %v6483 = vadd.f32 %v6400, %v6482
    %6484 = vdwg.mxu0
    %6485 = vmatprep.subr.mxu0 0.0
    %6486 = vmatpush1.msra.mxu0 %v6389
    %6487 = vmatprep.subr.mxu0 0.0
    %6488 = vmatpush1.msra.mxu0 %v6386
    %6489 = vmatprep.subr.mxu0 0.0
    %6490 = vmatpush1.msra.mxu0 %v6383
    %6491 = vmatprep.subr.mxu0 0.0
    %6492 = vmatpush1.msra.mxu0 %v6380
    %6493 = vmatprep.subr.mxu0 0.0
    %6494 = vmatpush1.msra.mxu0 %v6377
    %6495 = vmatprep.subr.mxu0 0.0
    %6496 = vmatpush1.msra.mxu0 %v6374
    %6497 = vmatprep.subr.mxu0 0.0
    %6498 = vmatpush1.msra.mxu0 %v6371
    %6499 = vmatprep.subr.mxu0 0.0
    %6500 = vmatpush1.msra.mxu0 %v6368
    %6501 = vmatprep.subr.mxu0 0.0
    %6502 = vmatpush1.msra.mxu0 %v6365
    %6503 = vmatprep.subr.mxu0 0.0
    %6504 = vmatpush1.msra.mxu0 %v6362
    %6505 = vmatprep.subr.mxu0 0.0
    %6506 = vmatpush1.msra.mxu0 %v6359
    %6507 = vmatprep.subr.mxu0 0.0
    %6508 = vmatpush1.msra.mxu0 %v6356
    %6509 = vmatprep.subr.mxu0 0.0
    %6510 = vmatpush1.msra.mxu0 %v6353
    %6511 = vmatprep.subr.mxu0 0.0
    %6512 = vmatpush1.msra.mxu0 %v6350
    %6513 = vmatprep.subr.mxu0 0.0
    %6514 = vmatpush1.msra.mxu0 %v6347
    %6515 = vmatprep.subr.mxu0 0.0
    %6516 = vmatpush1.msra.mxu0 %v6344
    %6517 = vmatprep.subr.mxu0 0.0
    %6518 = vmatpush2.msra.mxu0 0.0
    %6519 = vmatprep.subr.mxu0 0.0
    %6520 = vmatpush2.msra.mxu0 0.0
    %6521 = vmatprep.subr.mxu0 0.0
    %6522 = vmatpush2.msra.mxu0 0.0
    %6523 = vmatprep.subr.mxu0 0.0
    %6524 = vmatpush2.msra.mxu0 0.0
    %6525 = vmatprep.subr.mxu0 0.0
    %6526 = vmatpush2.msra.mxu0 0.0
    %6527 = vmatprep.subr.mxu0 0.0
    %6528 = vmatpush2.msra.mxu0 0.0
    %6529 = vmatprep.subr.mxu0 0.0
    %6530 = vmatpush2.msra.mxu0 0.0
    %6531 = vmatprep.subr.mxu0 0.0
    %6532 = vmatpush2.msra.mxu0 0.0
    %6533 = vmatprep.subr.mxu0 0.0
    %6534 = vmatpush2.msra.mxu0 0.0
    %6535 = vmatprep.subr.mxu0 0.0
    %6536 = vmatpush2.msra.mxu0 0.0
    %6537 = vmatprep.subr.mxu0 0.0
    %6538 = vmatpush2.msra.mxu0 0.0
    %6539 = vmatprep.subr.mxu0 0.0
    %6540 = vmatpush2.msra.mxu0 0.0
    %6541 = vmatprep.subr.mxu0 0.0
    %6542 = vmatpush2.msra.mxu0 0.0
    %6543 = vmatprep.subr.mxu0 0.0
    %6544 = vmatpush2.msra.mxu0 0.0
    %6545 = vmatprep.subr.mxu0 0.0
    %6546 = vmatpush2.msra.mxu0 0.0
    %6547 = vmatprep.subr.mxu0 0.0
    %6548 = vmatpush2.msra.mxu0 0.0
    %6549 = vmatprep.mubr.f32.mxu0 0.0
    %6550 = vmatmul.mubr.f32.gmra.mxu0 %v6307
    %v6551 = vpop.f32.mrf.mxu0
    %v6552 = vadd.f32 %v6404, %v6551
    %v6553 = vpop.f32.mrf.mxu0
    %6554 = vmatprep.mubr.f32.mxu0 0.0
    %6555 = vmatmul.mubr.f32.gmra.mxu0 %v6308
    %v6556 = vpop.f32.mrf.mxu0
    %v6557 = vadd.f32 %v6404, %v6556
    %v6558 = vpop.f32.mrf.mxu0
    %6559 = vdwg.mxu0
    %v6560 = vmul.f32 %v6475, %v56
    %v6561 = vmul.f32 %v6481, %v56
    %v6562 = vmul.f32 %v6475, %v61
    %v6563 = vmul.f32 %v6481, %v61
    %v6564 = vmul.f32 %v6475, %v66
    %v6565 = vmul.f32 %v6481, %v66
    %v6566 = vmul.f32 %v6475, %v71
    %v6567 = vmul.f32 %v6481, %v71
    %6568 = vmatprep.subr.mxu0 0.0
    %6569 = vmatpush1.xpose.msra.mxu0 0.0
    %6570 = vmatprep.subr.mxu0 0.0
    %6571 = vmatpush1.xpose.msra.mxu0 0.0
    %6572 = vmatprep.subr.mxu0 0.0
    %6573 = vmatpush1.xpose.msra.mxu0 0.0
    %6574 = vmatprep.subr.mxu0 0.0
    %6575 = vmatpush1.xpose.msra.mxu0 0.0
    %6576 = vmatprep.subr.mxu0 0.0
    %6577 = vmatpush1.xpose.msra.mxu0 0.0
    %6578 = vmatprep.subr.mxu0 0.0
    %6579 = vmatpush1.xpose.msra.mxu0 0.0
    %6580 = vmatprep.subr.mxu0 0.0
    %6581 = vmatpush1.xpose.msra.mxu0 0.0
    %6582 = vmatprep.subr.mxu0 0.0
    %6583 = vmatpush1.xpose.msra.mxu0 0.0
    %6584 = vmatprep.subr.mxu0 0.0
    %6585 = vmatpush1.xpose.msra.mxu0 0.0
    %6586 = vmatprep.subr.mxu0 0.0
    %6587 = vmatpush1.xpose.msra.mxu0 0.0
    %6588 = vmatprep.subr.mxu0 0.0
    %6589 = vmatpush1.xpose.msra.mxu0 0.0
    %6590 = vmatprep.subr.mxu0 0.0
    %6591 = vmatpush1.xpose.msra.mxu0 0.0
    %6592 = vmatprep.subr.mxu0 0.0
    %6593 = vmatpush1.xpose.msra.mxu0 0.0
    %6594 = vmatprep.subr.mxu0 0.0
    %6595 = vmatpush1.xpose.msra.mxu0 0.0
    %6596 = vmatprep.subr.mxu0 0.0
    %6597 = vmatpush1.xpose.msra.mxu0 %v6483
    %6598 = vmatprep.subr.mxu0 0.0
    %6599 = vmatpush1.xpose.msra.mxu0 %v6477
    %6600 = vmatprep.subr.mxu0 0.0
    %6601 = vmatpush2.xpose.msra.mxu0 0.0
    %6602 = vmatprep.subr.mxu0 0.0
    %6603 = vmatpush2.xpose.msra.mxu0 0.0
    %6604 = vmatprep.subr.mxu0 0.0
    %6605 = vmatpush2.xpose.msra.mxu0 0.0
    %6606 = vmatprep.subr.mxu0 0.0
    %6607 = vmatpush2.xpose.msra.mxu0 0.0
    %6608 = vmatprep.subr.mxu0 0.0
    %6609 = vmatpush2.xpose.msra.mxu0 0.0
    %6610 = vmatprep.subr.mxu0 0.0
    %6611 = vmatpush2.xpose.msra.mxu0 0.0
    %6612 = vmatprep.subr.mxu0 0.0
    %6613 = vmatpush2.xpose.msra.mxu0 0.0
    %6614 = vmatprep.subr.mxu0 0.0
    %6615 = vmatpush2.xpose.msra.mxu0 0.0
    %6616 = vmatprep.subr.mxu0 0.0
    %6617 = vmatpush2.xpose.msra.mxu0 0.0
    %6618 = vmatprep.subr.mxu0 0.0
    %6619 = vmatpush2.xpose.msra.mxu0 0.0
    %6620 = vmatprep.subr.mxu0 0.0
    %6621 = vmatpush2.xpose.msra.mxu0 0.0
    %6622 = vmatprep.subr.mxu0 0.0
    %6623 = vmatpush2.xpose.msra.mxu0 0.0
    %6624 = vmatprep.subr.mxu0 0.0
    %6625 = vmatpush2.xpose.msra.mxu0 0.0
    %6626 = vmatprep.subr.mxu0 0.0
    %6627 = vmatpush2.xpose.msra.mxu0 0.0
    %6628 = vmatprep.subr.mxu0 0.0
    %6629 = vmatpush2.xpose.msra.mxu0 0.0
    %6630 = vmatprep.subr.mxu0 0.0
    %6631 = vmatpush2.xpose.msra.mxu0 0.0
    %6632 = vmatprep.mubr.f32.mxu0 0.0
    %6633 = vmatmul.mubr.f32.gmra.mxu0 %v6560
    %v6634 = vpop.f32.mrf.mxu0
    %v6635 = vadd.f32 0.0, %v6634
    %v6636 = vpop.f32.mrf.mxu0
    %6637 = vmatprep.mubr.f32.mxu0 0.0
    %6638 = vmatmul.mubr.f32.gmra.mxu0 %v6561
    %v6639 = vpop.f32.mrf.mxu0
    %v6640 = vadd.f32 0.0, %v6639
    %v6641 = vpop.f32.mrf.mxu0
    %6642 = vmatprep.mubr.f32.mxu0 0.0
    %6643 = vmatmul.mubr.f32.gmra.mxu0 %v6562
    %v6644 = vpop.f32.mrf.mxu0
    %v6645 = vadd.f32 0.0, %v6644
    %v6646 = vpop.f32.mrf.mxu0
    %6647 = vmatprep.mubr.f32.mxu0 0.0
    %6648 = vmatmul.mubr.f32.gmra.mxu0 %v6563
    %v6649 = vpop.f32.mrf.mxu0
    %v6650 = vadd.f32 0.0, %v6649
    %v6651 = vpop.f32.mrf.mxu0
    %6652 = vmatprep.mubr.f32.mxu0 0.0
    %6653 = vmatmul.mubr.f32.gmra.mxu0 %v6564
    %v6654 = vpop.f32.mrf.mxu0
    %v6655 = vadd.f32 0.0, %v6654
    %v6656 = vpop.f32.mrf.mxu0
    %6657 = vmatprep.mubr.f32.mxu0 0.0
    %6658 = vmatmul.mubr.f32.gmra.mxu0 %v6565
    %v6659 = vpop.f32.mrf.mxu0
    %v6660 = vadd.f32 0.0, %v6659
    %v6661 = vpop.f32.mrf.mxu0
    %6662 = vmatprep.mubr.f32.mxu0 0.0
    %6663 = vmatmul.mubr.f32.gmra.mxu0 %v6566
    %v6664 = vpop.f32.mrf.mxu0
    %v6665 = vadd.f32 0.0, %v6664
    %v6666 = vpop.f32.mrf.mxu0
    %6667 = vmatprep.mubr.f32.mxu0 0.0
    %6668 = vmatmul.mubr.f32.gmra.mxu0 %v6567
    %v6669 = vpop.f32.mrf.mxu0
    %v6670 = vadd.f32 0.0, %v6669
    %v6671 = vpop.f32.mrf.mxu0
    %6672 = vdwg.mxu0
    %v6673 = vmul.f32 %v6635, 0.088388346
    %v6674 = vmul.f32 %v6640, 0.088388346
    %v6675 = vmul.f32 %v6645, 0.088388346
    %v6676 = vmul.f32 %v6650, 0.088388346
    %v6677 = vmul.f32 %v6655, 0.088388346
    %v6678 = vmul.f32 %v6660, 0.088388346
    %v6679 = vmul.f32 %v6665, 0.088388346
    %v6680 = vmul.f32 %v6670, 0.088388346
    %v6681 = vadd.f32 %v6673, %v132
    %v6682 = vadd.f32 %v6674, %v133
    %v6683 = vadd.f32 %v6675, %v134
    %v6684 = vadd.f32 %v6676, %v135
    %v6685 = vadd.f32 %v6677, %v136
    %v6686 = vadd.f32 %v6678, %v137
    %v6687 = vadd.f32 %v6679, %v138
    %v6688 = vadd.f32 %v6680, %v139
    %v6689 = vsel %vm5957, %v6681, -inf
    %6690 = vmax.xlane.f32.xlu0 %v6689
    %v6691 = vpop.xlane.xlu0 %6690
    %v6692 = vsel %vm5957, %v6682, -inf
    %6693 = vmax.xlane.f32.xlu0 %v6692
    %v6694 = vpop.xlane.xlu0 %6693
    %v6695 = vsel %vm5957, %v6683, -inf
    %6696 = vmax.xlane.f32.xlu0 %v6695
    %v6697 = vpop.xlane.xlu0 %6696
    %v6698 = vsel %vm5957, %v6684, -inf
    %6699 = vmax.xlane.f32.xlu0 %v6698
    %v6700 = vpop.xlane.xlu0 %6699
    %v6701 = vsel %vm5957, %v6685, -inf
    %6702 = vmax.xlane.f32.xlu0 %v6701
    %v6703 = vpop.xlane.xlu0 %6702
    %v6704 = vsel %vm5957, %v6686, -inf
    %6705 = vmax.xlane.f32.xlu0 %v6704
    %v6706 = vpop.xlane.xlu0 %6705
    %v6707 = vsel %vm5957, %v6687, -inf
    %6708 = vmax.xlane.f32.xlu0 %v6707
    %v6709 = vpop.xlane.xlu0 %6708
    %v6710 = vsel %vm5957, %v6688, -inf
    %6711 = vmax.xlane.f32.xlu0 %v6710
    %v6712 = vpop.xlane.xlu0 %6711
    %v6713 = vsub.f32 %v6681, %v6691
    %v6714 = vsub.f32 %v6682, %v6694
    %v6715 = vsub.f32 %v6683, %v6697
    %v6716 = vsub.f32 %v6684, %v6700
    %v6717 = vsub.f32 %v6685, %v6703
    %v6718 = vsub.f32 %v6686, %v6706
    %v6719 = vsub.f32 %v6687, %v6709
    %v6720 = vsub.f32 %v6688, %v6712
    %v6721 = vmul.f32 %v6713, 1.442695
    %v6722 = vpow.pop %v6721
    %v6723 = vmul.f32 %v6714, 1.442695
    %v6724 = vpow.pop %v6723
    %v6725 = vmul.f32 %v6715, 1.442695
    %v6726 = vpow.pop %v6725
    %v6727 = vmul.f32 %v6716, 1.442695
    %v6728 = vpow.pop %v6727
    %v6729 = vmul.f32 %v6717, 1.442695
    %v6730 = vpow.pop %v6729
    %v6731 = vmul.f32 %v6718, 1.442695
    %v6732 = vpow.pop %v6731
    %v6733 = vmul.f32 %v6719, 1.442695
    %v6734 = vpow.pop %v6733
    %v6735 = vmul.f32 %v6720, 1.442695
    %v6736 = vpow.pop %v6735
    %v6737 = vsel %vm5957, %v6722, 0.0
    %6738 = vadd.xlane.f32.xlu0 %v6737
    %v6739 = vpop.xlane.xlu0 %6738
    %v6740 = vsel %vm5957, %v6724, 0.0
    %6741 = vadd.xlane.f32.xlu0 %v6740
    %v6742 = vpop.xlane.xlu0 %6741
    %v6743 = vsel %vm5957, %v6726, 0.0
    %6744 = vadd.xlane.f32.xlu0 %v6743
    %v6745 = vpop.xlane.xlu0 %6744
    %v6746 = vsel %vm5957, %v6728, 0.0
    %6747 = vadd.xlane.f32.xlu0 %v6746
    %v6748 = vpop.xlane.xlu0 %6747
    %v6749 = vsel %vm5957, %v6730, 0.0
    %6750 = vadd.xlane.f32.xlu0 %v6749
    %v6751 = vpop.xlane.xlu0 %6750
    %v6752 = vsel %vm5957, %v6732, 0.0
    %6753 = vadd.xlane.f32.xlu0 %v6752
    %v6754 = vpop.xlane.xlu0 %6753
    %v6755 = vsel %vm5957, %v6734, 0.0
    %6756 = vadd.xlane.f32.xlu0 %v6755
    %v6757 = vpop.xlane.xlu0 %6756
    %v6758 = vsel %vm5957, %v6736, 0.0
    %6759 = vadd.xlane.f32.xlu0 %v6758
    %v6760 = vpop.xlane.xlu0 %6759
    %v6761 = vrcp.pop %v6739
    %v6762 = vmul.f32 %v6722, %v6761
    %v6763 = vrcp.pop %v6742
    %v6764 = vmul.f32 %v6724, %v6763
    %v6765 = vrcp.pop %v6745
    %v6766 = vmul.f32 %v6726, %v6765
    %v6767 = vrcp.pop %v6748
    %v6768 = vmul.f32 %v6728, %v6767
    %v6769 = vrcp.pop %v6751
    %v6770 = vmul.f32 %v6730, %v6769
    %v6771 = vrcp.pop %v6754
    %v6772 = vmul.f32 %v6732, %v6771
    %v6773 = vrcp.pop %v6757
    %v6774 = vmul.f32 %v6734, %v6773
    %v6775 = vrcp.pop %v6760
    %v6776 = vmul.f32 %v6736, %v6775
    %v6778 = vsel %vm5957, %v6762, 0
    %v6781 = vsel %vm5957, %v6764, 0
    %v6784 = vsel %vm5957, %v6766, 0
    %v6787 = vsel %vm5957, %v6768, 0
    %v6790 = vsel %vm5957, %v6770, 0
    %v6793 = vsel %vm5957, %v6772, 0
    %v6796 = vsel %vm5957, %v6774, 0
    %v6799 = vsel %vm5957, %v6776, 0
    %6801 = vmatprep.subr.mxu0 0.0
    %6802 = vmatpush1.msra.mxu0 0.0
    %6803 = vmatprep.subr.mxu0 0.0
    %6804 = vmatpush1.msra.mxu0 0.0
    %6805 = vmatprep.subr.mxu0 0.0
    %6806 = vmatpush1.msra.mxu0 0.0
    %6807 = vmatprep.subr.mxu0 0.0
    %6808 = vmatpush1.msra.mxu0 0.0
    %6809 = vmatprep.subr.mxu0 0.0
    %6810 = vmatpush1.msra.mxu0 0.0
    %6811 = vmatprep.subr.mxu0 0.0
    %6812 = vmatpush1.msra.mxu0 0.0
    %6813 = vmatprep.subr.mxu0 0.0
    %6814 = vmatpush1.msra.mxu0 0.0
    %6815 = vmatprep.subr.mxu0 0.0
    %6816 = vmatpush1.msra.mxu0 0.0
    %6817 = vmatprep.subr.mxu0 0.0
    %6818 = vmatpush1.msra.mxu0 0.0
    %6819 = vmatprep.subr.mxu0 0.0
    %6820 = vmatpush1.msra.mxu0 0.0
    %6821 = vmatprep.subr.mxu0 0.0
    %6822 = vmatpush1.msra.mxu0 0.0
    %6823 = vmatprep.subr.mxu0 0.0
    %6824 = vmatpush1.msra.mxu0 0.0
    %6825 = vmatprep.subr.mxu0 0.0
    %6826 = vmatpush1.msra.mxu0 0.0
    %6827 = vmatprep.subr.mxu0 0.0
    %6828 = vmatpush1.msra.mxu0 0.0
    %6829 = vmatprep.subr.mxu0 0.0
    %6830 = vmatpush1.msra.mxu0 %v6557
    %6831 = vmatprep.subr.mxu0 0.0
    %6832 = vmatpush1.msra.mxu0 %v6552
    %6833 = vmatprep.subr.mxu0 0.0
    %6834 = vmatpush2.msra.mxu0 0.0
    %6835 = vmatprep.subr.mxu0 0.0
    %6836 = vmatpush2.msra.mxu0 0.0
    %6837 = vmatprep.subr.mxu0 0.0
    %6838 = vmatpush2.msra.mxu0 0.0
    %6839 = vmatprep.subr.mxu0 0.0
    %6840 = vmatpush2.msra.mxu0 0.0
    %6841 = vmatprep.subr.mxu0 0.0
    %6842 = vmatpush2.msra.mxu0 0.0
    %6843 = vmatprep.subr.mxu0 0.0
    %6844 = vmatpush2.msra.mxu0 0.0
    %6845 = vmatprep.subr.mxu0 0.0
    %6846 = vmatpush2.msra.mxu0 0.0
    %6847 = vmatprep.subr.mxu0 0.0
    %6848 = vmatpush2.msra.mxu0 0.0
    %6849 = vmatprep.subr.mxu0 0.0
    %6850 = vmatpush2.msra.mxu0 0.0
    %6851 = vmatprep.subr.mxu0 0.0
    %6852 = vmatpush2.msra.mxu0 0.0
    %6853 = vmatprep.subr.mxu0 0.0
    %6854 = vmatpush2.msra.mxu0 0.0
    %6855 = vmatprep.subr.mxu0 0.0
    %6856 = vmatpush2.msra.mxu0 0.0
    %6857 = vmatprep.subr.mxu0 0.0
    %6858 = vmatpush2.msra.mxu0 0.0
    %6859 = vmatprep.subr.mxu0 0.0
    %6860 = vmatpush2.msra.mxu0 0.0
    %6861 = vmatprep.subr.mxu0 0.0
    %6862 = vmatpush2.msra.mxu0 0.0
    %6863 = vmatprep.subr.mxu0 0.0
    %6864 = vmatpush2.msra.mxu0 0.0
    %6865 = vmatprep.mubr.f32.mxu0 0.0
    %6866 = vmatmul.mubr.f32.gmra.mxu0 %v6778
    %v6867 = vpop.f32.mrf.mxu0
    %v6868 = vadd.f32 0.0, %v6867
    %v6869 = vpop.f32.mrf.mxu0
    %6870 = vmatprep.mubr.f32.mxu0 0.0
    %6871 = vmatmul.mubr.f32.gmra.mxu0 %v6781
    %v6872 = vpop.f32.mrf.mxu0
    %v6873 = vadd.f32 0.0, %v6872
    %v6874 = vpop.f32.mrf.mxu0
    %6875 = vmatprep.mubr.f32.mxu0 0.0
    %6876 = vmatmul.mubr.f32.gmra.mxu0 %v6784
    %v6877 = vpop.f32.mrf.mxu0
    %v6878 = vadd.f32 0.0, %v6877
    %v6879 = vpop.f32.mrf.mxu0
    %6880 = vmatprep.mubr.f32.mxu0 0.0
    %6881 = vmatmul.mubr.f32.gmra.mxu0 %v6787
    %v6882 = vpop.f32.mrf.mxu0
    %v6883 = vadd.f32 0.0, %v6882
    %v6884 = vpop.f32.mrf.mxu0
    %6885 = vmatprep.mubr.f32.mxu0 0.0
    %6886 = vmatmul.mubr.f32.gmra.mxu0 %v6790
    %v6887 = vpop.f32.mrf.mxu0
    %v6888 = vadd.f32 0.0, %v6887
    %v6889 = vpop.f32.mrf.mxu0
    %6890 = vmatprep.mubr.f32.mxu0 0.0
    %6891 = vmatmul.mubr.f32.gmra.mxu0 %v6793
    %v6892 = vpop.f32.mrf.mxu0
    %v6893 = vadd.f32 0.0, %v6892
    %v6894 = vpop.f32.mrf.mxu0
    %6895 = vmatprep.mubr.f32.mxu0 0.0
    %6896 = vmatmul.mubr.f32.gmra.mxu0 %v6796
    %v6897 = vpop.f32.mrf.mxu0
    %v6898 = vadd.f32 0.0, %v6897
    %v6899 = vpop.f32.mrf.mxu0
    %6900 = vmatprep.mubr.f32.mxu0 0.0
    %6901 = vmatmul.mubr.f32.gmra.mxu0 %v6799
    %v6902 = vpop.f32.mrf.mxu0
    %v6903 = vadd.f32 0.0, %v6902
    %v6904 = vpop.f32.mrf.mxu0
    %6905 = vdwg.mxu0
    %v6906 = vmul.f32 %v6868, %v56
    %v6907 = vmul.f32 %v6873, %v56
    %v6908 = vadd.f32 %v6475, %v6906
    %v6909 = vadd.f32 %v6481, %v6907
    %v6910 = vmul.f32 %v6878, %v61
    %v6911 = vmul.f32 %v6883, %v61
    %v6912 = vadd.f32 %v6908, %v6910
    %v6913 = vadd.f32 %v6909, %v6911
    %v6914 = vmul.f32 %v6888, %v66
    %v6915 = vmul.f32 %v6893, %v66
    %v6916 = vadd.f32 %v6912, %v6914
    %v6917 = vadd.f32 %v6913, %v6915
    %v6918 = vmul.f32 %v6898, %v71
    %v6919 = vmul.f32 %v6903, %v71
    %v6920 = vadd.f32 %v6916, %v6918
    %v6921 = vadd.f32 %v6917, %v6919
    %v6922 = vld [vmem:[%s6309 + $0xc] sm:$0xf]
    %v6923 = vld [vmem:[%s6309 + $0x1c] sm:$0xf]
    %v6924 = vld [vmem:[%s6309 + $0x2c] sm:$0xf]
    %v6925 = vld [vmem:[%s6309 + $0x3c] sm:$0xf]
    %v6926 = vld [vmem:[%s6309 + $0x4c] sm:$0xf]
    %v6927 = vld [vmem:[%s6309 + $0x5c] sm:$0xf]
    %v6928 = vld [vmem:[%s6309 + $0x6c] sm:$0xf]
    %v6929 = vld [vmem:[%s6309 + $0x7c] sm:$0xf]
    %v6930 = vld [vmem:[%s6309 + $0x8c] sm:$0xf]
    %v6931 = vld [vmem:[%s6309 + $0x9c] sm:$0xf]
    %v6932 = vld [vmem:[%s6309 + $0xac] sm:$0xf]
    %v6933 = vld [vmem:[%s6309 + $0xbc] sm:$0xf]
    %v6934 = vld [vmem:[%s6309 + $0xcc] sm:$0xf]
    %v6935 = vld [vmem:[%s6309 + $0xdc] sm:$0xf]
    %v6936 = vld [vmem:[%s6309 + $0xec] sm:$0xf]
    %v6937 = vld [vmem:[%s6309 + $0xfc] sm:$0xf]
    %v6938 = vunpack.c.l.bf16 %v6922
    %v6939 = vunpack.c.l.bf16 %v6923
    %v6940 = vunpack.c.l.bf16 %v6924
    %v6941 = vunpack.c.l.bf16 %v6925
    %v6942 = vunpack.c.l.bf16 %v6926
    %v6943 = vunpack.c.l.bf16 %v6927
    %v6944 = vunpack.c.l.bf16 %v6928
    %v6945 = vunpack.c.l.bf16 %v6929
    %v6946 = vunpack.c.l.bf16 %v6930
    %v6947 = vunpack.c.l.bf16 %v6931
    %v6948 = vunpack.c.l.bf16 %v6932
    %v6949 = vunpack.c.l.bf16 %v6933
    %v6950 = vunpack.c.l.bf16 %v6934
    %v6951 = vunpack.c.l.bf16 %v6935
    %v6952 = vunpack.c.l.bf16 %v6936
    %v6953 = vunpack.c.l.bf16 %v6937
    %v6954 = vld [vmem:[%s6390 + $0x3] sm:$0x1]
    %v6956 = vlaneseq
    %v6957 = vshrl.u32 %v6956, 7
    %v6958 = vsub.s32 0, %v6957
    %v6959 = vrot.slane %v6954, %v6958
    %6961 = vmatprep.subr.mxu0 0.0
    %6962 = vmatpush1.msra.mxu0 %v6953
    %6963 = vmatprep.subr.mxu0 0.0
    %6964 = vmatpush1.msra.mxu0 %v6952
    %6965 = vmatprep.subr.mxu0 0.0
    %6966 = vmatpush1.msra.mxu0 %v6951
    %6967 = vmatprep.subr.mxu0 0.0
    %6968 = vmatpush1.msra.mxu0 %v6950
    %6969 = vmatprep.subr.mxu0 0.0
    %6970 = vmatpush1.msra.mxu0 %v6949
    %6971 = vmatprep.subr.mxu0 0.0
    %6972 = vmatpush1.msra.mxu0 %v6948
    %6973 = vmatprep.subr.mxu0 0.0
    %6974 = vmatpush1.msra.mxu0 %v6947
    %6975 = vmatprep.subr.mxu0 0.0
    %6976 = vmatpush1.msra.mxu0 %v6946
    %6977 = vmatprep.subr.mxu0 0.0
    %6978 = vmatpush1.msra.mxu0 %v6945
    %6979 = vmatprep.subr.mxu0 0.0
    %6980 = vmatpush1.msra.mxu0 %v6944
    %6981 = vmatprep.subr.mxu0 0.0
    %6982 = vmatpush1.msra.mxu0 %v6943
    %6983 = vmatprep.subr.mxu0 0.0
    %6984 = vmatpush1.msra.mxu0 %v6942
    %6985 = vmatprep.subr.mxu0 0.0
    %6986 = vmatpush1.msra.mxu0 %v6941
    %6987 = vmatprep.subr.mxu0 0.0
    %6988 = vmatpush1.msra.mxu0 %v6940
    %6989 = vmatprep.subr.mxu0 0.0
    %6990 = vmatpush1.msra.mxu0 %v6939
    %6991 = vmatprep.subr.mxu0 0.0
    %6992 = vmatpush1.msra.mxu0 %v6938
    %6993 = vmatprep.subr.mxu0 0.0
    %6994 = vmatpush2.msra.mxu0 0.0
    %6995 = vmatprep.subr.mxu0 0.0
    %6996 = vmatpush2.msra.mxu0 0.0
    %6997 = vmatprep.subr.mxu0 0.0
    %6998 = vmatpush2.msra.mxu0 0.0
    %6999 = vmatprep.subr.mxu0 0.0
    %7000 = vmatpush2.msra.mxu0 0.0
    %7001 = vmatprep.subr.mxu0 0.0
    %7002 = vmatpush2.msra.mxu0 0.0
    %7003 = vmatprep.subr.mxu0 0.0
    %7004 = vmatpush2.msra.mxu0 0.0
    %7005 = vmatprep.subr.mxu0 0.0
    %7006 = vmatpush2.msra.mxu0 0.0
    %7007 = vmatprep.subr.mxu0 0.0
    %7008 = vmatpush2.msra.mxu0 0.0
    %7009 = vmatprep.subr.mxu0 0.0
    %7010 = vmatpush2.msra.mxu0 0.0
    %7011 = vmatprep.subr.mxu0 0.0
    %7012 = vmatpush2.msra.mxu0 0.0
    %7013 = vmatprep.subr.mxu0 0.0
    %7014 = vmatpush2.msra.mxu0 0.0
    %7015 = vmatprep.subr.mxu0 0.0
    %7016 = vmatpush2.msra.mxu0 0.0
    %7017 = vmatprep.subr.mxu0 0.0
    %7018 = vmatpush2.msra.mxu0 0.0
    %7019 = vmatprep.subr.mxu0 0.0
    %7020 = vmatpush2.msra.mxu0 0.0
    %7021 = vmatprep.subr.mxu0 0.0
    %7022 = vmatpush2.msra.mxu0 0.0
    %7023 = vmatprep.subr.mxu0 0.0
    %7024 = vmatpush2.msra.mxu0 0.0
    %7025 = vmatprep.mubr.f32.mxu0 0.0
    %7026 = vmatmul.mubr.f32.gmra.mxu0 %v6920
    %v7027 = vpop.f32.mrf.mxu0
    %v7028 = vadd.f32 %v6959, %v7027
    %v7029 = vpop.f32.mrf.mxu0
    %7030 = vmatprep.mubr.f32.mxu0 0.0
    %7031 = vmatmul.mubr.f32.gmra.mxu0 %v6921
    %v7032 = vpop.f32.mrf.mxu0
    %v7033 = vadd.f32 %v6959, %v7032
    %v7034 = vpop.f32.mrf.mxu0
    %7035 = vdwg.mxu0
    %v7036 = vmax.f32 %v7028, 0.0
    %v7037 = vmax.f32 %v7033, 0.0
    %v7038 = vadd.f32 %v6920, %v7036
    %v7039 = vadd.f32 %v6921, %v7037
    %s7040 = scalar_lea.vmem [#allocation2], 1792
    %v7041 = vld [vmem:[%s7040] sm:$0xf]
    %v7042 = vld [vmem:[%s7040 + $0x10] sm:$0xf]
    %v7043 = vld [vmem:[%s7040 + $0x20] sm:$0xf]
    %v7044 = vld [vmem:[%s7040 + $0x30] sm:$0xf]
    %v7045 = vld [vmem:[%s7040 + $0x40] sm:$0xf]
    %v7046 = vld [vmem:[%s7040 + $0x50] sm:$0xf]
    %v7047 = vld [vmem:[%s7040 + $0x60] sm:$0xf]
    %v7048 = vld [vmem:[%s7040 + $0x70] sm:$0xf]
    %v7049 = vld [vmem:[%s7040 + $0x80] sm:$0xf]
    %v7050 = vld [vmem:[%s7040 + $0x90] sm:$0xf]
    %v7051 = vld [vmem:[%s7040 + $0xa0] sm:$0xf]
    %v7052 = vld [vmem:[%s7040 + $0xb0] sm:$0xf]
    %v7053 = vld [vmem:[%s7040 + $0xc0] sm:$0xf]
    %v7054 = vld [vmem:[%s7040 + $0xd0] sm:$0xf]
    %v7055 = vld [vmem:[%s7040 + $0xe0] sm:$0xf]
    %v7056 = vld [vmem:[%s7040 + $0xf0] sm:$0xf]
    %v7057 = vunpack.c.l.bf16 %v7041
    %v7058 = vunpack.c.l.bf16 %v7042
    %v7059 = vunpack.c.l.bf16 %v7043
    %v7060 = vunpack.c.l.bf16 %v7044
    %v7061 = vunpack.c.l.bf16 %v7045
    %v7062 = vunpack.c.l.bf16 %v7046
    %v7063 = vunpack.c.l.bf16 %v7047
    %v7064 = vunpack.c.l.bf16 %v7048
    %v7065 = vunpack.c.l.bf16 %v7049
    %v7066 = vunpack.c.l.bf16 %v7050
    %v7067 = vunpack.c.l.bf16 %v7051
    %v7068 = vunpack.c.l.bf16 %v7052
    %v7069 = vunpack.c.l.bf16 %v7053
    %v7070 = vunpack.c.l.bf16 %v7054
    %v7071 = vunpack.c.l.bf16 %v7055
    %v7072 = vunpack.c.l.bf16 %v7056
    %s7073 = scalar_lea.vmem %s9, 28
    %v7074 = vld [vmem:[%s7073] sm:$0x1]
    %v7076 = vlaneseq
    %v7077 = vshrl.u32 %v7076, 7
    %v7078 = vsub.s32 0, %v7077
    %v7079 = vrot.slane %v7074, %v7078
    %7081 = vmatprep.subr.mxu0 0.0
    %7082 = vmatpush1.msra.mxu0 %v7072
    %7083 = vmatprep.subr.mxu0 0.0
    %7084 = vmatpush1.msra.mxu0 %v7071
    %7085 = vmatprep.subr.mxu0 0.0
    %7086 = vmatpush1.msra.mxu0 %v7070
    %7087 = vmatprep.subr.mxu0 0.0
    %7088 = vmatpush1.msra.mxu0 %v7069
    %7089 = vmatprep.subr.mxu0 0.0
    %7090 = vmatpush1.msra.mxu0 %v7068
    %7091 = vmatprep.subr.mxu0 0.0
    %7092 = vmatpush1.msra.mxu0 %v7067
    %7093 = vmatprep.subr.mxu0 0.0
    %7094 = vmatpush1.msra.mxu0 %v7066
    %7095 = vmatprep.subr.mxu0 0.0
    %7096 = vmatpush1.msra.mxu0 %v7065
    %7097 = vmatprep.subr.mxu0 0.0
    %7098 = vmatpush1.msra.mxu0 %v7064
    %7099 = vmatprep.subr.mxu0 0.0
    %7100 = vmatpush1.msra.mxu0 %v7063
    %7101 = vmatprep.subr.mxu0 0.0
    %7102 = vmatpush1.msra.mxu0 %v7062
    %7103 = vmatprep.subr.mxu0 0.0
    %7104 = vmatpush1.msra.mxu0 %v7061
    %7105 = vmatprep.subr.mxu0 0.0
    %7106 = vmatpush1.msra.mxu0 %v7060
    %7107 = vmatprep.subr.mxu0 0.0
    %7108 = vmatpush1.msra.mxu0 %v7059
    %7109 = vmatprep.subr.mxu0 0.0
    %7110 = vmatpush1.msra.mxu0 %v7058
    %7111 = vmatprep.subr.mxu0 0.0
    %7112 = vmatpush1.msra.mxu0 %v7057
    %7113 = vmatprep.subr.mxu0 0.0
    %7114 = vmatpush2.msra.mxu0 0.0
    %7115 = vmatprep.subr.mxu0 0.0
    %7116 = vmatpush2.msra.mxu0 0.0
    %7117 = vmatprep.subr.mxu0 0.0
    %7118 = vmatpush2.msra.mxu0 0.0
    %7119 = vmatprep.subr.mxu0 0.0
    %7120 = vmatpush2.msra.mxu0 0.0
    %7121 = vmatprep.subr.mxu0 0.0
    %7122 = vmatpush2.msra.mxu0 0.0
    %7123 = vmatprep.subr.mxu0 0.0
    %7124 = vmatpush2.msra.mxu0 0.0
    %7125 = vmatprep.subr.mxu0 0.0
    %7126 = vmatpush2.msra.mxu0 0.0
    %7127 = vmatprep.subr.mxu0 0.0
    %7128 = vmatpush2.msra.mxu0 0.0
    %7129 = vmatprep.subr.mxu0 0.0
    %7130 = vmatpush2.msra.mxu0 0.0
    %7131 = vmatprep.subr.mxu0 0.0
    %7132 = vmatpush2.msra.mxu0 0.0
    %7133 = vmatprep.subr.mxu0 0.0
    %7134 = vmatpush2.msra.mxu0 0.0
    %7135 = vmatprep.subr.mxu0 0.0
    %7136 = vmatpush2.msra.mxu0 0.0
    %7137 = vmatprep.subr.mxu0 0.0
    %7138 = vmatpush2.msra.mxu0 0.0
    %7139 = vmatprep.subr.mxu0 0.0
    %7140 = vmatpush2.msra.mxu0 0.0
    %7141 = vmatprep.subr.mxu0 0.0
    %7142 = vmatpush2.msra.mxu0 0.0
    %7143 = vmatprep.subr.mxu0 0.0
    %7144 = vmatpush2.msra.mxu0 0.0
    %7145 = vmatprep.mubr.f32.mxu0 0.0
    %7146 = vmatmul.mubr.f32.gmra.mxu0 %v7038
    %v7147 = vpop.f32.mrf.mxu0
    %v7148 = vadd.f32 %v7079, %v7147
    %v7149 = vpop.f32.mrf.mxu0
    %7150 = vmatprep.mubr.f32.mxu0 0.0
    %7151 = vmatmul.mubr.f32.gmra.mxu0 %v7039
    %v7152 = vpop.f32.mrf.mxu0
    %v7153 = vadd.f32 %v7079, %v7152
    %v7154 = vpop.f32.mrf.mxu0
    %7155 = vdwg.mxu0
    %7156 = vst [vmem:[#allocation5] sm:$0xff] %v7148
    %7157 = vst [vmem:[#allocation5 + $0x8] sm:$0xff] %v7153
    // Predicated region
    $region46: #{tpu_custom_call.1} parent=1 // pred_check
      _
    $region47: #{tpu_custom_call.1} parent=1 // pred_check_branch
      %7159 = sbr.rel (0) target = $region49
    $region48: #{tpu_custom_call.1} parent=1 // pred_region
      %s7161 = ssub.s32 256, 256
      %7162 = vsyncadd [#allocation4], %s7161
      %s7163 = sshll.u32 [#allocation5], 4
      %s7164 = int_to_ptr.vmem [resolvable:$true] %s7163
      %7169 = dma.vmem_to_hbm [thread:$0]  %s7164, 256, %s10, [#allocation4], 128, 128, 8
    $region49: #{tpu_custom_call.1} parent=1 // pred_fallthru
      _
    // Predicated region
    $region50: #{tpu_custom_call.1} parent=1 // pred_check
      _
    $region51: #{tpu_custom_call.1} parent=1 // pred_check_branch
      %7171 = sbr.rel (0) target = $region53
    $region52: #{tpu_custom_call.1} parent=1 // pred_region
      %7172 = dma.done [#allocation4], 256
    $region53: #{tpu_custom_call.1} parent=1 // pred_fallthru
      _
    %7173 = vsyncpa [#allocation3], 1
    %7174 = vsyncpa [#allocation4], 1

</llo_original>
